<compile_context>
chip_gen: v5e
topology: v5e:2x2
jax: 0.10.0
libtpu: 0.0.40
codegen_flags: <defaults>
</compile_context>

<pallas_src>
import functools

import jax
import jax.numpy as jnp
from jax.experimental import pallas as pl
from jax.experimental.pallas import tpu as pltpu

LN_EPS = 1e-5
NEG_INF = -1e30                     # finite "masked" bias: fully-masked rows stay finite
VMEM_LIMIT_BYTES = 48 * 1024 * 1024  # > default scoped 16/32 MiB, < v7x 64 MiB physical


# --------------------------------------------------------------------------- #
# In-kernel building blocks (pure array functions traced inside the kernels)
# --------------------------------------------------------------------------- #
def _layernorm(x, g, b):
    mu = jnp.mean(x, axis=-1, keepdims=True)
    var = jnp.mean(jnp.square(x - mu), axis=-1, keepdims=True)
    return (x - mu) * jax.lax.rsqrt(var + LN_EPS) * g + b


def _mha_residual(x, kv, bias, ln, w, b, num_heads):
    """Pre-norm residual MHA: x + MHA(LN(x), k, v), k = v = kv (cross) or LN(x) (self).

    x    : (Nq, D) f32 residual stream
    kv   : (Nk, D) f32 raw keys/values, or None -> self-attention on LN(x)
    bias : (Nq, Nk) additive attention bias (0 / NEG_INF), or None
    ln   : (2, D) f32  [gamma; beta]
    w    : (4, D, D) bf16  [wq, wk, wv, wo]   (head-fused, full width)
    b    : (4, D) f32  [bq, bk, bv, bo]
    """
    nq, d = x.shape
    dh = d // num_heads
    scale = 1.0 / (dh ** 0.5)

    xn = _layernorm(x, ln[0:1], ln[1:2])            # f32
    src = xn if kv is None else kv
    xb = xn.astype(jnp.bfloat16)
    sb = src.astype(jnp.bfloat16)

    # Head-fused projections: one full-width matmul each (MXU friendly).
    qf = jnp.dot(xb, w[0], preferred_element_type=jnp.float32) + b[0:1]
    kf = jnp.dot(sb, w[1], preferred_element_type=jnp.float32) + b[1:2]
    vf = jnp.dot(sb, w[2], preferred_element_type=jnp.float32) + b[2:3]

    bias_f = None if bias is None else bias.astype(jnp.float32)

    heads = []
    for h in range(num_heads):                      # small, unrolled
        sl = slice(h * dh, (h + 1) * dh)
        qh = qf[:, sl].astype(jnp.bfloat16)
        kh = kf[:, sl].astype(jnp.bfloat16)
        vh = vf[:, sl].astype(jnp.bfloat16)
        s = jax.lax.dot_general(qh, kh, (((1,), (1,)), ((), ())),
                                preferred_element_type=jnp.float32) * scale
        if bias_f is not None:
            s = s + bias_f                          # mask applied once, as an add
        s = s - jnp.max(s, axis=-1, keepdims=True)
        p = jnp.exp(s)
        p = p * pl.reciprocal(jnp.sum(p, axis=-1, keepdims=True), approx=True)
        heads.append(jnp.dot(p.astype(jnp.bfloat16), vh,
                             preferred_element_type=jnp.float32))
    o = jnp.concatenate(heads, axis=-1).astype(jnp.bfloat16)    # (Nq, D)
    out = jnp.dot(o, w[3], preferred_element_type=jnp.float32) + b[3:4]
    return x + out


def _dense_residual(x, ln, w1, b1, w2, b2):
    """Pre-norm residual MLP: x + W2(gelu(W1(LN(x))))."""
    xn = _layernorm(x, ln[0:1], ln[1:2])
    h = jnp.dot(xn.astype(jnp.bfloat16), w1, preferred_element_type=jnp.float32) + b1
    h = jax.nn.gelu(h, approximate=True)  # TODO(synk): torch nn.GELU default is exact erf
    return x + jnp.dot(h.astype(jnp.bfloat16), w2,
                       preferred_element_type=jnp.float32) + b2


# --------------------------------------------------------------------------- #
# Kernels
# --------------------------------------------------------------------------- #
def _mask_bias_kernel(q_ref, x_ref, wm_ref, bm_ref, bias_ref, bias_t_ref, *, threshold):
    """Additive attention biases from mask_net(q) @ x^T (no logits HBM writeback)."""
    q = q_ref[0]                                            # (Nobj, D)
    x = x_ref[0]                                            # (Nkv,  D)
    tok = jnp.dot(q.astype(jnp.bfloat16), wm_ref[...],
                  preferred_element_type=jnp.float32) + bm_ref[...]
    logits = jax.lax.dot_general(tok.astype(jnp.bfloat16), x.astype(jnp.bfloat16),
                                 (((1,), (1,)), ((), ())),
                                 preferred_element_type=jnp.float32)   # (Nobj, Nkv)
    masked = jax.nn.sigmoid(logits) < threshold             # f32 compare (stays f32)
    n_k = logits.shape[-1]
    fully = jnp.sum(masked.astype(jnp.float32), axis=-1, keepdims=True) >= (n_k - 0.5)
    bias = jnp.where(jnp.logical_and(masked, jnp.logical_not(fully)), NEG_INF, 0.0)
    bias_ref[0] = bias.astype(jnp.bfloat16)
    bias_t_ref[0] = bias.T.astype(jnp.bfloat16)   # in-kernel transpose, no XLA transpose op


def _q_path_kernel(q_ref, kv_ref, bias_ref,
                   ca_ln_ref, ca_w_ref, ca_b_ref,
                   sa_ln_ref, sa_w_ref, sa_b_ref,
                   dn_ln_ref, dn_w1_ref, dn_b1_ref, dn_w2_ref, dn_b2_ref,
                   o_ref, *, num_heads):
    """q_ca + q_sa + q_dense fused; q stays resident in VMEM."""
    q = q_ref[0]
    kv = kv_ref[0]
    bias = bias_ref[0]
    q = _mha_residual(q, kv, bias, ca_ln_ref[...], ca_w_ref[...], ca_b_ref[...], num_heads)
    q = _mha_residual(q, None, None, sa_ln_ref[...], sa_w_ref[...], sa_b_ref[...], num_heads)
    q = _dense_residual(q, dn_ln_ref[...], dn_w1_ref[...], dn_b1_ref[...],
                        dn_w2_ref[...], dn_b2_ref[...])
    o_ref[0] = q


def _kv_path_kernel(kv_ref, q_ref, bias_t_ref,
                    ca_ln_ref, ca_w_ref, ca_b_ref,
                    dn_ln_ref, dn_w1_ref, dn_b1_ref, dn_w2_ref, dn_b2_ref,
                    o_ref, *, num_heads):
    """kv_ca + kv_dense fused, operating on a row tile of kv."""
    kv = kv_ref[0]                                          # (TKV, D)
    q = q_ref[0]                                            # (Nobj, D)
    bt = bias_t_ref[0]                                      # (TKV, Nobj)
    kv = _mha_residual(kv, q, bt, ca_ln_ref[...], ca_w_ref[...], ca_b_ref[...], num_heads)
    kv = _dense_residual(kv, dn_ln_ref[...], dn_w1_ref[...], dn_b1_ref[...],
                         dn_w2_ref[...], dn_b2_ref[...])
    o_ref[0] = kv


def _final_pred_kernel(q_ref, x_ref, wm_ref, bm_ref, wc_ref, bc_ref, logit_ref, cls_ref):
    """Final mask logits + fused class head (avoids a standalone width-1 linear call)."""
    q = q_ref[0]
    x = x_ref[0]
    qb = q.astype(jnp.bfloat16)
    tok = jnp.dot(qb, wm_ref[...], preferred_element_type=jnp.float32) + bm_ref[...]
    logit_ref[0] = jax.lax.dot_general(tok.astype(jnp.bfloat16), x.astype(jnp.bfloat16),
                                       (((1,), (1,)), ((), ())),
                                       preferred_element_type=jnp.float32)
    cls_ref[0] = jnp.dot(qb, wc_ref[...], preferred_element_type=jnp.float32) + bc_ref[...]


# --------------------------------------------------------------------------- #
# pallas_call wrappers
# --------------------------------------------------------------------------- #
def _bspec(full_shape):
    """Full-array block, replicated across the grid (constant index_map)."""
    n = len(full_shape)
    return pl.BlockSpec(tuple(full_shape), lambda *_: (0,) * n)


def _per_batch_spec(tail_shape):
    """(1, *tail) block indexed by the leading grid axis."""
    n = len(tail_shape)
    return pl.BlockSpec((1,) + tuple(tail_shape), lambda b, *_: (b,) + (0,) * n)


def _cparams(semantics):
    return pltpu.CompilerParams(dimension_semantics=semantics,
                                vmem_limit_bytes=VMEM_LIMIT_BYTES)


def _row_tile(n, max_tile=256):
    if n <= max_tile:
        return n
    for t in (256, 128, 64, 32, 16, 8):
        if n % t == 0:
            return t
    return n


def mask_bias_call(q, x, mask_net, threshold):
    B, Nobj, D = q.shape
    Nkv = x.shape[1]
    kern = functools.partial(_mask_bias_kernel, threshold=threshold)
    return pl.pallas_call(
        kern,
        out_shape=(jax.ShapeDtypeStruct((B, Nobj, Nkv), jnp.bfloat16),
                   jax.ShapeDtypeStruct((B, Nkv, Nobj), jnp.bfloat16)),
        grid=(B,),
        in_specs=[_per_batch_spec((Nobj, D)), _per_batch_spec((Nkv, D)),
                  _bspec(mask_net["w"].shape), _bspec(mask_net["b"].shape)],
        out_specs=(_per_batch_spec((Nobj, Nkv)), _per_batch_spec((Nkv, Nobj))),
        compiler_params=_cparams(("parallel",)),
    )(q, x, mask_net["w"], mask_net["b"])


def q_path_call(q, kv, bias, ca, sa, dn, num_heads):
    B, Nobj, D = q.shape
    Nkv = kv.shape[1]
    kern = functools.partial(_q_path_kernel, num_heads=num_heads)
    return pl.pallas_call(
        kern,
        out_shape=jax.ShapeDtypeStruct((B, Nobj, D), jnp.float32),
        grid=(B,),
        in_specs=[
            _per_batch_spec((Nobj, D)), _per_batch_spec((Nkv, D)),
            _per_batch_spec((Nobj, Nkv)),
            _bspec(ca["ln"].shape), _bspec(ca["w"].shape), _bspec(ca["b"].shape),
            _bspec(sa["ln"].shape), _bspec(sa["w"].shape), _bspec(sa["b"].shape),
            _bspec(dn["ln"].shape), _bspec(dn["w1"].shape), _bspec(dn["b1"].shape),
            _bspec(dn["w2"].shape), _bspec(dn["b2"].shape),
        ],
        out_specs=_per_batch_spec((Nobj, D)),
        compiler_params=_cparams(("parallel",)),
    )(q, kv, bias, ca["ln"], ca["w"], ca["b"], sa["ln"], sa["w"], sa["b"],
      dn["ln"], dn["w1"], dn["b1"], dn["w2"], dn["b2"])


def kv_path_call(kv, q, bias_t, ca, dn, num_heads):
    B, Nkv, D = kv.shape
    Nobj = q.shape[1]
    TKV = _row_tile(Nkv)
    NT = Nkv // TKV
    kern = functools.partial(_kv_path_kernel, num_heads=num_heads)
    kv_spec = pl.BlockSpec((1, TKV, D), lambda b, t: (b, t, 0))
    bt_spec = pl.BlockSpec((1, TKV, Nobj), lambda b, t: (b, t, 0))
    q_spec = pl.BlockSpec((1, Nobj, D), lambda b, t: (b, 0, 0))
    return pl.pallas_call(
        kern,
        out_shape=jax.ShapeDtypeStruct((B, Nkv, D), jnp.float32),
        grid=(B, NT),
        in_specs=[kv_spec, q_spec, bt_spec,
                  _bspec(ca["ln"].shape), _bspec(ca["w"].shape), _bspec(ca["b"].shape),
                  _bspec(dn["ln"].shape), _bspec(dn["w1"].shape), _bspec(dn["b1"].shape),
                  _bspec(dn["w2"].shape), _bspec(dn["b2"].shape)],
        out_specs=kv_spec,
        compiler_params=_cparams(("parallel", "parallel")),
    )(kv, q, bias_t, ca["ln"], ca["w"], ca["b"],
      dn["ln"], dn["w1"], dn["b1"], dn["w2"], dn["b2"])


def final_pred_call(q, x, mask_net, class_net):
    B, Nobj, D = q.shape
    Nkv = x.shape[1]
    C = class_net["w"].shape[1]
    return pl.pallas_call(
        _final_pred_kernel,
        out_shape=(jax.ShapeDtypeStruct((B, Nobj, Nkv), jnp.float32),
                   jax.ShapeDtypeStruct((B, Nobj, C), jnp.float32)),
        grid=(B,),
        in_specs=[_per_batch_spec((Nobj, D)), _per_batch_spec((Nkv, D)),
                  _bspec(mask_net["w"].shape), _bspec(mask_net["b"].shape),
                  _bspec(class_net["w"].shape), _bspec(class_net["b"].shape)],
        out_specs=(_per_batch_spec((Nobj, Nkv)), _per_batch_spec((Nobj, C))),
        compiler_params=_cparams(("parallel",)),
    )(q, x, mask_net["w"], mask_net["b"], class_net["w"], class_net["b"])


# --------------------------------------------------------------------------- #
# Decoder forward (glue)
# --------------------------------------------------------------------------- #
def maskformer_decoder_forward(x, params, *, num_heads, mask_threshold):
    B, Nkv, D = x.shape
    Nobj = params["initial_q"].shape[0]
    q = jnp.broadcast_to(params["initial_q"][None], (B, Nobj, D)).astype(jnp.float32)

    # TODO(synk): intermediate_loss=False path only (no intermediate_outputs bookkeeping).
    for lp in params["layers"]:
        bias, bias_t = mask_bias_call(q, x, params["mask_net"], mask_threshold)
        q = q_path_call(q, x, bias, lp["q_ca"], lp["q_sa"], lp["q_dense"], num_heads)
        x = kv_path_call(x, q, bias_t, lp["kv_ca"], lp["kv_dense"], num_heads)

    mask_logits, class_logits = final_pred_call(q, x, params["mask_net"], params["class_net"])
    if class_logits.shape[-1] == 1:
        p = jax.nn.sigmoid(class_logits)
        class_probs = jnp.concatenate([1.0 - p, p], axis=-1)
    else:
        class_probs = jax.nn.softmax(class_logits, axis=-1)

    return {"q": q, "x": x, "class_logits": class_logits,
            "class_probs": class_probs, "mask_logits": mask_logits}


# --------------------------------------------------------------------------- #
# Deterministic synthetic parameters (weights in bf16, biases / LN in f32)
# --------------------------------------------------------------------------- #
def init_params(key, dim, num_layers, num_objects, num_heads, dense_hidden, num_classes):
    keys = [key]

    def nxt():
        keys[0], sub = jax.random.split(keys[0])
        return sub

    def w(shape, fan_in):
        return (jax.random.normal(nxt(), shape, jnp.float32)
                / jnp.sqrt(float(fan_in))).astype(jnp.bfloat16)

    def ln():
        return jnp.concatenate([jnp.ones((1, dim), jnp.float32),
                                jnp.zeros((1, dim), jnp.float32)], axis=0)  # (2, dim)

    def attn_params():
        return {"ln": ln(),
                "w": w((4, dim, dim), dim),                 # [wq, wk, wv, wo] head-fused
                "b": jnp.zeros((4, dim), jnp.float32)}

    def dense_params():
        return {"ln": ln(),
                "w1": w((dim, dense_hidden), dim),
                "b1": jnp.zeros((1, dense_hidden), jnp.float32),
                "w2": w((dense_hidden, dim), dense_hidden),
                "b2": jnp.zeros((1, dim), jnp.float32)}

    layers = [{"q_ca": attn_params(), "q_sa": attn_params(), "q_dense": dense_params(),
               "kv_ca": attn_params(), "kv_dense": dense_params()}
              for _ in range(num_layers)]

    return {
        "initial_q": jax.random.normal(nxt(), (num_objects, dim), jnp.float32),
        "mask_net": {"w": w((dim, dim), dim), "b": jnp.zeros((1, dim), jnp.float32)},
        "class_net": {"w": w((dim, num_classes), dim),
                      "b": jnp.zeros((1, num_classes), jnp.float32)},
        "layers": layers,
    }


# --------------------------------------------------------------------------- #
if __name__ == "__main__":
    B, N_KV, DIM = 2, 16, 32
    N_OBJ, NUM_LAYERS, NUM_HEADS = 8, 2, 2
    MASK_THRESHOLD = 0.1

    key = jax.random.PRNGKey(0)
    kx, kp = jax.random.split(key)
    x = jax.random.normal(kx, (B, N_KV, DIM), jnp.float32)
    params = init_params(kp, DIM, NUM_LAYERS, N_OBJ, NUM_HEADS,
                         dense_hidden=2 * DIM, num_classes=1)

    fwd = jax.jit(functools.partial(maskformer_decoder_forward,
                                    num_heads=NUM_HEADS, mask_threshold=MASK_THRESHOLD))
    preds = fwd(x, params)
    jax.block_until_ready(preds)

    # light sanity checks
    assert preds["q"].shape == (B, N_OBJ, DIM)
    assert preds["x"].shape == (B, N_KV, DIM)
    assert preds["mask_logits"].shape == (B, N_OBJ, N_KV)
    assert preds["class_logits"].shape == (B, N_OBJ, 1)
    assert preds["class_probs"].shape == (B, N_OBJ, 2)
    assert bool(jnp.all(jnp.isfinite(preds["q"])))
    assert bool(jnp.all(jnp.isfinite(preds["x"])))
    print("KERNEL_OK")
</pallas_src>

<mosaic_0001>
module attributes {stable_mosaic.version = 11 : i64} {
  func.func @_mask_bias_kernel(%arg0: i32, %arg1: memref<1x8x32xf32, #tpu.memory_space<vmem>>, %arg2: memref<1x16x32xf32, #tpu.memory_space<vmem>>, %arg3: memref<32x32xbf16, #tpu.memory_space<vmem>>, %arg4: memref<1x32xf32, #tpu.memory_space<vmem>>, %arg5: memref<1x8x16xbf16, #tpu.memory_space<vmem>>, %arg6: memref<1x16x8xbf16, #tpu.memory_space<vmem>>) attributes {dimension_semantics = [#tpu.dimension_semantics<parallel>], iteration_bounds = array<i64: 2>, scalar_prefetch = 0 : i64, scratch_operands = 0 : i64, tpu.core_type = #tpu.core_type<tc>, window_params = [{transform_indices = @transform_0, window_bounds = array<i64: 1, 8, 32>}, {transform_indices = @transform_1, window_bounds = array<i64: 1, 16, 32>}, {pipeline_mode = #tpu.pipeline_mode<synchronous>, transform_indices = @transform_2, window_bounds = array<i64: 32, 32>}, {pipeline_mode = #tpu.pipeline_mode<synchronous>, transform_indices = @transform_3, window_bounds = array<i64: 1, 32>}, {transform_indices = @transform_4, window_bounds = array<i64: 1, 8, 16>}, {transform_indices = @transform_5, window_bounds = array<i64: 1, 16, 8>}]} {
    %c0 = arith.constant 0 : index
    %c0_0 = arith.constant 0 : index
    %c0_1 = arith.constant 0 : index
    %0 = vector.load %arg1[%c0, %c0_0, %c0_1] : memref<1x8x32xf32, #tpu.memory_space<vmem>>, vector<1x8x32xf32>
    %1 = vector.shape_cast %0 : vector<1x8x32xf32> to vector<8x32xf32>
    %c0_2 = arith.constant 0 : index
    %c0_3 = arith.constant 0 : index
    %c0_4 = arith.constant 0 : index
    %2 = vector.load %arg2[%c0_2, %c0_3, %c0_4] : memref<1x16x32xf32, #tpu.memory_space<vmem>>, vector<1x16x32xf32>
    %3 = vector.shape_cast %2 : vector<1x16x32xf32> to vector<16x32xf32>
    %4 = arith.truncf %1 : vector<8x32xf32> to vector<8x32xbf16>
    %c0_5 = arith.constant 0 : index
    %c0_6 = arith.constant 0 : index
    %5 = vector.load %arg3[%c0_5, %c0_6] : memref<32x32xbf16, #tpu.memory_space<vmem>>, vector<32x32xbf16>
    %cst = arith.constant dense<0.000000e+00> : vector<8x32xf32>
    %6 = tpu.matmul %4, %5, %cst {dimension_numbers = #tpu.dot_dimension_numbers<[1], [0], [0], [1], [0, 0, 1, 1], [], []>} : vector<8x32xbf16>, vector<32x32xbf16>, vector<8x32xf32> -> vector<8x32xf32>
    %c0_7 = arith.constant 0 : index
    %c0_8 = arith.constant 0 : index
    %7 = vector.load %arg4[%c0_7, %c0_8] : memref<1x32xf32, #tpu.memory_space<vmem>>, vector<1x32xf32>
    %8 = vector.broadcast %7 : vector<1x32xf32> to vector<8x32xf32>
    %9 = arith.addf %6, %8 : vector<8x32xf32>
    %10 = arith.truncf %9 : vector<8x32xf32> to vector<8x32xbf16>
    %11 = arith.truncf %3 : vector<16x32xf32> to vector<16x32xbf16>
    %cst_9 = arith.constant dense<0.000000e+00> : vector<8x16xf32>
    %12 = tpu.matmul %10, %11, %cst_9 {dimension_numbers = #tpu.dot_dimension_numbers<[1], [1], [0], [0], [0, 0, 1, 0], [], []>} : vector<8x32xbf16>, vector<16x32xbf16>, vector<8x16xf32> -> vector<8x16xf32>
    %13 = arith.negf %12 : vector<8x16xf32>
    %14 = math.exp %13 : vector<8x16xf32>
    %cst_10 = arith.constant 1.000000e+00 : f32
    %15 = vector.broadcast %cst_10 : f32 to vector<8x16xf32>
    %16 = arith.addf %15, %14 : vector<8x16xf32>
    %17 = arith.divf %15, %16 : vector<8x16xf32>
    %cst_11 = arith.constant 1.000000e-01 : f32
    %18 = vector.broadcast %cst_11 : f32 to vector<8x16xf32>
    %19 = arith.cmpf olt, %17, %18 : vector<8x16xf32>
    %20 = arith.extui %19 : vector<8x16xi1> to vector<8x16xi32>
    %21 = arith.sitofp %20 : vector<8x16xi32> to vector<8x16xf32>
    %cst_12 = arith.constant dense<0.000000e+00> : vector<8xf32>
    %22 = vector.multi_reduction <add>, %21, %cst_12 [1] : vector<8x16xf32> to vector<8xf32>
    %23 = vector.shape_cast %22 : vector<8xf32> to vector<8x1xf32>
    %cst_13 = arith.constant 1.550000e+01 : f32
    %24 = vector.broadcast %cst_13 : f32 to vector<8x1xf32>
    %25 = arith.cmpf oge, %23, %24 : vector<8x1xf32>
    %cst_14 = arith.constant dense<true> : vector<8x1xi1>
    %26 = arith.xori %25, %cst_14 : vector<8x1xi1>
    %27 = vector.broadcast %26 : vector<8x1xi1> to vector<8x16xi1>
    %28 = arith.andi %19, %27 : vector<8x16xi1>
    %cst_15 = arith.constant -1.000000e+30 : f32
    %cst_16 = arith.constant 0.000000e+00 : f32
    %29 = vector.broadcast %cst_15 : f32 to vector<8x16xf32>
    %30 = vector.broadcast %cst_16 : f32 to vector<8x16xf32>
    %31 = arith.select %28, %29, %30 : vector<8x16xi1>, vector<8x16xf32>
    %32 = arith.truncf %31 : vector<8x16xf32> to vector<8x16xbf16>
    %c0_17 = arith.constant 0 : index
    %c0_18 = arith.constant 0 : index
    %c0_19 = arith.constant 0 : index
    %33 = vector.load %arg5[%c0_17, %c0_18, %c0_19] : memref<1x8x16xbf16, #tpu.memory_space<vmem>>, vector<1x8x16xbf16>
    %34 = vector.shape_cast %33 : vector<1x8x16xbf16> to vector<8x16xbf16>
    %35 = vector.shape_cast %32 : vector<8x16xbf16> to vector<1x8x16xbf16>
    tpu.vector_store %arg5[%c0_17, %c0_18, %c0_19], %35 {strides = array<i32>} : memref<1x8x16xbf16, #tpu.memory_space<vmem>>, vector<1x8x16xbf16>,
    %36 = tpu.transpose %31, [1, 0] : vector<8x16xf32> -> vector<16x8xf32>
    %37 = arith.truncf %36 : vector<16x8xf32> to vector<16x8xbf16>
    %c0_20 = arith.constant 0 : index
    %c0_21 = arith.constant 0 : index
    %c0_22 = arith.constant 0 : index
    %38 = vector.load %arg6[%c0_20, %c0_21, %c0_22] : memref<1x16x8xbf16, #tpu.memory_space<vmem>>, vector<1x16x8xbf16>
    %39 = vector.shape_cast %38 : vector<1x16x8xbf16> to vector<16x8xbf16>
    %40 = vector.shape_cast %37 : vector<16x8xbf16> to vector<1x16x8xbf16>
    tpu.vector_store %arg6[%c0_20, %c0_21, %c0_22], %40 {strides = array<i32>} : memref<1x16x8xbf16, #tpu.memory_space<vmem>>, vector<1x16x8xbf16>,
    return
  }
  func.func @transform_0(%arg0: i32) -> (i32, i32, i32) {
    %c0_i32 = arith.constant 0 : i32
    %c0_i32_0 = arith.constant 0 : i32
    %c0_i32_1 = arith.constant 0 : i32
    return %arg0, %c0_i32, %c0_i32_0 : i32, i32, i32
  }
  func.func @transform_1(%arg0: i32) -> (i32, i32, i32) {
    %c0_i32 = arith.constant 0 : i32
    %c0_i32_0 = arith.constant 0 : i32
    %c0_i32_1 = arith.constant 0 : i32
    return %arg0, %c0_i32, %c0_i32_0 : i32, i32, i32
  }
  func.func @transform_2(%arg0: i32) -> (i32, i32) {
    %c0_i32 = arith.constant 0 : i32
    %c0_i32_0 = arith.constant 0 : i32
    %c0_i32_1 = arith.constant 0 : i32
    return %c0_i32, %c0_i32_0 : i32, i32
  }
  func.func @transform_3(%arg0: i32) -> (i32, i32) {
    %c0_i32 = arith.constant 0 : i32
    %c0_i32_0 = arith.constant 0 : i32
    %c0_i32_1 = arith.constant 0 : i32
    return %c0_i32, %c0_i32_0 : i32, i32
  }
  func.func @transform_4(%arg0: i32) -> (i32, i32, i32) {
    %c0_i32 = arith.constant 0 : i32
    %c0_i32_0 = arith.constant 0 : i32
    %c0_i32_1 = arith.constant 0 : i32
    return %arg0, %c0_i32, %c0_i32_0 : i32, i32, i32
  }
  func.func @transform_5(%arg0: i32) -> (i32, i32, i32) {
    %c0_i32 = arith.constant 0 : i32
    %c0_i32_0 = arith.constant 0 : i32
    %c0_i32_1 = arith.constant 0 : i32
    return %arg0, %c0_i32, %c0_i32_0 : i32, i32, i32
  }
}

module attributes {stable_mosaic.version = 11 : i64} {
  func.func @_mask_bias_kernel(%arg0: i32, %arg1: memref<1x8x32xf32, #tpu.memory_space<vmem>>, %arg2: memref<1x16x32xf32, #tpu.memory_space<vmem>>, %arg3: memref<32x32xbf16, #tpu.memory_space<vmem>>, %arg4: memref<1x32xf32, #tpu.memory_space<vmem>>, %arg5: memref<1x8x16xbf16, #tpu.memory_space<vmem>>, %arg6: memref<1x16x8xbf16, #tpu.memory_space<vmem>>) attributes {dimension_semantics = [#tpu.dimension_semantics<parallel>], iteration_bounds = array<i64: 2>, scalar_prefetch = 0 : i64, scratch_operands = 0 : i64, tpu.core_type = #tpu.core_type<tc>, window_params = [{transform_indices = @transform_0, window_bounds = array<i64: 1, 8, 32>}, {transform_indices = @transform_1, window_bounds = array<i64: 1, 16, 32>}, {pipeline_mode = #tpu.pipeline_mode<synchronous>, transform_indices = @transform_2, window_bounds = array<i64: 32, 32>}, {pipeline_mode = #tpu.pipeline_mode<synchronous>, transform_indices = @transform_3, window_bounds = array<i64: 1, 32>}, {transform_indices = @transform_4, window_bounds = array<i64: 1, 8, 16>}, {transform_indices = @transform_5, window_bounds = array<i64: 1, 16, 8>}]} {
    %c0 = arith.constant 0 : index
    %c0_0 = arith.constant 0 : index
    %c0_1 = arith.constant 0 : index
    %0 = vector.load %arg1[%c0, %c0_0, %c0_1] : memref<1x8x32xf32, #tpu.memory_space<vmem>>, vector<1x8x32xf32>
    %1 = vector.shape_cast %0 : vector<1x8x32xf32> to vector<8x32xf32>
    %c0_2 = arith.constant 0 : index
    %c0_3 = arith.constant 0 : index
    %c0_4 = arith.constant 0 : index
    %2 = vector.load %arg2[%c0_2, %c0_3, %c0_4] : memref<1x16x32xf32, #tpu.memory_space<vmem>>, vector<1x16x32xf32>
    %3 = vector.shape_cast %2 : vector<1x16x32xf32> to vector<16x32xf32>
    %4 = arith.truncf %1 : vector<8x32xf32> to vector<8x32xbf16>
    %c0_5 = arith.constant 0 : index
    %c0_6 = arith.constant 0 : index
    %5 = vector.load %arg3[%c0_5, %c0_6] : memref<32x32xbf16, #tpu.memory_space<vmem>>, vector<32x32xbf16>
    %cst = arith.constant dense<0.000000e+00> : vector<8x32xf32>
    %6 = tpu.matmul %4, %5, %cst {dimension_numbers = #tpu.dot_dimension_numbers<[1], [0], [0], [1], [0, 0, 1, 1], [], []>} : vector<8x32xbf16>, vector<32x32xbf16>, vector<8x32xf32> -> vector<8x32xf32>
    %c0_7 = arith.constant 0 : index
    %c0_8 = arith.constant 0 : index
    %7 = vector.load %arg4[%c0_7, %c0_8] : memref<1x32xf32, #tpu.memory_space<vmem>>, vector<1x32xf32>
    %8 = vector.broadcast %7 : vector<1x32xf32> to vector<8x32xf32>
    %9 = arith.addf %6, %8 : vector<8x32xf32>
    %10 = arith.truncf %9 : vector<8x32xf32> to vector<8x32xbf16>
    %11 = arith.truncf %3 : vector<16x32xf32> to vector<16x32xbf16>
    %cst_9 = arith.constant dense<0.000000e+00> : vector<8x16xf32>
    %12 = tpu.matmul %10, %11, %cst_9 {dimension_numbers = #tpu.dot_dimension_numbers<[1], [1], [0], [0], [0, 0, 1, 0], [], []>} : vector<8x32xbf16>, vector<16x32xbf16>, vector<8x16xf32> -> vector<8x16xf32>
    %13 = arith.negf %12 : vector<8x16xf32>
    %14 = math.exp %13 : vector<8x16xf32>
    %cst_10 = arith.constant 1.000000e+00 : f32
    %15 = vector.broadcast %cst_10 : f32 to vector<8x16xf32>
    %16 = arith.addf %15, %14 : vector<8x16xf32>
    %17 = arith.divf %15, %16 : vector<8x16xf32>
    %cst_11 = arith.constant 1.000000e-01 : f32
    %18 = vector.broadcast %cst_11 : f32 to vector<8x16xf32>
    %19 = arith.cmpf olt, %17, %18 : vector<8x16xf32>
    %20 = arith.extui %19 : vector<8x16xi1> to vector<8x16xi32>
    %21 = arith.sitofp %20 : vector<8x16xi32> to vector<8x16xf32>
    %cst_12 = arith.constant dense<0.000000e+00> : vector<8xf32>
    %22 = vector.multi_reduction <add>, %21, %cst_12 [1] : vector<8x16xf32> to vector<8xf32>
    %23 = vector.shape_cast %22 : vector<8xf32> to vector<8x1xf32>
    %cst_13 = arith.constant 1.550000e+01 : f32
    %24 = vector.broadcast %cst_13 : f32 to vector<8x1xf32>
    %25 = arith.cmpf oge, %23, %24 : vector<8x1xf32>
    %cst_14 = arith.constant dense<true> : vector<8x1xi1>
    %26 = arith.xori %25, %cst_14 : vector<8x1xi1>
    %27 = vector.broadcast %26 : vector<8x1xi1> to vector<8x16xi1>
    %28 = arith.andi %19, %27 : vector<8x16xi1>
    %cst_15 = arith.constant -1.000000e+30 : f32
    %cst_16 = arith.constant 0.000000e+00 : f32
    %29 = vector.broadcast %cst_15 : f32 to vector<8x16xf32>
    %30 = vector.broadcast %cst_16 : f32 to vector<8x16xf32>
    %31 = arith.select %28, %29, %30 : vector<8x16xi1>, vector<8x16xf32>
    %32 = arith.truncf %31 : vector<8x16xf32> to vector<8x16xbf16>
    %c0_17 = arith.constant 0 : index
    %c0_18 = arith.constant 0 : index
    %c0_19 = arith.constant 0 : index
    %33 = vector.load %arg5[%c0_17, %c0_18, %c0_19] : memref<1x8x16xbf16, #tpu.memory_space<vmem>>, vector<1x8x16xbf16>
    %34 = vector.shape_cast %33 : vector<1x8x16xbf16> to vector<8x16xbf16>
    %35 = vector.shape_cast %32 : vector<8x16xbf16> to vector<1x8x16xbf16>
    tpu.vector_store %arg5[%c0_17, %c0_18, %c0_19], %35 {strides = array<i32>} : memref<1x8x16xbf16, #tpu.memory_space<vmem>>, vector<1x8x16xbf16>,
    %36 = tpu.transpose %31, [1, 0] : vector<8x16xf32> -> vector<16x8xf32>
    %37 = arith.truncf %36 : vector<16x8xf32> to vector<16x8xbf16>
    %c0_20 = arith.constant 0 : index
    %c0_21 = arith.constant 0 : index
    %c0_22 = arith.constant 0 : index
    %38 = vector.load %arg6[%c0_20, %c0_21, %c0_22] : memref<1x16x8xbf16, #tpu.memory_space<vmem>>, vector<1x16x8xbf16>
    %39 = vector.shape_cast %38 : vector<1x16x8xbf16> to vector<16x8xbf16>
    %40 = vector.shape_cast %37 : vector<16x8xbf16> to vector<1x16x8xbf16>
    tpu.vector_store %arg6[%c0_20, %c0_21, %c0_22], %40 {strides = array<i32>} : memref<1x16x8xbf16, #tpu.memory_space<vmem>>, vector<1x16x8xbf16>,
    return
  }
  func.func @transform_0(%arg0: i32) -> (i32, i32, i32) {
    %c0_i32 = arith.constant 0 : i32
    %c0_i32_0 = arith.constant 0 : i32
    %c0_i32_1 = arith.constant 0 : i32
    return %arg0, %c0_i32, %c0_i32_0 : i32, i32, i32
  }
  func.func @transform_1(%arg0: i32) -> (i32, i32, i32) {
    %c0_i32 = arith.constant 0 : i32
    %c0_i32_0 = arith.constant 0 : i32
    %c0_i32_1 = arith.constant 0 : i32
    return %arg0, %c0_i32, %c0_i32_0 : i32, i32, i32
  }
  func.func @transform_2(%arg0: i32) -> (i32, i32) {
    %c0_i32 = arith.constant 0 : i32
    %c0_i32_0 = arith.constant 0 : i32
    %c0_i32_1 = arith.constant 0 : i32
    return %c0_i32, %c0_i32_0 : i32, i32
  }
  func.func @transform_3(%arg0: i32) -> (i32, i32) {
    %c0_i32 = arith.constant 0 : i32
    %c0_i32_0 = arith.constant 0 : i32
    %c0_i32_1 = arith.constant 0 : i32
    return %c0_i32, %c0_i32_0 : i32, i32
  }
  func.func @transform_4(%arg0: i32) -> (i32, i32, i32) {
    %c0_i32 = arith.constant 0 : i32
    %c0_i32_0 = arith.constant 0 : i32
    %c0_i32_1 = arith.constant 0 : i32
    return %arg0, %c0_i32, %c0_i32_0 : i32, i32, i32
  }
  func.func @transform_5(%arg0: i32) -> (i32, i32, i32) {
    %c0_i32 = arith.constant 0 : i32
    %c0_i32_0 = arith.constant 0 : i32
    %c0_i32_1 = arith.constant 0 : i32
    return %arg0, %c0_i32, %c0_i32_0 : i32, i32, i32
  }
}

module attributes {stable_mosaic.version = 11 : i64} {
  func.func @_q_path_kernel(%arg0: i32, %arg1: memref<1x8x32xf32, #tpu.memory_space<vmem>>, %arg2: memref<1x16x32xf32, #tpu.memory_space<vmem>>, %arg3: memref<1x8x16xbf16, #tpu.memory_space<vmem>>, %arg4: memref<2x32xf32, #tpu.memory_space<vmem>>, %arg5: memref<4x32x32xbf16, #tpu.memory_space<vmem>>, %arg6: memref<4x32xf32, #tpu.memory_space<vmem>>, %arg7: memref<2x32xf32, #tpu.memory_space<vmem>>, %arg8: memref<4x32x32xbf16, #tpu.memory_space<vmem>>, %arg9: memref<4x32xf32, #tpu.memory_space<vmem>>, %arg10: memref<2x32xf32, #tpu.memory_space<vmem>>, %arg11: memref<32x64xbf16, #tpu.memory_space<vmem>>, %arg12: memref<1x64xf32, #tpu.memory_space<vmem>>, %arg13: memref<64x32xbf16, #tpu.memory_space<vmem>>, %arg14: memref<1x32xf32, #tpu.memory_space<vmem>>, %arg15: memref<1x8x32xf32, #tpu.memory_space<vmem>>) attributes {dimension_semantics = [#tpu.dimension_semantics<parallel>], iteration_bounds = array<i64: 2>, scalar_prefetch = 0 : i64, scratch_operands = 0 : i64, tpu.core_type = #tpu.core_type<tc>, window_params = [{transform_indices = @transform_0, window_bounds = array<i64: 1, 8, 32>}, {transform_indices = @transform_1, window_bounds = array<i64: 1, 16, 32>}, {transform_indices = @transform_2, window_bounds = array<i64: 1, 8, 16>}, {pipeline_mode = #tpu.pipeline_mode<synchronous>, transform_indices = @transform_3, window_bounds = array<i64: 2, 32>}, {pipeline_mode = #tpu.pipeline_mode<synchronous>, transform_indices = @transform_4, window_bounds = array<i64: 4, 32, 32>}, {pipeline_mode = #tpu.pipeline_mode<synchronous>, transform_indices = @transform_5, window_bounds = array<i64: 4, 32>}, {pipeline_mode = #tpu.pipeline_mode<synchronous>, transform_indices = @transform_6, window_bounds = array<i64: 2, 32>}, {pipeline_mode = #tpu.pipeline_mode<synchronous>, transform_indices = @transform_7, window_bounds = array<i64: 4, 32, 32>}, {pipeline_mode = #tpu.pipeline_mode<synchronous>, transform_indices = @transform_8, window_bounds = array<i64: 4, 32>}, {pipeline_mode = #tpu.pipeline_mode<synchronous>, transform_indices = @transform_9, window_bounds = array<i64: 2, 32>}, {pipeline_mode = #tpu.pipeline_mode<synchronous>, transform_indices = @transform_10, window_bounds = array<i64: 32, 64>}, {pipeline_mode = #tpu.pipeline_mode<synchronous>, transform_indices = @transform_11, window_bounds = array<i64: 1, 64>}, {pipeline_mode = #tpu.pipeline_mode<synchronous>, transform_indices = @transform_12, window_bounds = array<i64: 64, 32>}, {pipeline_mode = #tpu.pipeline_mode<synchronous>, transform_indices = @transform_13, window_bounds = array<i64: 1, 32>}, {transform_indices = @transform_14, window_bounds = array<i64: 1, 8, 32>}]} {
    %c0 = arith.constant 0 : index
    %c0_0 = arith.constant 0 : index
    %c0_1 = arith.constant 0 : index
    %0 = vector.load %arg1[%c0, %c0_0, %c0_1] : memref<1x8x32xf32, #tpu.memory_space<vmem>>, vector<1x8x32xf32>
    %1 = vector.shape_cast %0 : vector<1x8x32xf32> to vector<8x32xf32>
    %c0_2 = arith.constant 0 : index
    %c0_3 = arith.constant 0 : index
    %c0_4 = arith.constant 0 : index
    %2 = vector.load %arg2[%c0_2, %c0_3, %c0_4] : memref<1x16x32xf32, #tpu.memory_space<vmem>>, vector<1x16x32xf32>
    %3 = vector.shape_cast %2 : vector<1x16x32xf32> to vector<16x32xf32>
    %c0_5 = arith.constant 0 : index
    %c0_6 = arith.constant 0 : index
    %c0_7 = arith.constant 0 : index
    %4 = vector.load %arg3[%c0_5, %c0_6, %c0_7] : memref<1x8x16xbf16, #tpu.memory_space<vmem>>, vector<1x8x16xbf16>
    %5 = vector.shape_cast %4 : vector<1x8x16xbf16> to vector<8x16xbf16>
    %c0_8 = arith.constant 0 : index
    %c0_9 = arith.constant 0 : index
    %6 = vector.load %arg4[%c0_8, %c0_9] : memref<2x32xf32, #tpu.memory_space<vmem>>, vector<2x32xf32>
    %c0_10 = arith.constant 0 : index
    %c0_11 = arith.constant 0 : index
    %c0_12 = arith.constant 0 : index
    %7 = vector.load %arg5[%c0_10, %c0_11, %c0_12] : memref<4x32x32xbf16, #tpu.memory_space<vmem>>, vector<4x32x32xbf16>
    %c0_13 = arith.constant 0 : index
    %c0_14 = arith.constant 0 : index
    %8 = vector.load %arg6[%c0_13, %c0_14] : memref<4x32xf32, #tpu.memory_space<vmem>>, vector<4x32xf32>
    %9 = vector.extract_strided_slice %6 {offsets = [0, 0], sizes = [1, 32], strides = [1, 1]} : vector<2x32xf32> to vector<1x32xf32>
    %10 = vector.extract_strided_slice %6 {offsets = [1, 0], sizes = [1, 32], strides = [1, 1]} : vector<2x32xf32> to vector<1x32xf32>
    %cst = arith.constant dense<0.000000e+00> : vector<8xf32>
    %11 = vector.multi_reduction <add>, %1, %cst [1] : vector<8x32xf32> to vector<8xf32>
    %12 = vector.shape_cast %11 : vector<8xf32> to vector<8x1xf32>
    %cst_15 = arith.constant 3.200000e+01 : f32
    %13 = vector.broadcast %cst_15 : f32 to vector<8x1xf32>
    %14 = arith.divf %12, %13 : vector<8x1xf32>
    %15 = vector.broadcast %14 : vector<8x1xf32> to vector<8x32xf32>
    %16 = arith.subf %1, %15 : vector<8x32xf32>
    %17 = arith.mulf %16, %16 : vector<8x32xf32>
    %cst_16 = arith.constant dense<0.000000e+00> : vector<8xf32>
    %18 = vector.multi_reduction <add>, %17, %cst_16 [1] : vector<8x32xf32> to vector<8xf32>
    %19 = vector.shape_cast %18 : vector<8xf32> to vector<8x1xf32>
    %cst_17 = arith.constant 3.200000e+01 : f32
    %20 = vector.broadcast %cst_17 : f32 to vector<8x1xf32>
    %21 = arith.divf %19, %20 : vector<8x1xf32>
    %22 = vector.broadcast %14 : vector<8x1xf32> to vector<8x32xf32>
    %23 = arith.subf %1, %22 : vector<8x32xf32>
    %cst_18 = arith.constant 9.99999974E-6 : f32
    %24 = vector.broadcast %cst_18 : f32 to vector<8x1xf32>
    %25 = arith.addf %21, %24 : vector<8x1xf32>
    %26 = math.rsqrt %25 : vector<8x1xf32>
    %27 = vector.broadcast %26 : vector<8x1xf32> to vector<8x32xf32>
    %28 = arith.mulf %23, %27 : vector<8x32xf32>
    %29 = vector.broadcast %9 : vector<1x32xf32> to vector<8x32xf32>
    %30 = arith.mulf %28, %29 : vector<8x32xf32>
    %31 = vector.broadcast %10 : vector<1x32xf32> to vector<8x32xf32>
    %32 = arith.addf %30, %31 : vector<8x32xf32>
    %33 = arith.truncf %32 : vector<8x32xf32> to vector<8x32xbf16>
    %34 = arith.truncf %3 : vector<16x32xf32> to vector<16x32xbf16>
    %35 = vector.extract_strided_slice %7 {offsets = [0, 0, 0], sizes = [1, 32, 32], strides = [1, 1, 1]} : vector<4x32x32xbf16> to vector<1x32x32xbf16>
    %36 = vector.shape_cast %35 : vector<1x32x32xbf16> to vector<32x32xbf16>
    %cst_19 = arith.constant dense<0.000000e+00> : vector<8x32xf32>
    %37 = tpu.matmul %33, %36, %cst_19 {dimension_numbers = #tpu.dot_dimension_numbers<[1], [0], [0], [1], [0, 0, 1, 1], [], []>} : vector<8x32xbf16>, vector<32x32xbf16>, vector<8x32xf32> -> vector<8x32xf32>
    %38 = vector.extract_strided_slice %8 {offsets = [0, 0], sizes = [1, 32], strides = [1, 1]} : vector<4x32xf32> to vector<1x32xf32>
    %39 = vector.broadcast %38 : vector<1x32xf32> to vector<8x32xf32>
    %40 = arith.addf %37, %39 : vector<8x32xf32>
    %41 = vector.extract_strided_slice %7 {offsets = [1, 0, 0], sizes = [1, 32, 32], strides = [1, 1, 1]} : vector<4x32x32xbf16> to vector<1x32x32xbf16>
    %42 = vector.shape_cast %41 : vector<1x32x32xbf16> to vector<32x32xbf16>
    %cst_20 = arith.constant dense<0.000000e+00> : vector<16x32xf32>
    %43 = tpu.matmul %34, %42, %cst_20 {dimension_numbers = #tpu.dot_dimension_numbers<[1], [0], [0], [1], [0, 0, 1, 1], [], []>} : vector<16x32xbf16>, vector<32x32xbf16>, vector<16x32xf32> -> vector<16x32xf32>
    %44 = vector.extract_strided_slice %8 {offsets = [1, 0], sizes = [1, 32], strides = [1, 1]} : vector<4x32xf32> to vector<1x32xf32>
    %45 = vector.broadcast %44 : vector<1x32xf32> to vector<16x32xf32>
    %46 = arith.addf %43, %45 : vector<16x32xf32>
    %47 = vector.extract_strided_slice %7 {offsets = [2, 0, 0], sizes = [1, 32, 32], strides = [1, 1, 1]} : vector<4x32x32xbf16> to vector<1x32x32xbf16>
    %48 = vector.shape_cast %47 : vector<1x32x32xbf16> to vector<32x32xbf16>
    %cst_21 = arith.constant dense<0.000000e+00> : vector<16x32xf32>
    %49 = tpu.matmul %34, %48, %cst_21 {dimension_numbers = #tpu.dot_dimension_numbers<[1], [0], [0], [1], [0, 0, 1, 1], [], []>} : vector<16x32xbf16>, vector<32x32xbf16>, vector<16x32xf32> -> vector<16x32xf32>
    %50 = vector.extract_strided_slice %8 {offsets = [2, 0], sizes = [1, 32], strides = [1, 1]} : vector<4x32xf32> to vector<1x32xf32>
    %51 = vector.broadcast %50 : vector<1x32xf32> to vector<16x32xf32>
    %52 = arith.addf %49, %51 : vector<16x32xf32>
    %53 = arith.extf %5 : vector<8x16xbf16> to vector<8x16xf32>
    %54 = vector.extract_strided_slice %40 {offsets = [0, 0], sizes = [8, 16], strides = [1, 1]} : vector<8x32xf32> to vector<8x16xf32>
    %55 = arith.truncf %54 : vector<8x16xf32> to vector<8x16xbf16>
    %56 = vector.extract_strided_slice %46 {offsets = [0, 0], sizes = [16, 16], strides = [1, 1]} : vector<16x32xf32> to vector<16x16xf32>
    %57 = arith.truncf %56 : vector<16x16xf32> to vector<16x16xbf16>
    %58 = vector.extract_strided_slice %52 {offsets = [0, 0], sizes = [16, 16], strides = [1, 1]} : vector<16x32xf32> to vector<16x16xf32>
    %59 = arith.truncf %58 : vector<16x16xf32> to vector<16x16xbf16>
    %cst_22 = arith.constant dense<0.000000e+00> : vector<8x16xf32>
    %60 = tpu.matmul %55, %57, %cst_22 {dimension_numbers = #tpu.dot_dimension_numbers<[1], [1], [0], [0], [0, 0, 1, 0], [], []>} : vector<8x16xbf16>, vector<16x16xbf16>, vector<8x16xf32> -> vector<8x16xf32>
    %cst_23 = arith.constant 2.500000e-01 : f32
    %61 = vector.broadcast %cst_23 : f32 to vector<8x16xf32>
    %62 = arith.mulf %60, %61 : vector<8x16xf32>
    %63 = arith.addf %62, %53 : vector<8x16xf32>
    %cst_24 = arith.constant dense<0xFF800000> : vector<8xf32>
    %64 = vector.multi_reduction <maximumf>, %63, %cst_24 [1] : vector<8x16xf32> to vector<8xf32>
    %65 = vector.shape_cast %64 : vector<8xf32> to vector<8x1xf32>
    %66 = vector.broadcast %65 : vector<8x1xf32> to vector<8x16xf32>
    %67 = arith.subf %63, %66 : vector<8x16xf32>
    %68 = math.exp %67 : vector<8x16xf32>
    %cst_25 = arith.constant dense<0.000000e+00> : vector<8xf32>
    %69 = vector.multi_reduction <add>, %68, %cst_25 [1] : vector<8x16xf32> to vector<8xf32>
    %70 = vector.shape_cast %69 : vector<8xf32> to vector<8x1xf32>
    %71 = tpu.reciprocal %70 {approx = true} : vector<8x1xf32> -> vector<8x1xf32>
    %72 = vector.broadcast %71 : vector<8x1xf32> to vector<8x16xf32>
    %73 = arith.mulf %68, %72 : vector<8x16xf32>
    %74 = arith.truncf %73 : vector<8x16xf32> to vector<8x16xbf16>
    %cst_26 = arith.constant dense<0.000000e+00> : vector<8x16xf32>
    %75 = tpu.matmul %74, %59, %cst_26 {dimension_numbers = #tpu.dot_dimension_numbers<[1], [0], [0], [1], [0, 0, 1, 1], [], []>} : vector<8x16xbf16>, vector<16x16xbf16>, vector<8x16xf32> -> vector<8x16xf32>
    %76 = vector.extract_strided_slice %40 {offsets = [0, 16], sizes = [8, 16], strides = [1, 1]} : vector<8x32xf32> to vector<8x16xf32>
    %77 = arith.truncf %76 : vector<8x16xf32> to vector<8x16xbf16>
    %78 = vector.extract_strided_slice %46 {offsets = [0, 16], sizes = [16, 16], strides = [1, 1]} : vector<16x32xf32> to vector<16x16xf32>
    %79 = arith.truncf %78 : vector<16x16xf32> to vector<16x16xbf16>
    %80 = vector.extract_strided_slice %52 {offsets = [0, 16], sizes = [16, 16], strides = [1, 1]} : vector<16x32xf32> to vector<16x16xf32>
    %81 = arith.truncf %80 : vector<16x16xf32> to vector<16x16xbf16>
    %cst_27 = arith.constant dense<0.000000e+00> : vector<8x16xf32>
    %82 = tpu.matmul %77, %79, %cst_27 {dimension_numbers = #tpu.dot_dimension_numbers<[1], [1], [0], [0], [0, 0, 1, 0], [], []>} : vector<8x16xbf16>, vector<16x16xbf16>, vector<8x16xf32> -> vector<8x16xf32>
    %cst_28 = arith.constant 2.500000e-01 : f32
    %83 = vector.broadcast %cst_28 : f32 to vector<8x16xf32>
    %84 = arith.mulf %82, %83 : vector<8x16xf32>
    %85 = arith.addf %84, %53 : vector<8x16xf32>
    %cst_29 = arith.constant dense<0xFF800000> : vector<8xf32>
    %86 = vector.multi_reduction <maximumf>, %85, %cst_29 [1] : vector<8x16xf32> to vector<8xf32>
    %87 = vector.shape_cast %86 : vector<8xf32> to vector<8x1xf32>
    %88 = vector.broadcast %87 : vector<8x1xf32> to vector<8x16xf32>
    %89 = arith.subf %85, %88 : vector<8x16xf32>
    %90 = math.exp %89 : vector<8x16xf32>
    %cst_30 = arith.constant dense<0.000000e+00> : vector<8xf32>
    %91 = vector.multi_reduction <add>, %90, %cst_30 [1] : vector<8x16xf32> to vector<8xf32>
    %92 = vector.shape_cast %91 : vector<8xf32> to vector<8x1xf32>
    %93 = tpu.reciprocal %92 {approx = true} : vector<8x1xf32> -> vector<8x1xf32>
    %94 = vector.broadcast %93 : vector<8x1xf32> to vector<8x16xf32>
    %95 = arith.mulf %90, %94 : vector<8x16xf32>
    %96 = arith.truncf %95 : vector<8x16xf32> to vector<8x16xbf16>
    %cst_31 = arith.constant dense<0.000000e+00> : vector<8x16xf32>
    %97 = tpu.matmul %96, %81, %cst_31 {dimension_numbers = #tpu.dot_dimension_numbers<[1], [0], [0], [1], [0, 0, 1, 1], [], []>} : vector<8x16xbf16>, vector<16x16xbf16>, vector<8x16xf32> -> vector<8x16xf32>
    %98 = tpu.concatenate %75, %97 in 1 : vector<8x16xf32>, vector<8x16xf32> -> vector<8x32xf32>
    %99 = arith.truncf %98 : vector<8x32xf32> to vector<8x32xbf16>
    %100 = vector.extract_strided_slice %7 {offsets = [3, 0, 0], sizes = [1, 32, 32], strides = [1, 1, 1]} : vector<4x32x32xbf16> to vector<1x32x32xbf16>
    %101 = vector.shape_cast %100 : vector<1x32x32xbf16> to vector<32x32xbf16>
    %cst_32 = arith.constant dense<0.000000e+00> : vector<8x32xf32>
    %102 = tpu.matmul %99, %101, %cst_32 {dimension_numbers = #tpu.dot_dimension_numbers<[1], [0], [0], [1], [0, 0, 1, 1], [], []>} : vector<8x32xbf16>, vector<32x32xbf16>, vector<8x32xf32> -> vector<8x32xf32>
    %103 = vector.extract_strided_slice %8 {offsets = [3, 0], sizes = [1, 32], strides = [1, 1]} : vector<4x32xf32> to vector<1x32xf32>
    %104 = vector.broadcast %103 : vector<1x32xf32> to vector<8x32xf32>
    %105 = arith.addf %102, %104 : vector<8x32xf32>
    %106 = arith.addf %1, %105 : vector<8x32xf32>
    %c0_33 = arith.constant 0 : index
    %c0_34 = arith.constant 0 : index
    %107 = vector.load %arg7[%c0_33, %c0_34] : memref<2x32xf32, #tpu.memory_space<vmem>>, vector<2x32xf32>
    %c0_35 = arith.constant 0 : index
    %c0_36 = arith.constant 0 : index
    %c0_37 = arith.constant 0 : index
    %108 = vector.load %arg8[%c0_35, %c0_36, %c0_37] : memref<4x32x32xbf16, #tpu.memory_space<vmem>>, vector<4x32x32xbf16>
    %c0_38 = arith.constant 0 : index
    %c0_39 = arith.constant 0 : index
    %109 = vector.load %arg9[%c0_38, %c0_39] : memref<4x32xf32, #tpu.memory_space<vmem>>, vector<4x32xf32>
    %110 = vector.extract_strided_slice %107 {offsets = [0, 0], sizes = [1, 32], strides = [1, 1]} : vector<2x32xf32> to vector<1x32xf32>
    %111 = vector.extract_strided_slice %107 {offsets = [1, 0], sizes = [1, 32], strides = [1, 1]} : vector<2x32xf32> to vector<1x32xf32>
    %cst_40 = arith.constant dense<0.000000e+00> : vector<8xf32>
    %112 = vector.multi_reduction <add>, %106, %cst_40 [1] : vector<8x32xf32> to vector<8xf32>
    %113 = vector.shape_cast %112 : vector<8xf32> to vector<8x1xf32>
    %cst_41 = arith.constant 3.200000e+01 : f32
    %114 = vector.broadcast %cst_41 : f32 to vector<8x1xf32>
    %115 = arith.divf %113, %114 : vector<8x1xf32>
    %116 = vector.broadcast %115 : vector<8x1xf32> to vector<8x32xf32>
    %117 = arith.subf %106, %116 : vector<8x32xf32>
    %118 = arith.mulf %117, %117 : vector<8x32xf32>
    %cst_42 = arith.constant dense<0.000000e+00> : vector<8xf32>
    %119 = vector.multi_reduction <add>, %118, %cst_42 [1] : vector<8x32xf32> to vector<8xf32>
    %120 = vector.shape_cast %119 : vector<8xf32> to vector<8x1xf32>
    %cst_43 = arith.constant 3.200000e+01 : f32
    %121 = vector.broadcast %cst_43 : f32 to vector<8x1xf32>
    %122 = arith.divf %120, %121 : vector<8x1xf32>
    %123 = vector.broadcast %115 : vector<8x1xf32> to vector<8x32xf32>
    %124 = arith.subf %106, %123 : vector<8x32xf32>
    %cst_44 = arith.constant 9.99999974E-6 : f32
    %125 = vector.broadcast %cst_44 : f32 to vector<8x1xf32>
    %126 = arith.addf %122, %125 : vector<8x1xf32>
    %127 = math.rsqrt %126 : vector<8x1xf32>
    %128 = vector.broadcast %127 : vector<8x1xf32> to vector<8x32xf32>
    %129 = arith.mulf %124, %128 : vector<8x32xf32>
    %130 = vector.broadcast %110 : vector<1x32xf32> to vector<8x32xf32>
    %131 = arith.mulf %129, %130 : vector<8x32xf32>
    %132 = vector.broadcast %111 : vector<1x32xf32> to vector<8x32xf32>
    %133 = arith.addf %131, %132 : vector<8x32xf32>
    %134 = arith.truncf %133 : vector<8x32xf32> to vector<8x32xbf16>
    %135 = arith.truncf %133 : vector<8x32xf32> to vector<8x32xbf16>
    %136 = vector.extract_strided_slice %108 {offsets = [0, 0, 0], sizes = [1, 32, 32], strides = [1, 1, 1]} : vector<4x32x32xbf16> to vector<1x32x32xbf16>
    %137 = vector.shape_cast %136 : vector<1x32x32xbf16> to vector<32x32xbf16>
    %cst_45 = arith.constant dense<0.000000e+00> : vector<8x32xf32>
    %138 = tpu.matmul %134, %137, %cst_45 {dimension_numbers = #tpu.dot_dimension_numbers<[1], [0], [0], [1], [0, 0, 1, 1], [], []>} : vector<8x32xbf16>, vector<32x32xbf16>, vector<8x32xf32> -> vector<8x32xf32>
    %139 = vector.extract_strided_slice %109 {offsets = [0, 0], sizes = [1, 32], strides = [1, 1]} : vector<4x32xf32> to vector<1x32xf32>
    %140 = vector.broadcast %139 : vector<1x32xf32> to vector<8x32xf32>
    %141 = arith.addf %138, %140 : vector<8x32xf32>
    %142 = vector.extract_strided_slice %108 {offsets = [1, 0, 0], sizes = [1, 32, 32], strides = [1, 1, 1]} : vector<4x32x32xbf16> to vector<1x32x32xbf16>
    %143 = vector.shape_cast %142 : vector<1x32x32xbf16> to vector<32x32xbf16>
    %cst_46 = arith.constant dense<0.000000e+00> : vector<8x32xf32>
    %144 = tpu.matmul %135, %143, %cst_46 {dimension_numbers = #tpu.dot_dimension_numbers<[1], [0], [0], [1], [0, 0, 1, 1], [], []>} : vector<8x32xbf16>, vector<32x32xbf16>, vector<8x32xf32> -> vector<8x32xf32>
    %145 = vector.extract_strided_slice %109 {offsets = [1, 0], sizes = [1, 32], strides = [1, 1]} : vector<4x32xf32> to vector<1x32xf32>
    %146 = vector.broadcast %145 : vector<1x32xf32> to vector<8x32xf32>
    %147 = arith.addf %144, %146 : vector<8x32xf32>
    %148 = vector.extract_strided_slice %108 {offsets = [2, 0, 0], sizes = [1, 32, 32], strides = [1, 1, 1]} : vector<4x32x32xbf16> to vector<1x32x32xbf16>
    %149 = vector.shape_cast %148 : vector<1x32x32xbf16> to vector<32x32xbf16>
    %cst_47 = arith.constant dense<0.000000e+00> : vector<8x32xf32>
    %150 = tpu.matmul %135, %149, %cst_47 {dimension_numbers = #tpu.dot_dimension_numbers<[1], [0], [0], [1], [0, 0, 1, 1], [], []>} : vector<8x32xbf16>, vector<32x32xbf16>, vector<8x32xf32> -> vector<8x32xf32>
    %151 = vector.extract_strided_slice %109 {offsets = [2, 0], sizes = [1, 32], strides = [1, 1]} : vector<4x32xf32> to vector<1x32xf32>
    %152 = vector.broadcast %151 : vector<1x32xf32> to vector<8x32xf32>
    %153 = arith.addf %150, %152 : vector<8x32xf32>
    %154 = vector.extract_strided_slice %141 {offsets = [0, 0], sizes = [8, 16], strides = [1, 1]} : vector<8x32xf32> to vector<8x16xf32>
    %155 = arith.truncf %154 : vector<8x16xf32> to vector<8x16xbf16>
    %156 = vector.extract_strided_slice %147 {offsets = [0, 0], sizes = [8, 16], strides = [1, 1]} : vector<8x32xf32> to vector<8x16xf32>
    %157 = arith.truncf %156 : vector<8x16xf32> to vector<8x16xbf16>
    %158 = vector.extract_strided_slice %153 {offsets = [0, 0], sizes = [8, 16], strides = [1, 1]} : vector<8x32xf32> to vector<8x16xf32>
    %159 = arith.truncf %158 : vector<8x16xf32> to vector<8x16xbf16>
    %cst_48 = arith.constant dense<0.000000e+00> : vector<8x8xf32>
    %160 = tpu.matmul %155, %157, %cst_48 {dimension_numbers = #tpu.dot_dimension_numbers<[1], [1], [0], [0], [0, 0, 1, 0], [], []>} : vector<8x16xbf16>, vector<8x16xbf16>, vector<8x8xf32> -> vector<8x8xf32>
    %cst_49 = arith.constant 2.500000e-01 : f32
    %161 = vector.broadcast %cst_49 : f32 to vector<8x8xf32>
    %162 = arith.mulf %160, %161 : vector<8x8xf32>
    %cst_50 = arith.constant dense<0xFF800000> : vector<8xf32>
    %163 = vector.multi_reduction <maximumf>, %162, %cst_50 [1] : vector<8x8xf32> to vector<8xf32>
    %164 = vector.shape_cast %163 : vector<8xf32> to vector<8x1xf32>
    %165 = vector.broadcast %164 : vector<8x1xf32> to vector<8x8xf32>
    %166 = arith.subf %162, %165 : vector<8x8xf32>
    %167 = math.exp %166 : vector<8x8xf32>
    %cst_51 = arith.constant dense<0.000000e+00> : vector<8xf32>
    %168 = vector.multi_reduction <add>, %167, %cst_51 [1] : vector<8x8xf32> to vector<8xf32>
    %169 = vector.shape_cast %168 : vector<8xf32> to vector<8x1xf32>
    %170 = tpu.reciprocal %169 {approx = true} : vector<8x1xf32> -> vector<8x1xf32>
    %171 = vector.broadcast %170 : vector<8x1xf32> to vector<8x8xf32>
    %172 = arith.mulf %167, %171 : vector<8x8xf32>
    %173 = arith.truncf %172 : vector<8x8xf32> to vector<8x8xbf16>
    %cst_52 = arith.constant dense<0.000000e+00> : vector<8x16xf32>
    %174 = tpu.matmul %173, %159, %cst_52 {dimension_numbers = #tpu.dot_dimension_numbers<[1], [0], [0], [1], [0, 0, 1, 1], [], []>} : vector<8x8xbf16>, vector<8x16xbf16>, vector<8x16xf32> -> vector<8x16xf32>
    %175 = vector.extract_strided_slice %141 {offsets = [0, 16], sizes = [8, 16], strides = [1, 1]} : vector<8x32xf32> to vector<8x16xf32>
    %176 = arith.truncf %175 : vector<8x16xf32> to vector<8x16xbf16>
    %177 = vector.extract_strided_slice %147 {offsets = [0, 16], sizes = [8, 16], strides = [1, 1]} : vector<8x32xf32> to vector<8x16xf32>
    %178 = arith.truncf %177 : vector<8x16xf32> to vector<8x16xbf16>
    %179 = vector.extract_strided_slice %153 {offsets = [0, 16], sizes = [8, 16], strides = [1, 1]} : vector<8x32xf32> to vector<8x16xf32>
    %180 = arith.truncf %179 : vector<8x16xf32> to vector<8x16xbf16>
    %cst_53 = arith.constant dense<0.000000e+00> : vector<8x8xf32>
    %181 = tpu.matmul %176, %178, %cst_53 {dimension_numbers = #tpu.dot_dimension_numbers<[1], [1], [0], [0], [0, 0, 1, 0], [], []>} : vector<8x16xbf16>, vector<8x16xbf16>, vector<8x8xf32> -> vector<8x8xf32>
    %cst_54 = arith.constant 2.500000e-01 : f32
    %182 = vector.broadcast %cst_54 : f32 to vector<8x8xf32>
    %183 = arith.mulf %181, %182 : vector<8x8xf32>
    %cst_55 = arith.constant dense<0xFF800000> : vector<8xf32>
    %184 = vector.multi_reduction <maximumf>, %183, %cst_55 [1] : vector<8x8xf32> to vector<8xf32>
    %185 = vector.shape_cast %184 : vector<8xf32> to vector<8x1xf32>
    %186 = vector.broadcast %185 : vector<8x1xf32> to vector<8x8xf32>
    %187 = arith.subf %183, %186 : vector<8x8xf32>
    %188 = math.exp %187 : vector<8x8xf32>
    %cst_56 = arith.constant dense<0.000000e+00> : vector<8xf32>
    %189 = vector.multi_reduction <add>, %188, %cst_56 [1] : vector<8x8xf32> to vector<8xf32>
    %190 = vector.shape_cast %189 : vector<8xf32> to vector<8x1xf32>
    %191 = tpu.reciprocal %190 {approx = true} : vector<8x1xf32> -> vector<8x1xf32>
    %192 = vector.broadcast %191 : vector<8x1xf32> to vector<8x8xf32>
    %193 = arith.mulf %188, %192 : vector<8x8xf32>
    %194 = arith.truncf %193 : vector<8x8xf32> to vector<8x8xbf16>
    %cst_57 = arith.constant dense<0.000000e+00> : vector<8x16xf32>
    %195 = tpu.matmul %194, %180, %cst_57 {dimension_numbers = #tpu.dot_dimension_numbers<[1], [0], [0], [1], [0, 0, 1, 1], [], []>} : vector<8x8xbf16>, vector<8x16xbf16>, vector<8x16xf32> -> vector<8x16xf32>
    %196 = tpu.concatenate %174, %195 in 1 : vector<8x16xf32>, vector<8x16xf32> -> vector<8x32xf32>
    %197 = arith.truncf %196 : vector<8x32xf32> to vector<8x32xbf16>
    %198 = vector.extract_strided_slice %108 {offsets = [3, 0, 0], sizes = [1, 32, 32], strides = [1, 1, 1]} : vector<4x32x32xbf16> to vector<1x32x32xbf16>
    %199 = vector.shape_cast %198 : vector<1x32x32xbf16> to vector<32x32xbf16>
    %cst_58 = arith.constant dense<0.000000e+00> : vector<8x32xf32>
    %200 = tpu.matmul %197, %199, %cst_58 {dimension_numbers = #tpu.dot_dimension_numbers<[1], [0], [0], [1], [0, 0, 1, 1], [], []>} : vector<8x32xbf16>, vector<32x32xbf16>, vector<8x32xf32> -> vector<8x32xf32>
    %201 = vector.extract_strided_slice %109 {offsets = [3, 0], sizes = [1, 32], strides = [1, 1]} : vector<4x32xf32> to vector<1x32xf32>
    %202 = vector.broadcast %201 : vector<1x32xf32> to vector<8x32xf32>
    %203 = arith.addf %200, %202 : vector<8x32xf32>
    %204 = arith.addf %106, %203 : vector<8x32xf32>
    %c0_59 = arith.constant 0 : index
    %c0_60 = arith.constant 0 : index
    %205 = vector.load %arg10[%c0_59, %c0_60] : memref<2x32xf32, #tpu.memory_space<vmem>>, vector<2x32xf32>
    %c0_61 = arith.constant 0 : index
    %c0_62 = arith.constant 0 : index
    %206 = vector.load %arg11[%c0_61, %c0_62] : memref<32x64xbf16, #tpu.memory_space<vmem>>, vector<32x64xbf16>
    %c0_63 = arith.constant 0 : index
    %c0_64 = arith.constant 0 : index
    %207 = vector.load %arg12[%c0_63, %c0_64] : memref<1x64xf32, #tpu.memory_space<vmem>>, vector<1x64xf32>
    %c0_65 = arith.constant 0 : index
    %c0_66 = arith.constant 0 : index
    %208 = vector.load %arg13[%c0_65, %c0_66] : memref<64x32xbf16, #tpu.memory_space<vmem>>, vector<64x32xbf16>
    %c0_67 = arith.constant 0 : index
    %c0_68 = arith.constant 0 : index
    %209 = vector.load %arg14[%c0_67, %c0_68] : memref<1x32xf32, #tpu.memory_space<vmem>>, vector<1x32xf32>
    %210 = vector.extract_strided_slice %205 {offsets = [0, 0], sizes = [1, 32], strides = [1, 1]} : vector<2x32xf32> to vector<1x32xf32>
    %211 = vector.extract_strided_slice %205 {offsets = [1, 0], sizes = [1, 32], strides = [1, 1]} : vector<2x32xf32> to vector<1x32xf32>
    %cst_69 = arith.constant dense<0.000000e+00> : vector<8xf32>
    %212 = vector.multi_reduction <add>, %204, %cst_69 [1] : vector<8x32xf32> to vector<8xf32>
    %213 = vector.shape_cast %212 : vector<8xf32> to vector<8x1xf32>
    %cst_70 = arith.constant 3.200000e+01 : f32
    %214 = vector.broadcast %cst_70 : f32 to vector<8x1xf32>
    %215 = arith.divf %213, %214 : vector<8x1xf32>
    %216 = vector.broadcast %215 : vector<8x1xf32> to vector<8x32xf32>
    %217 = arith.subf %204, %216 : vector<8x32xf32>
    %218 = arith.mulf %217, %217 : vector<8x32xf32>
    %cst_71 = arith.constant dense<0.000000e+00> : vector<8xf32>
    %219 = vector.multi_reduction <add>, %218, %cst_71 [1] : vector<8x32xf32> to vector<8xf32>
    %220 = vector.shape_cast %219 : vector<8xf32> to vector<8x1xf32>
    %cst_72 = arith.constant 3.200000e+01 : f32
    %221 = vector.broadcast %cst_72 : f32 to vector<8x1xf32>
    %222 = arith.divf %220, %221 : vector<8x1xf32>
    %223 = vector.broadcast %215 : vector<8x1xf32> to vector<8x32xf32>
    %224 = arith.subf %204, %223 : vector<8x32xf32>
    %cst_73 = arith.constant 9.99999974E-6 : f32
    %225 = vector.broadcast %cst_73 : f32 to vector<8x1xf32>
    %226 = arith.addf %222, %225 : vector<8x1xf32>
    %227 = math.rsqrt %226 : vector<8x1xf32>
    %228 = vector.broadcast %227 : vector<8x1xf32> to vector<8x32xf32>
    %229 = arith.mulf %224, %228 : vector<8x32xf32>
    %230 = vector.broadcast %210 : vector<1x32xf32> to vector<8x32xf32>
    %231 = arith.mulf %229, %230 : vector<8x32xf32>
    %232 = vector.broadcast %211 : vector<1x32xf32> to vector<8x32xf32>
    %233 = arith.addf %231, %232 : vector<8x32xf32>
    %234 = arith.truncf %233 : vector<8x32xf32> to vector<8x32xbf16>
    %cst_74 = arith.constant dense<0.000000e+00> : vector<8x64xf32>
    %235 = tpu.matmul %234, %206, %cst_74 {dimension_numbers = #tpu.dot_dimension_numbers<[1], [0], [0], [1], [0, 0, 1, 1], [], []>} : vector<8x32xbf16>, vector<32x64xbf16>, vector<8x64xf32> -> vector<8x64xf32>
    %236 = vector.broadcast %207 : vector<1x64xf32> to vector<8x64xf32>
    %237 = arith.addf %235, %236 : vector<8x64xf32>
    %238 = arith.mulf %237, %237 : vector<8x64xf32>
    %239 = arith.mulf %237, %238 : vector<8x64xf32>
    %cst_75 = arith.constant 4.471500e-02 : f32
    %240 = vector.broadcast %cst_75 : f32 to vector<8x64xf32>
    %241 = arith.mulf %240, %239 : vector<8x64xf32>
    %242 = arith.addf %237, %241 : vector<8x64xf32>
    %cst_76 = arith.constant 0.797884583 : f32
    %243 = vector.broadcast %cst_76 : f32 to vector<8x64xf32>
    %244 = arith.mulf %243, %242 : vector<8x64xf32>
    %245 = math.tanh %244 : vector<8x64xf32>
    %cst_77 = arith.constant 1.000000e+00 : f32
    %246 = vector.broadcast %cst_77 : f32 to vector<8x64xf32>
    %247 = arith.addf %246, %245 : vector<8x64xf32>
    %cst_78 = arith.constant 5.000000e-01 : f32
    %248 = vector.broadcast %cst_78 : f32 to vector<8x64xf32>
    %249 = arith.mulf %248, %247 : vector<8x64xf32>
    %250 = arith.mulf %237, %249 : vector<8x64xf32>
    %251 = arith.truncf %250 : vector<8x64xf32> to vector<8x64xbf16>
    %cst_79 = arith.constant dense<0.000000e+00> : vector<8x32xf32>
    %252 = tpu.matmul %251, %208, %cst_79 {dimension_numbers = #tpu.dot_dimension_numbers<[1], [0], [0], [1], [0, 0, 1, 1], [], []>} : vector<8x64xbf16>, vector<64x32xbf16>, vector<8x32xf32> -> vector<8x32xf32>
    %253 = arith.addf %204, %252 : vector<8x32xf32>
    %254 = vector.broadcast %209 : vector<1x32xf32> to vector<8x32xf32>
    %255 = arith.addf %253, %254 : vector<8x32xf32>
    %c0_80 = arith.constant 0 : index
    %c0_81 = arith.constant 0 : index
    %c0_82 = arith.constant 0 : index
    %256 = vector.load %arg15[%c0_80, %c0_81, %c0_82] : memref<1x8x32xf32, #tpu.memory_space<vmem>>, vector<1x8x32xf32>
    %257 = vector.shape_cast %256 : vector<1x8x32xf32> to vector<8x32xf32>
    %258 = vector.shape_cast %255 : vector<8x32xf32> to vector<1x8x32xf32>
    tpu.vector_store %arg15[%c0_80, %c0_81, %c0_82], %258 {strides = array<i32>} : memref<1x8x32xf32, #tpu.memory_space<vmem>>, vector<1x8x32xf32>,
    return
  }
  func.func @transform_0(%arg0: i32) -> (i32, i32, i32) {
    %c0_i32 = arith.constant 0 : i32
    %c0_i32_0 = arith.constant 0 : i32
    %c0_i32_1 = arith.constant 0 : i32
    return %arg0, %c0_i32, %c0_i32_0 : i32, i32, i32
  }
  func.func @transform_1(%arg0: i32) -> (i32, i32, i32) {
    %c0_i32 = arith.constant 0 : i32
    %c0_i32_0 = arith.constant 0 : i32
    %c0_i32_1 = arith.constant 0 : i32
    return %arg0, %c0_i32, %c0_i32_0 : i32, i32, i32
  }
  func.func @transform_2(%arg0: i32) -> (i32, i32, i32) {
    %c0_i32 = arith.constant 0 : i32
    %c0_i32_0 = arith.constant 0 : i32
    %c0_i32_1 = arith.constant 0 : i32
    return %arg0, %c0_i32, %c0_i32_0 : i32, i32, i32
  }
  func.func @transform_3(%arg0: i32) -> (i32, i32) {
    %c0_i32 = arith.constant 0 : i32
    %c0_i32_0 = arith.constant 0 : i32
    %c0_i32_1 = arith.constant 0 : i32
    return %c0_i32, %c0_i32_0 : i32, i32
  }
  func.func @transform_4(%arg0: i32) -> (i32, i32, i32) {
    %c0_i32 = arith.constant 0 : i32
    %c0_i32_0 = arith.constant 0 : i32
    %c0_i32_1 = arith.constant 0 : i32
    %c0_i32_2 = arith.constant 0 : i32
    return %c0_i32, %c0_i32_0, %c0_i32_1 : i32, i32, i32
  }
  func.func @transform_5(%arg0: i32) -> (i32, i32) {
    %c0_i32 = arith.constant 0 : i32
    %c0_i32_0 = arith.constant 0 : i32
    %c0_i32_1 = arith.constant 0 : i32
    return %c0_i32, %c0_i32_0 : i32, i32
  }
  func.func @transform_6(%arg0: i32) -> (i32, i32) {
    %c0_i32 = arith.constant 0 : i32
    %c0_i32_0 = arith.constant 0 : i32
    %c0_i32_1 = arith.constant 0 : i32
    return %c0_i32, %c0_i32_0 : i32, i32
  }
  func.func @transform_7(%arg0: i32) -> (i32, i32, i32) {
    %c0_i32 = arith.constant 0 : i32
    %c0_i32_0 = arith.constant 0 : i32
    %c0_i32_1 = arith.constant 0 : i32
    %c0_i32_2 = arith.constant 0 : i32
    return %c0_i32, %c0_i32_0, %c0_i32_1 : i32, i32, i32
  }
  func.func @transform_8(%arg0: i32) -> (i32, i32) {
    %c0_i32 = arith.constant 0 : i32
    %c0_i32_0 = arith.constant 0 : i32
    %c0_i32_1 = arith.constant 0 : i32
    return %c0_i32, %c0_i32_0 : i32, i32
  }
  func.func @transform_9(%arg0: i32) -> (i32, i32) {
    %c0_i32 = arith.constant 0 : i32
    %c0_i32_0 = arith.constant 0 : i32
    %c0_i32_1 = arith.constant 0 : i32
    return %c0_i32, %c0_i32_0 : i32, i32
  }
  func.func @transform_10(%arg0: i32) -> (i32, i32) {
    %c0_i32 = arith.constant 0 : i32
    %c0_i32_0 = arith.constant 0 : i32
    %c0_i32_1 = arith.constant 0 : i32
    return %c0_i32, %c0_i32_0 : i32, i32
  }
  func.func @transform_11(%arg0: i32) -> (i32, i32) {
    %c0_i32 = arith.constant 0 : i32
    %c0_i32_0 = arith.constant 0 : i32
    %c0_i32_1 = arith.constant 0 : i32
    return %c0_i32, %c0_i32_0 : i32, i32
  }
  func.func @transform_12(%arg0: i32) -> (i32, i32) {
    %c0_i32 = arith.constant 0 : i32
    %c0_i32_0 = arith.constant 0 : i32
    %c0_i32_1 = arith.constant 0 : i32
    return %c0_i32, %c0_i32_0 : i32, i32
  }
  func.func @transform_13(%arg0: i32) -> (i32, i32) {
    %c0_i32 = arith.constant 0 : i32
    %c0_i32_0 = arith.constant 0 : i32
    %c0_i32_1 = arith.constant 0 : i32
    return %c0_i32, %c0_i32_0 : i32, i32
  }
  func.func @transform_14(%arg0: i32) -> (i32, i32, i32) {
    %c0_i32 = arith.constant 0 : i32
    %c0_i32_0 = arith.constant 0 : i32
    %c0_i32_1 = arith.constant 0 : i32
    return %arg0, %c0_i32, %c0_i32_0 : i32, i32, i32
  }
}

module attributes {stable_mosaic.version = 11 : i64} {
  func.func @_kv_path_kernel(%arg0: i32, %arg1: i32, %arg2: memref<1x16x32xf32, #tpu.memory_space<vmem>>, %arg3: memref<1x8x32xf32, #tpu.memory_space<vmem>>, %arg4: memref<1x16x8xbf16, #tpu.memory_space<vmem>>, %arg5: memref<2x32xf32, #tpu.memory_space<vmem>>, %arg6: memref<4x32x32xbf16, #tpu.memory_space<vmem>>, %arg7: memref<4x32xf32, #tpu.memory_space<vmem>>, %arg8: memref<2x32xf32, #tpu.memory_space<vmem>>, %arg9: memref<32x64xbf16, #tpu.memory_space<vmem>>, %arg10: memref<1x64xf32, #tpu.memory_space<vmem>>, %arg11: memref<64x32xbf16, #tpu.memory_space<vmem>>, %arg12: memref<1x32xf32, #tpu.memory_space<vmem>>, %arg13: memref<1x16x32xf32, #tpu.memory_space<vmem>>) attributes {dimension_semantics = [#tpu.dimension_semantics<parallel>, #tpu.dimension_semantics<parallel>], iteration_bounds = array<i64: 2, 1>, scalar_prefetch = 0 : i64, scratch_operands = 0 : i64, tpu.core_type = #tpu.core_type<tc>, window_params = [{transform_indices = @transform_0, window_bounds = array<i64: 1, 16, 32>}, {transform_indices = @transform_1, window_bounds = array<i64: 1, 8, 32>}, {transform_indices = @transform_2, window_bounds = array<i64: 1, 16, 8>}, {pipeline_mode = #tpu.pipeline_mode<synchronous>, transform_indices = @transform_3, window_bounds = array<i64: 2, 32>}, {pipeline_mode = #tpu.pipeline_mode<synchronous>, transform_indices = @transform_4, window_bounds = array<i64: 4, 32, 32>}, {pipeline_mode = #tpu.pipeline_mode<synchronous>, transform_indices = @transform_5, window_bounds = array<i64: 4, 32>}, {pipeline_mode = #tpu.pipeline_mode<synchronous>, transform_indices = @transform_6, window_bounds = array<i64: 2, 32>}, {pipeline_mode = #tpu.pipeline_mode<synchronous>, transform_indices = @transform_7, window_bounds = array<i64: 32, 64>}, {pipeline_mode = #tpu.pipeline_mode<synchronous>, transform_indices = @transform_8, window_bounds = array<i64: 1, 64>}, {pipeline_mode = #tpu.pipeline_mode<synchronous>, transform_indices = @transform_9, window_bounds = array<i64: 64, 32>}, {pipeline_mode = #tpu.pipeline_mode<synchronous>, transform_indices = @transform_10, window_bounds = array<i64: 1, 32>}, {transform_indices = @transform_11, window_bounds = array<i64: 1, 16, 32>}]} {
    %c0 = arith.constant 0 : index
    %c0_0 = arith.constant 0 : index
    %c0_1 = arith.constant 0 : index
    %0 = vector.load %arg2[%c0, %c0_0, %c0_1] : memref<1x16x32xf32, #tpu.memory_space<vmem>>, vector<1x16x32xf32>
    %1 = vector.shape_cast %0 : vector<1x16x32xf32> to vector<16x32xf32>
    %c0_2 = arith.constant 0 : index
    %c0_3 = arith.constant 0 : index
    %c0_4 = arith.constant 0 : index
    %2 = vector.load %arg3[%c0_2, %c0_3, %c0_4] : memref<1x8x32xf32, #tpu.memory_space<vmem>>, vector<1x8x32xf32>
    %3 = vector.shape_cast %2 : vector<1x8x32xf32> to vector<8x32xf32>
    %c0_5 = arith.constant 0 : index
    %c0_6 = arith.constant 0 : index
    %c0_7 = arith.constant 0 : index
    %4 = vector.load %arg4[%c0_5, %c0_6, %c0_7] : memref<1x16x8xbf16, #tpu.memory_space<vmem>>, vector<1x16x8xbf16>
    %5 = vector.shape_cast %4 : vector<1x16x8xbf16> to vector<16x8xbf16>
    %c0_8 = arith.constant 0 : index
    %c0_9 = arith.constant 0 : index
    %6 = vector.load %arg5[%c0_8, %c0_9] : memref<2x32xf32, #tpu.memory_space<vmem>>, vector<2x32xf32>
    %c0_10 = arith.constant 0 : index
    %c0_11 = arith.constant 0 : index
    %c0_12 = arith.constant 0 : index
    %7 = vector.load %arg6[%c0_10, %c0_11, %c0_12] : memref<4x32x32xbf16, #tpu.memory_space<vmem>>, vector<4x32x32xbf16>
    %c0_13 = arith.constant 0 : index
    %c0_14 = arith.constant 0 : index
    %8 = vector.load %arg7[%c0_13, %c0_14] : memref<4x32xf32, #tpu.memory_space<vmem>>, vector<4x32xf32>
    %9 = vector.extract_strided_slice %6 {offsets = [0, 0], sizes = [1, 32], strides = [1, 1]} : vector<2x32xf32> to vector<1x32xf32>
    %10 = vector.extract_strided_slice %6 {offsets = [1, 0], sizes = [1, 32], strides = [1, 1]} : vector<2x32xf32> to vector<1x32xf32>
    %cst = arith.constant dense<0.000000e+00> : vector<16xf32>
    %11 = vector.multi_reduction <add>, %1, %cst [1] : vector<16x32xf32> to vector<16xf32>
    %12 = vector.shape_cast %11 : vector<16xf32> to vector<16x1xf32>
    %cst_15 = arith.constant 3.200000e+01 : f32
    %13 = vector.broadcast %cst_15 : f32 to vector<16x1xf32>
    %14 = arith.divf %12, %13 : vector<16x1xf32>
    %15 = vector.broadcast %14 : vector<16x1xf32> to vector<16x32xf32>
    %16 = arith.subf %1, %15 : vector<16x32xf32>
    %17 = arith.mulf %16, %16 : vector<16x32xf32>
    %cst_16 = arith.constant dense<0.000000e+00> : vector<16xf32>
    %18 = vector.multi_reduction <add>, %17, %cst_16 [1] : vector<16x32xf32> to vector<16xf32>
    %19 = vector.shape_cast %18 : vector<16xf32> to vector<16x1xf32>
    %cst_17 = arith.constant 3.200000e+01 : f32
    %20 = vector.broadcast %cst_17 : f32 to vector<16x1xf32>
    %21 = arith.divf %19, %20 : vector<16x1xf32>
    %22 = vector.broadcast %14 : vector<16x1xf32> to vector<16x32xf32>
    %23 = arith.subf %1, %22 : vector<16x32xf32>
    %cst_18 = arith.constant 9.99999974E-6 : f32
    %24 = vector.broadcast %cst_18 : f32 to vector<16x1xf32>
    %25 = arith.addf %21, %24 : vector<16x1xf32>
    %26 = math.rsqrt %25 : vector<16x1xf32>
    %27 = vector.broadcast %26 : vector<16x1xf32> to vector<16x32xf32>
    %28 = arith.mulf %23, %27 : vector<16x32xf32>
    %29 = vector.broadcast %9 : vector<1x32xf32> to vector<16x32xf32>
    %30 = arith.mulf %28, %29 : vector<16x32xf32>
    %31 = vector.broadcast %10 : vector<1x32xf32> to vector<16x32xf32>
    %32 = arith.addf %30, %31 : vector<16x32xf32>
    %33 = arith.truncf %32 : vector<16x32xf32> to vector<16x32xbf16>
    %34 = arith.truncf %3 : vector<8x32xf32> to vector<8x32xbf16>
    %35 = vector.extract_strided_slice %7 {offsets = [0, 0, 0], sizes = [1, 32, 32], strides = [1, 1, 1]} : vector<4x32x32xbf16> to vector<1x32x32xbf16>
    %36 = vector.shape_cast %35 : vector<1x32x32xbf16> to vector<32x32xbf16>
    %cst_19 = arith.constant dense<0.000000e+00> : vector<16x32xf32>
    %37 = tpu.matmul %33, %36, %cst_19 {dimension_numbers = #tpu.dot_dimension_numbers<[1], [0], [0], [1], [0, 0, 1, 1], [], []>} : vector<16x32xbf16>, vector<32x32xbf16>, vector<16x32xf32> -> vector<16x32xf32>
    %38 = vector.extract_strided_slice %8 {offsets = [0, 0], sizes = [1, 32], strides = [1, 1]} : vector<4x32xf32> to vector<1x32xf32>
    %39 = vector.broadcast %38 : vector<1x32xf32> to vector<16x32xf32>
    %40 = arith.addf %37, %39 : vector<16x32xf32>
    %41 = vector.extract_strided_slice %7 {offsets = [1, 0, 0], sizes = [1, 32, 32], strides = [1, 1, 1]} : vector<4x32x32xbf16> to vector<1x32x32xbf16>
    %42 = vector.shape_cast %41 : vector<1x32x32xbf16> to vector<32x32xbf16>
    %cst_20 = arith.constant dense<0.000000e+00> : vector<8x32xf32>
    %43 = tpu.matmul %34, %42, %cst_20 {dimension_numbers = #tpu.dot_dimension_numbers<[1], [0], [0], [1], [0, 0, 1, 1], [], []>} : vector<8x32xbf16>, vector<32x32xbf16>, vector<8x32xf32> -> vector<8x32xf32>
    %44 = vector.extract_strided_slice %8 {offsets = [1, 0], sizes = [1, 32], strides = [1, 1]} : vector<4x32xf32> to vector<1x32xf32>
    %45 = vector.broadcast %44 : vector<1x32xf32> to vector<8x32xf32>
    %46 = arith.addf %43, %45 : vector<8x32xf32>
    %47 = vector.extract_strided_slice %7 {offsets = [2, 0, 0], sizes = [1, 32, 32], strides = [1, 1, 1]} : vector<4x32x32xbf16> to vector<1x32x32xbf16>
    %48 = vector.shape_cast %47 : vector<1x32x32xbf16> to vector<32x32xbf16>
    %cst_21 = arith.constant dense<0.000000e+00> : vector<8x32xf32>
    %49 = tpu.matmul %34, %48, %cst_21 {dimension_numbers = #tpu.dot_dimension_numbers<[1], [0], [0], [1], [0, 0, 1, 1], [], []>} : vector<8x32xbf16>, vector<32x32xbf16>, vector<8x32xf32> -> vector<8x32xf32>
    %50 = vector.extract_strided_slice %8 {offsets = [2, 0], sizes = [1, 32], strides = [1, 1]} : vector<4x32xf32> to vector<1x32xf32>
    %51 = vector.broadcast %50 : vector<1x32xf32> to vector<8x32xf32>
    %52 = arith.addf %49, %51 : vector<8x32xf32>
    %53 = arith.extf %5 : vector<16x8xbf16> to vector<16x8xf32>
    %54 = vector.extract_strided_slice %40 {offsets = [0, 0], sizes = [16, 16], strides = [1, 1]} : vector<16x32xf32> to vector<16x16xf32>
    %55 = arith.truncf %54 : vector<16x16xf32> to vector<16x16xbf16>
    %56 = vector.extract_strided_slice %46 {offsets = [0, 0], sizes = [8, 16], strides = [1, 1]} : vector<8x32xf32> to vector<8x16xf32>
    %57 = arith.truncf %56 : vector<8x16xf32> to vector<8x16xbf16>
    %58 = vector.extract_strided_slice %52 {offsets = [0, 0], sizes = [8, 16], strides = [1, 1]} : vector<8x32xf32> to vector<8x16xf32>
    %59 = arith.truncf %58 : vector<8x16xf32> to vector<8x16xbf16>
    %cst_22 = arith.constant dense<0.000000e+00> : vector<16x8xf32>
    %60 = tpu.matmul %55, %57, %cst_22 {dimension_numbers = #tpu.dot_dimension_numbers<[1], [1], [0], [0], [0, 0, 1, 0], [], []>} : vector<16x16xbf16>, vector<8x16xbf16>, vector<16x8xf32> -> vector<16x8xf32>
    %cst_23 = arith.constant 2.500000e-01 : f32
    %61 = vector.broadcast %cst_23 : f32 to vector<16x8xf32>
    %62 = arith.mulf %60, %61 : vector<16x8xf32>
    %63 = arith.addf %62, %53 : vector<16x8xf32>
    %cst_24 = arith.constant dense<0xFF800000> : vector<16xf32>
    %64 = vector.multi_reduction <maximumf>, %63, %cst_24 [1] : vector<16x8xf32> to vector<16xf32>
    %65 = vector.shape_cast %64 : vector<16xf32> to vector<16x1xf32>
    %66 = vector.broadcast %65 : vector<16x1xf32> to vector<16x8xf32>
    %67 = arith.subf %63, %66 : vector<16x8xf32>
    %68 = math.exp %67 : vector<16x8xf32>
    %cst_25 = arith.constant dense<0.000000e+00> : vector<16xf32>
    %69 = vector.multi_reduction <add>, %68, %cst_25 [1] : vector<16x8xf32> to vector<16xf32>
    %70 = vector.shape_cast %69 : vector<16xf32> to vector<16x1xf32>
    %71 = tpu.reciprocal %70 {approx = true} : vector<16x1xf32> -> vector<16x1xf32>
    %72 = vector.broadcast %71 : vector<16x1xf32> to vector<16x8xf32>
    %73 = arith.mulf %68, %72 : vector<16x8xf32>
    %74 = arith.truncf %73 : vector<16x8xf32> to vector<16x8xbf16>
    %cst_26 = arith.constant dense<0.000000e+00> : vector<16x16xf32>
    %75 = tpu.matmul %74, %59, %cst_26 {dimension_numbers = #tpu.dot_dimension_numbers<[1], [0], [0], [1], [0, 0, 1, 1], [], []>} : vector<16x8xbf16>, vector<8x16xbf16>, vector<16x16xf32> -> vector<16x16xf32>
    %76 = vector.extract_strided_slice %40 {offsets = [0, 16], sizes = [16, 16], strides = [1, 1]} : vector<16x32xf32> to vector<16x16xf32>
    %77 = arith.truncf %76 : vector<16x16xf32> to vector<16x16xbf16>
    %78 = vector.extract_strided_slice %46 {offsets = [0, 16], sizes = [8, 16], strides = [1, 1]} : vector<8x32xf32> to vector<8x16xf32>
    %79 = arith.truncf %78 : vector<8x16xf32> to vector<8x16xbf16>
    %80 = vector.extract_strided_slice %52 {offsets = [0, 16], sizes = [8, 16], strides = [1, 1]} : vector<8x32xf32> to vector<8x16xf32>
    %81 = arith.truncf %80 : vector<8x16xf32> to vector<8x16xbf16>
    %cst_27 = arith.constant dense<0.000000e+00> : vector<16x8xf32>
    %82 = tpu.matmul %77, %79, %cst_27 {dimension_numbers = #tpu.dot_dimension_numbers<[1], [1], [0], [0], [0, 0, 1, 0], [], []>} : vector<16x16xbf16>, vector<8x16xbf16>, vector<16x8xf32> -> vector<16x8xf32>
    %cst_28 = arith.constant 2.500000e-01 : f32
    %83 = vector.broadcast %cst_28 : f32 to vector<16x8xf32>
    %84 = arith.mulf %82, %83 : vector<16x8xf32>
    %85 = arith.addf %84, %53 : vector<16x8xf32>
    %cst_29 = arith.constant dense<0xFF800000> : vector<16xf32>
    %86 = vector.multi_reduction <maximumf>, %85, %cst_29 [1] : vector<16x8xf32> to vector<16xf32>
    %87 = vector.shape_cast %86 : vector<16xf32> to vector<16x1xf32>
    %88 = vector.broadcast %87 : vector<16x1xf32> to vector<16x8xf32>
    %89 = arith.subf %85, %88 : vector<16x8xf32>
    %90 = math.exp %89 : vector<16x8xf32>
    %cst_30 = arith.constant dense<0.000000e+00> : vector<16xf32>
    %91 = vector.multi_reduction <add>, %90, %cst_30 [1] : vector<16x8xf32> to vector<16xf32>
    %92 = vector.shape_cast %91 : vector<16xf32> to vector<16x1xf32>
    %93 = tpu.reciprocal %92 {approx = true} : vector<16x1xf32> -> vector<16x1xf32>
    %94 = vector.broadcast %93 : vector<16x1xf32> to vector<16x8xf32>
    %95 = arith.mulf %90, %94 : vector<16x8xf32>
    %96 = arith.truncf %95 : vector<16x8xf32> to vector<16x8xbf16>
    %cst_31 = arith.constant dense<0.000000e+00> : vector<16x16xf32>
    %97 = tpu.matmul %96, %81, %cst_31 {dimension_numbers = #tpu.dot_dimension_numbers<[1], [0], [0], [1], [0, 0, 1, 1], [], []>} : vector<16x8xbf16>, vector<8x16xbf16>, vector<16x16xf32> -> vector<16x16xf32>
    %98 = tpu.concatenate %75, %97 in 1 : vector<16x16xf32>, vector<16x16xf32> -> vector<16x32xf32>
    %99 = arith.truncf %98 : vector<16x32xf32> to vector<16x32xbf16>
    %100 = vector.extract_strided_slice %7 {offsets = [3, 0, 0], sizes = [1, 32, 32], strides = [1, 1, 1]} : vector<4x32x32xbf16> to vector<1x32x32xbf16>
    %101 = vector.shape_cast %100 : vector<1x32x32xbf16> to vector<32x32xbf16>
    %cst_32 = arith.constant dense<0.000000e+00> : vector<16x32xf32>
    %102 = tpu.matmul %99, %101, %cst_32 {dimension_numbers = #tpu.dot_dimension_numbers<[1], [0], [0], [1], [0, 0, 1, 1], [], []>} : vector<16x32xbf16>, vector<32x32xbf16>, vector<16x32xf32> -> vector<16x32xf32>
    %103 = vector.extract_strided_slice %8 {offsets = [3, 0], sizes = [1, 32], strides = [1, 1]} : vector<4x32xf32> to vector<1x32xf32>
    %104 = vector.broadcast %103 : vector<1x32xf32> to vector<16x32xf32>
    %105 = arith.addf %102, %104 : vector<16x32xf32>
    %106 = arith.addf %1, %105 : vector<16x32xf32>
    %c0_33 = arith.constant 0 : index
    %c0_34 = arith.constant 0 : index
    %107 = vector.load %arg8[%c0_33, %c0_34] : memref<2x32xf32, #tpu.memory_space<vmem>>, vector<2x32xf32>
    %c0_35 = arith.constant 0 : index
    %c0_36 = arith.constant 0 : index
    %108 = vector.load %arg9[%c0_35, %c0_36] : memref<32x64xbf16, #tpu.memory_space<vmem>>, vector<32x64xbf16>
    %c0_37 = arith.constant 0 : index
    %c0_38 = arith.constant 0 : index
    %109 = vector.load %arg10[%c0_37, %c0_38] : memref<1x64xf32, #tpu.memory_space<vmem>>, vector<1x64xf32>
    %c0_39 = arith.constant 0 : index
    %c0_40 = arith.constant 0 : index
    %110 = vector.load %arg11[%c0_39, %c0_40] : memref<64x32xbf16, #tpu.memory_space<vmem>>, vector<64x32xbf16>
    %c0_41 = arith.constant 0 : index
    %c0_42 = arith.constant 0 : index
    %111 = vector.load %arg12[%c0_41, %c0_42] : memref<1x32xf32, #tpu.memory_space<vmem>>, vector<1x32xf32>
    %112 = vector.extract_strided_slice %107 {offsets = [0, 0], sizes = [1, 32], strides = [1, 1]} : vector<2x32xf32> to vector<1x32xf32>
    %113 = vector.extract_strided_slice %107 {offsets = [1, 0], sizes = [1, 32], strides = [1, 1]} : vector<2x32xf32> to vector<1x32xf32>
    %cst_43 = arith.constant dense<0.000000e+00> : vector<16xf32>
    %114 = vector.multi_reduction <add>, %106, %cst_43 [1] : vector<16x32xf32> to vector<16xf32>
    %115 = vector.shape_cast %114 : vector<16xf32> to vector<16x1xf32>
    %cst_44 = arith.constant 3.200000e+01 : f32
    %116 = vector.broadcast %cst_44 : f32 to vector<16x1xf32>
    %117 = arith.divf %115, %116 : vector<16x1xf32>
    %118 = vector.broadcast %117 : vector<16x1xf32> to vector<16x32xf32>
    %119 = arith.subf %106, %118 : vector<16x32xf32>
    %120 = arith.mulf %119, %119 : vector<16x32xf32>
    %cst_45 = arith.constant dense<0.000000e+00> : vector<16xf32>
    %121 = vector.multi_reduction <add>, %120, %cst_45 [1] : vector<16x32xf32> to vector<16xf32>
    %122 = vector.shape_cast %121 : vector<16xf32> to vector<16x1xf32>
    %cst_46 = arith.constant 3.200000e+01 : f32
    %123 = vector.broadcast %cst_46 : f32 to vector<16x1xf32>
    %124 = arith.divf %122, %123 : vector<16x1xf32>
    %125 = vector.broadcast %117 : vector<16x1xf32> to vector<16x32xf32>
    %126 = arith.subf %106, %125 : vector<16x32xf32>
    %cst_47 = arith.constant 9.99999974E-6 : f32
    %127 = vector.broadcast %cst_47 : f32 to vector<16x1xf32>
    %128 = arith.addf %124, %127 : vector<16x1xf32>
    %129 = math.rsqrt %128 : vector<16x1xf32>
    %130 = vector.broadcast %129 : vector<16x1xf32> to vector<16x32xf32>
    %131 = arith.mulf %126, %130 : vector<16x32xf32>
    %132 = vector.broadcast %112 : vector<1x32xf32> to vector<16x32xf32>
    %133 = arith.mulf %131, %132 : vector<16x32xf32>
    %134 = vector.broadcast %113 : vector<1x32xf32> to vector<16x32xf32>
    %135 = arith.addf %133, %134 : vector<16x32xf32>
    %136 = arith.truncf %135 : vector<16x32xf32> to vector<16x32xbf16>
    %cst_48 = arith.constant dense<0.000000e+00> : vector<16x64xf32>
    %137 = tpu.matmul %136, %108, %cst_48 {dimension_numbers = #tpu.dot_dimension_numbers<[1], [0], [0], [1], [0, 0, 1, 1], [], []>} : vector<16x32xbf16>, vector<32x64xbf16>, vector<16x64xf32> -> vector<16x64xf32>
    %138 = vector.broadcast %109 : vector<1x64xf32> to vector<16x64xf32>
    %139 = arith.addf %137, %138 : vector<16x64xf32>
    %140 = arith.mulf %139, %139 : vector<16x64xf32>
    %141 = arith.mulf %139, %140 : vector<16x64xf32>
    %cst_49 = arith.constant 4.471500e-02 : f32
    %142 = vector.broadcast %cst_49 : f32 to vector<16x64xf32>
    %143 = arith.mulf %142, %141 : vector<16x64xf32>
    %144 = arith.addf %139, %143 : vector<16x64xf32>
    %cst_50 = arith.constant 0.797884583 : f32
    %145 = vector.broadcast %cst_50 : f32 to vector<16x64xf32>
    %146 = arith.mulf %145, %144 : vector<16x64xf32>
    %147 = math.tanh %146 : vector<16x64xf32>
    %cst_51 = arith.constant 1.000000e+00 : f32
    %148 = vector.broadcast %cst_51 : f32 to vector<16x64xf32>
    %149 = arith.addf %148, %147 : vector<16x64xf32>
    %cst_52 = arith.constant 5.000000e-01 : f32
    %150 = vector.broadcast %cst_52 : f32 to vector<16x64xf32>
    %151 = arith.mulf %150, %149 : vector<16x64xf32>
    %152 = arith.mulf %139, %151 : vector<16x64xf32>
    %153 = arith.truncf %152 : vector<16x64xf32> to vector<16x64xbf16>
    %cst_53 = arith.constant dense<0.000000e+00> : vector<16x32xf32>
    %154 = tpu.matmul %153, %110, %cst_53 {dimension_numbers = #tpu.dot_dimension_numbers<[1], [0], [0], [1], [0, 0, 1, 1], [], []>} : vector<16x64xbf16>, vector<64x32xbf16>, vector<16x32xf32> -> vector<16x32xf32>
    %155 = arith.addf %106, %154 : vector<16x32xf32>
    %156 = vector.broadcast %111 : vector<1x32xf32> to vector<16x32xf32>
    %157 = arith.addf %155, %156 : vector<16x32xf32>
    %c0_54 = arith.constant 0 : index
    %c0_55 = arith.constant 0 : index
    %c0_56 = arith.constant 0 : index
    %158 = vector.load %arg13[%c0_54, %c0_55, %c0_56] : memref<1x16x32xf32, #tpu.memory_space<vmem>>, vector<1x16x32xf32>
    %159 = vector.shape_cast %158 : vector<1x16x32xf32> to vector<16x32xf32>
    %160 = vector.shape_cast %157 : vector<16x32xf32> to vector<1x16x32xf32>
    tpu.vector_store %arg13[%c0_54, %c0_55, %c0_56], %160 {strides = array<i32>} : memref<1x16x32xf32, #tpu.memory_space<vmem>>, vector<1x16x32xf32>,
    return
  }
  func.func @transform_0(%arg0: i32, %arg1: i32) -> (i32, i32, i32) {
    %c0_i32 = arith.constant 0 : i32
    %c0_i32_0 = arith.constant 0 : i32
    return %arg0, %arg1, %c0_i32 : i32, i32, i32
  }
  func.func @transform_1(%arg0: i32, %arg1: i32) -> (i32, i32, i32) {
    %c0_i32 = arith.constant 0 : i32
    %c0_i32_0 = arith.constant 0 : i32
    %c0_i32_1 = arith.constant 0 : i32
    return %arg0, %c0_i32, %c0_i32_0 : i32, i32, i32
  }
  func.func @transform_2(%arg0: i32, %arg1: i32) -> (i32, i32, i32) {
    %c0_i32 = arith.constant 0 : i32
    %c0_i32_0 = arith.constant 0 : i32
    return %arg0, %arg1, %c0_i32 : i32, i32, i32
  }
  func.func @transform_3(%arg0: i32, %arg1: i32) -> (i32, i32) {
    %c0_i32 = arith.constant 0 : i32
    %c0_i32_0 = arith.constant 0 : i32
    %c0_i32_1 = arith.constant 0 : i32
    return %c0_i32, %c0_i32_0 : i32, i32
  }
  func.func @transform_4(%arg0: i32, %arg1: i32) -> (i32, i32, i32) {
    %c0_i32 = arith.constant 0 : i32
    %c0_i32_0 = arith.constant 0 : i32
    %c0_i32_1 = arith.constant 0 : i32
    %c0_i32_2 = arith.constant 0 : i32
    return %c0_i32, %c0_i32_0, %c0_i32_1 : i32, i32, i32
  }
  func.func @transform_5(%arg0: i32, %arg1: i32) -> (i32, i32) {
    %c0_i32 = arith.constant 0 : i32
    %c0_i32_0 = arith.constant 0 : i32
    %c0_i32_1 = arith.constant 0 : i32
    return %c0_i32, %c0_i32_0 : i32, i32
  }
  func.func @transform_6(%arg0: i32, %arg1: i32) -> (i32, i32) {
    %c0_i32 = arith.constant 0 : i32
    %c0_i32_0 = arith.constant 0 : i32
    %c0_i32_1 = arith.constant 0 : i32
    return %c0_i32, %c0_i32_0 : i32, i32
  }
  func.func @transform_7(%arg0: i32, %arg1: i32) -> (i32, i32) {
    %c0_i32 = arith.constant 0 : i32
    %c0_i32_0 = arith.constant 0 : i32
    %c0_i32_1 = arith.constant 0 : i32
    return %c0_i32, %c0_i32_0 : i32, i32
  }
  func.func @transform_8(%arg0: i32, %arg1: i32) -> (i32, i32) {
    %c0_i32 = arith.constant 0 : i32
    %c0_i32_0 = arith.constant 0 : i32
    %c0_i32_1 = arith.constant 0 : i32
    return %c0_i32, %c0_i32_0 : i32, i32
  }
  func.func @transform_9(%arg0: i32, %arg1: i32) -> (i32, i32) {
    %c0_i32 = arith.constant 0 : i32
    %c0_i32_0 = arith.constant 0 : i32
    %c0_i32_1 = arith.constant 0 : i32
    return %c0_i32, %c0_i32_0 : i32, i32
  }
  func.func @transform_10(%arg0: i32, %arg1: i32) -> (i32, i32) {
    %c0_i32 = arith.constant 0 : i32
    %c0_i32_0 = arith.constant 0 : i32
    %c0_i32_1 = arith.constant 0 : i32
    return %c0_i32, %c0_i32_0 : i32, i32
  }
  func.func @transform_11(%arg0: i32, %arg1: i32) -> (i32, i32, i32) {
    %c0_i32 = arith.constant 0 : i32
    %c0_i32_0 = arith.constant 0 : i32
    return %arg0, %arg1, %c0_i32 : i32, i32, i32
  }
}

module attributes {stable_mosaic.version = 11 : i64} {
  func.func @_q_path_kernel(%arg0: i32, %arg1: memref<1x8x32xf32, #tpu.memory_space<vmem>>, %arg2: memref<1x16x32xf32, #tpu.memory_space<vmem>>, %arg3: memref<1x8x16xbf16, #tpu.memory_space<vmem>>, %arg4: memref<2x32xf32, #tpu.memory_space<vmem>>, %arg5: memref<4x32x32xbf16, #tpu.memory_space<vmem>>, %arg6: memref<4x32xf32, #tpu.memory_space<vmem>>, %arg7: memref<2x32xf32, #tpu.memory_space<vmem>>, %arg8: memref<4x32x32xbf16, #tpu.memory_space<vmem>>, %arg9: memref<4x32xf32, #tpu.memory_space<vmem>>, %arg10: memref<2x32xf32, #tpu.memory_space<vmem>>, %arg11: memref<32x64xbf16, #tpu.memory_space<vmem>>, %arg12: memref<1x64xf32, #tpu.memory_space<vmem>>, %arg13: memref<64x32xbf16, #tpu.memory_space<vmem>>, %arg14: memref<1x32xf32, #tpu.memory_space<vmem>>, %arg15: memref<1x8x32xf32, #tpu.memory_space<vmem>>) attributes {dimension_semantics = [#tpu.dimension_semantics<parallel>], iteration_bounds = array<i64: 2>, scalar_prefetch = 0 : i64, scratch_operands = 0 : i64, tpu.core_type = #tpu.core_type<tc>, window_params = [{transform_indices = @transform_0, window_bounds = array<i64: 1, 8, 32>}, {transform_indices = @transform_1, window_bounds = array<i64: 1, 16, 32>}, {transform_indices = @transform_2, window_bounds = array<i64: 1, 8, 16>}, {pipeline_mode = #tpu.pipeline_mode<synchronous>, transform_indices = @transform_3, window_bounds = array<i64: 2, 32>}, {pipeline_mode = #tpu.pipeline_mode<synchronous>, transform_indices = @transform_4, window_bounds = array<i64: 4, 32, 32>}, {pipeline_mode = #tpu.pipeline_mode<synchronous>, transform_indices = @transform_5, window_bounds = array<i64: 4, 32>}, {pipeline_mode = #tpu.pipeline_mode<synchronous>, transform_indices = @transform_6, window_bounds = array<i64: 2, 32>}, {pipeline_mode = #tpu.pipeline_mode<synchronous>, transform_indices = @transform_7, window_bounds = array<i64: 4, 32, 32>}, {pipeline_mode = #tpu.pipeline_mode<synchronous>, transform_indices = @transform_8, window_bounds = array<i64: 4, 32>}, {pipeline_mode = #tpu.pipeline_mode<synchronous>, transform_indices = @transform_9, window_bounds = array<i64: 2, 32>}, {pipeline_mode = #tpu.pipeline_mode<synchronous>, transform_indices = @transform_10, window_bounds = array<i64: 32, 64>}, {pipeline_mode = #tpu.pipeline_mode<synchronous>, transform_indices = @transform_11, window_bounds = array<i64: 1, 64>}, {pipeline_mode = #tpu.pipeline_mode<synchronous>, transform_indices = @transform_12, window_bounds = array<i64: 64, 32>}, {pipeline_mode = #tpu.pipeline_mode<synchronous>, transform_indices = @transform_13, window_bounds = array<i64: 1, 32>}, {transform_indices = @transform_14, window_bounds = array<i64: 1, 8, 32>}]} {
    %c0 = arith.constant 0 : index
    %c0_0 = arith.constant 0 : index
    %c0_1 = arith.constant 0 : index
    %0 = vector.load %arg1[%c0, %c0_0, %c0_1] : memref<1x8x32xf32, #tpu.memory_space<vmem>>, vector<1x8x32xf32>
    %1 = vector.shape_cast %0 : vector<1x8x32xf32> to vector<8x32xf32>
    %c0_2 = arith.constant 0 : index
    %c0_3 = arith.constant 0 : index
    %c0_4 = arith.constant 0 : index
    %2 = vector.load %arg2[%c0_2, %c0_3, %c0_4] : memref<1x16x32xf32, #tpu.memory_space<vmem>>, vector<1x16x32xf32>
    %3 = vector.shape_cast %2 : vector<1x16x32xf32> to vector<16x32xf32>
    %c0_5 = arith.constant 0 : index
    %c0_6 = arith.constant 0 : index
    %c0_7 = arith.constant 0 : index
    %4 = vector.load %arg3[%c0_5, %c0_6, %c0_7] : memref<1x8x16xbf16, #tpu.memory_space<vmem>>, vector<1x8x16xbf16>
    %5 = vector.shape_cast %4 : vector<1x8x16xbf16> to vector<8x16xbf16>
    %c0_8 = arith.constant 0 : index
    %c0_9 = arith.constant 0 : index
    %6 = vector.load %arg4[%c0_8, %c0_9] : memref<2x32xf32, #tpu.memory_space<vmem>>, vector<2x32xf32>
    %c0_10 = arith.constant 0 : index
    %c0_11 = arith.constant 0 : index
    %c0_12 = arith.constant 0 : index
    %7 = vector.load %arg5[%c0_10, %c0_11, %c0_12] : memref<4x32x32xbf16, #tpu.memory_space<vmem>>, vector<4x32x32xbf16>
    %c0_13 = arith.constant 0 : index
    %c0_14 = arith.constant 0 : index
    %8 = vector.load %arg6[%c0_13, %c0_14] : memref<4x32xf32, #tpu.memory_space<vmem>>, vector<4x32xf32>
    %9 = vector.extract_strided_slice %6 {offsets = [0, 0], sizes = [1, 32], strides = [1, 1]} : vector<2x32xf32> to vector<1x32xf32>
    %10 = vector.extract_strided_slice %6 {offsets = [1, 0], sizes = [1, 32], strides = [1, 1]} : vector<2x32xf32> to vector<1x32xf32>
    %cst = arith.constant dense<0.000000e+00> : vector<8xf32>
    %11 = vector.multi_reduction <add>, %1, %cst [1] : vector<8x32xf32> to vector<8xf32>
    %12 = vector.shape_cast %11 : vector<8xf32> to vector<8x1xf32>
    %cst_15 = arith.constant 3.200000e+01 : f32
    %13 = vector.broadcast %cst_15 : f32 to vector<8x1xf32>
    %14 = arith.divf %12, %13 : vector<8x1xf32>
    %15 = vector.broadcast %14 : vector<8x1xf32> to vector<8x32xf32>
    %16 = arith.subf %1, %15 : vector<8x32xf32>
    %17 = arith.mulf %16, %16 : vector<8x32xf32>
    %cst_16 = arith.constant dense<0.000000e+00> : vector<8xf32>
    %18 = vector.multi_reduction <add>, %17, %cst_16 [1] : vector<8x32xf32> to vector<8xf32>
    %19 = vector.shape_cast %18 : vector<8xf32> to vector<8x1xf32>
    %cst_17 = arith.constant 3.200000e+01 : f32
    %20 = vector.broadcast %cst_17 : f32 to vector<8x1xf32>
    %21 = arith.divf %19, %20 : vector<8x1xf32>
    %22 = vector.broadcast %14 : vector<8x1xf32> to vector<8x32xf32>
    %23 = arith.subf %1, %22 : vector<8x32xf32>
    %cst_18 = arith.constant 9.99999974E-6 : f32
    %24 = vector.broadcast %cst_18 : f32 to vector<8x1xf32>
    %25 = arith.addf %21, %24 : vector<8x1xf32>
    %26 = math.rsqrt %25 : vector<8x1xf32>
    %27 = vector.broadcast %26 : vector<8x1xf32> to vector<8x32xf32>
    %28 = arith.mulf %23, %27 : vector<8x32xf32>
    %29 = vector.broadcast %9 : vector<1x32xf32> to vector<8x32xf32>
    %30 = arith.mulf %28, %29 : vector<8x32xf32>
    %31 = vector.broadcast %10 : vector<1x32xf32> to vector<8x32xf32>
    %32 = arith.addf %30, %31 : vector<8x32xf32>
    %33 = arith.truncf %32 : vector<8x32xf32> to vector<8x32xbf16>
    %34 = arith.truncf %3 : vector<16x32xf32> to vector<16x32xbf16>
    %35 = vector.extract_strided_slice %7 {offsets = [0, 0, 0], sizes = [1, 32, 32], strides = [1, 1, 1]} : vector<4x32x32xbf16> to vector<1x32x32xbf16>
    %36 = vector.shape_cast %35 : vector<1x32x32xbf16> to vector<32x32xbf16>
    %cst_19 = arith.constant dense<0.000000e+00> : vector<8x32xf32>
    %37 = tpu.matmul %33, %36, %cst_19 {dimension_numbers = #tpu.dot_dimension_numbers<[1], [0], [0], [1], [0, 0, 1, 1], [], []>} : vector<8x32xbf16>, vector<32x32xbf16>, vector<8x32xf32> -> vector<8x32xf32>
    %38 = vector.extract_strided_slice %8 {offsets = [0, 0], sizes = [1, 32], strides = [1, 1]} : vector<4x32xf32> to vector<1x32xf32>
    %39 = vector.broadcast %38 : vector<1x32xf32> to vector<8x32xf32>
    %40 = arith.addf %37, %39 : vector<8x32xf32>
    %41 = vector.extract_strided_slice %7 {offsets = [1, 0, 0], sizes = [1, 32, 32], strides = [1, 1, 1]} : vector<4x32x32xbf16> to vector<1x32x32xbf16>
    %42 = vector.shape_cast %41 : vector<1x32x32xbf16> to vector<32x32xbf16>
    %cst_20 = arith.constant dense<0.000000e+00> : vector<16x32xf32>
    %43 = tpu.matmul %34, %42, %cst_20 {dimension_numbers = #tpu.dot_dimension_numbers<[1], [0], [0], [1], [0, 0, 1, 1], [], []>} : vector<16x32xbf16>, vector<32x32xbf16>, vector<16x32xf32> -> vector<16x32xf32>
    %44 = vector.extract_strided_slice %8 {offsets = [1, 0], sizes = [1, 32], strides = [1, 1]} : vector<4x32xf32> to vector<1x32xf32>
    %45 = vector.broadcast %44 : vector<1x32xf32> to vector<16x32xf32>
    %46 = arith.addf %43, %45 : vector<16x32xf32>
    %47 = vector.extract_strided_slice %7 {offsets = [2, 0, 0], sizes = [1, 32, 32], strides = [1, 1, 1]} : vector<4x32x32xbf16> to vector<1x32x32xbf16>
    %48 = vector.shape_cast %47 : vector<1x32x32xbf16> to vector<32x32xbf16>
    %cst_21 = arith.constant dense<0.000000e+00> : vector<16x32xf32>
    %49 = tpu.matmul %34, %48, %cst_21 {dimension_numbers = #tpu.dot_dimension_numbers<[1], [0], [0], [1], [0, 0, 1, 1], [], []>} : vector<16x32xbf16>, vector<32x32xbf16>, vector<16x32xf32> -> vector<16x32xf32>
    %50 = vector.extract_strided_slice %8 {offsets = [2, 0], sizes = [1, 32], strides = [1, 1]} : vector<4x32xf32> to vector<1x32xf32>
    %51 = vector.broadcast %50 : vector<1x32xf32> to vector<16x32xf32>
    %52 = arith.addf %49, %51 : vector<16x32xf32>
    %53 = arith.extf %5 : vector<8x16xbf16> to vector<8x16xf32>
    %54 = vector.extract_strided_slice %40 {offsets = [0, 0], sizes = [8, 16], strides = [1, 1]} : vector<8x32xf32> to vector<8x16xf32>
    %55 = arith.truncf %54 : vector<8x16xf32> to vector<8x16xbf16>
    %56 = vector.extract_strided_slice %46 {offsets = [0, 0], sizes = [16, 16], strides = [1, 1]} : vector<16x32xf32> to vector<16x16xf32>
    %57 = arith.truncf %56 : vector<16x16xf32> to vector<16x16xbf16>
    %58 = vector.extract_strided_slice %52 {offsets = [0, 0], sizes = [16, 16], strides = [1, 1]} : vector<16x32xf32> to vector<16x16xf32>
    %59 = arith.truncf %58 : vector<16x16xf32> to vector<16x16xbf16>
    %cst_22 = arith.constant dense<0.000000e+00> : vector<8x16xf32>
    %60 = tpu.matmul %55, %57, %cst_22 {dimension_numbers = #tpu.dot_dimension_numbers<[1], [1], [0], [0], [0, 0, 1, 0], [], []>} : vector<8x16xbf16>, vector<16x16xbf16>, vector<8x16xf32> -> vector<8x16xf32>
    %cst_23 = arith.constant 2.500000e-01 : f32
    %61 = vector.broadcast %cst_23 : f32 to vector<8x16xf32>
    %62 = arith.mulf %60, %61 : vector<8x16xf32>
    %63 = arith.addf %62, %53 : vector<8x16xf32>
    %cst_24 = arith.constant dense<0xFF800000> : vector<8xf32>
    %64 = vector.multi_reduction <maximumf>, %63, %cst_24 [1] : vector<8x16xf32> to vector<8xf32>
    %65 = vector.shape_cast %64 : vector<8xf32> to vector<8x1xf32>
    %66 = vector.broadcast %65 : vector<8x1xf32> to vector<8x16xf32>
    %67 = arith.subf %63, %66 : vector<8x16xf32>
    %68 = math.exp %67 : vector<8x16xf32>
    %cst_25 = arith.constant dense<0.000000e+00> : vector<8xf32>
    %69 = vector.multi_reduction <add>, %68, %cst_25 [1] : vector<8x16xf32> to vector<8xf32>
    %70 = vector.shape_cast %69 : vector<8xf32> to vector<8x1xf32>
    %71 = tpu.reciprocal %70 {approx = true} : vector<8x1xf32> -> vector<8x1xf32>
    %72 = vector.broadcast %71 : vector<8x1xf32> to vector<8x16xf32>
    %73 = arith.mulf %68, %72 : vector<8x16xf32>
    %74 = arith.truncf %73 : vector<8x16xf32> to vector<8x16xbf16>
    %cst_26 = arith.constant dense<0.000000e+00> : vector<8x16xf32>
    %75 = tpu.matmul %74, %59, %cst_26 {dimension_numbers = #tpu.dot_dimension_numbers<[1], [0], [0], [1], [0, 0, 1, 1], [], []>} : vector<8x16xbf16>, vector<16x16xbf16>, vector<8x16xf32> -> vector<8x16xf32>
    %76 = vector.extract_strided_slice %40 {offsets = [0, 16], sizes = [8, 16], strides = [1, 1]} : vector<8x32xf32> to vector<8x16xf32>
    %77 = arith.truncf %76 : vector<8x16xf32> to vector<8x16xbf16>
    %78 = vector.extract_strided_slice %46 {offsets = [0, 16], sizes = [16, 16], strides = [1, 1]} : vector<16x32xf32> to vector<16x16xf32>
    %79 = arith.truncf %78 : vector<16x16xf32> to vector<16x16xbf16>
    %80 = vector.extract_strided_slice %52 {offsets = [0, 16], sizes = [16, 16], strides = [1, 1]} : vector<16x32xf32> to vector<16x16xf32>
    %81 = arith.truncf %80 : vector<16x16xf32> to vector<16x16xbf16>
    %cst_27 = arith.constant dense<0.000000e+00> : vector<8x16xf32>
    %82 = tpu.matmul %77, %79, %cst_27 {dimension_numbers = #tpu.dot_dimension_numbers<[1], [1], [0], [0], [0, 0, 1, 0], [], []>} : vector<8x16xbf16>, vector<16x16xbf16>, vector<8x16xf32> -> vector<8x16xf32>
    %cst_28 = arith.constant 2.500000e-01 : f32
    %83 = vector.broadcast %cst_28 : f32 to vector<8x16xf32>
    %84 = arith.mulf %82, %83 : vector<8x16xf32>
    %85 = arith.addf %84, %53 : vector<8x16xf32>
    %cst_29 = arith.constant dense<0xFF800000> : vector<8xf32>
    %86 = vector.multi_reduction <maximumf>, %85, %cst_29 [1] : vector<8x16xf32> to vector<8xf32>
    %87 = vector.shape_cast %86 : vector<8xf32> to vector<8x1xf32>
    %88 = vector.broadcast %87 : vector<8x1xf32> to vector<8x16xf32>
    %89 = arith.subf %85, %88 : vector<8x16xf32>
    %90 = math.exp %89 : vector<8x16xf32>
    %cst_30 = arith.constant dense<0.000000e+00> : vector<8xf32>
    %91 = vector.multi_reduction <add>, %90, %cst_30 [1] : vector<8x16xf32> to vector<8xf32>
    %92 = vector.shape_cast %91 : vector<8xf32> to vector<8x1xf32>
    %93 = tpu.reciprocal %92 {approx = true} : vector<8x1xf32> -> vector<8x1xf32>
    %94 = vector.broadcast %93 : vector<8x1xf32> to vector<8x16xf32>
    %95 = arith.mulf %90, %94 : vector<8x16xf32>
    %96 = arith.truncf %95 : vector<8x16xf32> to vector<8x16xbf16>
    %cst_31 = arith.constant dense<0.000000e+00> : vector<8x16xf32>
    %97 = tpu.matmul %96, %81, %cst_31 {dimension_numbers = #tpu.dot_dimension_numbers<[1], [0], [0], [1], [0, 0, 1, 1], [], []>} : vector<8x16xbf16>, vector<16x16xbf16>, vector<8x16xf32> -> vector<8x16xf32>
    %98 = tpu.concatenate %75, %97 in 1 : vector<8x16xf32>, vector<8x16xf32> -> vector<8x32xf32>
    %99 = arith.truncf %98 : vector<8x32xf32> to vector<8x32xbf16>
    %100 = vector.extract_strided_slice %7 {offsets = [3, 0, 0], sizes = [1, 32, 32], strides = [1, 1, 1]} : vector<4x32x32xbf16> to vector<1x32x32xbf16>
    %101 = vector.shape_cast %100 : vector<1x32x32xbf16> to vector<32x32xbf16>
    %cst_32 = arith.constant dense<0.000000e+00> : vector<8x32xf32>
    %102 = tpu.matmul %99, %101, %cst_32 {dimension_numbers = #tpu.dot_dimension_numbers<[1], [0], [0], [1], [0, 0, 1, 1], [], []>} : vector<8x32xbf16>, vector<32x32xbf16>, vector<8x32xf32> -> vector<8x32xf32>
    %103 = vector.extract_strided_slice %8 {offsets = [3, 0], sizes = [1, 32], strides = [1, 1]} : vector<4x32xf32> to vector<1x32xf32>
    %104 = vector.broadcast %103 : vector<1x32xf32> to vector<8x32xf32>
    %105 = arith.addf %102, %104 : vector<8x32xf32>
    %106 = arith.addf %1, %105 : vector<8x32xf32>
    %c0_33 = arith.constant 0 : index
    %c0_34 = arith.constant 0 : index
    %107 = vector.load %arg7[%c0_33, %c0_34] : memref<2x32xf32, #tpu.memory_space<vmem>>, vector<2x32xf32>
    %c0_35 = arith.constant 0 : index
    %c0_36 = arith.constant 0 : index
    %c0_37 = arith.constant 0 : index
    %108 = vector.load %arg8[%c0_35, %c0_36, %c0_37] : memref<4x32x32xbf16, #tpu.memory_space<vmem>>, vector<4x32x32xbf16>
    %c0_38 = arith.constant 0 : index
    %c0_39 = arith.constant 0 : index
    %109 = vector.load %arg9[%c0_38, %c0_39] : memref<4x32xf32, #tpu.memory_space<vmem>>, vector<4x32xf32>
    %110 = vector.extract_strided_slice %107 {offsets = [0, 0], sizes = [1, 32], strides = [1, 1]} : vector<2x32xf32> to vector<1x32xf32>
    %111 = vector.extract_strided_slice %107 {offsets = [1, 0], sizes = [1, 32], strides = [1, 1]} : vector<2x32xf32> to vector<1x32xf32>
    %cst_40 = arith.constant dense<0.000000e+00> : vector<8xf32>
    %112 = vector.multi_reduction <add>, %106, %cst_40 [1] : vector<8x32xf32> to vector<8xf32>
    %113 = vector.shape_cast %112 : vector<8xf32> to vector<8x1xf32>
    %cst_41 = arith.constant 3.200000e+01 : f32
    %114 = vector.broadcast %cst_41 : f32 to vector<8x1xf32>
    %115 = arith.divf %113, %114 : vector<8x1xf32>
    %116 = vector.broadcast %115 : vector<8x1xf32> to vector<8x32xf32>
    %117 = arith.subf %106, %116 : vector<8x32xf32>
    %118 = arith.mulf %117, %117 : vector<8x32xf32>
    %cst_42 = arith.constant dense<0.000000e+00> : vector<8xf32>
    %119 = vector.multi_reduction <add>, %118, %cst_42 [1] : vector<8x32xf32> to vector<8xf32>
    %120 = vector.shape_cast %119 : vector<8xf32> to vector<8x1xf32>
    %cst_43 = arith.constant 3.200000e+01 : f32
    %121 = vector.broadcast %cst_43 : f32 to vector<8x1xf32>
    %122 = arith.divf %120, %121 : vector<8x1xf32>
    %123 = vector.broadcast %115 : vector<8x1xf32> to vector<8x32xf32>
    %124 = arith.subf %106, %123 : vector<8x32xf32>
    %cst_44 = arith.constant 9.99999974E-6 : f32
    %125 = vector.broadcast %cst_44 : f32 to vector<8x1xf32>
    %126 = arith.addf %122, %125 : vector<8x1xf32>
    %127 = math.rsqrt %126 : vector<8x1xf32>
    %128 = vector.broadcast %127 : vector<8x1xf32> to vector<8x32xf32>
    %129 = arith.mulf %124, %128 : vector<8x32xf32>
    %130 = vector.broadcast %110 : vector<1x32xf32> to vector<8x32xf32>
    %131 = arith.mulf %129, %130 : vector<8x32xf32>
    %132 = vector.broadcast %111 : vector<1x32xf32> to vector<8x32xf32>
    %133 = arith.addf %131, %132 : vector<8x32xf32>
    %134 = arith.truncf %133 : vector<8x32xf32> to vector<8x32xbf16>
    %135 = arith.truncf %133 : vector<8x32xf32> to vector<8x32xbf16>
    %136 = vector.extract_strided_slice %108 {offsets = [0, 0, 0], sizes = [1, 32, 32], strides = [1, 1, 1]} : vector<4x32x32xbf16> to vector<1x32x32xbf16>
    %137 = vector.shape_cast %136 : vector<1x32x32xbf16> to vector<32x32xbf16>
    %cst_45 = arith.constant dense<0.000000e+00> : vector<8x32xf32>
    %138 = tpu.matmul %134, %137, %cst_45 {dimension_numbers = #tpu.dot_dimension_numbers<[1], [0], [0], [1], [0, 0, 1, 1], [], []>} : vector<8x32xbf16>, vector<32x32xbf16>, vector<8x32xf32> -> vector<8x32xf32>
    %139 = vector.extract_strided_slice %109 {offsets = [0, 0], sizes = [1, 32], strides = [1, 1]} : vector<4x32xf32> to vector<1x32xf32>
    %140 = vector.broadcast %139 : vector<1x32xf32> to vector<8x32xf32>
    %141 = arith.addf %138, %140 : vector<8x32xf32>
    %142 = vector.extract_strided_slice %108 {offsets = [1, 0, 0], sizes = [1, 32, 32], strides = [1, 1, 1]} : vector<4x32x32xbf16> to vector<1x32x32xbf16>
    %143 = vector.shape_cast %142 : vector<1x32x32xbf16> to vector<32x32xbf16>
    %cst_46 = arith.constant dense<0.000000e+00> : vector<8x32xf32>
    %144 = tpu.matmul %135, %143, %cst_46 {dimension_numbers = #tpu.dot_dimension_numbers<[1], [0], [0], [1], [0, 0, 1, 1], [], []>} : vector<8x32xbf16>, vector<32x32xbf16>, vector<8x32xf32> -> vector<8x32xf32>
    %145 = vector.extract_strided_slice %109 {offsets = [1, 0], sizes = [1, 32], strides = [1, 1]} : vector<4x32xf32> to vector<1x32xf32>
    %146 = vector.broadcast %145 : vector<1x32xf32> to vector<8x32xf32>
    %147 = arith.addf %144, %146 : vector<8x32xf32>
    %148 = vector.extract_strided_slice %108 {offsets = [2, 0, 0], sizes = [1, 32, 32], strides = [1, 1, 1]} : vector<4x32x32xbf16> to vector<1x32x32xbf16>
    %149 = vector.shape_cast %148 : vector<1x32x32xbf16> to vector<32x32xbf16>
    %cst_47 = arith.constant dense<0.000000e+00> : vector<8x32xf32>
    %150 = tpu.matmul %135, %149, %cst_47 {dimension_numbers = #tpu.dot_dimension_numbers<[1], [0], [0], [1], [0, 0, 1, 1], [], []>} : vector<8x32xbf16>, vector<32x32xbf16>, vector<8x32xf32> -> vector<8x32xf32>
    %151 = vector.extract_strided_slice %109 {offsets = [2, 0], sizes = [1, 32], strides = [1, 1]} : vector<4x32xf32> to vector<1x32xf32>
    %152 = vector.broadcast %151 : vector<1x32xf32> to vector<8x32xf32>
    %153 = arith.addf %150, %152 : vector<8x32xf32>
    %154 = vector.extract_strided_slice %141 {offsets = [0, 0], sizes = [8, 16], strides = [1, 1]} : vector<8x32xf32> to vector<8x16xf32>
    %155 = arith.truncf %154 : vector<8x16xf32> to vector<8x16xbf16>
    %156 = vector.extract_strided_slice %147 {offsets = [0, 0], sizes = [8, 16], strides = [1, 1]} : vector<8x32xf32> to vector<8x16xf32>
    %157 = arith.truncf %156 : vector<8x16xf32> to vector<8x16xbf16>
    %158 = vector.extract_strided_slice %153 {offsets = [0, 0], sizes = [8, 16], strides = [1, 1]} : vector<8x32xf32> to vector<8x16xf32>
    %159 = arith.truncf %158 : vector<8x16xf32> to vector<8x16xbf16>
    %cst_48 = arith.constant dense<0.000000e+00> : vector<8x8xf32>
    %160 = tpu.matmul %155, %157, %cst_48 {dimension_numbers = #tpu.dot_dimension_numbers<[1], [1], [0], [0], [0, 0, 1, 0], [], []>} : vector<8x16xbf16>, vector<8x16xbf16>, vector<8x8xf32> -> vector<8x8xf32>
    %cst_49 = arith.constant 2.500000e-01 : f32
    %161 = vector.broadcast %cst_49 : f32 to vector<8x8xf32>
    %162 = arith.mulf %160, %161 : vector<8x8xf32>
    %cst_50 = arith.constant dense<0xFF800000> : vector<8xf32>
    %163 = vector.multi_reduction <maximumf>, %162, %cst_50 [1] : vector<8x8xf32> to vector<8xf32>
    %164 = vector.shape_cast %163 : vector<8xf32> to vector<8x1xf32>
    %165 = vector.broadcast %164 : vector<8x1xf32> to vector<8x8xf32>
    %166 = arith.subf %162, %165 : vector<8x8xf32>
    %167 = math.exp %166 : vector<8x8xf32>
    %cst_51 = arith.constant dense<0.000000e+00> : vector<8xf32>
    %168 = vector.multi_reduction <add>, %167, %cst_51 [1] : vector<8x8xf32> to vector<8xf32>
    %169 = vector.shape_cast %168 : vector<8xf32> to vector<8x1xf32>
    %170 = tpu.reciprocal %169 {approx = true} : vector<8x1xf32> -> vector<8x1xf32>
    %171 = vector.broadcast %170 : vector<8x1xf32> to vector<8x8xf32>
    %172 = arith.mulf %167, %171 : vector<8x8xf32>
    %173 = arith.truncf %172 : vector<8x8xf32> to vector<8x8xbf16>
    %cst_52 = arith.constant dense<0.000000e+00> : vector<8x16xf32>
    %174 = tpu.matmul %173, %159, %cst_52 {dimension_numbers = #tpu.dot_dimension_numbers<[1], [0], [0], [1], [0, 0, 1, 1], [], []>} : vector<8x8xbf16>, vector<8x16xbf16>, vector<8x16xf32> -> vector<8x16xf32>
    %175 = vector.extract_strided_slice %141 {offsets = [0, 16], sizes = [8, 16], strides = [1, 1]} : vector<8x32xf32> to vector<8x16xf32>
    %176 = arith.truncf %175 : vector<8x16xf32> to vector<8x16xbf16>
    %177 = vector.extract_strided_slice %147 {offsets = [0, 16], sizes = [8, 16], strides = [1, 1]} : vector<8x32xf32> to vector<8x16xf32>
    %178 = arith.truncf %177 : vector<8x16xf32> to vector<8x16xbf16>
    %179 = vector.extract_strided_slice %153 {offsets = [0, 16], sizes = [8, 16], strides = [1, 1]} : vector<8x32xf32> to vector<8x16xf32>
    %180 = arith.truncf %179 : vector<8x16xf32> to vector<8x16xbf16>
    %cst_53 = arith.constant dense<0.000000e+00> : vector<8x8xf32>
    %181 = tpu.matmul %176, %178, %cst_53 {dimension_numbers = #tpu.dot_dimension_numbers<[1], [1], [0], [0], [0, 0, 1, 0], [], []>} : vector<8x16xbf16>, vector<8x16xbf16>, vector<8x8xf32> -> vector<8x8xf32>
    %cst_54 = arith.constant 2.500000e-01 : f32
    %182 = vector.broadcast %cst_54 : f32 to vector<8x8xf32>
    %183 = arith.mulf %181, %182 : vector<8x8xf32>
    %cst_55 = arith.constant dense<0xFF800000> : vector<8xf32>
    %184 = vector.multi_reduction <maximumf>, %183, %cst_55 [1] : vector<8x8xf32> to vector<8xf32>
    %185 = vector.shape_cast %184 : vector<8xf32> to vector<8x1xf32>
    %186 = vector.broadcast %185 : vector<8x1xf32> to vector<8x8xf32>
    %187 = arith.subf %183, %186 : vector<8x8xf32>
    %188 = math.exp %187 : vector<8x8xf32>
    %cst_56 = arith.constant dense<0.000000e+00> : vector<8xf32>
    %189 = vector.multi_reduction <add>, %188, %cst_56 [1] : vector<8x8xf32> to vector<8xf32>
    %190 = vector.shape_cast %189 : vector<8xf32> to vector<8x1xf32>
    %191 = tpu.reciprocal %190 {approx = true} : vector<8x1xf32> -> vector<8x1xf32>
    %192 = vector.broadcast %191 : vector<8x1xf32> to vector<8x8xf32>
    %193 = arith.mulf %188, %192 : vector<8x8xf32>
    %194 = arith.truncf %193 : vector<8x8xf32> to vector<8x8xbf16>
    %cst_57 = arith.constant dense<0.000000e+00> : vector<8x16xf32>
    %195 = tpu.matmul %194, %180, %cst_57 {dimension_numbers = #tpu.dot_dimension_numbers<[1], [0], [0], [1], [0, 0, 1, 1], [], []>} : vector<8x8xbf16>, vector<8x16xbf16>, vector<8x16xf32> -> vector<8x16xf32>
    %196 = tpu.concatenate %174, %195 in 1 : vector<8x16xf32>, vector<8x16xf32> -> vector<8x32xf32>
    %197 = arith.truncf %196 : vector<8x32xf32> to vector<8x32xbf16>
    %198 = vector.extract_strided_slice %108 {offsets = [3, 0, 0], sizes = [1, 32, 32], strides = [1, 1, 1]} : vector<4x32x32xbf16> to vector<1x32x32xbf16>
    %199 = vector.shape_cast %198 : vector<1x32x32xbf16> to vector<32x32xbf16>
    %cst_58 = arith.constant dense<0.000000e+00> : vector<8x32xf32>
    %200 = tpu.matmul %197, %199, %cst_58 {dimension_numbers = #tpu.dot_dimension_numbers<[1], [0], [0], [1], [0, 0, 1, 1], [], []>} : vector<8x32xbf16>, vector<32x32xbf16>, vector<8x32xf32> -> vector<8x32xf32>
    %201 = vector.extract_strided_slice %109 {offsets = [3, 0], sizes = [1, 32], strides = [1, 1]} : vector<4x32xf32> to vector<1x32xf32>
    %202 = vector.broadcast %201 : vector<1x32xf32> to vector<8x32xf32>
    %203 = arith.addf %200, %202 : vector<8x32xf32>
    %204 = arith.addf %106, %203 : vector<8x32xf32>
    %c0_59 = arith.constant 0 : index
    %c0_60 = arith.constant 0 : index
    %205 = vector.load %arg10[%c0_59, %c0_60] : memref<2x32xf32, #tpu.memory_space<vmem>>, vector<2x32xf32>
    %c0_61 = arith.constant 0 : index
    %c0_62 = arith.constant 0 : index
    %206 = vector.load %arg11[%c0_61, %c0_62] : memref<32x64xbf16, #tpu.memory_space<vmem>>, vector<32x64xbf16>
    %c0_63 = arith.constant 0 : index
    %c0_64 = arith.constant 0 : index
    %207 = vector.load %arg12[%c0_63, %c0_64] : memref<1x64xf32, #tpu.memory_space<vmem>>, vector<1x64xf32>
    %c0_65 = arith.constant 0 : index
    %c0_66 = arith.constant 0 : index
    %208 = vector.load %arg13[%c0_65, %c0_66] : memref<64x32xbf16, #tpu.memory_space<vmem>>, vector<64x32xbf16>
    %c0_67 = arith.constant 0 : index
    %c0_68 = arith.constant 0 : index
    %209 = vector.load %arg14[%c0_67, %c0_68] : memref<1x32xf32, #tpu.memory_space<vmem>>, vector<1x32xf32>
    %210 = vector.extract_strided_slice %205 {offsets = [0, 0], sizes = [1, 32], strides = [1, 1]} : vector<2x32xf32> to vector<1x32xf32>
    %211 = vector.extract_strided_slice %205 {offsets = [1, 0], sizes = [1, 32], strides = [1, 1]} : vector<2x32xf32> to vector<1x32xf32>
    %cst_69 = arith.constant dense<0.000000e+00> : vector<8xf32>
    %212 = vector.multi_reduction <add>, %204, %cst_69 [1] : vector<8x32xf32> to vector<8xf32>
    %213 = vector.shape_cast %212 : vector<8xf32> to vector<8x1xf32>
    %cst_70 = arith.constant 3.200000e+01 : f32
    %214 = vector.broadcast %cst_70 : f32 to vector<8x1xf32>
    %215 = arith.divf %213, %214 : vector<8x1xf32>
    %216 = vector.broadcast %215 : vector<8x1xf32> to vector<8x32xf32>
    %217 = arith.subf %204, %216 : vector<8x32xf32>
    %218 = arith.mulf %217, %217 : vector<8x32xf32>
    %cst_71 = arith.constant dense<0.000000e+00> : vector<8xf32>
    %219 = vector.multi_reduction <add>, %218, %cst_71 [1] : vector<8x32xf32> to vector<8xf32>
    %220 = vector.shape_cast %219 : vector<8xf32> to vector<8x1xf32>
    %cst_72 = arith.constant 3.200000e+01 : f32
    %221 = vector.broadcast %cst_72 : f32 to vector<8x1xf32>
    %222 = arith.divf %220, %221 : vector<8x1xf32>
    %223 = vector.broadcast %215 : vector<8x1xf32> to vector<8x32xf32>
    %224 = arith.subf %204, %223 : vector<8x32xf32>
    %cst_73 = arith.constant 9.99999974E-6 : f32
    %225 = vector.broadcast %cst_73 : f32 to vector<8x1xf32>
    %226 = arith.addf %222, %225 : vector<8x1xf32>
    %227 = math.rsqrt %226 : vector<8x1xf32>
    %228 = vector.broadcast %227 : vector<8x1xf32> to vector<8x32xf32>
    %229 = arith.mulf %224, %228 : vector<8x32xf32>
    %230 = vector.broadcast %210 : vector<1x32xf32> to vector<8x32xf32>
    %231 = arith.mulf %229, %230 : vector<8x32xf32>
    %232 = vector.broadcast %211 : vector<1x32xf32> to vector<8x32xf32>
    %233 = arith.addf %231, %232 : vector<8x32xf32>
    %234 = arith.truncf %233 : vector<8x32xf32> to vector<8x32xbf16>
    %cst_74 = arith.constant dense<0.000000e+00> : vector<8x64xf32>
    %235 = tpu.matmul %234, %206, %cst_74 {dimension_numbers = #tpu.dot_dimension_numbers<[1], [0], [0], [1], [0, 0, 1, 1], [], []>} : vector<8x32xbf16>, vector<32x64xbf16>, vector<8x64xf32> -> vector<8x64xf32>
    %236 = vector.broadcast %207 : vector<1x64xf32> to vector<8x64xf32>
    %237 = arith.addf %235, %236 : vector<8x64xf32>
    %238 = arith.mulf %237, %237 : vector<8x64xf32>
    %239 = arith.mulf %237, %238 : vector<8x64xf32>
    %cst_75 = arith.constant 4.471500e-02 : f32
    %240 = vector.broadcast %cst_75 : f32 to vector<8x64xf32>
    %241 = arith.mulf %240, %239 : vector<8x64xf32>
    %242 = arith.addf %237, %241 : vector<8x64xf32>
    %cst_76 = arith.constant 0.797884583 : f32
    %243 = vector.broadcast %cst_76 : f32 to vector<8x64xf32>
    %244 = arith.mulf %243, %242 : vector<8x64xf32>
    %245 = math.tanh %244 : vector<8x64xf32>
    %cst_77 = arith.constant 1.000000e+00 : f32
    %246 = vector.broadcast %cst_77 : f32 to vector<8x64xf32>
    %247 = arith.addf %246, %245 : vector<8x64xf32>
    %cst_78 = arith.constant 5.000000e-01 : f32
    %248 = vector.broadcast %cst_78 : f32 to vector<8x64xf32>
    %249 = arith.mulf %248, %247 : vector<8x64xf32>
    %250 = arith.mulf %237, %249 : vector<8x64xf32>
    %251 = arith.truncf %250 : vector<8x64xf32> to vector<8x64xbf16>
    %cst_79 = arith.constant dense<0.000000e+00> : vector<8x32xf32>
    %252 = tpu.matmul %251, %208, %cst_79 {dimension_numbers = #tpu.dot_dimension_numbers<[1], [0], [0], [1], [0, 0, 1, 1], [], []>} : vector<8x64xbf16>, vector<64x32xbf16>, vector<8x32xf32> -> vector<8x32xf32>
    %253 = arith.addf %204, %252 : vector<8x32xf32>
    %254 = vector.broadcast %209 : vector<1x32xf32> to vector<8x32xf32>
    %255 = arith.addf %253, %254 : vector<8x32xf32>
    %c0_80 = arith.constant 0 : index
    %c0_81 = arith.constant 0 : index
    %c0_82 = arith.constant 0 : index
    %256 = vector.load %arg15[%c0_80, %c0_81, %c0_82] : memref<1x8x32xf32, #tpu.memory_space<vmem>>, vector<1x8x32xf32>
    %257 = vector.shape_cast %256 : vector<1x8x32xf32> to vector<8x32xf32>
    %258 = vector.shape_cast %255 : vector<8x32xf32> to vector<1x8x32xf32>
    tpu.vector_store %arg15[%c0_80, %c0_81, %c0_82], %258 {strides = array<i32>} : memref<1x8x32xf32, #tpu.memory_space<vmem>>, vector<1x8x32xf32>,
    return
  }
  func.func @transform_0(%arg0: i32) -> (i32, i32, i32) {
    %c0_i32 = arith.constant 0 : i32
    %c0_i32_0 = arith.constant 0 : i32
    %c0_i32_1 = arith.constant 0 : i32
    return %arg0, %c0_i32, %c0_i32_0 : i32, i32, i32
  }
  func.func @transform_1(%arg0: i32) -> (i32, i32, i32) {
    %c0_i32 = arith.constant 0 : i32
    %c0_i32_0 = arith.constant 0 : i32
    %c0_i32_1 = arith.constant 0 : i32
    return %arg0, %c0_i32, %c0_i32_0 : i32, i32, i32
  }
  func.func @transform_2(%arg0: i32) -> (i32, i32, i32) {
    %c0_i32 = arith.constant 0 : i32
    %c0_i32_0 = arith.constant 0 : i32
    %c0_i32_1 = arith.constant 0 : i32
    return %arg0, %c0_i32, %c0_i32_0 : i32, i32, i32
  }
  func.func @transform_3(%arg0: i32) -> (i32, i32) {
    %c0_i32 = arith.constant 0 : i32
    %c0_i32_0 = arith.constant 0 : i32
    %c0_i32_1 = arith.constant 0 : i32
    return %c0_i32, %c0_i32_0 : i32, i32
  }
  func.func @transform_4(%arg0: i32) -> (i32, i32, i32) {
    %c0_i32 = arith.constant 0 : i32
    %c0_i32_0 = arith.constant 0 : i32
    %c0_i32_1 = arith.constant 0 : i32
    %c0_i32_2 = arith.constant 0 : i32
    return %c0_i32, %c0_i32_0, %c0_i32_1 : i32, i32, i32
  }
  func.func @transform_5(%arg0: i32) -> (i32, i32) {
    %c0_i32 = arith.constant 0 : i32
    %c0_i32_0 = arith.constant 0 : i32
    %c0_i32_1 = arith.constant 0 : i32
    return %c0_i32, %c0_i32_0 : i32, i32
  }
  func.func @transform_6(%arg0: i32) -> (i32, i32) {
    %c0_i32 = arith.constant 0 : i32
    %c0_i32_0 = arith.constant 0 : i32
    %c0_i32_1 = arith.constant 0 : i32
    return %c0_i32, %c0_i32_0 : i32, i32
  }
  func.func @transform_7(%arg0: i32) -> (i32, i32, i32) {
    %c0_i32 = arith.constant 0 : i32
    %c0_i32_0 = arith.constant 0 : i32
    %c0_i32_1 = arith.constant 0 : i32
    %c0_i32_2 = arith.constant 0 : i32
    return %c0_i32, %c0_i32_0, %c0_i32_1 : i32, i32, i32
  }
  func.func @transform_8(%arg0: i32) -> (i32, i32) {
    %c0_i32 = arith.constant 0 : i32
    %c0_i32_0 = arith.constant 0 : i32
    %c0_i32_1 = arith.constant 0 : i32
    return %c0_i32, %c0_i32_0 : i32, i32
  }
  func.func @transform_9(%arg0: i32) -> (i32, i32) {
    %c0_i32 = arith.constant 0 : i32
    %c0_i32_0 = arith.constant 0 : i32
    %c0_i32_1 = arith.constant 0 : i32
    return %c0_i32, %c0_i32_0 : i32, i32
  }
  func.func @transform_10(%arg0: i32) -> (i32, i32) {
    %c0_i32 = arith.constant 0 : i32
    %c0_i32_0 = arith.constant 0 : i32
    %c0_i32_1 = arith.constant 0 : i32
    return %c0_i32, %c0_i32_0 : i32, i32
  }
  func.func @transform_11(%arg0: i32) -> (i32, i32) {
    %c0_i32 = arith.constant 0 : i32
    %c0_i32_0 = arith.constant 0 : i32
    %c0_i32_1 = arith.constant 0 : i32
    return %c0_i32, %c0_i32_0 : i32, i32
  }
  func.func @transform_12(%arg0: i32) -> (i32, i32) {
    %c0_i32 = arith.constant 0 : i32
    %c0_i32_0 = arith.constant 0 : i32
    %c0_i32_1 = arith.constant 0 : i32
    return %c0_i32, %c0_i32_0 : i32, i32
  }
  func.func @transform_13(%arg0: i32) -> (i32, i32) {
    %c0_i32 = arith.constant 0 : i32
    %c0_i32_0 = arith.constant 0 : i32
    %c0_i32_1 = arith.constant 0 : i32
    return %c0_i32, %c0_i32_0 : i32, i32
  }
  func.func @transform_14(%arg0: i32) -> (i32, i32, i32) {
    %c0_i32 = arith.constant 0 : i32
    %c0_i32_0 = arith.constant 0 : i32
    %c0_i32_1 = arith.constant 0 : i32
    return %arg0, %c0_i32, %c0_i32_0 : i32, i32, i32
  }
}

module attributes {stable_mosaic.version = 11 : i64} {
  func.func @_kv_path_kernel(%arg0: i32, %arg1: i32, %arg2: memref<1x16x32xf32, #tpu.memory_space<vmem>>, %arg3: memref<1x8x32xf32, #tpu.memory_space<vmem>>, %arg4: memref<1x16x8xbf16, #tpu.memory_space<vmem>>, %arg5: memref<2x32xf32, #tpu.memory_space<vmem>>, %arg6: memref<4x32x32xbf16, #tpu.memory_space<vmem>>, %arg7: memref<4x32xf32, #tpu.memory_space<vmem>>, %arg8: memref<2x32xf32, #tpu.memory_space<vmem>>, %arg9: memref<32x64xbf16, #tpu.memory_space<vmem>>, %arg10: memref<1x64xf32, #tpu.memory_space<vmem>>, %arg11: memref<64x32xbf16, #tpu.memory_space<vmem>>, %arg12: memref<1x32xf32, #tpu.memory_space<vmem>>, %arg13: memref<1x16x32xf32, #tpu.memory_space<vmem>>) attributes {dimension_semantics = [#tpu.dimension_semantics<parallel>, #tpu.dimension_semantics<parallel>], iteration_bounds = array<i64: 2, 1>, scalar_prefetch = 0 : i64, scratch_operands = 0 : i64, tpu.core_type = #tpu.core_type<tc>, window_params = [{transform_indices = @transform_0, window_bounds = array<i64: 1, 16, 32>}, {transform_indices = @transform_1, window_bounds = array<i64: 1, 8, 32>}, {transform_indices = @transform_2, window_bounds = array<i64: 1, 16, 8>}, {pipeline_mode = #tpu.pipeline_mode<synchronous>, transform_indices = @transform_3, window_bounds = array<i64: 2, 32>}, {pipeline_mode = #tpu.pipeline_mode<synchronous>, transform_indices = @transform_4, window_bounds = array<i64: 4, 32, 32>}, {pipeline_mode = #tpu.pipeline_mode<synchronous>, transform_indices = @transform_5, window_bounds = array<i64: 4, 32>}, {pipeline_mode = #tpu.pipeline_mode<synchronous>, transform_indices = @transform_6, window_bounds = array<i64: 2, 32>}, {pipeline_mode = #tpu.pipeline_mode<synchronous>, transform_indices = @transform_7, window_bounds = array<i64: 32, 64>}, {pipeline_mode = #tpu.pipeline_mode<synchronous>, transform_indices = @transform_8, window_bounds = array<i64: 1, 64>}, {pipeline_mode = #tpu.pipeline_mode<synchronous>, transform_indices = @transform_9, window_bounds = array<i64: 64, 32>}, {pipeline_mode = #tpu.pipeline_mode<synchronous>, transform_indices = @transform_10, window_bounds = array<i64: 1, 32>}, {transform_indices = @transform_11, window_bounds = array<i64: 1, 16, 32>}]} {
    %c0 = arith.constant 0 : index
    %c0_0 = arith.constant 0 : index
    %c0_1 = arith.constant 0 : index
    %0 = vector.load %arg2[%c0, %c0_0, %c0_1] : memref<1x16x32xf32, #tpu.memory_space<vmem>>, vector<1x16x32xf32>
    %1 = vector.shape_cast %0 : vector<1x16x32xf32> to vector<16x32xf32>
    %c0_2 = arith.constant 0 : index
    %c0_3 = arith.constant 0 : index
    %c0_4 = arith.constant 0 : index
    %2 = vector.load %arg3[%c0_2, %c0_3, %c0_4] : memref<1x8x32xf32, #tpu.memory_space<vmem>>, vector<1x8x32xf32>
    %3 = vector.shape_cast %2 : vector<1x8x32xf32> to vector<8x32xf32>
    %c0_5 = arith.constant 0 : index
    %c0_6 = arith.constant 0 : index
    %c0_7 = arith.constant 0 : index
    %4 = vector.load %arg4[%c0_5, %c0_6, %c0_7] : memref<1x16x8xbf16, #tpu.memory_space<vmem>>, vector<1x16x8xbf16>
    %5 = vector.shape_cast %4 : vector<1x16x8xbf16> to vector<16x8xbf16>
    %c0_8 = arith.constant 0 : index
    %c0_9 = arith.constant 0 : index
    %6 = vector.load %arg5[%c0_8, %c0_9] : memref<2x32xf32, #tpu.memory_space<vmem>>, vector<2x32xf32>
    %c0_10 = arith.constant 0 : index
    %c0_11 = arith.constant 0 : index
    %c0_12 = arith.constant 0 : index
    %7 = vector.load %arg6[%c0_10, %c0_11, %c0_12] : memref<4x32x32xbf16, #tpu.memory_space<vmem>>, vector<4x32x32xbf16>
    %c0_13 = arith.constant 0 : index
    %c0_14 = arith.constant 0 : index
    %8 = vector.load %arg7[%c0_13, %c0_14] : memref<4x32xf32, #tpu.memory_space<vmem>>, vector<4x32xf32>
    %9 = vector.extract_strided_slice %6 {offsets = [0, 0], sizes = [1, 32], strides = [1, 1]} : vector<2x32xf32> to vector<1x32xf32>
    %10 = vector.extract_strided_slice %6 {offsets = [1, 0], sizes = [1, 32], strides = [1, 1]} : vector<2x32xf32> to vector<1x32xf32>
    %cst = arith.constant dense<0.000000e+00> : vector<16xf32>
    %11 = vector.multi_reduction <add>, %1, %cst [1] : vector<16x32xf32> to vector<16xf32>
    %12 = vector.shape_cast %11 : vector<16xf32> to vector<16x1xf32>
    %cst_15 = arith.constant 3.200000e+01 : f32
    %13 = vector.broadcast %cst_15 : f32 to vector<16x1xf32>
    %14 = arith.divf %12, %13 : vector<16x1xf32>
    %15 = vector.broadcast %14 : vector<16x1xf32> to vector<16x32xf32>
    %16 = arith.subf %1, %15 : vector<16x32xf32>
    %17 = arith.mulf %16, %16 : vector<16x32xf32>
    %cst_16 = arith.constant dense<0.000000e+00> : vector<16xf32>
    %18 = vector.multi_reduction <add>, %17, %cst_16 [1] : vector<16x32xf32> to vector<16xf32>
    %19 = vector.shape_cast %18 : vector<16xf32> to vector<16x1xf32>
    %cst_17 = arith.constant 3.200000e+01 : f32
    %20 = vector.broadcast %cst_17 : f32 to vector<16x1xf32>
    %21 = arith.divf %19, %20 : vector<16x1xf32>
    %22 = vector.broadcast %14 : vector<16x1xf32> to vector<16x32xf32>
    %23 = arith.subf %1, %22 : vector<16x32xf32>
    %cst_18 = arith.constant 9.99999974E-6 : f32
    %24 = vector.broadcast %cst_18 : f32 to vector<16x1xf32>
    %25 = arith.addf %21, %24 : vector<16x1xf32>
    %26 = math.rsqrt %25 : vector<16x1xf32>
    %27 = vector.broadcast %26 : vector<16x1xf32> to vector<16x32xf32>
    %28 = arith.mulf %23, %27 : vector<16x32xf32>
    %29 = vector.broadcast %9 : vector<1x32xf32> to vector<16x32xf32>
    %30 = arith.mulf %28, %29 : vector<16x32xf32>
    %31 = vector.broadcast %10 : vector<1x32xf32> to vector<16x32xf32>
    %32 = arith.addf %30, %31 : vector<16x32xf32>
    %33 = arith.truncf %32 : vector<16x32xf32> to vector<16x32xbf16>
    %34 = arith.truncf %3 : vector<8x32xf32> to vector<8x32xbf16>
    %35 = vector.extract_strided_slice %7 {offsets = [0, 0, 0], sizes = [1, 32, 32], strides = [1, 1, 1]} : vector<4x32x32xbf16> to vector<1x32x32xbf16>
    %36 = vector.shape_cast %35 : vector<1x32x32xbf16> to vector<32x32xbf16>
    %cst_19 = arith.constant dense<0.000000e+00> : vector<16x32xf32>
    %37 = tpu.matmul %33, %36, %cst_19 {dimension_numbers = #tpu.dot_dimension_numbers<[1], [0], [0], [1], [0, 0, 1, 1], [], []>} : vector<16x32xbf16>, vector<32x32xbf16>, vector<16x32xf32> -> vector<16x32xf32>
    %38 = vector.extract_strided_slice %8 {offsets = [0, 0], sizes = [1, 32], strides = [1, 1]} : vector<4x32xf32> to vector<1x32xf32>
    %39 = vector.broadcast %38 : vector<1x32xf32> to vector<16x32xf32>
    %40 = arith.addf %37, %39 : vector<16x32xf32>
    %41 = vector.extract_strided_slice %7 {offsets = [1, 0, 0], sizes = [1, 32, 32], strides = [1, 1, 1]} : vector<4x32x32xbf16> to vector<1x32x32xbf16>
    %42 = vector.shape_cast %41 : vector<1x32x32xbf16> to vector<32x32xbf16>
    %cst_20 = arith.constant dense<0.000000e+00> : vector<8x32xf32>
    %43 = tpu.matmul %34, %42, %cst_20 {dimension_numbers = #tpu.dot_dimension_numbers<[1], [0], [0], [1], [0, 0, 1, 1], [], []>} : vector<8x32xbf16>, vector<32x32xbf16>, vector<8x32xf32> -> vector<8x32xf32>
    %44 = vector.extract_strided_slice %8 {offsets = [1, 0], sizes = [1, 32], strides = [1, 1]} : vector<4x32xf32> to vector<1x32xf32>
    %45 = vector.broadcast %44 : vector<1x32xf32> to vector<8x32xf32>
    %46 = arith.addf %43, %45 : vector<8x32xf32>
    %47 = vector.extract_strided_slice %7 {offsets = [2, 0, 0], sizes = [1, 32, 32], strides = [1, 1, 1]} : vector<4x32x32xbf16> to vector<1x32x32xbf16>
    %48 = vector.shape_cast %47 : vector<1x32x32xbf16> to vector<32x32xbf16>
    %cst_21 = arith.constant dense<0.000000e+00> : vector<8x32xf32>
    %49 = tpu.matmul %34, %48, %cst_21 {dimension_numbers = #tpu.dot_dimension_numbers<[1], [0], [0], [1], [0, 0, 1, 1], [], []>} : vector<8x32xbf16>, vector<32x32xbf16>, vector<8x32xf32> -> vector<8x32xf32>
    %50 = vector.extract_strided_slice %8 {offsets = [2, 0], sizes = [1, 32], strides = [1, 1]} : vector<4x32xf32> to vector<1x32xf32>
    %51 = vector.broadcast %50 : vector<1x32xf32> to vector<8x32xf32>
    %52 = arith.addf %49, %51 : vector<8x32xf32>
    %53 = arith.extf %5 : vector<16x8xbf16> to vector<16x8xf32>
    %54 = vector.extract_strided_slice %40 {offsets = [0, 0], sizes = [16, 16], strides = [1, 1]} : vector<16x32xf32> to vector<16x16xf32>
    %55 = arith.truncf %54 : vector<16x16xf32> to vector<16x16xbf16>
    %56 = vector.extract_strided_slice %46 {offsets = [0, 0], sizes = [8, 16], strides = [1, 1]} : vector<8x32xf32> to vector<8x16xf32>
    %57 = arith.truncf %56 : vector<8x16xf32> to vector<8x16xbf16>
    %58 = vector.extract_strided_slice %52 {offsets = [0, 0], sizes = [8, 16], strides = [1, 1]} : vector<8x32xf32> to vector<8x16xf32>
    %59 = arith.truncf %58 : vector<8x16xf32> to vector<8x16xbf16>
    %cst_22 = arith.constant dense<0.000000e+00> : vector<16x8xf32>
    %60 = tpu.matmul %55, %57, %cst_22 {dimension_numbers = #tpu.dot_dimension_numbers<[1], [1], [0], [0], [0, 0, 1, 0], [], []>} : vector<16x16xbf16>, vector<8x16xbf16>, vector<16x8xf32> -> vector<16x8xf32>
    %cst_23 = arith.constant 2.500000e-01 : f32
    %61 = vector.broadcast %cst_23 : f32 to vector<16x8xf32>
    %62 = arith.mulf %60, %61 : vector<16x8xf32>
    %63 = arith.addf %62, %53 : vector<16x8xf32>
    %cst_24 = arith.constant dense<0xFF800000> : vector<16xf32>
    %64 = vector.multi_reduction <maximumf>, %63, %cst_24 [1] : vector<16x8xf32> to vector<16xf32>
    %65 = vector.shape_cast %64 : vector<16xf32> to vector<16x1xf32>
    %66 = vector.broadcast %65 : vector<16x1xf32> to vector<16x8xf32>
    %67 = arith.subf %63, %66 : vector<16x8xf32>
    %68 = math.exp %67 : vector<16x8xf32>
    %cst_25 = arith.constant dense<0.000000e+00> : vector<16xf32>
    %69 = vector.multi_reduction <add>, %68, %cst_25 [1] : vector<16x8xf32> to vector<16xf32>
    %70 = vector.shape_cast %69 : vector<16xf32> to vector<16x1xf32>
    %71 = tpu.reciprocal %70 {approx = true} : vector<16x1xf32> -> vector<16x1xf32>
    %72 = vector.broadcast %71 : vector<16x1xf32> to vector<16x8xf32>
    %73 = arith.mulf %68, %72 : vector<16x8xf32>
    %74 = arith.truncf %73 : vector<16x8xf32> to vector<16x8xbf16>
    %cst_26 = arith.constant dense<0.000000e+00> : vector<16x16xf32>
    %75 = tpu.matmul %74, %59, %cst_26 {dimension_numbers = #tpu.dot_dimension_numbers<[1], [0], [0], [1], [0, 0, 1, 1], [], []>} : vector<16x8xbf16>, vector<8x16xbf16>, vector<16x16xf32> -> vector<16x16xf32>
    %76 = vector.extract_strided_slice %40 {offsets = [0, 16], sizes = [16, 16], strides = [1, 1]} : vector<16x32xf32> to vector<16x16xf32>
    %77 = arith.truncf %76 : vector<16x16xf32> to vector<16x16xbf16>
    %78 = vector.extract_strided_slice %46 {offsets = [0, 16], sizes = [8, 16], strides = [1, 1]} : vector<8x32xf32> to vector<8x16xf32>
    %79 = arith.truncf %78 : vector<8x16xf32> to vector<8x16xbf16>
    %80 = vector.extract_strided_slice %52 {offsets = [0, 16], sizes = [8, 16], strides = [1, 1]} : vector<8x32xf32> to vector<8x16xf32>
    %81 = arith.truncf %80 : vector<8x16xf32> to vector<8x16xbf16>
    %cst_27 = arith.constant dense<0.000000e+00> : vector<16x8xf32>
    %82 = tpu.matmul %77, %79, %cst_27 {dimension_numbers = #tpu.dot_dimension_numbers<[1], [1], [0], [0], [0, 0, 1, 0], [], []>} : vector<16x16xbf16>, vector<8x16xbf16>, vector<16x8xf32> -> vector<16x8xf32>
    %cst_28 = arith.constant 2.500000e-01 : f32
    %83 = vector.broadcast %cst_28 : f32 to vector<16x8xf32>
    %84 = arith.mulf %82, %83 : vector<16x8xf32>
    %85 = arith.addf %84, %53 : vector<16x8xf32>
    %cst_29 = arith.constant dense<0xFF800000> : vector<16xf32>
    %86 = vector.multi_reduction <maximumf>, %85, %cst_29 [1] : vector<16x8xf32> to vector<16xf32>
    %87 = vector.shape_cast %86 : vector<16xf32> to vector<16x1xf32>
    %88 = vector.broadcast %87 : vector<16x1xf32> to vector<16x8xf32>
    %89 = arith.subf %85, %88 : vector<16x8xf32>
    %90 = math.exp %89 : vector<16x8xf32>
    %cst_30 = arith.constant dense<0.000000e+00> : vector<16xf32>
    %91 = vector.multi_reduction <add>, %90, %cst_30 [1] : vector<16x8xf32> to vector<16xf32>
    %92 = vector.shape_cast %91 : vector<16xf32> to vector<16x1xf32>
    %93 = tpu.reciprocal %92 {approx = true} : vector<16x1xf32> -> vector<16x1xf32>
    %94 = vector.broadcast %93 : vector<16x1xf32> to vector<16x8xf32>
    %95 = arith.mulf %90, %94 : vector<16x8xf32>
    %96 = arith.truncf %95 : vector<16x8xf32> to vector<16x8xbf16>
    %cst_31 = arith.constant dense<0.000000e+00> : vector<16x16xf32>
    %97 = tpu.matmul %96, %81, %cst_31 {dimension_numbers = #tpu.dot_dimension_numbers<[1], [0], [0], [1], [0, 0, 1, 1], [], []>} : vector<16x8xbf16>, vector<8x16xbf16>, vector<16x16xf32> -> vector<16x16xf32>
    %98 = tpu.concatenate %75, %97 in 1 : vector<16x16xf32>, vector<16x16xf32> -> vector<16x32xf32>
    %99 = arith.truncf %98 : vector<16x32xf32> to vector<16x32xbf16>
    %100 = vector.extract_strided_slice %7 {offsets = [3, 0, 0], sizes = [1, 32, 32], strides = [1, 1, 1]} : vector<4x32x32xbf16> to vector<1x32x32xbf16>
    %101 = vector.shape_cast %100 : vector<1x32x32xbf16> to vector<32x32xbf16>
    %cst_32 = arith.constant dense<0.000000e+00> : vector<16x32xf32>
    %102 = tpu.matmul %99, %101, %cst_32 {dimension_numbers = #tpu.dot_dimension_numbers<[1], [0], [0], [1], [0, 0, 1, 1], [], []>} : vector<16x32xbf16>, vector<32x32xbf16>, vector<16x32xf32> -> vector<16x32xf32>
    %103 = vector.extract_strided_slice %8 {offsets = [3, 0], sizes = [1, 32], strides = [1, 1]} : vector<4x32xf32> to vector<1x32xf32>
    %104 = vector.broadcast %103 : vector<1x32xf32> to vector<16x32xf32>
    %105 = arith.addf %102, %104 : vector<16x32xf32>
    %106 = arith.addf %1, %105 : vector<16x32xf32>
    %c0_33 = arith.constant 0 : index
    %c0_34 = arith.constant 0 : index
    %107 = vector.load %arg8[%c0_33, %c0_34] : memref<2x32xf32, #tpu.memory_space<vmem>>, vector<2x32xf32>
    %c0_35 = arith.constant 0 : index
    %c0_36 = arith.constant 0 : index
    %108 = vector.load %arg9[%c0_35, %c0_36] : memref<32x64xbf16, #tpu.memory_space<vmem>>, vector<32x64xbf16>
    %c0_37 = arith.constant 0 : index
    %c0_38 = arith.constant 0 : index
    %109 = vector.load %arg10[%c0_37, %c0_38] : memref<1x64xf32, #tpu.memory_space<vmem>>, vector<1x64xf32>
    %c0_39 = arith.constant 0 : index
    %c0_40 = arith.constant 0 : index
    %110 = vector.load %arg11[%c0_39, %c0_40] : memref<64x32xbf16, #tpu.memory_space<vmem>>, vector<64x32xbf16>
    %c0_41 = arith.constant 0 : index
    %c0_42 = arith.constant 0 : index
    %111 = vector.load %arg12[%c0_41, %c0_42] : memref<1x32xf32, #tpu.memory_space<vmem>>, vector<1x32xf32>
    %112 = vector.extract_strided_slice %107 {offsets = [0, 0], sizes = [1, 32], strides = [1, 1]} : vector<2x32xf32> to vector<1x32xf32>
    %113 = vector.extract_strided_slice %107 {offsets = [1, 0], sizes = [1, 32], strides = [1, 1]} : vector<2x32xf32> to vector<1x32xf32>
    %cst_43 = arith.constant dense<0.000000e+00> : vector<16xf32>
    %114 = vector.multi_reduction <add>, %106, %cst_43 [1] : vector<16x32xf32> to vector<16xf32>
    %115 = vector.shape_cast %114 : vector<16xf32> to vector<16x1xf32>
    %cst_44 = arith.constant 3.200000e+01 : f32
    %116 = vector.broadcast %cst_44 : f32 to vector<16x1xf32>
    %117 = arith.divf %115, %116 : vector<16x1xf32>
    %118 = vector.broadcast %117 : vector<16x1xf32> to vector<16x32xf32>
    %119 = arith.subf %106, %118 : vector<16x32xf32>
    %120 = arith.mulf %119, %119 : vector<16x32xf32>
    %cst_45 = arith.constant dense<0.000000e+00> : vector<16xf32>
    %121 = vector.multi_reduction <add>, %120, %cst_45 [1] : vector<16x32xf32> to vector<16xf32>
    %122 = vector.shape_cast %121 : vector<16xf32> to vector<16x1xf32>
    %cst_46 = arith.constant 3.200000e+01 : f32
    %123 = vector.broadcast %cst_46 : f32 to vector<16x1xf32>
    %124 = arith.divf %122, %123 : vector<16x1xf32>
    %125 = vector.broadcast %117 : vector<16x1xf32> to vector<16x32xf32>
    %126 = arith.subf %106, %125 : vector<16x32xf32>
    %cst_47 = arith.constant 9.99999974E-6 : f32
    %127 = vector.broadcast %cst_47 : f32 to vector<16x1xf32>
    %128 = arith.addf %124, %127 : vector<16x1xf32>
    %129 = math.rsqrt %128 : vector<16x1xf32>
    %130 = vector.broadcast %129 : vector<16x1xf32> to vector<16x32xf32>
    %131 = arith.mulf %126, %130 : vector<16x32xf32>
    %132 = vector.broadcast %112 : vector<1x32xf32> to vector<16x32xf32>
    %133 = arith.mulf %131, %132 : vector<16x32xf32>
    %134 = vector.broadcast %113 : vector<1x32xf32> to vector<16x32xf32>
    %135 = arith.addf %133, %134 : vector<16x32xf32>
    %136 = arith.truncf %135 : vector<16x32xf32> to vector<16x32xbf16>
    %cst_48 = arith.constant dense<0.000000e+00> : vector<16x64xf32>
    %137 = tpu.matmul %136, %108, %cst_48 {dimension_numbers = #tpu.dot_dimension_numbers<[1], [0], [0], [1], [0, 0, 1, 1], [], []>} : vector<16x32xbf16>, vector<32x64xbf16>, vector<16x64xf32> -> vector<16x64xf32>
    %138 = vector.broadcast %109 : vector<1x64xf32> to vector<16x64xf32>
    %139 = arith.addf %137, %138 : vector<16x64xf32>
    %140 = arith.mulf %139, %139 : vector<16x64xf32>
    %141 = arith.mulf %139, %140 : vector<16x64xf32>
    %cst_49 = arith.constant 4.471500e-02 : f32
    %142 = vector.broadcast %cst_49 : f32 to vector<16x64xf32>
    %143 = arith.mulf %142, %141 : vector<16x64xf32>
    %144 = arith.addf %139, %143 : vector<16x64xf32>
    %cst_50 = arith.constant 0.797884583 : f32
    %145 = vector.broadcast %cst_50 : f32 to vector<16x64xf32>
    %146 = arith.mulf %145, %144 : vector<16x64xf32>
    %147 = math.tanh %146 : vector<16x64xf32>
    %cst_51 = arith.constant 1.000000e+00 : f32
    %148 = vector.broadcast %cst_51 : f32 to vector<16x64xf32>
    %149 = arith.addf %148, %147 : vector<16x64xf32>
    %cst_52 = arith.constant 5.000000e-01 : f32
    %150 = vector.broadcast %cst_52 : f32 to vector<16x64xf32>
    %151 = arith.mulf %150, %149 : vector<16x64xf32>
    %152 = arith.mulf %139, %151 : vector<16x64xf32>
    %153 = arith.truncf %152 : vector<16x64xf32> to vector<16x64xbf16>
    %cst_53 = arith.constant dense<0.000000e+00> : vector<16x32xf32>
    %154 = tpu.matmul %153, %110, %cst_53 {dimension_numbers = #tpu.dot_dimension_numbers<[1], [0], [0], [1], [0, 0, 1, 1], [], []>} : vector<16x64xbf16>, vector<64x32xbf16>, vector<16x32xf32> -> vector<16x32xf32>
    %155 = arith.addf %106, %154 : vector<16x32xf32>
    %156 = vector.broadcast %111 : vector<1x32xf32> to vector<16x32xf32>
    %157 = arith.addf %155, %156 : vector<16x32xf32>
    %c0_54 = arith.constant 0 : index
    %c0_55 = arith.constant 0 : index
    %c0_56 = arith.constant 0 : index
    %158 = vector.load %arg13[%c0_54, %c0_55, %c0_56] : memref<1x16x32xf32, #tpu.memory_space<vmem>>, vector<1x16x32xf32>
    %159 = vector.shape_cast %158 : vector<1x16x32xf32> to vector<16x32xf32>
    %160 = vector.shape_cast %157 : vector<16x32xf32> to vector<1x16x32xf32>
    tpu.vector_store %arg13[%c0_54, %c0_55, %c0_56], %160 {strides = array<i32>} : memref<1x16x32xf32, #tpu.memory_space<vmem>>, vector<1x16x32xf32>,
    return
  }
  func.func @transform_0(%arg0: i32, %arg1: i32) -> (i32, i32, i32) {
    %c0_i32 = arith.constant 0 : i32
    %c0_i32_0 = arith.constant 0 : i32
    return %arg0, %arg1, %c0_i32 : i32, i32, i32
  }
  func.func @transform_1(%arg0: i32, %arg1: i32) -> (i32, i32, i32) {
    %c0_i32 = arith.constant 0 : i32
    %c0_i32_0 = arith.constant 0 : i32
    %c0_i32_1 = arith.constant 0 : i32
    return %arg0, %c0_i32, %c0_i32_0 : i32, i32, i32
  }
  func.func @transform_2(%arg0: i32, %arg1: i32) -> (i32, i32, i32) {
    %c0_i32 = arith.constant 0 : i32
    %c0_i32_0 = arith.constant 0 : i32
    return %arg0, %arg1, %c0_i32 : i32, i32, i32
  }
  func.func @transform_3(%arg0: i32, %arg1: i32) -> (i32, i32) {
    %c0_i32 = arith.constant 0 : i32
    %c0_i32_0 = arith.constant 0 : i32
    %c0_i32_1 = arith.constant 0 : i32
    return %c0_i32, %c0_i32_0 : i32, i32
  }
  func.func @transform_4(%arg0: i32, %arg1: i32) -> (i32, i32, i32) {
    %c0_i32 = arith.constant 0 : i32
    %c0_i32_0 = arith.constant 0 : i32
    %c0_i32_1 = arith.constant 0 : i32
    %c0_i32_2 = arith.constant 0 : i32
    return %c0_i32, %c0_i32_0, %c0_i32_1 : i32, i32, i32
  }
  func.func @transform_5(%arg0: i32, %arg1: i32) -> (i32, i32) {
    %c0_i32 = arith.constant 0 : i32
    %c0_i32_0 = arith.constant 0 : i32
    %c0_i32_1 = arith.constant 0 : i32
    return %c0_i32, %c0_i32_0 : i32, i32
  }
  func.func @transform_6(%arg0: i32, %arg1: i32) -> (i32, i32) {
    %c0_i32 = arith.constant 0 : i32
    %c0_i32_0 = arith.constant 0 : i32
    %c0_i32_1 = arith.constant 0 : i32
    return %c0_i32, %c0_i32_0 : i32, i32
  }
  func.func @transform_7(%arg0: i32, %arg1: i32) -> (i32, i32) {
    %c0_i32 = arith.constant 0 : i32
    %c0_i32_0 = arith.constant 0 : i32
    %c0_i32_1 = arith.constant 0 : i32
    return %c0_i32, %c0_i32_0 : i32, i32
  }
  func.func @transform_8(%arg0: i32, %arg1: i32) -> (i32, i32) {
    %c0_i32 = arith.constant 0 : i32
    %c0_i32_0 = arith.constant 0 : i32
    %c0_i32_1 = arith.constant 0 : i32
    return %c0_i32, %c0_i32_0 : i32, i32
  }
  func.func @transform_9(%arg0: i32, %arg1: i32) -> (i32, i32) {
    %c0_i32 = arith.constant 0 : i32
    %c0_i32_0 = arith.constant 0 : i32
    %c0_i32_1 = arith.constant 0 : i32
    return %c0_i32, %c0_i32_0 : i32, i32
  }
  func.func @transform_10(%arg0: i32, %arg1: i32) -> (i32, i32) {
    %c0_i32 = arith.constant 0 : i32
    %c0_i32_0 = arith.constant 0 : i32
    %c0_i32_1 = arith.constant 0 : i32
    return %c0_i32, %c0_i32_0 : i32, i32
  }
  func.func @transform_11(%arg0: i32, %arg1: i32) -> (i32, i32, i32) {
    %c0_i32 = arith.constant 0 : i32
    %c0_i32_0 = arith.constant 0 : i32
    return %arg0, %arg1, %c0_i32 : i32, i32, i32
  }
}

module attributes {stable_mosaic.version = 11 : i64} {
  func.func @_final_pred_kernel(%arg0: i32, %arg1: memref<1x8x32xf32, #tpu.memory_space<vmem>>, %arg2: memref<1x16x32xf32, #tpu.memory_space<vmem>>, %arg3: memref<32x32xbf16, #tpu.memory_space<vmem>>, %arg4: memref<1x32xf32, #tpu.memory_space<vmem>>, %arg5: memref<32x1xbf16, #tpu.memory_space<vmem>>, %arg6: memref<1x1xf32, #tpu.memory_space<vmem>>, %arg7: memref<1x8x16xf32, #tpu.memory_space<vmem>>, %arg8: memref<1x8x1xf32, #tpu.memory_space<vmem>>) attributes {dimension_semantics = [#tpu.dimension_semantics<parallel>], iteration_bounds = array<i64: 2>, scalar_prefetch = 0 : i64, scratch_operands = 0 : i64, tpu.core_type = #tpu.core_type<tc>, window_params = [{transform_indices = @transform_0, window_bounds = array<i64: 1, 8, 32>}, {transform_indices = @transform_1, window_bounds = array<i64: 1, 16, 32>}, {pipeline_mode = #tpu.pipeline_mode<synchronous>, transform_indices = @transform_2, window_bounds = array<i64: 32, 32>}, {pipeline_mode = #tpu.pipeline_mode<synchronous>, transform_indices = @transform_3, window_bounds = array<i64: 1, 32>}, {pipeline_mode = #tpu.pipeline_mode<synchronous>, transform_indices = @transform_4, window_bounds = array<i64: 32, 1>}, {pipeline_mode = #tpu.pipeline_mode<synchronous>, transform_indices = @transform_5, window_bounds = array<i64: 1, 1>}, {transform_indices = @transform_6, window_bounds = array<i64: 1, 8, 16>}, {transform_indices = @transform_7, window_bounds = array<i64: 1, 8, 1>}]} {
    %c0 = arith.constant 0 : index
    %c0_0 = arith.constant 0 : index
    %c0_1 = arith.constant 0 : index
    %0 = vector.load %arg1[%c0, %c0_0, %c0_1] : memref<1x8x32xf32, #tpu.memory_space<vmem>>, vector<1x8x32xf32>
    %1 = vector.shape_cast %0 : vector<1x8x32xf32> to vector<8x32xf32>
    %c0_2 = arith.constant 0 : index
    %c0_3 = arith.constant 0 : index
    %c0_4 = arith.constant 0 : index
    %2 = vector.load %arg2[%c0_2, %c0_3, %c0_4] : memref<1x16x32xf32, #tpu.memory_space<vmem>>, vector<1x16x32xf32>
    %3 = vector.shape_cast %2 : vector<1x16x32xf32> to vector<16x32xf32>
    %4 = arith.truncf %1 : vector<8x32xf32> to vector<8x32xbf16>
    %c0_5 = arith.constant 0 : index
    %c0_6 = arith.constant 0 : index
    %5 = vector.load %arg3[%c0_5, %c0_6] : memref<32x32xbf16, #tpu.memory_space<vmem>>, vector<32x32xbf16>
    %cst = arith.constant dense<0.000000e+00> : vector<8x32xf32>
    %6 = tpu.matmul %4, %5, %cst {dimension_numbers = #tpu.dot_dimension_numbers<[1], [0], [0], [1], [0, 0, 1, 1], [], []>} : vector<8x32xbf16>, vector<32x32xbf16>, vector<8x32xf32> -> vector<8x32xf32>
    %c0_7 = arith.constant 0 : index
    %c0_8 = arith.constant 0 : index
    %7 = vector.load %arg4[%c0_7, %c0_8] : memref<1x32xf32, #tpu.memory_space<vmem>>, vector<1x32xf32>
    %8 = vector.broadcast %7 : vector<1x32xf32> to vector<8x32xf32>
    %9 = arith.addf %6, %8 : vector<8x32xf32>
    %10 = arith.truncf %9 : vector<8x32xf32> to vector<8x32xbf16>
    %11 = arith.truncf %3 : vector<16x32xf32> to vector<16x32xbf16>
    %cst_9 = arith.constant dense<0.000000e+00> : vector<8x16xf32>
    %12 = tpu.matmul %10, %11, %cst_9 {dimension_numbers = #tpu.dot_dimension_numbers<[1], [1], [0], [0], [0, 0, 1, 0], [], []>} : vector<8x32xbf16>, vector<16x32xbf16>, vector<8x16xf32> -> vector<8x16xf32>
    %c0_10 = arith.constant 0 : index
    %c0_11 = arith.constant 0 : index
    %c0_12 = arith.constant 0 : index
    %13 = vector.load %arg7[%c0_10, %c0_11, %c0_12] : memref<1x8x16xf32, #tpu.memory_space<vmem>>, vector<1x8x16xf32>
    %14 = vector.shape_cast %13 : vector<1x8x16xf32> to vector<8x16xf32>
    %15 = vector.shape_cast %12 : vector<8x16xf32> to vector<1x8x16xf32>
    tpu.vector_store %arg7[%c0_10, %c0_11, %c0_12], %15 {strides = array<i32>} : memref<1x8x16xf32, #tpu.memory_space<vmem>>, vector<1x8x16xf32>,
    %c0_13 = arith.constant 0 : index
    %c0_14 = arith.constant 0 : index
    %16 = vector.load %arg5[%c0_13, %c0_14] : memref<32x1xbf16, #tpu.memory_space<vmem>>, vector<32x1xbf16>
    %cst_15 = arith.constant dense<0.000000e+00> : vector<8x1xf32>
    %17 = tpu.matmul %4, %16, %cst_15 {dimension_numbers = #tpu.dot_dimension_numbers<[1], [0], [0], [1], [0, 0, 1, 1], [], []>} : vector<8x32xbf16>, vector<32x1xbf16>, vector<8x1xf32> -> vector<8x1xf32>
    %c0_16 = arith.constant 0 : index
    %c0_17 = arith.constant 0 : index
    %18 = vector.load %arg6[%c0_16, %c0_17] : memref<1x1xf32, #tpu.memory_space<vmem>>, vector<1x1xf32>
    %19 = vector.broadcast %18 : vector<1x1xf32> to vector<8x1xf32>
    %20 = arith.addf %17, %19 : vector<8x1xf32>
    %c0_18 = arith.constant 0 : index
    %c0_19 = arith.constant 0 : index
    %c0_20 = arith.constant 0 : index
    %21 = vector.load %arg8[%c0_18, %c0_19, %c0_20] : memref<1x8x1xf32, #tpu.memory_space<vmem>>, vector<1x8x1xf32>
    %22 = vector.shape_cast %21 : vector<1x8x1xf32> to vector<8x1xf32>
    %23 = vector.shape_cast %20 : vector<8x1xf32> to vector<1x8x1xf32>
    tpu.vector_store %arg8[%c0_18, %c0_19, %c0_20], %23 {strides = array<i32>} : memref<1x8x1xf32, #tpu.memory_space<vmem>>, vector<1x8x1xf32>,
    return
  }
  func.func @transform_0(%arg0: i32) -> (i32, i32, i32) {
    %c0_i32 = arith.constant 0 : i32
    %c0_i32_0 = arith.constant 0 : i32
    %c0_i32_1 = arith.constant 0 : i32
    return %arg0, %c0_i32, %c0_i32_0 : i32, i32, i32
  }
  func.func @transform_1(%arg0: i32) -> (i32, i32, i32) {
    %c0_i32 = arith.constant 0 : i32
    %c0_i32_0 = arith.constant 0 : i32
    %c0_i32_1 = arith.constant 0 : i32
    return %arg0, %c0_i32, %c0_i32_0 : i32, i32, i32
  }
  func.func @transform_2(%arg0: i32) -> (i32, i32) {
    %c0_i32 = arith.constant 0 : i32
    %c0_i32_0 = arith.constant 0 : i32
    %c0_i32_1 = arith.constant 0 : i32
    return %c0_i32, %c0_i32_0 : i32, i32
  }
  func.func @transform_3(%arg0: i32) -> (i32, i32) {
    %c0_i32 = arith.constant 0 : i32
    %c0_i32_0 = arith.constant 0 : i32
    %c0_i32_1 = arith.constant 0 : i32
    return %c0_i32, %c0_i32_0 : i32, i32
  }
  func.func @transform_4(%arg0: i32) -> (i32, i32) {
    %c0_i32 = arith.constant 0 : i32
    %c0_i32_0 = arith.constant 0 : i32
    %c0_i32_1 = arith.constant 0 : i32
    return %c0_i32, %c0_i32_0 : i32, i32
  }
  func.func @transform_5(%arg0: i32) -> (i32, i32) {
    %c0_i32 = arith.constant 0 : i32
    %c0_i32_0 = arith.constant 0 : i32
    %c0_i32_1 = arith.constant 0 : i32
    return %c0_i32, %c0_i32_0 : i32, i32
  }
  func.func @transform_6(%arg0: i32) -> (i32, i32, i32) {
    %c0_i32 = arith.constant 0 : i32
    %c0_i32_0 = arith.constant 0 : i32
    %c0_i32_1 = arith.constant 0 : i32
    return %arg0, %c0_i32, %c0_i32_0 : i32, i32, i32
  }
  func.func @transform_7(%arg0: i32) -> (i32, i32, i32) {
    %c0_i32 = arith.constant 0 : i32
    %c0_i32_0 = arith.constant 0 : i32
    %c0_i32_1 = arith.constant 0 : i32
    return %arg0, %c0_i32, %c0_i32_0 : i32, i32, i32
  }
}

</mosaic_0001>

<llo_original>
// kernel: maskformer_decoder_forward.10
$region0: #{maskformer_decoder_forward.10}
  #allocation0 [shape = 'u32[]', space=smem, size = 0x4, offset = 0x4, fixed_abs, tag = 'smem constant byte address 0x4 - core index']
  #allocation1 [shape = 'u32[72,128]{1,0:T(1,128)}', space=vmem, size = 0x9000, scoped, tag = 'internal scratch']
  %s0 = inlined_call_operand.vmem [shape: f32[2,8,32], index: 0, kind: input, shape index: {}]
  %s1 = inlined_call_operand.vmem [shape: f32[2,16,32], index: 1, kind: input, shape index: {}]
  %s2 = inlined_call_operand.vmem [shape: bf16[32,32], index: 2, kind: input, shape index: {}]
  %s3 = inlined_call_operand.vmem [shape: f32[1,32], index: 3, kind: input, shape index: {}]
  %s4 = inlined_call_operand.vmem [shape: bf16[2,8,16], index: 4, kind: output, shape index: {0}]
  %s5 = inlined_call_operand.vmem [shape: bf16[2,16,8], index: 5, kind: output, shape index: {1}]
  %6 = xla_tuple %s4, %s5
  %s7 = sld [smem:[#allocation0]]
  $region57: #{maskformer_decoder_forward.10} parent=0
    _
  %s9 = ssub.s32 1, %s7
  %s10 = scalar_select 0, %s9, %s7
  loop: start=0, step=1, limit=4
  $region2: #{maskformer_decoder_forward.10} parent=0 // loop_pre_header
    _
  $region3: #{maskformer_decoder_forward.10} parent=0 // loop_header
    %s12 = sphi 0, %s16
    %p13 = scmp.ge.s32.totalorder %s12, 4
    %s22 = sphi 0, %s24
    %s25 = sphi 0, %s22
    %s26 = sphi 0, %s25
    %s42 = sphi 0, %s26
    %s48 = sphi 0, %s50
    %s51 = sphi 0, %s48
    %s52 = sphi 0, %s51
    %s68 = sphi 0, %s52
    %s72 = sphi 0, %s72
    %s74 = sphi 0, %s72
    %s75 = sphi 0, %s74
    %s89 = sphi 0, %s75
    %s93 = sphi 0, %s93
    %s95 = sphi 0, %s93
    %s96 = sphi 0, %s95
    %s110 = sphi 0, %s96
    %s116 = sphi 0, %s118
    %s119 = sphi 0, %s116
    %s120 = sphi 0, %s119
    %s136 = sphi 0, %s120
    %s142 = sphi 0, %s144
    %s145 = sphi 0, %s142
    %s146 = sphi 0, %s145
    %s162 = sphi 0, %s146
  $region4: #{maskformer_decoder_forward.10} parent=0 // loop_header_branch
    %15 = sbr.rel (%p13) target = $region8
  $region5: #{maskformer_decoder_forward.10} parent=0 // loop_body
    %s17 = ssub.s32 %s12, 1
    %s18 = ssub.s32 %s12, 2
    %s19 = sadd.s32 %s12, 1
    %s20 = ssub.s32 %s12, %s19
    %p21 = scmp.eq.s32.totalorder %s20, 0
    %s23 = sadd.s32 %s22, 1
    %s24 = scalar_select %p21, %s22, %s23
    %p27 = pneg %p21
    %p28 = scmp.eq.s32.totalorder %s12, 1
    %p29 = por %p27, %p28
    %p30 = scmp.ne.s32.totalorder %s22, %s25
    %p31 = scmp.eq.s32.totalorder %s12, 0
    %p32 = por %p30, %p31
    %p33 = scmp.ne.s32.totalorder %s22, %s25
    %p34 = scmp.eq.s32.totalorder %s17, 1
    %p35 = por %p33, %p34
    %p36 = scmp.ne.s32.totalorder %s25, %s26
    %p37 = scmp.eq.s32.totalorder %s17, 0
    %p38 = por %p36, %p37
    %p39 = scmp.ne.s32.totalorder %s25, %s26
    %p40 = scmp.eq.s32.totalorder %s18, 1
    %p41 = por %p39, %p40
    %p43 = scmp.ne.s32.totalorder %s26, %s42
    %p44 = scmp.eq.s32.totalorder %s18, 0
    %p45 = por %p43, %p44
    %s46 = ssub.s32 %s12, %s19
    %p47 = scmp.eq.s32.totalorder %s46, 0
    %s49 = sadd.s32 %s48, 1
    %s50 = scalar_select %p47, %s48, %s49
    %p53 = pneg %p47
    %p54 = scmp.eq.s32.totalorder %s12, 1
    %p55 = por %p53, %p54
    %p56 = scmp.ne.s32.totalorder %s48, %s51
    %p57 = scmp.eq.s32.totalorder %s12, 0
    %p58 = por %p56, %p57
    %p59 = scmp.ne.s32.totalorder %s48, %s51
    %p60 = scmp.eq.s32.totalorder %s17, 1
    %p61 = por %p59, %p60
    %p62 = scmp.ne.s32.totalorder %s51, %s52
    %p63 = scmp.eq.s32.totalorder %s17, 0
    %p64 = por %p62, %p63
    %p65 = scmp.ne.s32.totalorder %s51, %s52
    %p66 = scmp.eq.s32.totalorder %s18, 1
    %p67 = por %p65, %p66
    %p69 = scmp.ne.s32.totalorder %s52, %s68
    %p70 = scmp.eq.s32.totalorder %s18, 0
    %p71 = por %p69, %p70
    %s73 = sadd.s32 %s72, 1
    %p76 = scmp.eq.s32.totalorder %s12, 1
    %p77 = scmp.ne.s32.totalorder %s72, %s74
    %p78 = scmp.eq.s32.totalorder %s12, 0
    %p79 = por %p77, %p78
    %p80 = scmp.ne.s32.totalorder %s72, %s74
    %p81 = scmp.eq.s32.totalorder %s17, 1
    %p82 = por %p80, %p81
    %p83 = scmp.ne.s32.totalorder %s74, %s75
    %p84 = scmp.eq.s32.totalorder %s17, 0
    %p85 = por %p83, %p84
    %p86 = scmp.ne.s32.totalorder %s74, %s75
    %p87 = scmp.eq.s32.totalorder %s18, 1
    %p88 = por %p86, %p87
    %p90 = scmp.ne.s32.totalorder %s75, %s89
    %p91 = scmp.eq.s32.totalorder %s18, 0
    %p92 = por %p90, %p91
    %s94 = sadd.s32 %s93, 1
    %p97 = scmp.eq.s32.totalorder %s12, 1
    %p98 = scmp.ne.s32.totalorder %s93, %s95
    %p99 = scmp.eq.s32.totalorder %s12, 0
    %p100 = por %p98, %p99
    %p101 = scmp.ne.s32.totalorder %s93, %s95
    %p102 = scmp.eq.s32.totalorder %s17, 1
    %p103 = por %p101, %p102
    %p104 = scmp.ne.s32.totalorder %s95, %s96
    %p105 = scmp.eq.s32.totalorder %s17, 0
    %p106 = por %p104, %p105
    %p107 = scmp.ne.s32.totalorder %s95, %s96
    %p108 = scmp.eq.s32.totalorder %s18, 1
    %p109 = por %p107, %p108
    %p111 = scmp.ne.s32.totalorder %s96, %s110
    %p112 = scmp.eq.s32.totalorder %s18, 0
    %p113 = por %p111, %p112
    %s114 = ssub.s32 %s12, %s19
    %p115 = scmp.eq.s32.totalorder %s114, 0
    %s117 = sadd.s32 %s116, 1
    %s118 = scalar_select %p115, %s116, %s117
    %p121 = pneg %p115
    %p122 = scmp.eq.s32.totalorder %s12, 1
    %p123 = por %p121, %p122
    %p124 = scmp.ne.s32.totalorder %s116, %s119
    %p125 = scmp.eq.s32.totalorder %s12, 0
    %p126 = por %p124, %p125
    %p127 = scmp.ne.s32.totalorder %s116, %s119
    %p128 = scmp.eq.s32.totalorder %s17, 1
    %p129 = por %p127, %p128
    %p130 = scmp.ne.s32.totalorder %s119, %s120
    %p131 = scmp.eq.s32.totalorder %s17, 0
    %p132 = por %p130, %p131
    %p133 = scmp.ne.s32.totalorder %s119, %s120
    %p134 = scmp.eq.s32.totalorder %s18, 1
    %p135 = por %p133, %p134
    %p137 = scmp.ne.s32.totalorder %s120, %s136
    %p138 = scmp.eq.s32.totalorder %s18, 0
    %p139 = por %p137, %p138
    %s140 = ssub.s32 %s12, %s19
    %p141 = scmp.eq.s32.totalorder %s140, 0
    %s143 = sadd.s32 %s142, 1
    %s144 = scalar_select %p141, %s142, %s143
    %p147 = pneg %p141
    %p148 = scmp.eq.s32.totalorder %s12, 1
    %p149 = por %p147, %p148
    %p150 = scmp.ne.s32.totalorder %s142, %s145
    %p151 = scmp.eq.s32.totalorder %s12, 0
    %p152 = por %p150, %p151
    %p153 = scmp.ne.s32.totalorder %s142, %s145
    %p154 = scmp.eq.s32.totalorder %s17, 1
    %p155 = por %p153, %p154
    %p156 = scmp.ne.s32.totalorder %s145, %s146
    %p157 = scmp.eq.s32.totalorder %s17, 0
    %p158 = por %p156, %p157
    %p159 = scmp.ne.s32.totalorder %s145, %s146
    %p160 = scmp.eq.s32.totalorder %s18, 1
    %p161 = por %p159, %p160
    %p163 = scmp.ne.s32.totalorder %s146, %s162
    %p164 = scmp.eq.s32.totalorder %s18, 0
    %p165 = por %p163, %p164
    %p166 = scmp.le.s32.totalorder 1, %s12
    %p167 = scmp.lt.s32.totalorder %s12, 3
    %p168 = pnand %p166, %p167
    %p169 = pneg %p168
    // Predicated region
    $region9: #{maskformer_decoder_forward.10} parent=5 // pred_check
      _
    $region10: #{maskformer_decoder_forward.10} parent=5 // pred_check_branch
      %171 = sbr.rel (%p168) target = $region12
    $region11: #{maskformer_decoder_forward.10} parent=5 // pred_region
      %s172 = ssub.s32 %s12, 1
      // Predicated region
      $region13: #{maskformer_decoder_forward.10} parent=11 // pred_check
        %p173 = pneg %p85
      $region14: #{maskformer_decoder_forward.10} parent=11 // pred_check_branch
        %175 = sbr.rel (%p173) target = $region16
      $region15: #{maskformer_decoder_forward.10} parent=11 // pred_region
        _
      $region16: #{maskformer_decoder_forward.10} parent=11 // pred_fallthru
        _
      // Predicated region
      $region17: #{maskformer_decoder_forward.10} parent=11 // pred_check
        %p176 = pneg %p106
      $region18: #{maskformer_decoder_forward.10} parent=11 // pred_check_branch
        %178 = sbr.rel (%p176) target = $region20
      $region19: #{maskformer_decoder_forward.10} parent=11 // pred_region
        _
      $region20: #{maskformer_decoder_forward.10} parent=11 // pred_fallthru
        _
    $region12: #{maskformer_decoder_forward.10} parent=5 // pred_fallthru
      _
    %p179 = scmp.lt.s32.totalorder %s12, 2
    // Predicated region
    $region21: #{maskformer_decoder_forward.10} parent=5 // pred_check
      %p180 = pneg %p179
    $region22: #{maskformer_decoder_forward.10} parent=5 // pred_check_branch
      %182 = sbr.rel (%p180) target = $region24
    $region23: #{maskformer_decoder_forward.10} parent=5 // pred_region
      // Predicated region
      $region25: #{maskformer_decoder_forward.10} parent=23 // pred_check
        %p183 = pneg %p32
      $region26: #{maskformer_decoder_forward.10} parent=23 // pred_check_branch
        %185 = sbr.rel (%p183) target = $region28
      $region27: #{maskformer_decoder_forward.10} parent=23 // pred_region
        %p186 = scmp.lt.s32.totalorder %s12, 1
        %s187 = scalar_select %p186, %s12, 1
        %s188 = smul.addr %s187, 8
        %s189 = scalar_lea.vmem %s0, %s188
      $region28: #{maskformer_decoder_forward.10} parent=23 // pred_fallthru
        _
      // Predicated region
      $region29: #{maskformer_decoder_forward.10} parent=23 // pred_check
        %p190 = pneg %p58
      $region30: #{maskformer_decoder_forward.10} parent=23 // pred_check_branch
        %192 = sbr.rel (%p190) target = $region32
      $region31: #{maskformer_decoder_forward.10} parent=23 // pred_region
        %p193 = scmp.lt.s32.totalorder %s12, 1
        %s194 = scalar_select %p193, %s12, 1
        %s195 = smul.addr %s194, 2
        %s196 = smul.addr %s195, 8
        %s197 = scalar_lea.vmem %s1, %s196
      $region32: #{maskformer_decoder_forward.10} parent=23 // pred_fallthru
        _
    $region24: #{maskformer_decoder_forward.10} parent=5 // pred_fallthru
      _
    %p198 = scmp.le.s32.totalorder 1, %s12
    %p199 = scmp.lt.s32.totalorder %s12, 3
    %p200 = pnand %p198, %p199
    %p201 = pneg %p200
    // Predicated region
    $region33: #{maskformer_decoder_forward.10} parent=5 // pred_check
      _
    $region34: #{maskformer_decoder_forward.10} parent=5 // pred_check_branch
      %203 = sbr.rel (%p200) target = $region36
    $region35: #{maskformer_decoder_forward.10} parent=5 // pred_region
      %s204 = ssub.s32 %s12, 1
      %p205 = scmp.lt.s32.totalorder %s17, 1
      %s206 = scalar_select %p205, %s17, 1
      %s207 = smul.addr %s206, 8
      %s208 = scalar_lea.vmem %s0, %s207
      %p209 = pneg %p38
      %p210 = pneg %p35
      %p211 = scmp.lt.s32.totalorder %s17, 1
      %s212 = scalar_select %p211, %s17, 1
      %s213 = smul.addr %s212, 2
      %s214 = smul.addr %s213, 8
      %s215 = scalar_lea.vmem %s1, %s214
      %p216 = pneg %p64
      %p217 = pneg %p61
      %p218 = pneg %p85
      %p219 = pneg %p82
      %p220 = pneg %p106
      %p221 = pneg %p103
      %p222 = pneg %p132
      %p223 = pneg %p129
      %p224 = scmp.lt.s32.totalorder %s17, 1
      %s225 = scalar_select %p224, %s17, 1
      %s226 = smul.addr %s225, 4
      %s227 = scalar_lea.vmem %s4, %s226
      %p228 = pneg %p158
      %p229 = pneg %p155
      %p230 = scmp.lt.s32.totalorder %s17, 1
      %s231 = scalar_select %p230, %s17, 1
      %s232 = smul.addr %s231, 2
      %s233 = smul.addr %s232, 4
      %s234 = scalar_lea.vmem %s5, %s233
      %p235 = scmp.lt.s32.totalorder %s17, 1
      %s236 = scalar_select %p235, %s17, 1
      %s237 = smul.addr %s236, 8
      %s238 = scalar_lea.vmem %s0, %s237
      %p239 = scmp.lt.s32.totalorder %s17, 1
      %s240 = scalar_select %p239, %s17, 1
      %s241 = smul.addr %s240, 2
      %s242 = smul.addr %s241, 8
      %s243 = scalar_lea.vmem %s1, %s242
      %p244 = scmp.lt.s32.totalorder %s17, 1
      %s245 = scalar_select %p244, %s17, 1
      %s246 = smul.addr %s245, 4
      %s247 = scalar_lea.vmem %s4, %s246
      %p248 = scmp.lt.s32.totalorder %s17, 1
      %s249 = scalar_select %p248, %s17, 1
      %s250 = smul.addr %s249, 2
      %s251 = smul.addr %s250, 4
      %s252 = scalar_lea.vmem %s5, %s251
      %v254 = vld [vmem:[%s238] sm:$0xff]
      %v255 = vld [vmem:[%s243] sm:$0xff]
      %v256 = vld [vmem:[%s243 + $0x8] sm:$0xff]
      %v257 = vpack.c.bf16 %v254, %v254
      %v258 = vld [vmem:[%s2] sm:$0xf]
      %v259 = vld [vmem:[%s2 + $0x4] sm:$0xf]
      %v260 = vld [vmem:[%s2 + $0x8] sm:$0xf]
      %v261 = vld [vmem:[%s2 + $0xc] sm:$0xf]
      %v262 = vld [vmem:[%s3] sm:$0x1]
      %v264 = vperm.slane %v262, 0
      %v270 = vunpack.c.l.b16 %v258
      %v271 = vunpack.c.l.b16 %v259
      %v272 = vunpack.c.l.b16 %v260
      %v273 = vunpack.c.l.b16 %v261
      %v274 = vpack.c.b16 %v271, %v270
      %v275 = vpack.c.b16 %v273, %v272
      %vm278 = vcmask 261120
      %v280 = vsel %vm278, %v257, 0
      %282 = vmatpush.bf16.msra.mxu0 0
      %283 = vmatpush.bf16.msra.mxu0 0
      %284 = vmatpush.bf16.msra.mxu0 0
      %285 = vmatpush.bf16.msra.mxu0 0
      %286 = vmatpush.bf16.msra.mxu0 0
      %287 = vmatpush.bf16.msra.mxu0 0
      %288 = vmatpush.bf16.msra.mxu0 %v275
      %289 = vmatpush.bf16.msra.mxu0 %v274
      %290 = vmatmul.bf16.gmra.mxu0 %v280
      %v291 = vpop.f32.mrf.mxu0
      %v292 = vadd.f32 %v264, %v291
      %v293 = vpop.f32.mrf.mxu0
      %294 = vdwg.mxu0
      %v295 = vpack.c.bf16 %v292, %v292
      %v296 = vpack.c.bf16 %v256, %v255
      %v298 = vsel %vm278, %v295, 0
      %v301 = vsel %vm278, %v296, 0
      %303 = vmatpush.bf16.xpose.msra.mxu0 0
      %304 = vmatpush.bf16.xpose.msra.mxu0 0
      %305 = vmatpush.bf16.xpose.msra.mxu0 0
      %306 = vmatpush.bf16.xpose.msra.mxu0 0
      %307 = vmatpush.bf16.xpose.msra.mxu0 0
      %308 = vmatpush.bf16.xpose.msra.mxu0 0
      %309 = vmatpush.bf16.xpose.msra.mxu0 0
      %310 = vmatpush.bf16.xpose.msra.mxu0 %v301
      %311 = vmatmul.bf16.gmra.mxu0 %v298
      %v312 = vpop.f32.mrf.mxu0
      %v313 = vadd.f32 0.0, %v312
      %v314 = vpop.f32.mrf.mxu0
      %315 = vdwg.mxu0
      %v316 = vxor.u32 %v313, 2147483648
      %v317 = vmul.f32 %v316, 1.442695
      %v318 = vpow.pop %v317
      %v319 = vadd.f32 %v318, 1.0
      %v320 = vrcp.pop %v319
      %v321 = vmul.f32 %v319, %v320
      %v322 = vsub.f32 1.0, %v321
      %v323 = vmul.f32 %v320, %v322
      %v324 = vadd.f32 %v320, %v323
      %vm325 = vweird.f32 %v319
      %vm326 = vweird.f32 %v320
      %vm327 = vmor %vm325, %vm326
      %v328 = vsel %vm327, %v320, %v324
      %v329 = vand.u32 2147483647, %v319
      %vm330 = vcmp.eq.f32.partialorder %v329, 8.507059e+37
      %v331 = vand.u32 %v319, 2147483648
      %v332 = vor.u32 1.1754944e-38, %v331
      %v333 = vsel %vm330, %v332, %v328
      %v334 = vmul.f32 1.0, %v333
      %vm335 = vcmp.lt.f32.partialorder %v334, 0.1
      %v336 = vsel %vm335, 1, 0
      %v337 = vcvt.s32.f32 %v336
      %vm338 = vcmask 130048
      %v339 = vsel %vm338, %v337, 0.0
      %340 = vadd.xlane.f32.xlu0 %v339
      %v341 = vpop.xlane.xlu0 %340
      %vm342 = vcmp.ge.f32.partialorder %v341, 15.5
      %vm343 = vmxor %vm342, 1
      %v344 = vsel %vm343, 1, 0
      %vm345 = vcmp.eq.s32.totalorder %v344, 1
      %vm346 = vmand %vm335, %vm345
      %v347 = vsel %vm346, -1e+30, 0.0
      %v348 = vpack.c.bf16 %v347, %v347
      %vm349 = vcmask 125952
      %350 = vst.msk [vmem:[%s247] sm:$0xf] %vm349, %v348
      %351 = vxpose.xlu0.b32.start [1/16] %v347, 128
      %352 = vxpose.xlu0.b32.cont [2/16] 0.0, 128
      %353 = vxpose.xlu0.b32.cont [3/16] 0.0, 128
      %354 = vxpose.xlu0.b32.cont [4/16] 0.0, 128
      %355 = vxpose.xlu0.b32.cont [5/16] 0.0, 128
      %356 = vxpose.xlu0.b32.cont [6/16] 0.0, 128
      %357 = vxpose.xlu0.b32.cont [7/16] 0.0, 128
      %358 = vxpose.xlu0.b32.cont [8/16] 0.0, 128
      %359 = vxpose.xlu0.b32.cont [9/16] 0.0, 128
      %360 = vxpose.xlu0.b32.cont [10/16] 0.0, 128
      %361 = vxpose.xlu0.b32.cont [11/16] 0.0, 128
      %362 = vxpose.xlu0.b32.cont [12/16] 0.0, 128
      %363 = vxpose.xlu0.b32.cont [13/16] 0.0, 128
      %364 = vxpose.xlu0.b32.cont [14/16] 0.0, 128
      %365 = vxpose.xlu0.b32.cont [15/16] 0.0, 128
      %366 = vxpose.xlu0.b32.end [16/16] 0.0, 128
      %v367 = vpop.trf.xlu0
      %v368 = vpop.trf.xlu0
      %v369 = vpop.trf.xlu0
      %v370 = vpop.trf.xlu0
      %v371 = vpop.trf.xlu0
      %v372 = vpop.trf.xlu0
      %v373 = vpop.trf.xlu0
      %v374 = vpop.trf.xlu0
      %v375 = vpop.trf.xlu0
      %v376 = vpop.trf.xlu0
      %v377 = vpop.trf.xlu0
      %v378 = vpop.trf.xlu0
      %v379 = vpop.trf.xlu0
      %v380 = vpop.trf.xlu0
      %v381 = vpop.trf.xlu0
      %v382 = vpop.trf.xlu0
      %v383 = vpack.c.bf16 %v367, %v367
      %v384 = vpack.c.bf16 %v368, %v368
      %vm385 = vcmask 60416
      %386 = vst.msk [vmem:[%s252] sm:$0xf] %vm385, %v383
      %387 = vst.msk [vmem:[%s252 + $0x4] sm:$0xf] %vm385, %v384
      %p388 = scmp.lt.s32.totalorder %s17, 1
      %s389 = scalar_select %p388, %s17, 1
      %s390 = smul.addr %s389, 4
      %s391 = scalar_lea.vmem %s4, %s390
      %p392 = scmp.lt.s32.totalorder %s17, 1
      %s393 = scalar_select %p392, %s17, 1
      %s394 = smul.addr %s393, 2
      %s395 = smul.addr %s394, 4
      %s396 = scalar_lea.vmem %s5, %s395
      // Predicated region
      $region37: #{maskformer_decoder_forward.10} parent=35 // pred_check
        %p397 = pneg %p129
      $region38: #{maskformer_decoder_forward.10} parent=35 // pred_check_branch
        %399 = sbr.rel (%p397) target = $region40
      $region39: #{maskformer_decoder_forward.10} parent=35 // pred_region
        _
      $region40: #{maskformer_decoder_forward.10} parent=35 // pred_fallthru
        _
      // Predicated region
      $region41: #{maskformer_decoder_forward.10} parent=35 // pred_check
        %p400 = pneg %p155
      $region42: #{maskformer_decoder_forward.10} parent=35 // pred_check_branch
        %402 = sbr.rel (%p400) target = $region44
      $region43: #{maskformer_decoder_forward.10} parent=35 // pred_region
        _
      $region44: #{maskformer_decoder_forward.10} parent=35 // pred_fallthru
        _
    $region36: #{maskformer_decoder_forward.10} parent=5 // pred_fallthru
      _
    %p403 = scmp.le.s32.totalorder 2, %s12
    // Predicated region
    $region45: #{maskformer_decoder_forward.10} parent=5 // pred_check
      %p404 = pneg %p403
    $region46: #{maskformer_decoder_forward.10} parent=5 // pred_check_branch
      %406 = sbr.rel (%p404) target = $region48
    $region47: #{maskformer_decoder_forward.10} parent=5 // pred_region
      %s407 = ssub.s32 %s12, 2
      // Predicated region
      $region49: #{maskformer_decoder_forward.10} parent=47 // pred_check
        %p408 = pneg %p135
      $region50: #{maskformer_decoder_forward.10} parent=47 // pred_check_branch
        %410 = sbr.rel (%p408) target = $region52
      $region51: #{maskformer_decoder_forward.10} parent=47 // pred_region
        %p411 = scmp.lt.s32.totalorder %s18, 1
        %s412 = scalar_select %p411, %s18, 1
        %s413 = smul.addr %s412, 4
        %s414 = scalar_lea.vmem %s4, %s413
      $region52: #{maskformer_decoder_forward.10} parent=47 // pred_fallthru
        _
      // Predicated region
      $region53: #{maskformer_decoder_forward.10} parent=47 // pred_check
        %p415 = pneg %p161
      $region54: #{maskformer_decoder_forward.10} parent=47 // pred_check_branch
        %417 = sbr.rel (%p415) target = $region56
      $region55: #{maskformer_decoder_forward.10} parent=47 // pred_region
        %p418 = scmp.lt.s32.totalorder %s18, 1
        %s419 = scalar_select %p418, %s18, 1
        %s420 = smul.addr %s419, 2
        %s421 = smul.addr %s420, 4
        %s422 = scalar_lea.vmem %s5, %s421
      $region56: #{maskformer_decoder_forward.10} parent=47 // pred_fallthru
        _
    $region48: #{maskformer_decoder_forward.10} parent=5 // pred_fallthru
      _
  $region6: #{maskformer_decoder_forward.10} parent=0 // loop_footer
    %s16 = sadd.s32 1, %s12
  $region7: #{maskformer_decoder_forward.10} parent=0 // loop_footer_branch
    %11 = sbr.rel target = $region3
  $region8: #{maskformer_decoder_forward.10} parent=0 // loop_exit
    _

// kernel: maskformer_decoder_forward.7
$region0: #{maskformer_decoder_forward.7}
  #allocation0 [shape = 'u32[]', space=smem, size = 0x4, offset = 0x4, fixed_abs, tag = 'smem constant byte address 0x4 - core index']
  #allocation1 [shape = 'u32[72,128]{1,0:T(1,128)}', space=vmem, size = 0x9000, scoped, tag = 'internal scratch']
  %s0 = inlined_call_operand.vmem [shape: f32[2,8,32], index: 0, kind: input, shape index: {}]
  %s1 = inlined_call_operand.hbm [shape: f32[2,16,32], index: 1, kind: input, shape index: {}]
  %s2 = inlined_call_operand.vmem [shape: bf16[32,32], index: 2, kind: input, shape index: {}]
  %s3 = inlined_call_operand.vmem [shape: f32[1,32], index: 3, kind: input, shape index: {}]
  %s4 = inlined_call_operand.vmem [shape: bf16[2,8,16], index: 4, kind: output, shape index: {0}]
  %s5 = inlined_call_operand.vmem [shape: bf16[2,16,8], index: 5, kind: output, shape index: {1}]
  %6 = xla_tuple %s4, %s5
  %s7 = sld [smem:[#allocation0]]
  $region61: #{maskformer_decoder_forward.7} parent=0
    _
  %s9 = ssub.s32 1, %s7
  %s10 = scalar_select 0, %s9, %s7
  $region1: #{maskformer_decoder_forward.7} parent=0
    #allocation2 [shape = 'u8[16384]{0}', space=vmem, size = 0x4000, scoped, tag = 'input window, operand 1']
    #allocation3 [shape = 's32[2]{0}', space=sflag, size = 0x8, scoped, tag = 'scoped memory for maskformer_decoder_forward.7']
    %11 = vsyncpa [#allocation3], 0
    %s12 = scalar_lea.sflag [#allocation3], 1
    %13 = vsyncpa %s12, 0
    loop: start=0, step=1, limit=4
    $region2: #{maskformer_decoder_forward.7} parent=1 // loop_pre_header
      _
    $region3: #{maskformer_decoder_forward.7} parent=1 // loop_header
      %s15 = sphi 0, %s19
      %p16 = scmp.ge.s32.totalorder %s15, 4
      %s25 = sphi 0, %s27
      %s28 = sphi 0, %s25
      %s29 = sphi 0, %s28
      %s45 = sphi 0, %s29
      %s51 = sphi 0, %s53
      %s54 = sphi 0, %s51
      %s55 = sphi 0, %s54
      %s71 = sphi 0, %s55
      %s75 = sphi 0, %s75
      %s77 = sphi 0, %s75
      %s78 = sphi 0, %s77
      %s92 = sphi 0, %s78
      %s96 = sphi 0, %s96
      %s98 = sphi 0, %s96
      %s99 = sphi 0, %s98
      %s113 = sphi 0, %s99
      %s119 = sphi 0, %s121
      %s122 = sphi 0, %s119
      %s123 = sphi 0, %s122
      %s139 = sphi 0, %s123
      %s145 = sphi 0, %s147
      %s148 = sphi 0, %s145
      %s149 = sphi 0, %s148
      %s165 = sphi 0, %s149
    $region4: #{maskformer_decoder_forward.7} parent=1 // loop_header_branch
      %18 = sbr.rel (%p16) target = $region8
    $region5: #{maskformer_decoder_forward.7} parent=1 // loop_body
      %s20 = ssub.s32 %s15, 1
      %s21 = ssub.s32 %s15, 2
      %s22 = sadd.s32 %s15, 1
      %s23 = ssub.s32 %s15, %s22
      %p24 = scmp.eq.s32.totalorder %s23, 0
      %s26 = sadd.s32 %s25, 1
      %s27 = scalar_select %p24, %s25, %s26
      %p30 = pneg %p24
      %p31 = scmp.eq.s32.totalorder %s15, 1
      %p32 = por %p30, %p31
      %p33 = scmp.ne.s32.totalorder %s25, %s28
      %p34 = scmp.eq.s32.totalorder %s15, 0
      %p35 = por %p33, %p34
      %p36 = scmp.ne.s32.totalorder %s25, %s28
      %p37 = scmp.eq.s32.totalorder %s20, 1
      %p38 = por %p36, %p37
      %p39 = scmp.ne.s32.totalorder %s28, %s29
      %p40 = scmp.eq.s32.totalorder %s20, 0
      %p41 = por %p39, %p40
      %p42 = scmp.ne.s32.totalorder %s28, %s29
      %p43 = scmp.eq.s32.totalorder %s21, 1
      %p44 = por %p42, %p43
      %p46 = scmp.ne.s32.totalorder %s29, %s45
      %p47 = scmp.eq.s32.totalorder %s21, 0
      %p48 = por %p46, %p47
      %s49 = ssub.s32 %s15, %s22
      %p50 = scmp.eq.s32.totalorder %s49, 0
      %s52 = sadd.s32 %s51, 1
      %s53 = scalar_select %p50, %s51, %s52
      %p56 = pneg %p50
      %p57 = scmp.eq.s32.totalorder %s15, 1
      %p58 = por %p56, %p57
      %p59 = scmp.ne.s32.totalorder %s51, %s54
      %p60 = scmp.eq.s32.totalorder %s15, 0
      %p61 = por %p59, %p60
      %p62 = scmp.ne.s32.totalorder %s51, %s54
      %p63 = scmp.eq.s32.totalorder %s20, 1
      %p64 = por %p62, %p63
      %p65 = scmp.ne.s32.totalorder %s54, %s55
      %p66 = scmp.eq.s32.totalorder %s20, 0
      %p67 = por %p65, %p66
      %p68 = scmp.ne.s32.totalorder %s54, %s55
      %p69 = scmp.eq.s32.totalorder %s21, 1
      %p70 = por %p68, %p69
      %p72 = scmp.ne.s32.totalorder %s55, %s71
      %p73 = scmp.eq.s32.totalorder %s21, 0
      %p74 = por %p72, %p73
      %s76 = sadd.s32 %s75, 1
      %p79 = scmp.eq.s32.totalorder %s15, 1
      %p80 = scmp.ne.s32.totalorder %s75, %s77
      %p81 = scmp.eq.s32.totalorder %s15, 0
      %p82 = por %p80, %p81
      %p83 = scmp.ne.s32.totalorder %s75, %s77
      %p84 = scmp.eq.s32.totalorder %s20, 1
      %p85 = por %p83, %p84
      %p86 = scmp.ne.s32.totalorder %s77, %s78
      %p87 = scmp.eq.s32.totalorder %s20, 0
      %p88 = por %p86, %p87
      %p89 = scmp.ne.s32.totalorder %s77, %s78
      %p90 = scmp.eq.s32.totalorder %s21, 1
      %p91 = por %p89, %p90
      %p93 = scmp.ne.s32.totalorder %s78, %s92
      %p94 = scmp.eq.s32.totalorder %s21, 0
      %p95 = por %p93, %p94
      %s97 = sadd.s32 %s96, 1
      %p100 = scmp.eq.s32.totalorder %s15, 1
      %p101 = scmp.ne.s32.totalorder %s96, %s98
      %p102 = scmp.eq.s32.totalorder %s15, 0
      %p103 = por %p101, %p102
      %p104 = scmp.ne.s32.totalorder %s96, %s98
      %p105 = scmp.eq.s32.totalorder %s20, 1
      %p106 = por %p104, %p105
      %p107 = scmp.ne.s32.totalorder %s98, %s99
      %p108 = scmp.eq.s32.totalorder %s20, 0
      %p109 = por %p107, %p108
      %p110 = scmp.ne.s32.totalorder %s98, %s99
      %p111 = scmp.eq.s32.totalorder %s21, 1
      %p112 = por %p110, %p111
      %p114 = scmp.ne.s32.totalorder %s99, %s113
      %p115 = scmp.eq.s32.totalorder %s21, 0
      %p116 = por %p114, %p115
      %s117 = ssub.s32 %s15, %s22
      %p118 = scmp.eq.s32.totalorder %s117, 0
      %s120 = sadd.s32 %s119, 1
      %s121 = scalar_select %p118, %s119, %s120
      %p124 = pneg %p118
      %p125 = scmp.eq.s32.totalorder %s15, 1
      %p126 = por %p124, %p125
      %p127 = scmp.ne.s32.totalorder %s119, %s122
      %p128 = scmp.eq.s32.totalorder %s15, 0
      %p129 = por %p127, %p128
      %p130 = scmp.ne.s32.totalorder %s119, %s122
      %p131 = scmp.eq.s32.totalorder %s20, 1
      %p132 = por %p130, %p131
      %p133 = scmp.ne.s32.totalorder %s122, %s123
      %p134 = scmp.eq.s32.totalorder %s20, 0
      %p135 = por %p133, %p134
      %p136 = scmp.ne.s32.totalorder %s122, %s123
      %p137 = scmp.eq.s32.totalorder %s21, 1
      %p138 = por %p136, %p137
      %p140 = scmp.ne.s32.totalorder %s123, %s139
      %p141 = scmp.eq.s32.totalorder %s21, 0
      %p142 = por %p140, %p141
      %s143 = ssub.s32 %s15, %s22
      %p144 = scmp.eq.s32.totalorder %s143, 0
      %s146 = sadd.s32 %s145, 1
      %s147 = scalar_select %p144, %s145, %s146
      %p150 = pneg %p144
      %p151 = scmp.eq.s32.totalorder %s15, 1
      %p152 = por %p150, %p151
      %p153 = scmp.ne.s32.totalorder %s145, %s148
      %p154 = scmp.eq.s32.totalorder %s15, 0
      %p155 = por %p153, %p154
      %p156 = scmp.ne.s32.totalorder %s145, %s148
      %p157 = scmp.eq.s32.totalorder %s20, 1
      %p158 = por %p156, %p157
      %p159 = scmp.ne.s32.totalorder %s148, %s149
      %p160 = scmp.eq.s32.totalorder %s20, 0
      %p161 = por %p159, %p160
      %p162 = scmp.ne.s32.totalorder %s148, %s149
      %p163 = scmp.eq.s32.totalorder %s21, 1
      %p164 = por %p162, %p163
      %p166 = scmp.ne.s32.totalorder %s149, %s165
      %p167 = scmp.eq.s32.totalorder %s21, 0
      %p168 = por %p166, %p167
      %p169 = scmp.le.s32.totalorder 1, %s15
      %p170 = scmp.lt.s32.totalorder %s15, 3
      %p171 = pnand %p169, %p170
      %p172 = pneg %p171
      // Predicated region
      $region9: #{maskformer_decoder_forward.7} parent=5 // pred_check
        _
      $region10: #{maskformer_decoder_forward.7} parent=5 // pred_check_branch
        %174 = sbr.rel (%p171) target = $region12
      $region11: #{maskformer_decoder_forward.7} parent=5 // pred_region
        %s175 = ssub.s32 %s15, 1
        // Predicated region
        $region13: #{maskformer_decoder_forward.7} parent=11 // pred_check
          %p176 = pneg %p88
        $region14: #{maskformer_decoder_forward.7} parent=11 // pred_check_branch
          %178 = sbr.rel (%p176) target = $region16
        $region15: #{maskformer_decoder_forward.7} parent=11 // pred_region
          _
        $region16: #{maskformer_decoder_forward.7} parent=11 // pred_fallthru
          _
        // Predicated region
        $region17: #{maskformer_decoder_forward.7} parent=11 // pred_check
          %p179 = pneg %p109
        $region18: #{maskformer_decoder_forward.7} parent=11 // pred_check_branch
          %181 = sbr.rel (%p179) target = $region20
        $region19: #{maskformer_decoder_forward.7} parent=11 // pred_region
          _
        $region20: #{maskformer_decoder_forward.7} parent=11 // pred_fallthru
          _
      $region12: #{maskformer_decoder_forward.7} parent=5 // pred_fallthru
        _
      %p182 = scmp.lt.s32.totalorder %s15, 2
      // Predicated region
      $region21: #{maskformer_decoder_forward.7} parent=5 // pred_check
        %p183 = pneg %p182
      $region22: #{maskformer_decoder_forward.7} parent=5 // pred_check_branch
        %185 = sbr.rel (%p183) target = $region24
      $region23: #{maskformer_decoder_forward.7} parent=5 // pred_region
        // Predicated region
        $region25: #{maskformer_decoder_forward.7} parent=23 // pred_check
          %p186 = pneg %p35
        $region26: #{maskformer_decoder_forward.7} parent=23 // pred_check_branch
          %188 = sbr.rel (%p186) target = $region28
        $region27: #{maskformer_decoder_forward.7} parent=23 // pred_region
          %p189 = scmp.lt.s32.totalorder %s15, 1
          %s190 = scalar_select %p189, %s15, 1
          %s191 = smul.addr %s190, 8
          %s192 = scalar_lea.vmem %s0, %s191
        $region28: #{maskformer_decoder_forward.7} parent=23 // pred_fallthru
          _
        // Predicated region
        $region29: #{maskformer_decoder_forward.7} parent=23 // pred_check
          %p193 = pneg %p61
        $region30: #{maskformer_decoder_forward.7} parent=23 // pred_check_branch
          %195 = sbr.rel (%p193) target = $region32
        $region31: #{maskformer_decoder_forward.7} parent=23 // pred_region
          %s196 = sand.u32 %s51, 1
          %s197 = scalar_lea.sflag [#allocation3], %s196
          %s198 = sand.u32 %s51, 1
          %s199 = smul.addr %s198, 16
          %s200 = scalar_lea.vmem [#allocation2], %s199
          %202 = vsyncadd %s197, 0
          %s203 = smul.addr %s15, 2
          %s204 = smul.addr %s203, 8
          %s205 = scalar_lea.hbm %s1, %s204
          %s206 = sshll.u32 %s205, 4
          %s207 = int_to_ptr.hbm [resolvable:$true] %s206
          %s208 = sshll.u32 %s200, 4
          %s209 = int_to_ptr.vmem [resolvable:$true] %s208
          %214 = dma.hbm_to_vmem [thread:$0]  %s207, 256, %s209, %s197, 128, 128, 8
        $region32: #{maskformer_decoder_forward.7} parent=23 // pred_fallthru
          _
      $region24: #{maskformer_decoder_forward.7} parent=5 // pred_fallthru
        _
      %p215 = scmp.le.s32.totalorder 1, %s15
      %p216 = scmp.lt.s32.totalorder %s15, 3
      %p217 = pnand %p215, %p216
      %p218 = pneg %p217
      // Predicated region
      $region33: #{maskformer_decoder_forward.7} parent=5 // pred_check
        _
      $region34: #{maskformer_decoder_forward.7} parent=5 // pred_check_branch
        %220 = sbr.rel (%p217) target = $region36
      $region35: #{maskformer_decoder_forward.7} parent=5 // pred_region
        %s221 = ssub.s32 %s15, 1
        %s222 = sand.u32 %s54, 1
        %s223 = scalar_lea.sflag [#allocation3], %s222
        %s224 = sand.u32 %s54, 1
        %s225 = smul.addr %s224, 16
        %s226 = scalar_lea.vmem [#allocation2], %s225
        // Predicated region
        $region37: #{maskformer_decoder_forward.7} parent=35 // pred_check
          %p227 = pneg %p67
        $region38: #{maskformer_decoder_forward.7} parent=35 // pred_check_branch
          %229 = sbr.rel (%p227) target = $region40
        $region39: #{maskformer_decoder_forward.7} parent=35 // pred_region
          %231 = dma.done %s223, 256
        $region40: #{maskformer_decoder_forward.7} parent=35 // pred_fallthru
          _
        %p232 = scmp.lt.s32.totalorder %s20, 1
        %s233 = scalar_select %p232, %s20, 1
        %s234 = smul.addr %s233, 8
        %s235 = scalar_lea.vmem %s0, %s234
        %p236 = pneg %p41
        %p237 = pneg %p38
        %s238 = sand.u32 %s54, 1
        %s239 = scalar_lea.sflag [#allocation3], %s238
        %s240 = sand.u32 %s54, 1
        %s241 = smul.addr %s240, 16
        %s242 = scalar_lea.vmem [#allocation2], %s241
        %p243 = pneg %p67
        %p244 = pneg %p64
        %p245 = pneg %p88
        %p246 = pneg %p85
        %p247 = pneg %p109
        %p248 = pneg %p106
        %p249 = pneg %p135
        %p250 = pneg %p132
        %p251 = scmp.lt.s32.totalorder %s20, 1
        %s252 = scalar_select %p251, %s20, 1
        %s253 = smul.addr %s252, 4
        %s254 = scalar_lea.vmem %s4, %s253
        %p255 = pneg %p161
        %p256 = pneg %p158
        %p257 = scmp.lt.s32.totalorder %s20, 1
        %s258 = scalar_select %p257, %s20, 1
        %s259 = smul.addr %s258, 2
        %s260 = smul.addr %s259, 4
        %s261 = scalar_lea.vmem %s5, %s260
        %p262 = scmp.lt.s32.totalorder %s20, 1
        %s263 = scalar_select %p262, %s20, 1
        %s264 = smul.addr %s263, 8
        %s265 = scalar_lea.vmem %s0, %s264
        %p266 = scmp.lt.s32.totalorder %s20, 1
        %s267 = scalar_select %p266, %s20, 1
        %s268 = smul.addr %s267, 4
        %s269 = scalar_lea.vmem %s4, %s268
        %p270 = scmp.lt.s32.totalorder %s20, 1
        %s271 = scalar_select %p270, %s20, 1
        %s272 = smul.addr %s271, 2
        %s273 = smul.addr %s272, 4
        %s274 = scalar_lea.vmem %s5, %s273
        %v276 = vld [vmem:[%s265] sm:$0xff]
        %v277 = vld [vmem:[%s226] sm:$0xff]
        %v278 = vld [vmem:[%s226 + $0x8] sm:$0xff]
        %v279 = vpack.c.bf16 %v276, %v276
        %v280 = vld [vmem:[%s2] sm:$0xf]
        %v281 = vld [vmem:[%s2 + $0x4] sm:$0xf]
        %v282 = vld [vmem:[%s2 + $0x8] sm:$0xf]
        %v283 = vld [vmem:[%s2 + $0xc] sm:$0xf]
        %v284 = vld [vmem:[%s3] sm:$0x1]
        %v286 = vperm.slane %v284, 0
        %v292 = vunpack.c.l.b16 %v280
        %v293 = vunpack.c.l.b16 %v281
        %v294 = vunpack.c.l.b16 %v282
        %v295 = vunpack.c.l.b16 %v283
        %v296 = vpack.c.b16 %v293, %v292
        %v297 = vpack.c.b16 %v295, %v294
        %vm300 = vcmask 261120
        %v302 = vsel %vm300, %v279, 0
        %304 = vmatpush.bf16.msra.mxu0 0
        %305 = vmatpush.bf16.msra.mxu0 0
        %306 = vmatpush.bf16.msra.mxu0 0
        %307 = vmatpush.bf16.msra.mxu0 0
        %308 = vmatpush.bf16.msra.mxu0 0
        %309 = vmatpush.bf16.msra.mxu0 0
        %310 = vmatpush.bf16.msra.mxu0 %v297
        %311 = vmatpush.bf16.msra.mxu0 %v296
        %312 = vmatmul.bf16.gmra.mxu0 %v302
        %v313 = vpop.f32.mrf.mxu0
        %v314 = vadd.f32 %v286, %v313
        %v315 = vpop.f32.mrf.mxu0
        %316 = vdwg.mxu0
        %v317 = vpack.c.bf16 %v314, %v314
        %v318 = vpack.c.bf16 %v278, %v277
        %v320 = vsel %vm300, %v317, 0
        %v323 = vsel %vm300, %v318, 0
        %325 = vmatpush.bf16.xpose.msra.mxu0 0
        %326 = vmatpush.bf16.xpose.msra.mxu0 0
        %327 = vmatpush.bf16.xpose.msra.mxu0 0
        %328 = vmatpush.bf16.xpose.msra.mxu0 0
        %329 = vmatpush.bf16.xpose.msra.mxu0 0
        %330 = vmatpush.bf16.xpose.msra.mxu0 0
        %331 = vmatpush.bf16.xpose.msra.mxu0 0
        %332 = vmatpush.bf16.xpose.msra.mxu0 %v323
        %333 = vmatmul.bf16.gmra.mxu0 %v320
        %v334 = vpop.f32.mrf.mxu0
        %v335 = vadd.f32 0.0, %v334
        %v336 = vpop.f32.mrf.mxu0
        %337 = vdwg.mxu0
        %v338 = vxor.u32 %v335, 2147483648
        %v339 = vmul.f32 %v338, 1.442695
        %v340 = vpow.pop %v339
        %v341 = vadd.f32 %v340, 1.0
        %v342 = vrcp.pop %v341
        %v343 = vmul.f32 %v341, %v342
        %v344 = vsub.f32 1.0, %v343
        %v345 = vmul.f32 %v342, %v344
        %v346 = vadd.f32 %v342, %v345
        %vm347 = vweird.f32 %v341
        %vm348 = vweird.f32 %v342
        %vm349 = vmor %vm347, %vm348
        %v350 = vsel %vm349, %v342, %v346
        %v351 = vand.u32 2147483647, %v341
        %vm352 = vcmp.eq.f32.partialorder %v351, 8.507059e+37
        %v353 = vand.u32 %v341, 2147483648
        %v354 = vor.u32 1.1754944e-38, %v353
        %v355 = vsel %vm352, %v354, %v350
        %v356 = vmul.f32 1.0, %v355
        %vm357 = vcmp.lt.f32.partialorder %v356, 0.1
        %v358 = vsel %vm357, 1, 0
        %v359 = vcvt.s32.f32 %v358
        %vm360 = vcmask 130048
        %v361 = vsel %vm360, %v359, 0.0
        %362 = vadd.xlane.f32.xlu0 %v361
        %v363 = vpop.xlane.xlu0 %362
        %vm364 = vcmp.ge.f32.partialorder %v363, 15.5
        %vm365 = vmxor %vm364, 1
        %v366 = vsel %vm365, 1, 0
        %vm367 = vcmp.eq.s32.totalorder %v366, 1
        %vm368 = vmand %vm357, %vm367
        %v369 = vsel %vm368, -1e+30, 0.0
        %v370 = vpack.c.bf16 %v369, %v369
        %vm371 = vcmask 125952
        %372 = vst.msk [vmem:[%s269] sm:$0xf] %vm371, %v370
        %373 = vxpose.xlu0.b32.start [1/16] %v369, 128
        %374 = vxpose.xlu0.b32.cont [2/16] 0.0, 128
        %375 = vxpose.xlu0.b32.cont [3/16] 0.0, 128
        %376 = vxpose.xlu0.b32.cont [4/16] 0.0, 128
        %377 = vxpose.xlu0.b32.cont [5/16] 0.0, 128
        %378 = vxpose.xlu0.b32.cont [6/16] 0.0, 128
        %379 = vxpose.xlu0.b32.cont [7/16] 0.0, 128
        %380 = vxpose.xlu0.b32.cont [8/16] 0.0, 128
        %381 = vxpose.xlu0.b32.cont [9/16] 0.0, 128
        %382 = vxpose.xlu0.b32.cont [10/16] 0.0, 128
        %383 = vxpose.xlu0.b32.cont [11/16] 0.0, 128
        %384 = vxpose.xlu0.b32.cont [12/16] 0.0, 128
        %385 = vxpose.xlu0.b32.cont [13/16] 0.0, 128
        %386 = vxpose.xlu0.b32.cont [14/16] 0.0, 128
        %387 = vxpose.xlu0.b32.cont [15/16] 0.0, 128
        %388 = vxpose.xlu0.b32.end [16/16] 0.0, 128
        %v389 = vpop.trf.xlu0
        %v390 = vpop.trf.xlu0
        %v391 = vpop.trf.xlu0
        %v392 = vpop.trf.xlu0
        %v393 = vpop.trf.xlu0
        %v394 = vpop.trf.xlu0
        %v395 = vpop.trf.xlu0
        %v396 = vpop.trf.xlu0
        %v397 = vpop.trf.xlu0
        %v398 = vpop.trf.xlu0
        %v399 = vpop.trf.xlu0
        %v400 = vpop.trf.xlu0
        %v401 = vpop.trf.xlu0
        %v402 = vpop.trf.xlu0
        %v403 = vpop.trf.xlu0
        %v404 = vpop.trf.xlu0
        %v405 = vpack.c.bf16 %v389, %v389
        %v406 = vpack.c.bf16 %v390, %v390
        %vm407 = vcmask 60416
        %408 = vst.msk [vmem:[%s274] sm:$0xf] %vm407, %v405
        %409 = vst.msk [vmem:[%s274 + $0x4] sm:$0xf] %vm407, %v406
        %p410 = scmp.lt.s32.totalorder %s20, 1
        %s411 = scalar_select %p410, %s20, 1
        %s412 = smul.addr %s411, 4
        %s413 = scalar_lea.vmem %s4, %s412
        %p414 = scmp.lt.s32.totalorder %s20, 1
        %s415 = scalar_select %p414, %s20, 1
        %s416 = smul.addr %s415, 2
        %s417 = smul.addr %s416, 4
        %s418 = scalar_lea.vmem %s5, %s417
        // Predicated region
        $region41: #{maskformer_decoder_forward.7} parent=35 // pred_check
          %p419 = pneg %p132
        $region42: #{maskformer_decoder_forward.7} parent=35 // pred_check_branch
          %421 = sbr.rel (%p419) target = $region44
        $region43: #{maskformer_decoder_forward.7} parent=35 // pred_region
          _
        $region44: #{maskformer_decoder_forward.7} parent=35 // pred_fallthru
          _
        // Predicated region
        $region45: #{maskformer_decoder_forward.7} parent=35 // pred_check
          %p422 = pneg %p158
        $region46: #{maskformer_decoder_forward.7} parent=35 // pred_check_branch
          %424 = sbr.rel (%p422) target = $region48
        $region47: #{maskformer_decoder_forward.7} parent=35 // pred_region
          _
        $region48: #{maskformer_decoder_forward.7} parent=35 // pred_fallthru
          _
      $region36: #{maskformer_decoder_forward.7} parent=5 // pred_fallthru
        _
      %p425 = scmp.le.s32.totalorder 2, %s15
      // Predicated region
      $region49: #{maskformer_decoder_forward.7} parent=5 // pred_check
        %p426 = pneg %p425
      $region50: #{maskformer_decoder_forward.7} parent=5 // pred_check_branch
        %428 = sbr.rel (%p426) target = $region52
      $region51: #{maskformer_decoder_forward.7} parent=5 // pred_region
        %s429 = ssub.s32 %s15, 2
        // Predicated region
        $region53: #{maskformer_decoder_forward.7} parent=51 // pred_check
          %p430 = pneg %p138
        $region54: #{maskformer_decoder_forward.7} parent=51 // pred_check_branch
          %432 = sbr.rel (%p430) target = $region56
        $region55: #{maskformer_decoder_forward.7} parent=51 // pred_region
          %p433 = scmp.lt.s32.totalorder %s21, 1
          %s434 = scalar_select %p433, %s21, 1
          %s435 = smul.addr %s434, 4
          %s436 = scalar_lea.vmem %s4, %s435
        $region56: #{maskformer_decoder_forward.7} parent=51 // pred_fallthru
          _
        // Predicated region
        $region57: #{maskformer_decoder_forward.7} parent=51 // pred_check
          %p437 = pneg %p164
        $region58: #{maskformer_decoder_forward.7} parent=51 // pred_check_branch
          %439 = sbr.rel (%p437) target = $region60
        $region59: #{maskformer_decoder_forward.7} parent=51 // pred_region
          %p440 = scmp.lt.s32.totalorder %s21, 1
          %s441 = scalar_select %p440, %s21, 1
          %s442 = smul.addr %s441, 2
          %s443 = smul.addr %s442, 4
          %s444 = scalar_lea.vmem %s5, %s443
        $region60: #{maskformer_decoder_forward.7} parent=51 // pred_fallthru
          _
      $region52: #{maskformer_decoder_forward.7} parent=5 // pred_fallthru
        _
    $region6: #{maskformer_decoder_forward.7} parent=1 // loop_footer
      %s19 = sadd.s32 1, %s15
    $region7: #{maskformer_decoder_forward.7} parent=1 // loop_footer_branch
      %14 = sbr.rel target = $region3
    $region8: #{maskformer_decoder_forward.7} parent=1 // loop_exit
      _
    %445 = vsyncpa [#allocation3], 1
    %s446 = scalar_lea.sflag [#allocation3], 1
    %447 = vsyncpa %s446, 1

// kernel: maskformer_decoder_forward.8
$region0: #{maskformer_decoder_forward.8}
  #allocation0 [shape = 'u32[]', space=smem, size = 0x4, offset = 0x4, fixed_abs, tag = 'smem constant byte address 0x4 - core index']
  #allocation1 [shape = 'u32[72,128]{1,0:T(1,128)}', space=vmem, size = 0x9000, scoped, tag = 'internal scratch']
  %s0 = inlined_call_operand.vmem [shape: f32[2,8,32], index: 0, kind: input, shape index: {}]
  %s1 = inlined_call_operand.hbm [shape: f32[2,16,32], index: 1, kind: input, shape index: {}]
  %s2 = inlined_call_operand.vmem [shape: bf16[2,8,16], index: 2, kind: input, shape index: {}]
  %s3 = inlined_call_operand.vmem [shape: f32[2,32], index: 3, kind: input, shape index: {}]
  %s4 = inlined_call_operand.hbm [shape: bf16[4,32,32], index: 4, kind: input, shape index: {}]
  %s5 = inlined_call_operand.vmem [shape: f32[4,32], index: 5, kind: input, shape index: {}]
  %s6 = inlined_call_operand.hbm [shape: f32[2,32], index: 6, kind: input, shape index: {}]
  %s7 = inlined_call_operand.hbm [shape: bf16[4,32,32], index: 7, kind: input, shape index: {}]
  %s8 = inlined_call_operand.hbm [shape: f32[4,32], index: 8, kind: input, shape index: {}]
  %s9 = inlined_call_operand.hbm [shape: f32[2,32], index: 9, kind: input, shape index: {}]
  %s10 = inlined_call_operand.vmem [shape: bf16[32,64], index: 10, kind: input, shape index: {}]
  %s11 = inlined_call_operand.vmem [shape: f32[1,64], index: 11, kind: input, shape index: {}]
  %s12 = inlined_call_operand.vmem [shape: bf16[64,32], index: 12, kind: input, shape index: {}]
  %s13 = inlined_call_operand.hbm [shape: f32[1,32], index: 13, kind: input, shape index: {}]
  %s14 = inlined_call_operand.vmem [shape: f32[2,8,32], index: 14, kind: output, shape index: {}]
  %s15 = sld [smem:[#allocation0]]
  $region117: #{maskformer_decoder_forward.8} parent=0
    _
  %s17 = ssub.s32 1, %s15
  %s18 = scalar_select 0, %s17, %s15
  $region1: #{maskformer_decoder_forward.8} parent=0
    #allocation2 [shape = 'u8[16384]{0}', space=vmem, size = 0x4000, scoped, tag = 'input window, operand 1']
    #allocation3 [shape = 's32[2]{0}', space=sflag, size = 0x8, scoped, tag = 'scoped memory for maskformer_decoder_forward.8']
    #allocation4 [shape = 'u8[32768]{0}', space=vmem, size = 0x8000, scoped, tag = 'input window, operand 4, single buffered']
    #allocation5 [shape = 's32[1]{0}', space=sflag, size = 0x4, scoped, tag = 'scoped memory for maskformer_decoder_forward.8']
    #allocation6 [shape = 'u8[1024]{0}', space=vmem, size = 0x400, scoped, tag = 'input window, operand 6, single buffered']
    #allocation7 [shape = 'u8[32768]{0}', space=vmem, size = 0x8000, scoped, tag = 'input window, operand 7, single buffered']
    #allocation8 [shape = 's32[1]{0}', space=sflag, size = 0x4, scoped, tag = 'scoped memory for maskformer_decoder_forward.8']
    #allocation9 [shape = 'u8[2048]{0}', space=vmem, size = 0x800, scoped, tag = 'input window, operand 8, single buffered']
    #allocation10 [shape = 'u8[1024]{0}', space=vmem, size = 0x400, scoped, tag = 'input window, operand 9, single buffered']
    #allocation11 [shape = 's32[1]{0}', space=sflag, size = 0x4, scoped, tag = 'scoped memory for maskformer_decoder_forward.8']
    #allocation12 [shape = 'u8[512]{0}', space=vmem, size = 0x400, scoped, tag = 'input window, operand 13, single buffered']
    %19 = vsyncpa [#allocation3], 0
    %s20 = scalar_lea.sflag [#allocation3], 1
    %21 = vsyncpa %s20, 0
    %22 = vsyncpa [#allocation5], 0
    %23 = vsyncpa [#allocation8], 0
    %24 = vsyncpa [#allocation11], 0
    loop: start=0, step=1, limit=4
    $region2: #{maskformer_decoder_forward.8} parent=1 // loop_pre_header
      _
    $region3: #{maskformer_decoder_forward.8} parent=1 // loop_header
      %s26 = sphi 0, %s30
      %p27 = scmp.ge.s32.totalorder %s26, 4
      %s36 = sphi 0, %s38
      %s39 = sphi 0, %s36
      %s40 = sphi 0, %s39
      %s56 = sphi 0, %s40
      %s62 = sphi 0, %s64
      %s65 = sphi 0, %s62
      %s66 = sphi 0, %s65
      %s82 = sphi 0, %s66
      %s88 = sphi 0, %s90
      %s91 = sphi 0, %s88
      %s92 = sphi 0, %s91
      %s108 = sphi 0, %s92
      %s112 = sphi 0, %s112
      %s114 = sphi 0, %s112
      %s115 = sphi 0, %s114
      %s129 = sphi 0, %s115
      %s133 = sphi 0, %s133
      %s135 = sphi 0, %s133
      %s136 = sphi 0, %s135
      %s150 = sphi 0, %s136
      %s154 = sphi 0, %s154
      %s156 = sphi 0, %s154
      %s157 = sphi 0, %s156
      %s171 = sphi 0, %s157
      %s175 = sphi 0, %s175
      %s177 = sphi 0, %s175
      %s178 = sphi 0, %s177
      %s192 = sphi 0, %s178
      %s196 = sphi 0, %s196
      %s198 = sphi 0, %s196
      %s199 = sphi 0, %s198
      %s213 = sphi 0, %s199
      %s217 = sphi 0, %s217
      %s219 = sphi 0, %s217
      %s220 = sphi 0, %s219
      %s234 = sphi 0, %s220
      %s238 = sphi 0, %s238
      %s240 = sphi 0, %s238
      %s241 = sphi 0, %s240
      %s255 = sphi 0, %s241
      %s259 = sphi 0, %s259
      %s261 = sphi 0, %s259
      %s262 = sphi 0, %s261
      %s276 = sphi 0, %s262
      %s280 = sphi 0, %s280
      %s282 = sphi 0, %s280
      %s283 = sphi 0, %s282
      %s297 = sphi 0, %s283
      %s301 = sphi 0, %s301
      %s303 = sphi 0, %s301
      %s304 = sphi 0, %s303
      %s318 = sphi 0, %s304
      %s322 = sphi 0, %s322
      %s324 = sphi 0, %s322
      %s325 = sphi 0, %s324
      %s339 = sphi 0, %s325
      %s345 = sphi 0, %s347
      %s348 = sphi 0, %s345
      %s349 = sphi 0, %s348
      %s365 = sphi 0, %s349
    $region4: #{maskformer_decoder_forward.8} parent=1 // loop_header_branch
      %29 = sbr.rel (%p27) target = $region8
    $region5: #{maskformer_decoder_forward.8} parent=1 // loop_body
      %s31 = ssub.s32 %s26, 1
      %s32 = ssub.s32 %s26, 2
      %s33 = sadd.s32 %s26, 1
      %s34 = ssub.s32 %s26, %s33
      %p35 = scmp.eq.s32.totalorder %s34, 0
      %s37 = sadd.s32 %s36, 1
      %s38 = scalar_select %p35, %s36, %s37
      %p41 = pneg %p35
      %p42 = scmp.eq.s32.totalorder %s26, 1
      %p43 = por %p41, %p42
      %p44 = scmp.ne.s32.totalorder %s36, %s39
      %p45 = scmp.eq.s32.totalorder %s26, 0
      %p46 = por %p44, %p45
      %p47 = scmp.ne.s32.totalorder %s36, %s39
      %p48 = scmp.eq.s32.totalorder %s31, 1
      %p49 = por %p47, %p48
      %p50 = scmp.ne.s32.totalorder %s39, %s40
      %p51 = scmp.eq.s32.totalorder %s31, 0
      %p52 = por %p50, %p51
      %p53 = scmp.ne.s32.totalorder %s39, %s40
      %p54 = scmp.eq.s32.totalorder %s32, 1
      %p55 = por %p53, %p54
      %p57 = scmp.ne.s32.totalorder %s40, %s56
      %p58 = scmp.eq.s32.totalorder %s32, 0
      %p59 = por %p57, %p58
      %s60 = ssub.s32 %s26, %s33
      %p61 = scmp.eq.s32.totalorder %s60, 0
      %s63 = sadd.s32 %s62, 1
      %s64 = scalar_select %p61, %s62, %s63
      %p67 = pneg %p61
      %p68 = scmp.eq.s32.totalorder %s26, 1
      %p69 = por %p67, %p68
      %p70 = scmp.ne.s32.totalorder %s62, %s65
      %p71 = scmp.eq.s32.totalorder %s26, 0
      %p72 = por %p70, %p71
      %p73 = scmp.ne.s32.totalorder %s62, %s65
      %p74 = scmp.eq.s32.totalorder %s31, 1
      %p75 = por %p73, %p74
      %p76 = scmp.ne.s32.totalorder %s65, %s66
      %p77 = scmp.eq.s32.totalorder %s31, 0
      %p78 = por %p76, %p77
      %p79 = scmp.ne.s32.totalorder %s65, %s66
      %p80 = scmp.eq.s32.totalorder %s32, 1
      %p81 = por %p79, %p80
      %p83 = scmp.ne.s32.totalorder %s66, %s82
      %p84 = scmp.eq.s32.totalorder %s32, 0
      %p85 = por %p83, %p84
      %s86 = ssub.s32 %s26, %s33
      %p87 = scmp.eq.s32.totalorder %s86, 0
      %s89 = sadd.s32 %s88, 1
      %s90 = scalar_select %p87, %s88, %s89
      %p93 = pneg %p87
      %p94 = scmp.eq.s32.totalorder %s26, 1
      %p95 = por %p93, %p94
      %p96 = scmp.ne.s32.totalorder %s88, %s91
      %p97 = scmp.eq.s32.totalorder %s26, 0
      %p98 = por %p96, %p97
      %p99 = scmp.ne.s32.totalorder %s88, %s91
      %p100 = scmp.eq.s32.totalorder %s31, 1
      %p101 = por %p99, %p100
      %p102 = scmp.ne.s32.totalorder %s91, %s92
      %p103 = scmp.eq.s32.totalorder %s31, 0
      %p104 = por %p102, %p103
      %p105 = scmp.ne.s32.totalorder %s91, %s92
      %p106 = scmp.eq.s32.totalorder %s32, 1
      %p107 = por %p105, %p106
      %p109 = scmp.ne.s32.totalorder %s92, %s108
      %p110 = scmp.eq.s32.totalorder %s32, 0
      %p111 = por %p109, %p110
      %s113 = sadd.s32 %s112, 1
      %p116 = scmp.eq.s32.totalorder %s26, 1
      %p117 = scmp.ne.s32.totalorder %s112, %s114
      %p118 = scmp.eq.s32.totalorder %s26, 0
      %p119 = por %p117, %p118
      %p120 = scmp.ne.s32.totalorder %s112, %s114
      %p121 = scmp.eq.s32.totalorder %s31, 1
      %p122 = por %p120, %p121
      %p123 = scmp.ne.s32.totalorder %s114, %s115
      %p124 = scmp.eq.s32.totalorder %s31, 0
      %p125 = por %p123, %p124
      %p126 = scmp.ne.s32.totalorder %s114, %s115
      %p127 = scmp.eq.s32.totalorder %s32, 1
      %p128 = por %p126, %p127
      %p130 = scmp.ne.s32.totalorder %s115, %s129
      %p131 = scmp.eq.s32.totalorder %s32, 0
      %p132 = por %p130, %p131
      %s134 = sadd.s32 %s133, 1
      %p137 = scmp.eq.s32.totalorder %s26, 1
      %p138 = scmp.ne.s32.totalorder %s133, %s135
      %p139 = scmp.eq.s32.totalorder %s26, 0
      %p140 = por %p138, %p139
      %p141 = scmp.ne.s32.totalorder %s133, %s135
      %p142 = scmp.eq.s32.totalorder %s31, 1
      %p143 = por %p141, %p142
      %p144 = scmp.ne.s32.totalorder %s135, %s136
      %p145 = scmp.eq.s32.totalorder %s31, 0
      %p146 = por %p144, %p145
      %p147 = scmp.ne.s32.totalorder %s135, %s136
      %p148 = scmp.eq.s32.totalorder %s32, 1
      %p149 = por %p147, %p148
      %p151 = scmp.ne.s32.totalorder %s136, %s150
      %p152 = scmp.eq.s32.totalorder %s32, 0
      %p153 = por %p151, %p152
      %s155 = sadd.s32 %s154, 1
      %p158 = scmp.eq.s32.totalorder %s26, 1
      %p159 = scmp.ne.s32.totalorder %s154, %s156
      %p160 = scmp.eq.s32.totalorder %s26, 0
      %p161 = por %p159, %p160
      %p162 = scmp.ne.s32.totalorder %s154, %s156
      %p163 = scmp.eq.s32.totalorder %s31, 1
      %p164 = por %p162, %p163
      %p165 = scmp.ne.s32.totalorder %s156, %s157
      %p166 = scmp.eq.s32.totalorder %s31, 0
      %p167 = por %p165, %p166
      %p168 = scmp.ne.s32.totalorder %s156, %s157
      %p169 = scmp.eq.s32.totalorder %s32, 1
      %p170 = por %p168, %p169
      %p172 = scmp.ne.s32.totalorder %s157, %s171
      %p173 = scmp.eq.s32.totalorder %s32, 0
      %p174 = por %p172, %p173
      %s176 = sadd.s32 %s175, 1
      %p179 = scmp.eq.s32.totalorder %s26, 1
      %p180 = scmp.ne.s32.totalorder %s175, %s177
      %p181 = scmp.eq.s32.totalorder %s26, 0
      %p182 = por %p180, %p181
      %p183 = scmp.ne.s32.totalorder %s175, %s177
      %p184 = scmp.eq.s32.totalorder %s31, 1
      %p185 = por %p183, %p184
      %p186 = scmp.ne.s32.totalorder %s177, %s178
      %p187 = scmp.eq.s32.totalorder %s31, 0
      %p188 = por %p186, %p187
      %p189 = scmp.ne.s32.totalorder %s177, %s178
      %p190 = scmp.eq.s32.totalorder %s32, 1
      %p191 = por %p189, %p190
      %p193 = scmp.ne.s32.totalorder %s178, %s192
      %p194 = scmp.eq.s32.totalorder %s32, 0
      %p195 = por %p193, %p194
      %s197 = sadd.s32 %s196, 1
      %p200 = scmp.eq.s32.totalorder %s26, 1
      %p201 = scmp.ne.s32.totalorder %s196, %s198
      %p202 = scmp.eq.s32.totalorder %s26, 0
      %p203 = por %p201, %p202
      %p204 = scmp.ne.s32.totalorder %s196, %s198
      %p205 = scmp.eq.s32.totalorder %s31, 1
      %p206 = por %p204, %p205
      %p207 = scmp.ne.s32.totalorder %s198, %s199
      %p208 = scmp.eq.s32.totalorder %s31, 0
      %p209 = por %p207, %p208
      %p210 = scmp.ne.s32.totalorder %s198, %s199
      %p211 = scmp.eq.s32.totalorder %s32, 1
      %p212 = por %p210, %p211
      %p214 = scmp.ne.s32.totalorder %s199, %s213
      %p215 = scmp.eq.s32.totalorder %s32, 0
      %p216 = por %p214, %p215
      %s218 = sadd.s32 %s217, 1
      %p221 = scmp.eq.s32.totalorder %s26, 1
      %p222 = scmp.ne.s32.totalorder %s217, %s219
      %p223 = scmp.eq.s32.totalorder %s26, 0
      %p224 = por %p222, %p223
      %p225 = scmp.ne.s32.totalorder %s217, %s219
      %p226 = scmp.eq.s32.totalorder %s31, 1
      %p227 = por %p225, %p226
      %p228 = scmp.ne.s32.totalorder %s219, %s220
      %p229 = scmp.eq.s32.totalorder %s31, 0
      %p230 = por %p228, %p229
      %p231 = scmp.ne.s32.totalorder %s219, %s220
      %p232 = scmp.eq.s32.totalorder %s32, 1
      %p233 = por %p231, %p232
      %p235 = scmp.ne.s32.totalorder %s220, %s234
      %p236 = scmp.eq.s32.totalorder %s32, 0
      %p237 = por %p235, %p236
      %s239 = sadd.s32 %s238, 1
      %p242 = scmp.eq.s32.totalorder %s26, 1
      %p243 = scmp.ne.s32.totalorder %s238, %s240
      %p244 = scmp.eq.s32.totalorder %s26, 0
      %p245 = por %p243, %p244
      %p246 = scmp.ne.s32.totalorder %s238, %s240
      %p247 = scmp.eq.s32.totalorder %s31, 1
      %p248 = por %p246, %p247
      %p249 = scmp.ne.s32.totalorder %s240, %s241
      %p250 = scmp.eq.s32.totalorder %s31, 0
      %p251 = por %p249, %p250
      %p252 = scmp.ne.s32.totalorder %s240, %s241
      %p253 = scmp.eq.s32.totalorder %s32, 1
      %p254 = por %p252, %p253
      %p256 = scmp.ne.s32.totalorder %s241, %s255
      %p257 = scmp.eq.s32.totalorder %s32, 0
      %p258 = por %p256, %p257
      %s260 = sadd.s32 %s259, 1
      %p263 = scmp.eq.s32.totalorder %s26, 1
      %p264 = scmp.ne.s32.totalorder %s259, %s261
      %p265 = scmp.eq.s32.totalorder %s26, 0
      %p266 = por %p264, %p265
      %p267 = scmp.ne.s32.totalorder %s259, %s261
      %p268 = scmp.eq.s32.totalorder %s31, 1
      %p269 = por %p267, %p268
      %p270 = scmp.ne.s32.totalorder %s261, %s262
      %p271 = scmp.eq.s32.totalorder %s31, 0
      %p272 = por %p270, %p271
      %p273 = scmp.ne.s32.totalorder %s261, %s262
      %p274 = scmp.eq.s32.totalorder %s32, 1
      %p275 = por %p273, %p274
      %p277 = scmp.ne.s32.totalorder %s262, %s276
      %p278 = scmp.eq.s32.totalorder %s32, 0
      %p279 = por %p277, %p278
      %s281 = sadd.s32 %s280, 1
      %p284 = scmp.eq.s32.totalorder %s26, 1
      %p285 = scmp.ne.s32.totalorder %s280, %s282
      %p286 = scmp.eq.s32.totalorder %s26, 0
      %p287 = por %p285, %p286
      %p288 = scmp.ne.s32.totalorder %s280, %s282
      %p289 = scmp.eq.s32.totalorder %s31, 1
      %p290 = por %p288, %p289
      %p291 = scmp.ne.s32.totalorder %s282, %s283
      %p292 = scmp.eq.s32.totalorder %s31, 0
      %p293 = por %p291, %p292
      %p294 = scmp.ne.s32.totalorder %s282, %s283
      %p295 = scmp.eq.s32.totalorder %s32, 1
      %p296 = por %p294, %p295
      %p298 = scmp.ne.s32.totalorder %s283, %s297
      %p299 = scmp.eq.s32.totalorder %s32, 0
      %p300 = por %p298, %p299
      %s302 = sadd.s32 %s301, 1
      %p305 = scmp.eq.s32.totalorder %s26, 1
      %p306 = scmp.ne.s32.totalorder %s301, %s303
      %p307 = scmp.eq.s32.totalorder %s26, 0
      %p308 = por %p306, %p307
      %p309 = scmp.ne.s32.totalorder %s301, %s303
      %p310 = scmp.eq.s32.totalorder %s31, 1
      %p311 = por %p309, %p310
      %p312 = scmp.ne.s32.totalorder %s303, %s304
      %p313 = scmp.eq.s32.totalorder %s31, 0
      %p314 = por %p312, %p313
      %p315 = scmp.ne.s32.totalorder %s303, %s304
      %p316 = scmp.eq.s32.totalorder %s32, 1
      %p317 = por %p315, %p316
      %p319 = scmp.ne.s32.totalorder %s304, %s318
      %p320 = scmp.eq.s32.totalorder %s32, 0
      %p321 = por %p319, %p320
      %s323 = sadd.s32 %s322, 1
      %p326 = scmp.eq.s32.totalorder %s26, 1
      %p327 = scmp.ne.s32.totalorder %s322, %s324
      %p328 = scmp.eq.s32.totalorder %s26, 0
      %p329 = por %p327, %p328
      %p330 = scmp.ne.s32.totalorder %s322, %s324
      %p331 = scmp.eq.s32.totalorder %s31, 1
      %p332 = por %p330, %p331
      %p333 = scmp.ne.s32.totalorder %s324, %s325
      %p334 = scmp.eq.s32.totalorder %s31, 0
      %p335 = por %p333, %p334
      %p336 = scmp.ne.s32.totalorder %s324, %s325
      %p337 = scmp.eq.s32.totalorder %s32, 1
      %p338 = por %p336, %p337
      %p340 = scmp.ne.s32.totalorder %s325, %s339
      %p341 = scmp.eq.s32.totalorder %s32, 0
      %p342 = por %p340, %p341
      %s343 = ssub.s32 %s26, %s33
      %p344 = scmp.eq.s32.totalorder %s343, 0
      %s346 = sadd.s32 %s345, 1
      %s347 = scalar_select %p344, %s345, %s346
      %p350 = pneg %p344
      %p351 = scmp.eq.s32.totalorder %s26, 1
      %p352 = por %p350, %p351
      %p353 = scmp.ne.s32.totalorder %s345, %s348
      %p354 = scmp.eq.s32.totalorder %s26, 0
      %p355 = por %p353, %p354
      %p356 = scmp.ne.s32.totalorder %s345, %s348
      %p357 = scmp.eq.s32.totalorder %s31, 1
      %p358 = por %p356, %p357
      %p359 = scmp.ne.s32.totalorder %s348, %s349
      %p360 = scmp.eq.s32.totalorder %s31, 0
      %p361 = por %p359, %p360
      %p362 = scmp.ne.s32.totalorder %s348, %s349
      %p363 = scmp.eq.s32.totalorder %s32, 1
      %p364 = por %p362, %p363
      %p366 = scmp.ne.s32.totalorder %s349, %s365
      %p367 = scmp.eq.s32.totalorder %s32, 0
      %p368 = por %p366, %p367
      %p369 = scmp.le.s32.totalorder 1, %s26
      %p370 = scmp.lt.s32.totalorder %s26, 3
      %p371 = pnand %p369, %p370
      %p372 = pneg %p371
      // Predicated region
      $region9: #{maskformer_decoder_forward.8} parent=5 // pred_check
        _
      $region10: #{maskformer_decoder_forward.8} parent=5 // pred_check_branch
        %374 = sbr.rel (%p371) target = $region12
      $region11: #{maskformer_decoder_forward.8} parent=5 // pred_region
        %s375 = ssub.s32 %s26, 1
        // Predicated region
        $region13: #{maskformer_decoder_forward.8} parent=11 // pred_check
          %p376 = pneg %p125
        $region14: #{maskformer_decoder_forward.8} parent=11 // pred_check_branch
          %378 = sbr.rel (%p376) target = $region16
        $region15: #{maskformer_decoder_forward.8} parent=11 // pred_region
          _
        $region16: #{maskformer_decoder_forward.8} parent=11 // pred_fallthru
          _
        // Predicated region
        $region17: #{maskformer_decoder_forward.8} parent=11 // pred_check
          %p379 = pneg %p146
        $region18: #{maskformer_decoder_forward.8} parent=11 // pred_check_branch
          %381 = sbr.rel (%p379) target = $region20
        $region19: #{maskformer_decoder_forward.8} parent=11 // pred_region
          %383 = vsyncadd [#allocation5], 0
          %s384 = sshll.u32 %s4, 4
          %s385 = int_to_ptr.hbm [resolvable:$true] %s384
          %s386 = sshll.u32 [#allocation4], 4
          %s387 = int_to_ptr.vmem [resolvable:$true] %s386
          %392 = dma.hbm_to_vmem [thread:$0]  %s385, 1024, %s387, [#allocation5], 64, 64, 4
        $region20: #{maskformer_decoder_forward.8} parent=11 // pred_fallthru
          _
        // Predicated region
        $region21: #{maskformer_decoder_forward.8} parent=11 // pred_check
          %p393 = pneg %p167
        $region22: #{maskformer_decoder_forward.8} parent=11 // pred_check_branch
          %395 = sbr.rel (%p393) target = $region24
        $region23: #{maskformer_decoder_forward.8} parent=11 // pred_region
          _
        $region24: #{maskformer_decoder_forward.8} parent=11 // pred_fallthru
          _
        // Predicated region
        $region25: #{maskformer_decoder_forward.8} parent=11 // pred_check
          %p396 = pneg %p188
        $region26: #{maskformer_decoder_forward.8} parent=11 // pred_check_branch
          %398 = sbr.rel (%p396) target = $region28
        $region27: #{maskformer_decoder_forward.8} parent=11 // pred_region
          %400 = vsyncadd [#allocation5], 0
          %s402 = sshll.u32 %s6, 4
          %s403 = int_to_ptr.hbm [resolvable:$true] %s402
          %s404 = sshll.u32 [#allocation6], 4
          %s405 = int_to_ptr.vmem [resolvable:$true] %s404
          %407 = dma.hbm_to_vmem [thread:$0]  %s403, 32, %s405, [#allocation5]
        $region28: #{maskformer_decoder_forward.8} parent=11 // pred_fallthru
          _
        // Predicated region
        $region29: #{maskformer_decoder_forward.8} parent=11 // pred_check
          %p408 = pneg %p209
        $region30: #{maskformer_decoder_forward.8} parent=11 // pred_check_branch
          %410 = sbr.rel (%p408) target = $region32
        $region31: #{maskformer_decoder_forward.8} parent=11 // pred_region
          %412 = vsyncadd [#allocation8], 0
          %s413 = sshll.u32 %s7, 4
          %s414 = int_to_ptr.hbm [resolvable:$true] %s413
          %s415 = sshll.u32 [#allocation7], 4
          %s416 = int_to_ptr.vmem [resolvable:$true] %s415
          %421 = dma.hbm_to_vmem [thread:$0]  %s414, 1024, %s416, [#allocation8], 64, 64, 4
        $region32: #{maskformer_decoder_forward.8} parent=11 // pred_fallthru
          _
        // Predicated region
        $region33: #{maskformer_decoder_forward.8} parent=11 // pred_check
          %p422 = pneg %p230
        $region34: #{maskformer_decoder_forward.8} parent=11 // pred_check_branch
          %424 = sbr.rel (%p422) target = $region36
        $region35: #{maskformer_decoder_forward.8} parent=11 // pred_region
          %426 = vsyncadd [#allocation8], 0
          %s428 = sshll.u32 %s8, 4
          %s429 = int_to_ptr.hbm [resolvable:$true] %s428
          %s430 = sshll.u32 [#allocation9], 4
          %s431 = int_to_ptr.vmem [resolvable:$true] %s430
          %433 = dma.hbm_to_vmem [thread:$0]  %s429, 64, %s431, [#allocation8]
        $region36: #{maskformer_decoder_forward.8} parent=11 // pred_fallthru
          _
        // Predicated region
        $region37: #{maskformer_decoder_forward.8} parent=11 // pred_check
          %p434 = pneg %p251
        $region38: #{maskformer_decoder_forward.8} parent=11 // pred_check_branch
          %436 = sbr.rel (%p434) target = $region40
        $region39: #{maskformer_decoder_forward.8} parent=11 // pred_region
          %438 = vsyncadd [#allocation11], 0
          %s440 = sshll.u32 %s9, 4
          %s441 = int_to_ptr.hbm [resolvable:$true] %s440
          %s442 = sshll.u32 [#allocation10], 4
          %s443 = int_to_ptr.vmem [resolvable:$true] %s442
          %445 = dma.hbm_to_vmem [thread:$0]  %s441, 32, %s443, [#allocation11]
        $region40: #{maskformer_decoder_forward.8} parent=11 // pred_fallthru
          _
        // Predicated region
        $region41: #{maskformer_decoder_forward.8} parent=11 // pred_check
          %p446 = pneg %p272
        $region42: #{maskformer_decoder_forward.8} parent=11 // pred_check_branch
          %448 = sbr.rel (%p446) target = $region44
        $region43: #{maskformer_decoder_forward.8} parent=11 // pred_region
          _
        $region44: #{maskformer_decoder_forward.8} parent=11 // pred_fallthru
          _
        // Predicated region
        $region45: #{maskformer_decoder_forward.8} parent=11 // pred_check
          %p449 = pneg %p293
        $region46: #{maskformer_decoder_forward.8} parent=11 // pred_check_branch
          %451 = sbr.rel (%p449) target = $region48
        $region47: #{maskformer_decoder_forward.8} parent=11 // pred_region
          _
        $region48: #{maskformer_decoder_forward.8} parent=11 // pred_fallthru
          _
        // Predicated region
        $region49: #{maskformer_decoder_forward.8} parent=11 // pred_check
          %p452 = pneg %p314
        $region50: #{maskformer_decoder_forward.8} parent=11 // pred_check_branch
          %454 = sbr.rel (%p452) target = $region52
        $region51: #{maskformer_decoder_forward.8} parent=11 // pred_region
          _
        $region52: #{maskformer_decoder_forward.8} parent=11 // pred_fallthru
          _
        // Predicated region
        $region53: #{maskformer_decoder_forward.8} parent=11 // pred_check
          %p455 = pneg %p335
        $region54: #{maskformer_decoder_forward.8} parent=11 // pred_check_branch
          %457 = sbr.rel (%p455) target = $region56
        $region55: #{maskformer_decoder_forward.8} parent=11 // pred_region
          %459 = vsyncadd [#allocation11], 0
          %s461 = sshll.u32 %s13, 4
          %s462 = int_to_ptr.hbm [resolvable:$true] %s461
          %s463 = sshll.u32 [#allocation12], 4
          %s464 = int_to_ptr.vmem [resolvable:$true] %s463
          %466 = dma.hbm_to_vmem [thread:$0]  %s462, 16, %s464, [#allocation11]
        $region56: #{maskformer_decoder_forward.8} parent=11 // pred_fallthru
          _
      $region12: #{maskformer_decoder_forward.8} parent=5 // pred_fallthru
        _
      %p467 = scmp.lt.s32.totalorder %s26, 2
      // Predicated region
      $region57: #{maskformer_decoder_forward.8} parent=5 // pred_check
        %p468 = pneg %p467
      $region58: #{maskformer_decoder_forward.8} parent=5 // pred_check_branch
        %470 = sbr.rel (%p468) target = $region60
      $region59: #{maskformer_decoder_forward.8} parent=5 // pred_region
        // Predicated region
        $region61: #{maskformer_decoder_forward.8} parent=59 // pred_check
          %p471 = pneg %p46
        $region62: #{maskformer_decoder_forward.8} parent=59 // pred_check_branch
          %473 = sbr.rel (%p471) target = $region64
        $region63: #{maskformer_decoder_forward.8} parent=59 // pred_region
          %p474 = scmp.lt.s32.totalorder %s26, 1
          %s475 = scalar_select %p474, %s26, 1
          %s476 = smul.addr %s475, 8
          %s477 = scalar_lea.vmem %s0, %s476
        $region64: #{maskformer_decoder_forward.8} parent=59 // pred_fallthru
          _
        // Predicated region
        $region65: #{maskformer_decoder_forward.8} parent=59 // pred_check
          %p478 = pneg %p72
        $region66: #{maskformer_decoder_forward.8} parent=59 // pred_check_branch
          %480 = sbr.rel (%p478) target = $region68
        $region67: #{maskformer_decoder_forward.8} parent=59 // pred_region
          %s481 = sand.u32 %s62, 1
          %s482 = scalar_lea.sflag [#allocation3], %s481
          %s483 = sand.u32 %s62, 1
          %s484 = smul.addr %s483, 16
          %s485 = scalar_lea.vmem [#allocation2], %s484
          %487 = vsyncadd %s482, 0
          %s488 = smul.addr %s26, 2
          %s489 = smul.addr %s488, 8
          %s490 = scalar_lea.hbm %s1, %s489
          %s491 = sshll.u32 %s490, 4
          %s492 = int_to_ptr.hbm [resolvable:$true] %s491
          %s493 = sshll.u32 %s485, 4
          %s494 = int_to_ptr.vmem [resolvable:$true] %s493
          %499 = dma.hbm_to_vmem [thread:$0]  %s492, 256, %s494, %s482, 128, 128, 8
        $region68: #{maskformer_decoder_forward.8} parent=59 // pred_fallthru
          _
        // Predicated region
        $region69: #{maskformer_decoder_forward.8} parent=59 // pred_check
          %p500 = pneg %p98
        $region70: #{maskformer_decoder_forward.8} parent=59 // pred_check_branch
          %502 = sbr.rel (%p500) target = $region72
        $region71: #{maskformer_decoder_forward.8} parent=59 // pred_region
          %p503 = scmp.lt.s32.totalorder %s26, 1
          %s504 = scalar_select %p503, %s26, 1
          %s505 = smul.addr %s504, 4
          %s506 = scalar_lea.vmem %s2, %s505
        $region72: #{maskformer_decoder_forward.8} parent=59 // pred_fallthru
          _
      $region60: #{maskformer_decoder_forward.8} parent=5 // pred_fallthru
        _
      %p507 = scmp.le.s32.totalorder 1, %s26
      %p508 = scmp.lt.s32.totalorder %s26, 3
      %p509 = pnand %p507, %p508
      %p510 = pneg %p509
      // Predicated region
      $region73: #{maskformer_decoder_forward.8} parent=5 // pred_check
        _
      $region74: #{maskformer_decoder_forward.8} parent=5 // pred_check_branch
        %512 = sbr.rel (%p509) target = $region76
      $region75: #{maskformer_decoder_forward.8} parent=5 // pred_region
        %s513 = ssub.s32 %s26, 1
        %s514 = sand.u32 %s65, 1
        %s515 = scalar_lea.sflag [#allocation3], %s514
        %s516 = sand.u32 %s65, 1
        %s517 = smul.addr %s516, 16
        %s518 = scalar_lea.vmem [#allocation2], %s517
        // Predicated region
        $region77: #{maskformer_decoder_forward.8} parent=75 // pred_check
          %p519 = pneg %p78
        $region78: #{maskformer_decoder_forward.8} parent=75 // pred_check_branch
          %521 = sbr.rel (%p519) target = $region80
        $region79: #{maskformer_decoder_forward.8} parent=75 // pred_region
          %523 = dma.done %s515, 256
        $region80: #{maskformer_decoder_forward.8} parent=75 // pred_fallthru
          _
        // Predicated region
        $region81: #{maskformer_decoder_forward.8} parent=75 // pred_check
          %p524 = pneg %p146
        $region82: #{maskformer_decoder_forward.8} parent=75 // pred_check_branch
          %526 = sbr.rel (%p524) target = $region84
        $region83: #{maskformer_decoder_forward.8} parent=75 // pred_region
          %528 = dma.done [#allocation5], 1024
        $region84: #{maskformer_decoder_forward.8} parent=75 // pred_fallthru
          _
        // Predicated region
        $region85: #{maskformer_decoder_forward.8} parent=75 // pred_check
          %p529 = pneg %p188
        $region86: #{maskformer_decoder_forward.8} parent=75 // pred_check_branch
          %531 = sbr.rel (%p529) target = $region88
        $region87: #{maskformer_decoder_forward.8} parent=75 // pred_region
          %533 = dma.done [#allocation5], 32
        $region88: #{maskformer_decoder_forward.8} parent=75 // pred_fallthru
          _
        // Predicated region
        $region89: #{maskformer_decoder_forward.8} parent=75 // pred_check
          %p534 = pneg %p209
        $region90: #{maskformer_decoder_forward.8} parent=75 // pred_check_branch
          %536 = sbr.rel (%p534) target = $region92
        $region91: #{maskformer_decoder_forward.8} parent=75 // pred_region
          %538 = dma.done [#allocation8], 1024
        $region92: #{maskformer_decoder_forward.8} parent=75 // pred_fallthru
          _
        // Predicated region
        $region93: #{maskformer_decoder_forward.8} parent=75 // pred_check
          %p539 = pneg %p230
        $region94: #{maskformer_decoder_forward.8} parent=75 // pred_check_branch
          %541 = sbr.rel (%p539) target = $region96
        $region95: #{maskformer_decoder_forward.8} parent=75 // pred_region
          %543 = dma.done [#allocation8], 64
        $region96: #{maskformer_decoder_forward.8} parent=75 // pred_fallthru
          _
        // Predicated region
        $region97: #{maskformer_decoder_forward.8} parent=75 // pred_check
          %p544 = pneg %p251
        $region98: #{maskformer_decoder_forward.8} parent=75 // pred_check_branch
          %546 = sbr.rel (%p544) target = $region100
        $region99: #{maskformer_decoder_forward.8} parent=75 // pred_region
          %548 = dma.done [#allocation11], 32
        $region100: #{maskformer_decoder_forward.8} parent=75 // pred_fallthru
          _
        // Predicated region
        $region101: #{maskformer_decoder_forward.8} parent=75 // pred_check
          %p549 = pneg %p335
        $region102: #{maskformer_decoder_forward.8} parent=75 // pred_check_branch
          %551 = sbr.rel (%p549) target = $region104
        $region103: #{maskformer_decoder_forward.8} parent=75 // pred_region
          %553 = dma.done [#allocation11], 16
        $region104: #{maskformer_decoder_forward.8} parent=75 // pred_fallthru
          _
        %p554 = scmp.lt.s32.totalorder %s31, 1
        %s555 = scalar_select %p554, %s31, 1
        %s556 = smul.addr %s555, 8
        %s557 = scalar_lea.vmem %s0, %s556
        %p558 = pneg %p52
        %p559 = pneg %p49
        %s560 = sand.u32 %s65, 1
        %s561 = scalar_lea.sflag [#allocation3], %s560
        %s562 = sand.u32 %s65, 1
        %s563 = smul.addr %s562, 16
        %s564 = scalar_lea.vmem [#allocation2], %s563
        %p565 = pneg %p78
        %p566 = pneg %p75
        %p567 = scmp.lt.s32.totalorder %s31, 1
        %s568 = scalar_select %p567, %s31, 1
        %s569 = smul.addr %s568, 4
        %s570 = scalar_lea.vmem %s2, %s569
        %p571 = pneg %p104
        %p572 = pneg %p101
        %p573 = pneg %p125
        %p574 = pneg %p122
        %p575 = pneg %p146
        %p576 = pneg %p143
        %p577 = pneg %p167
        %p578 = pneg %p164
        %p579 = pneg %p188
        %p580 = pneg %p185
        %p581 = pneg %p209
        %p582 = pneg %p206
        %p583 = pneg %p230
        %p584 = pneg %p227
        %p585 = pneg %p251
        %p586 = pneg %p248
        %p587 = pneg %p272
        %p588 = pneg %p269
        %p589 = pneg %p293
        %p590 = pneg %p290
        %p591 = pneg %p314
        %p592 = pneg %p311
        %p593 = pneg %p335
        %p594 = pneg %p332
        %p595 = pneg %p361
        %p596 = pneg %p358
        %p597 = scmp.lt.s32.totalorder %s31, 1
        %s598 = scalar_select %p597, %s31, 1
        %s599 = smul.addr %s598, 8
        %s600 = scalar_lea.vmem %s14, %s599
        %p601 = scmp.lt.s32.totalorder %s31, 1
        %s602 = scalar_select %p601, %s31, 1
        %s603 = smul.addr %s602, 8
        %s604 = scalar_lea.vmem %s0, %s603
        %p605 = scmp.lt.s32.totalorder %s31, 1
        %s606 = scalar_select %p605, %s31, 1
        %s607 = smul.addr %s606, 4
        %s608 = scalar_lea.vmem %s2, %s607
        %p609 = scmp.lt.s32.totalorder %s31, 1
        %s610 = scalar_select %p609, %s31, 1
        %s611 = smul.addr %s610, 8
        %s612 = scalar_lea.vmem %s14, %s611
        %v614 = vld [vmem:[%s604] sm:$0xff]
        %v615 = vld [vmem:[%s518] sm:$0xff]
        %v616 = vld [vmem:[%s518 + $0x8] sm:$0xff]
        %v617 = vld [vmem:[%s608] sm:$0xf]
        %v618 = vld [vmem:[%s3] sm:$0x3]
        %v619 = vld [vmem:[#allocation4] sm:$0xf]
        %v620 = vld [vmem:[#allocation4 + $0x4] sm:$0xf]
        %v621 = vld [vmem:[#allocation4 + $0x8] sm:$0xf]
        %v622 = vld [vmem:[#allocation4 + $0xc] sm:$0xf]
        %v623 = vld [vmem:[#allocation4 + $0x10] sm:$0xf]
        %v624 = vld [vmem:[#allocation4 + $0x14] sm:$0xf]
        %v625 = vld [vmem:[#allocation4 + $0x18] sm:$0xf]
        %v626 = vld [vmem:[#allocation4 + $0x1c] sm:$0xf]
        %v627 = vld [vmem:[#allocation4 + $0x20] sm:$0xf]
        %v628 = vld [vmem:[#allocation4 + $0x24] sm:$0xf]
        %v629 = vld [vmem:[#allocation4 + $0x28] sm:$0xf]
        %v630 = vld [vmem:[#allocation4 + $0x2c] sm:$0xf]
        %v631 = vld [vmem:[#allocation4 + $0x30] sm:$0xf]
        %v632 = vld [vmem:[#allocation4 + $0x34] sm:$0xf]
        %v633 = vld [vmem:[#allocation4 + $0x38] sm:$0xf]
        %v634 = vld [vmem:[#allocation4 + $0x3c] sm:$0xf]
        %v635 = vld [vmem:[%s5] sm:$0xf]
        %vm636 = vcmask 261120
        %v637 = vsel %vm636, %v614, 0.0
        %638 = vadd.xlane.f32.xlu0 %v637
        %v639 = vpop.xlane.xlu0 %638
        %v640 = vrcp.pop 32.0
        %v641 = vmul.f32 32.0, %v640
        %v642 = vsub.f32 1.0, %v641
        %v643 = vmul.f32 %v640, %v642
        %v644 = vadd.f32 %v640, %v643
        %vm645 = vweird.f32 %v640
        %v646 = vsel %vm645, %v640, %v644
        %v647 = vmul.f32 %v639, %v646
        %v648 = vsub.f32 %v614, %v647
        %v649 = vmul.f32 %v648, %v648
        %v650 = vsel %vm636, %v649, 0.0
        %651 = vadd.xlane.f32.xlu0 %v650
        %v652 = vpop.xlane.xlu0 %651
        %v653 = vmul.f32 %v652, %v646
        %v654 = vadd.f32 %v653, 1e-05
        %v655 = vrsqrt.pop %v654
        %v656 = vmul.f32 %v655, %v654
        %v657 = vmul.f32 %v656, %v655
        %v658 = vmul.f32 0.5, %v657
        %v659 = vsub.f32 1.5, %v658
        %v660 = vmul.f32 %v655, %v659
        %vm661 = vweird.f32 %v654
        %vm662 = vweird.f32 %v655
        %vm663 = vmor %vm661, %vm662
        %v664 = vsel %vm663, %v655, %v660
        %v665 = vmul.f32 %v648, %v664
        %v666 = vperm.slane %v618, 0
        %v667 = vmul.f32 %v665, %v666
        %v668 = vperm.slane %v618, 1
        %v669 = vadd.f32 %v667, %v668
        %v670 = vpack.c.bf16 %v669, %v669
        %v671 = vpack.c.bf16 %v616, %v615
        %v672 = vperm.slane %v635, 0
        %v677 = vunpack.c.l.b16 %v619
        %v678 = vunpack.c.l.b16 %v620
        %v679 = vunpack.c.l.b16 %v621
        %v680 = vunpack.c.l.b16 %v622
        %v681 = vpack.c.b16 %v678, %v677
        %v682 = vpack.c.b16 %v680, %v679
        %v686 = vsel %vm636, %v670, 0
        %688 = vmatpush.bf16.msra.mxu0 0
        %689 = vmatpush.bf16.msra.mxu0 0
        %690 = vmatpush.bf16.msra.mxu0 0
        %691 = vmatpush.bf16.msra.mxu0 0
        %692 = vmatpush.bf16.msra.mxu0 0
        %693 = vmatpush.bf16.msra.mxu0 0
        %694 = vmatpush.bf16.msra.mxu0 %v682
        %695 = vmatpush.bf16.msra.mxu0 %v681
        %696 = vmatmul.bf16.gmra.mxu0 %v686
        %v697 = vpop.f32.mrf.mxu0
        %v698 = vadd.f32 %v672, %v697
        %v699 = vpop.f32.mrf.mxu0
        %700 = vdwg.mxu0
        %v701 = vperm.slane %v635, 1
        %v706 = vunpack.c.l.b16 %v623
        %v707 = vunpack.c.l.b16 %v624
        %v708 = vunpack.c.l.b16 %v625
        %v709 = vunpack.c.l.b16 %v626
        %v710 = vpack.c.b16 %v707, %v706
        %v711 = vpack.c.b16 %v709, %v708
        %v715 = vsel %vm636, %v671, 0
        %717 = vmatpush.bf16.msra.mxu0 0
        %718 = vmatpush.bf16.msra.mxu0 0
        %719 = vmatpush.bf16.msra.mxu0 0
        %720 = vmatpush.bf16.msra.mxu0 0
        %721 = vmatpush.bf16.msra.mxu0 0
        %722 = vmatpush.bf16.msra.mxu0 0
        %723 = vmatpush.bf16.msra.mxu0 %v711
        %724 = vmatpush.bf16.msra.mxu0 %v710
        %725 = vmatmul.bf16.gmra.mxu0 %v715
        %v726 = vpop.f32.mrf.mxu0
        %v727 = vadd.f32 %v701, %v726
        %v728 = vpop.f32.mrf.mxu0
        %v729 = vadd.f32 %v701, %v728
        %730 = vdwg.mxu0
        %v731 = vperm.slane %v635, 2
        %v736 = vunpack.c.l.b16 %v627
        %v737 = vunpack.c.l.b16 %v628
        %v738 = vunpack.c.l.b16 %v629
        %v739 = vunpack.c.l.b16 %v630
        %v740 = vpack.c.b16 %v737, %v736
        %v741 = vpack.c.b16 %v739, %v738
        %744 = vmatpush.bf16.msra.mxu0 0
        %745 = vmatpush.bf16.msra.mxu0 0
        %746 = vmatpush.bf16.msra.mxu0 0
        %747 = vmatpush.bf16.msra.mxu0 0
        %748 = vmatpush.bf16.msra.mxu0 0
        %749 = vmatpush.bf16.msra.mxu0 0
        %750 = vmatpush.bf16.msra.mxu0 %v741
        %751 = vmatpush.bf16.msra.mxu0 %v740
        %752 = vmatmul.bf16.gmra.mxu0 %v715
        %v753 = vpop.f32.mrf.mxu0
        %v754 = vadd.f32 %v731, %v753
        %v755 = vpop.f32.mrf.mxu0
        %v756 = vadd.f32 %v731, %v755
        %757 = vdwg.mxu0
        %v758 = vunpack.c.l.bf16 %v617
        %v759 = vpack.c.bf16 %v698, %v698
        %v760 = vpack.c.bf16 %v729, %v727
        %v761 = vpack.c.bf16 %v756, %v754
        %vm762 = vcmask 130048
        %v764 = vsel %vm762, %v759, 0
        %v767 = vsel %vm762, %v760, 0
        %769 = vmatpush.bf16.xpose.msra.mxu0 0
        %770 = vmatpush.bf16.xpose.msra.mxu0 0
        %771 = vmatpush.bf16.xpose.msra.mxu0 0
        %772 = vmatpush.bf16.xpose.msra.mxu0 0
        %773 = vmatpush.bf16.xpose.msra.mxu0 0
        %774 = vmatpush.bf16.xpose.msra.mxu0 0
        %775 = vmatpush.bf16.xpose.msra.mxu0 0
        %776 = vmatpush.bf16.xpose.msra.mxu0 %v767
        %777 = vmatmul.bf16.gmra.mxu0 %v764
        %v778 = vpop.f32.mrf.mxu0
        %v779 = vadd.f32 0.0, %v778
        %v780 = vpop.f32.mrf.mxu0
        %781 = vdwg.mxu0
        %v782 = vmul.f32 %v779, 0.25
        %v783 = vadd.f32 %v782, %v758
        %v784 = vsel %vm762, %v783, -inf
        %785 = vmax.xlane.f32.xlu0 %v784
        %v786 = vpop.xlane.xlu0 %785
        %v787 = vsub.f32 %v783, %v786
        %v788 = vmul.f32 %v787, 1.442695
        %v789 = vpow.pop %v788
        %v790 = vsel %vm762, %v789, 0.0
        %791 = vadd.xlane.f32.xlu0 %v790
        %v792 = vpop.xlane.xlu0 %791
        %v793 = vrcp.pop %v792
        %v794 = vmul.f32 %v789, %v793
        %v795 = vpack.c.bf16 %v794, %v794
        %v797 = vsel %vm762, %v795, 0
        %799 = vmatpush.bf16.msra.mxu0 0
        %800 = vmatpush.bf16.msra.mxu0 0
        %801 = vmatpush.bf16.msra.mxu0 0
        %802 = vmatpush.bf16.msra.mxu0 0
        %803 = vmatpush.bf16.msra.mxu0 0
        %804 = vmatpush.bf16.msra.mxu0 0
        %805 = vmatpush.bf16.msra.mxu0 0
        %806 = vmatpush.bf16.msra.mxu0 %v761
        %807 = vmatmul.bf16.gmra.mxu0 %v797
        %v808 = vpop.f32.mrf.mxu0
        %v809 = vadd.f32 0.0, %v808
        %v810 = vpop.f32.mrf.mxu0
        %811 = vdwg.mxu0
        %813 = vrot.lane.b32.xlu0 %v759, 112
        %v814 = vpop.permute.xlu0 %813
        %816 = vrot.lane.b32.xlu0 %v760, 112
        %v817 = vpop.permute.xlu0 %816
        %v819 = vsel %vm762, %v814, 0
        %v822 = vsel %vm762, %v817, 0
        %824 = vmatpush.bf16.xpose.msra.mxu0 0
        %825 = vmatpush.bf16.xpose.msra.mxu0 0
        %826 = vmatpush.bf16.xpose.msra.mxu0 0
        %827 = vmatpush.bf16.xpose.msra.mxu0 0
        %828 = vmatpush.bf16.xpose.msra.mxu0 0
        %829 = vmatpush.bf16.xpose.msra.mxu0 0
        %830 = vmatpush.bf16.xpose.msra.mxu0 0
        %831 = vmatpush.bf16.xpose.msra.mxu0 %v822
        %832 = vmatmul.bf16.gmra.mxu0 %v819
        %v833 = vpop.f32.mrf.mxu0
        %v834 = vadd.f32 0.0, %v833
        %v835 = vpop.f32.mrf.mxu0
        %836 = vdwg.mxu0
        %v837 = vmul.f32 %v834, 0.25
        %v838 = vadd.f32 %v837, %v758
        %v839 = vsel %vm762, %v838, -inf
        %840 = vmax.xlane.f32.xlu0 %v839
        %v841 = vpop.xlane.xlu0 %840
        %v842 = vsub.f32 %v838, %v841
        %v843 = vmul.f32 %v842, 1.442695
        %v844 = vpow.pop %v843
        %v845 = vsel %vm762, %v844, 0.0
        %846 = vadd.xlane.f32.xlu0 %v845
        %v847 = vpop.xlane.xlu0 %846
        %v848 = vrcp.pop %v847
        %v849 = vmul.f32 %v844, %v848
        %v850 = vpack.c.bf16 %v849, %v849
        %852 = vrot.lane.b32.xlu0 %v761, 112
        %v853 = vpop.permute.xlu0 %852
        %v856 = vsel %vm762, %v850, 0
        %858 = vmatpush.bf16.msra.mxu0 0
        %859 = vmatpush.bf16.msra.mxu0 0
        %860 = vmatpush.bf16.msra.mxu0 0
        %861 = vmatpush.bf16.msra.mxu0 0
        %862 = vmatpush.bf16.msra.mxu0 0
        %863 = vmatpush.bf16.msra.mxu0 0
        %864 = vmatpush.bf16.msra.mxu0 0
        %865 = vmatpush.bf16.msra.mxu0 %v853
        %866 = vmatmul.bf16.gmra.mxu0 %v856
        %v867 = vpop.f32.mrf.mxu0
        %v868 = vadd.f32 0.0, %v867
        %v869 = vpop.f32.mrf.mxu0
        %870 = vdwg.mxu0
        %872 = vrot.lane.b32.xlu0 %v868, 16
        %v873 = vpop.permute.xlu0 %872
        %v875 = vsel %vm762, %v809, %v873
        %v876 = vpack.c.bf16 %v875, %v875
        %v877 = vperm.slane %v635, 3
        %v882 = vunpack.c.l.b16 %v631
        %v883 = vunpack.c.l.b16 %v632
        %v884 = vunpack.c.l.b16 %v633
        %v885 = vunpack.c.l.b16 %v634
        %v886 = vpack.c.b16 %v883, %v882
        %v887 = vpack.c.b16 %v885, %v884
        %v891 = vsel %vm636, %v876, 0
        %893 = vmatpush.bf16.msra.mxu0 0
        %894 = vmatpush.bf16.msra.mxu0 0
        %895 = vmatpush.bf16.msra.mxu0 0
        %896 = vmatpush.bf16.msra.mxu0 0
        %897 = vmatpush.bf16.msra.mxu0 0
        %898 = vmatpush.bf16.msra.mxu0 0
        %899 = vmatpush.bf16.msra.mxu0 %v887
        %900 = vmatpush.bf16.msra.mxu0 %v886
        %901 = vmatmul.bf16.gmra.mxu0 %v891
        %v902 = vpop.f32.mrf.mxu0
        %v903 = vadd.f32 %v877, %v902
        %v904 = vpop.f32.mrf.mxu0
        %905 = vdwg.mxu0
        %v906 = vadd.f32 %v614, %v903
        %v907 = vld [vmem:[#allocation6] sm:$0x3]
        %v908 = vld [vmem:[#allocation7] sm:$0xf]
        %v909 = vld [vmem:[#allocation7 + $0x4] sm:$0xf]
        %v910 = vld [vmem:[#allocation7 + $0x8] sm:$0xf]
        %v911 = vld [vmem:[#allocation7 + $0xc] sm:$0xf]
        %v912 = vld [vmem:[#allocation7 + $0x10] sm:$0xf]
        %v913 = vld [vmem:[#allocation7 + $0x14] sm:$0xf]
        %v914 = vld [vmem:[#allocation7 + $0x18] sm:$0xf]
        %v915 = vld [vmem:[#allocation7 + $0x1c] sm:$0xf]
        %v916 = vld [vmem:[#allocation7 + $0x20] sm:$0xf]
        %v917 = vld [vmem:[#allocation7 + $0x24] sm:$0xf]
        %v918 = vld [vmem:[#allocation7 + $0x28] sm:$0xf]
        %v919 = vld [vmem:[#allocation7 + $0x2c] sm:$0xf]
        %v920 = vld [vmem:[#allocation7 + $0x30] sm:$0xf]
        %v921 = vld [vmem:[#allocation7 + $0x34] sm:$0xf]
        %v922 = vld [vmem:[#allocation7 + $0x38] sm:$0xf]
        %v923 = vld [vmem:[#allocation7 + $0x3c] sm:$0xf]
        %v924 = vld [vmem:[#allocation9] sm:$0xf]
        %v925 = vsel %vm636, %v906, 0.0
        %926 = vadd.xlane.f32.xlu0 %v925
        %v927 = vpop.xlane.xlu0 %926
        %v928 = vmul.f32 %v927, %v646
        %v929 = vsub.f32 %v906, %v928
        %v930 = vmul.f32 %v929, %v929
        %v931 = vsel %vm636, %v930, 0.0
        %932 = vadd.xlane.f32.xlu0 %v931
        %v933 = vpop.xlane.xlu0 %932
        %v934 = vmul.f32 %v933, %v646
        %v935 = vadd.f32 %v934, 1e-05
        %v936 = vrsqrt.pop %v935
        %v937 = vmul.f32 %v936, %v935
        %v938 = vmul.f32 %v937, %v936
        %v939 = vmul.f32 0.5, %v938
        %v940 = vsub.f32 1.5, %v939
        %v941 = vmul.f32 %v936, %v940
        %vm942 = vweird.f32 %v935
        %vm943 = vweird.f32 %v936
        %vm944 = vmor %vm942, %vm943
        %v945 = vsel %vm944, %v936, %v941
        %v946 = vmul.f32 %v929, %v945
        %v947 = vperm.slane %v907, 0
        %v948 = vmul.f32 %v946, %v947
        %v949 = vperm.slane %v907, 1
        %v950 = vadd.f32 %v948, %v949
        %v951 = vpack.c.bf16 %v950, %v950
        %v952 = vperm.slane %v924, 0
        %v957 = vunpack.c.l.b16 %v908
        %v958 = vunpack.c.l.b16 %v909
        %v959 = vunpack.c.l.b16 %v910
        %v960 = vunpack.c.l.b16 %v911
        %v961 = vpack.c.b16 %v958, %v957
        %v962 = vpack.c.b16 %v960, %v959
        %v966 = vsel %vm636, %v951, 0
        %968 = vmatpush.bf16.msra.mxu0 0
        %969 = vmatpush.bf16.msra.mxu0 0
        %970 = vmatpush.bf16.msra.mxu0 0
        %971 = vmatpush.bf16.msra.mxu0 0
        %972 = vmatpush.bf16.msra.mxu0 0
        %973 = vmatpush.bf16.msra.mxu0 0
        %974 = vmatpush.bf16.msra.mxu0 %v962
        %975 = vmatpush.bf16.msra.mxu0 %v961
        %976 = vmatmul.bf16.gmra.mxu0 %v966
        %v977 = vpop.f32.mrf.mxu0
        %v978 = vadd.f32 %v952, %v977
        %v979 = vpop.f32.mrf.mxu0
        %980 = vdwg.mxu0
        %v981 = vperm.slane %v924, 1
        %v986 = vunpack.c.l.b16 %v912
        %v987 = vunpack.c.l.b16 %v913
        %v988 = vunpack.c.l.b16 %v914
        %v989 = vunpack.c.l.b16 %v915
        %v990 = vpack.c.b16 %v987, %v986
        %v991 = vpack.c.b16 %v989, %v988
        %994 = vmatpush.bf16.msra.mxu0 0
        %995 = vmatpush.bf16.msra.mxu0 0
        %996 = vmatpush.bf16.msra.mxu0 0
        %997 = vmatpush.bf16.msra.mxu0 0
        %998 = vmatpush.bf16.msra.mxu0 0
        %999 = vmatpush.bf16.msra.mxu0 0
        %1000 = vmatpush.bf16.msra.mxu0 %v991
        %1001 = vmatpush.bf16.msra.mxu0 %v990
        %1002 = vmatmul.bf16.gmra.mxu0 %v966
        %v1003 = vpop.f32.mrf.mxu0
        %v1004 = vadd.f32 %v981, %v1003
        %v1005 = vpop.f32.mrf.mxu0
        %1006 = vdwg.mxu0
        %v1007 = vperm.slane %v924, 2
        %v1012 = vunpack.c.l.b16 %v916
        %v1013 = vunpack.c.l.b16 %v917
        %v1014 = vunpack.c.l.b16 %v918
        %v1015 = vunpack.c.l.b16 %v919
        %v1016 = vpack.c.b16 %v1013, %v1012
        %v1017 = vpack.c.b16 %v1015, %v1014
        %1020 = vmatpush.bf16.msra.mxu0 0
        %1021 = vmatpush.bf16.msra.mxu0 0
        %1022 = vmatpush.bf16.msra.mxu0 0
        %1023 = vmatpush.bf16.msra.mxu0 0
        %1024 = vmatpush.bf16.msra.mxu0 0
        %1025 = vmatpush.bf16.msra.mxu0 0
        %1026 = vmatpush.bf16.msra.mxu0 %v1017
        %1027 = vmatpush.bf16.msra.mxu0 %v1016
        %1028 = vmatmul.bf16.gmra.mxu0 %v966
        %v1029 = vpop.f32.mrf.mxu0
        %v1030 = vadd.f32 %v1007, %v1029
        %v1031 = vpop.f32.mrf.mxu0
        %1032 = vdwg.mxu0
        %v1033 = vpack.c.bf16 %v978, %v978
        %v1034 = vpack.c.bf16 %v1004, %v1004
        %v1035 = vpack.c.bf16 %v1030, %v1030
        %v1037 = vsel %vm762, %v1033, 0
        %v1040 = vsel %vm762, %v1034, 0
        %1042 = vmatpush.bf16.xpose.msra.mxu0 0
        %1043 = vmatpush.bf16.xpose.msra.mxu0 0
        %1044 = vmatpush.bf16.xpose.msra.mxu0 0
        %1045 = vmatpush.bf16.xpose.msra.mxu0 0
        %1046 = vmatpush.bf16.xpose.msra.mxu0 0
        %1047 = vmatpush.bf16.xpose.msra.mxu0 0
        %1048 = vmatpush.bf16.xpose.msra.mxu0 0
        %1049 = vmatpush.bf16.xpose.msra.mxu0 %v1040
        %1050 = vmatmul.bf16.gmra.mxu0 %v1037
        %v1051 = vpop.f32.mrf.mxu0
        %v1052 = vadd.f32 0.0, %v1051
        %v1053 = vpop.f32.mrf.mxu0
        %1054 = vdwg.mxu0
        %v1055 = vmul.f32 %v1052, 0.25
        %vm1056 = vcmask 64512
        %v1057 = vsel %vm1056, %v1055, -inf
        %1058 = vmax.xlane.f32.xlu0 %v1057
        %v1059 = vpop.xlane.xlu0 %1058
        %v1060 = vsub.f32 %v1055, %v1059
        %v1061 = vmul.f32 %v1060, 1.442695
        %v1062 = vpow.pop %v1061
        %v1063 = vsel %vm1056, %v1062, 0.0
        %1064 = vadd.xlane.f32.xlu0 %v1063
        %v1065 = vpop.xlane.xlu0 %1064
        %v1066 = vrcp.pop %v1065
        %v1067 = vmul.f32 %v1062, %v1066
        %v1068 = vpack.c.bf16 %v1067, %v1067
        %v1070 = vsel %vm1056, %v1068, 0
        %vm1072 = vcmask 1043456
        %v1074 = vsel %vm1072, %v1035, 0
        %1076 = vmatpush.bf16.msra.mxu0 0
        %1077 = vmatpush.bf16.msra.mxu0 0
        %1078 = vmatpush.bf16.msra.mxu0 0
        %1079 = vmatpush.bf16.msra.mxu0 0
        %1080 = vmatpush.bf16.msra.mxu0 0
        %1081 = vmatpush.bf16.msra.mxu0 0
        %1082 = vmatpush.bf16.msra.mxu0 0
        %1083 = vmatpush.bf16.msra.mxu0 %v1074
        %1084 = vmatmul.bf16.gmra.mxu0 %v1070
        %v1085 = vpop.f32.mrf.mxu0
        %v1086 = vadd.f32 0.0, %v1085
        %v1087 = vpop.f32.mrf.mxu0
        %1088 = vdwg.mxu0
        %1090 = vrot.lane.b32.xlu0 %v1033, 112
        %v1091 = vpop.permute.xlu0 %1090
        %1093 = vrot.lane.b32.xlu0 %v1034, 112
        %v1094 = vpop.permute.xlu0 %1093
        %v1096 = vsel %vm762, %v1091, 0
        %v1099 = vsel %vm762, %v1094, 0
        %1101 = vmatpush.bf16.xpose.msra.mxu0 0
        %1102 = vmatpush.bf16.xpose.msra.mxu0 0
        %1103 = vmatpush.bf16.xpose.msra.mxu0 0
        %1104 = vmatpush.bf16.xpose.msra.mxu0 0
        %1105 = vmatpush.bf16.xpose.msra.mxu0 0
        %1106 = vmatpush.bf16.xpose.msra.mxu0 0
        %1107 = vmatpush.bf16.xpose.msra.mxu0 0
        %1108 = vmatpush.bf16.xpose.msra.mxu0 %v1099
        %1109 = vmatmul.bf16.gmra.mxu0 %v1096
        %v1110 = vpop.f32.mrf.mxu0
        %v1111 = vadd.f32 0.0, %v1110
        %v1112 = vpop.f32.mrf.mxu0
        %1113 = vdwg.mxu0
        %v1114 = vmul.f32 %v1111, 0.25
        %v1115 = vsel %vm1056, %v1114, -inf
        %1116 = vmax.xlane.f32.xlu0 %v1115
        %v1117 = vpop.xlane.xlu0 %1116
        %v1118 = vsub.f32 %v1114, %v1117
        %v1119 = vmul.f32 %v1118, 1.442695
        %v1120 = vpow.pop %v1119
        %v1121 = vsel %vm1056, %v1120, 0.0
        %1122 = vadd.xlane.f32.xlu0 %v1121
        %v1123 = vpop.xlane.xlu0 %1122
        %v1124 = vrcp.pop %v1123
        %v1125 = vmul.f32 %v1120, %v1124
        %v1126 = vpack.c.bf16 %v1125, %v1125
        %1128 = vrot.lane.b32.xlu0 %v1035, 112
        %v1129 = vpop.permute.xlu0 %1128
        %v1131 = vsel %vm1056, %v1126, 0
        %v1134 = vsel %vm1072, %v1129, 0
        %1136 = vmatpush.bf16.msra.mxu0 0
        %1137 = vmatpush.bf16.msra.mxu0 0
        %1138 = vmatpush.bf16.msra.mxu0 0
        %1139 = vmatpush.bf16.msra.mxu0 0
        %1140 = vmatpush.bf16.msra.mxu0 0
        %1141 = vmatpush.bf16.msra.mxu0 0
        %1142 = vmatpush.bf16.msra.mxu0 0
        %1143 = vmatpush.bf16.msra.mxu0 %v1134
        %1144 = vmatmul.bf16.gmra.mxu0 %v1131
        %v1145 = vpop.f32.mrf.mxu0
        %v1146 = vadd.f32 0.0, %v1145
        %v1147 = vpop.f32.mrf.mxu0
        %1148 = vdwg.mxu0
        %1150 = vrot.lane.b32.xlu0 %v1146, 16
        %v1151 = vpop.permute.xlu0 %1150
        %v1153 = vsel %vm762, %v1086, %v1151
        %v1154 = vpack.c.bf16 %v1153, %v1153
        %v1155 = vperm.slane %v924, 3
        %v1160 = vunpack.c.l.b16 %v920
        %v1161 = vunpack.c.l.b16 %v921
        %v1162 = vunpack.c.l.b16 %v922
        %v1163 = vunpack.c.l.b16 %v923
        %v1164 = vpack.c.b16 %v1161, %v1160
        %v1165 = vpack.c.b16 %v1163, %v1162
        %v1169 = vsel %vm636, %v1154, 0
        %1171 = vmatpush.bf16.msra.mxu0 0
        %1172 = vmatpush.bf16.msra.mxu0 0
        %1173 = vmatpush.bf16.msra.mxu0 0
        %1174 = vmatpush.bf16.msra.mxu0 0
        %1175 = vmatpush.bf16.msra.mxu0 0
        %1176 = vmatpush.bf16.msra.mxu0 0
        %1177 = vmatpush.bf16.msra.mxu0 %v1165
        %1178 = vmatpush.bf16.msra.mxu0 %v1164
        %1179 = vmatmul.bf16.gmra.mxu0 %v1169
        %v1180 = vpop.f32.mrf.mxu0
        %v1181 = vadd.f32 %v1155, %v1180
        %v1182 = vpop.f32.mrf.mxu0
        %1183 = vdwg.mxu0
        %v1184 = vadd.f32 %v906, %v1181
        %v1185 = vld [vmem:[#allocation10] sm:$0x3]
        %v1186 = vld [vmem:[%s10] sm:$0xf]
        %v1187 = vld [vmem:[%s10 + $0x4] sm:$0xf]
        %v1188 = vld [vmem:[%s10 + $0x8] sm:$0xf]
        %v1189 = vld [vmem:[%s10 + $0xc] sm:$0xf]
        %v1190 = vld [vmem:[%s11] sm:$0x1]
        %v1191 = vld [vmem:[%s12] sm:$0xf]
        %v1192 = vld [vmem:[%s12 + $0x4] sm:$0xf]
        %v1193 = vld [vmem:[%s12 + $0x8] sm:$0xf]
        %v1194 = vld [vmem:[%s12 + $0xc] sm:$0xf]
        %v1195 = vld [vmem:[%s12 + $0x10] sm:$0xf]
        %v1196 = vld [vmem:[%s12 + $0x14] sm:$0xf]
        %v1197 = vld [vmem:[%s12 + $0x18] sm:$0xf]
        %v1198 = vld [vmem:[%s12 + $0x1c] sm:$0xf]
        %v1199 = vld [vmem:[#allocation12] sm:$0x1]
        %v1200 = vsel %vm636, %v1184, 0.0
        %1201 = vadd.xlane.f32.xlu0 %v1200
        %v1202 = vpop.xlane.xlu0 %1201
        %v1203 = vmul.f32 %v1202, %v646
        %v1204 = vsub.f32 %v1184, %v1203
        %v1205 = vmul.f32 %v1204, %v1204
        %v1206 = vsel %vm636, %v1205, 0.0
        %1207 = vadd.xlane.f32.xlu0 %v1206
        %v1208 = vpop.xlane.xlu0 %1207
        %v1209 = vmul.f32 %v1208, %v646
        %v1210 = vadd.f32 %v1209, 1e-05
        %v1211 = vrsqrt.pop %v1210
        %v1212 = vmul.f32 %v1211, %v1210
        %v1213 = vmul.f32 %v1212, %v1211
        %v1214 = vmul.f32 0.5, %v1213
        %v1215 = vsub.f32 1.5, %v1214
        %v1216 = vmul.f32 %v1211, %v1215
        %vm1217 = vweird.f32 %v1210
        %vm1218 = vweird.f32 %v1211
        %vm1219 = vmor %vm1217, %vm1218
        %v1220 = vsel %vm1219, %v1211, %v1216
        %v1221 = vmul.f32 %v1204, %v1220
        %v1222 = vperm.slane %v1185, 0
        %v1223 = vmul.f32 %v1221, %v1222
        %v1224 = vperm.slane %v1185, 1
        %v1225 = vadd.f32 %v1223, %v1224
        %v1226 = vpack.c.bf16 %v1225, %v1225
        %v1228 = vperm.slane %v1190, 0
        %v1234 = vunpack.c.l.b16 %v1186
        %v1235 = vunpack.c.l.b16 %v1187
        %v1236 = vunpack.c.l.b16 %v1188
        %v1237 = vunpack.c.l.b16 %v1189
        %v1238 = vpack.c.b16 %v1235, %v1234
        %v1239 = vpack.c.b16 %v1237, %v1236
        %v1243 = vsel %vm636, %v1226, 0
        %1245 = vmatpush.bf16.msra.mxu0 0
        %1246 = vmatpush.bf16.msra.mxu0 0
        %1247 = vmatpush.bf16.msra.mxu0 0
        %1248 = vmatpush.bf16.msra.mxu0 0
        %1249 = vmatpush.bf16.msra.mxu0 0
        %1250 = vmatpush.bf16.msra.mxu0 0
        %1251 = vmatpush.bf16.msra.mxu0 %v1239
        %1252 = vmatpush.bf16.msra.mxu0 %v1238
        %1253 = vmatmul.bf16.gmra.mxu0 %v1243
        %v1254 = vpop.f32.mrf.mxu0
        %v1255 = vadd.f32 %v1228, %v1254
        %v1256 = vpop.f32.mrf.mxu0
        %1257 = vdwg.mxu0
        %v1258 = vmul.f32 %v1255, %v1255
        %v1259 = vmul.f32 %v1255, %v1258
        %v1260 = vmul.f32 %v1259, 0.044715
        %v1261 = vadd.f32 %v1255, %v1260
        %v1262 = vmul.f32 %v1261, 0.7978846
        %v1263 = vtanh.pop %v1262
        %v1264 = vadd.f32 %v1263, 1.0
        %v1265 = vmul.f32 %v1264, 0.5
        %v1266 = vmul.f32 %v1255, %v1265
        %v1267 = vpack.c.bf16 %v1266, %v1266
        %v1276 = vunpack.c.l.b16 %v1191
        %v1277 = vunpack.c.l.b16 %v1192
        %v1278 = vunpack.c.l.b16 %v1193
        %v1279 = vunpack.c.l.b16 %v1194
        %v1280 = vunpack.c.l.b16 %v1195
        %v1281 = vunpack.c.l.b16 %v1196
        %v1282 = vunpack.c.l.b16 %v1197
        %v1283 = vunpack.c.l.b16 %v1198
        %v1284 = vpack.c.b16 %v1277, %v1276
        %v1285 = vpack.c.b16 %v1279, %v1278
        %v1286 = vpack.c.b16 %v1281, %v1280
        %v1287 = vpack.c.b16 %v1283, %v1282
        %vm1292 = vcmask 523264
        %v1294 = vsel %vm1292, %v1267, 0
        %1296 = vmatpush.bf16.msra.mxu0 0
        %1297 = vmatpush.bf16.msra.mxu0 0
        %1298 = vmatpush.bf16.msra.mxu0 0
        %1299 = vmatpush.bf16.msra.mxu0 0
        %1300 = vmatpush.bf16.msra.mxu0 %v1287
        %1301 = vmatpush.bf16.msra.mxu0 %v1286
        %1302 = vmatpush.bf16.msra.mxu0 %v1285
        %1303 = vmatpush.bf16.msra.mxu0 %v1284
        %1304 = vmatmul.bf16.gmra.mxu0 %v1294
        %v1305 = vpop.f32.mrf.mxu0
        %v1306 = vadd.f32 0.0, %v1305
        %v1307 = vpop.f32.mrf.mxu0
        %1308 = vdwg.mxu0
        %v1309 = vadd.f32 %v1184, %v1306
        %v1311 = vperm.slane %v1199, 0
        %v1313 = vadd.f32 %v1309, %v1311
        %1314 = vst.msk [vmem:[%s612] sm:$0xff] %vm636, %v1313
        %p1315 = scmp.lt.s32.totalorder %s31, 1
        %s1316 = scalar_select %p1315, %s31, 1
        %s1317 = smul.addr %s1316, 8
        %s1318 = scalar_lea.vmem %s14, %s1317
        // Predicated region
        $region105: #{maskformer_decoder_forward.8} parent=75 // pred_check
          %p1319 = pneg %p358
        $region106: #{maskformer_decoder_forward.8} parent=75 // pred_check_branch
          %1321 = sbr.rel (%p1319) target = $region108
        $region107: #{maskformer_decoder_forward.8} parent=75 // pred_region
          _
        $region108: #{maskformer_decoder_forward.8} parent=75 // pred_fallthru
          _
      $region76: #{maskformer_decoder_forward.8} parent=5 // pred_fallthru
        _
      %p1322 = scmp.le.s32.totalorder 2, %s26
      // Predicated region
      $region109: #{maskformer_decoder_forward.8} parent=5 // pred_check
        %p1323 = pneg %p1322
      $region110: #{maskformer_decoder_forward.8} parent=5 // pred_check_branch
        %1325 = sbr.rel (%p1323) target = $region112
      $region111: #{maskformer_decoder_forward.8} parent=5 // pred_region
        %s1326 = ssub.s32 %s26, 2
        // Predicated region
        $region113: #{maskformer_decoder_forward.8} parent=111 // pred_check
          %p1327 = pneg %p364
        $region114: #{maskformer_decoder_forward.8} parent=111 // pred_check_branch
          %1329 = sbr.rel (%p1327) target = $region116
        $region115: #{maskformer_decoder_forward.8} parent=111 // pred_region
          %p1330 = scmp.lt.s32.totalorder %s32, 1
          %s1331 = scalar_select %p1330, %s32, 1
          %s1332 = smul.addr %s1331, 8
          %s1333 = scalar_lea.vmem %s14, %s1332
        $region116: #{maskformer_decoder_forward.8} parent=111 // pred_fallthru
          _
      $region112: #{maskformer_decoder_forward.8} parent=5 // pred_fallthru
        _
    $region6: #{maskformer_decoder_forward.8} parent=1 // loop_footer
      %s30 = sadd.s32 1, %s26
    $region7: #{maskformer_decoder_forward.8} parent=1 // loop_footer_branch
      %25 = sbr.rel target = $region3
    $region8: #{maskformer_decoder_forward.8} parent=1 // loop_exit
      _
    %1334 = vsyncpa [#allocation3], 1
    %s1335 = scalar_lea.sflag [#allocation3], 1
    %1336 = vsyncpa %s1335, 1
    %1337 = vsyncpa [#allocation5], 1
    %1338 = vsyncpa [#allocation8], 1
    %1339 = vsyncpa [#allocation11], 1

// kernel: maskformer_decoder_forward.9
$region0: #{maskformer_decoder_forward.9}
  #allocation0 [shape = 'u32[]', space=smem, size = 0x4, offset = 0x4, fixed_abs, tag = 'smem constant byte address 0x4 - core index']
  #allocation1 [shape = 'u32[72,128]{1,0:T(1,128)}', space=vmem, size = 0x9000, scoped, tag = 'internal scratch']
  %s0 = inlined_call_operand.hbm [shape: f32[2,16,32], index: 0, kind: input, shape index: {}]
  %s1 = inlined_call_operand.vmem [shape: f32[2,8,32], index: 1, kind: input, shape index: {}]
  %s2 = inlined_call_operand.vmem [shape: bf16[2,16,8], index: 2, kind: input, shape index: {}]
  %s3 = inlined_call_operand.hbm [shape: f32[2,32], index: 3, kind: input, shape index: {}]
  %s4 = inlined_call_operand.vmem [shape: bf16[4,32,32], index: 4, kind: input, shape index: {}]
  %s5 = inlined_call_operand.hbm [shape: f32[4,32], index: 5, kind: input, shape index: {}]
  %s6 = inlined_call_operand.hbm [shape: f32[2,32], index: 6, kind: input, shape index: {}]
  %s7 = inlined_call_operand.hbm [shape: bf16[32,64], index: 7, kind: input, shape index: {}]
  %s8 = inlined_call_operand.hbm [shape: f32[1,64], index: 8, kind: input, shape index: {}]
  %s9 = inlined_call_operand.vmem [shape: bf16[64,32], index: 9, kind: input, shape index: {}]
  %s10 = inlined_call_operand.hbm [shape: f32[1,32], index: 10, kind: input, shape index: {}]
  %s11 = inlined_call_operand.vmem [shape: f32[2,16,32], index: 11, kind: output, shape index: {}]
  %s12 = sld [smem:[#allocation0]]
  $region105: #{maskformer_decoder_forward.9} parent=0
    _
  %s14 = ssub.s32 1, %s12
  %s15 = scalar_select 0, %s14, %s12
  $region1: #{maskformer_decoder_forward.9} parent=0
    #allocation2 [shape = 'u8[16384]{0}', space=vmem, size = 0x4000, scoped, tag = 'input window, operand 0']
    #allocation3 [shape = 's32[2]{0}', space=sflag, size = 0x8, scoped, tag = 'scoped memory for maskformer_decoder_forward.9']
    #allocation4 [shape = 'u8[1024]{0}', space=vmem, size = 0x400, scoped, tag = 'input window, operand 3, single buffered']
    #allocation5 [shape = 's32[1]{0}', space=sflag, size = 0x4, scoped, tag = 'scoped memory for maskformer_decoder_forward.9']
    #allocation6 [shape = 'u8[2048]{0}', space=vmem, size = 0x800, scoped, tag = 'input window, operand 5, single buffered']
    #allocation7 [shape = 'u8[1024]{0}', space=vmem, size = 0x400, scoped, tag = 'input window, operand 6, single buffered']
    #allocation8 [shape = 's32[1]{0}', space=sflag, size = 0x4, scoped, tag = 'scoped memory for maskformer_decoder_forward.9']
    #allocation9 [shape = 'u8[8192]{0}', space=vmem, size = 0x2000, scoped, tag = 'input window, operand 7, single buffered']
    #allocation10 [shape = 'u8[512]{0}', space=vmem, size = 0x400, scoped, tag = 'input window, operand 8, single buffered']
    #allocation11 [shape = 's32[1]{0}', space=sflag, size = 0x4, scoped, tag = 'scoped memory for maskformer_decoder_forward.9']
    #allocation12 [shape = 'u8[512]{0}', space=vmem, size = 0x400, scoped, tag = 'input window, operand 10, single buffered']
    %16 = vsyncpa [#allocation3], 0
    %s17 = scalar_lea.sflag [#allocation3], 1
    %18 = vsyncpa %s17, 0
    %19 = vsyncpa [#allocation5], 0
    %20 = vsyncpa [#allocation8], 0
    %21 = vsyncpa [#allocation11], 0
    loop: start=0, step=1, limit=4
    $region2: #{maskformer_decoder_forward.9} parent=1 // loop_pre_header
      _
    $region3: #{maskformer_decoder_forward.9} parent=1 // loop_header
      %s23 = sphi 0, %s27
      %p24 = scmp.ge.s32.totalorder %s23, 4
      %s30 = sphi 0, %s42
      %s31 = sphi 0, %s38
      %s32 = sphi 0, %s30
      %s33 = sphi 0, %s31
      %s34 = sphi 0, %s32
      %s35 = sphi 0, %s33
      %s47 = sphi 0, %s49
      %s50 = sphi 0, %s47
      %s51 = sphi 0, %s50
      %s67 = sphi 0, %s51
      %s73 = sphi 0, %s75
      %s76 = sphi 0, %s73
      %s77 = sphi 0, %s76
      %s93 = sphi 0, %s77
      %s101 = sphi 0, %s103
      %s104 = sphi 0, %s101
      %s105 = sphi 0, %s104
      %s121 = sphi 0, %s105
      %s125 = sphi 0, %s125
      %s127 = sphi 0, %s125
      %s128 = sphi 0, %s127
      %s142 = sphi 0, %s128
      %s146 = sphi 0, %s146
      %s148 = sphi 0, %s146
      %s149 = sphi 0, %s148
      %s163 = sphi 0, %s149
      %s167 = sphi 0, %s167
      %s169 = sphi 0, %s167
      %s170 = sphi 0, %s169
      %s184 = sphi 0, %s170
      %s188 = sphi 0, %s188
      %s190 = sphi 0, %s188
      %s191 = sphi 0, %s190
      %s205 = sphi 0, %s191
      %s209 = sphi 0, %s209
      %s211 = sphi 0, %s209
      %s212 = sphi 0, %s211
      %s226 = sphi 0, %s212
      %s230 = sphi 0, %s230
      %s232 = sphi 0, %s230
      %s233 = sphi 0, %s232
      %s247 = sphi 0, %s233
      %s251 = sphi 0, %s251
      %s253 = sphi 0, %s251
      %s254 = sphi 0, %s253
      %s268 = sphi 0, %s254
      %s272 = sphi 0, %s272
      %s274 = sphi 0, %s272
      %s275 = sphi 0, %s274
      %s289 = sphi 0, %s275
      %s297 = sphi 0, %s299
      %s300 = sphi 0, %s297
      %s301 = sphi 0, %s300
      %s317 = sphi 0, %s301
    $region4: #{maskformer_decoder_forward.9} parent=1 // loop_header_branch
      %26 = sbr.rel (%p24) target = $region8
    $region5: #{maskformer_decoder_forward.9} parent=1 // loop_body
      %s28 = ssub.s32 %s23, 1
      %s29 = ssub.s32 %s23, 2
      %s36 = sadd.s32 1, %s31
      %p37 = scmp.ge.s32.totalorder %s36, 1
      %s38 = scalar_select %p37, 0, %s36
      %s39 = sadd.s32 1, %s30
      %s40 = scalar_select %p37, %s39, %s30
      %p41 = scmp.ge.s32.totalorder %s40, 2
      %s42 = scalar_select %p41, 0, %s40
      %s43 = ssub.s32 %s30, %s42
      %s44 = ssub.s32 %s31, %s38
      %s45 = sor.u32 %s43, %s44
      %p46 = scmp.eq.s32.totalorder %s45, 0
      %s48 = sadd.s32 %s47, 1
      %s49 = scalar_select %p46, %s47, %s48
      %p52 = pneg %p46
      %p53 = scmp.eq.s32.totalorder %s23, 1
      %p54 = por %p52, %p53
      %p55 = scmp.ne.s32.totalorder %s47, %s50
      %p56 = scmp.eq.s32.totalorder %s23, 0
      %p57 = por %p55, %p56
      %p58 = scmp.ne.s32.totalorder %s47, %s50
      %p59 = scmp.eq.s32.totalorder %s28, 1
      %p60 = por %p58, %p59
      %p61 = scmp.ne.s32.totalorder %s50, %s51
      %p62 = scmp.eq.s32.totalorder %s28, 0
      %p63 = por %p61, %p62
      %p64 = scmp.ne.s32.totalorder %s50, %s51
      %p65 = scmp.eq.s32.totalorder %s29, 1
      %p66 = por %p64, %p65
      %p68 = scmp.ne.s32.totalorder %s51, %s67
      %p69 = scmp.eq.s32.totalorder %s29, 0
      %p70 = por %p68, %p69
      %s71 = ssub.s32 %s30, %s42
      %p72 = scmp.eq.s32.totalorder %s71, 0
      %s74 = sadd.s32 %s73, 1
      %s75 = scalar_select %p72, %s73, %s74
      %p78 = pneg %p72
      %p79 = scmp.eq.s32.totalorder %s23, 1
      %p80 = por %p78, %p79
      %p81 = scmp.ne.s32.totalorder %s73, %s76
      %p82 = scmp.eq.s32.totalorder %s23, 0
      %p83 = por %p81, %p82
      %p84 = scmp.ne.s32.totalorder %s73, %s76
      %p85 = scmp.eq.s32.totalorder %s28, 1
      %p86 = por %p84, %p85
      %p87 = scmp.ne.s32.totalorder %s76, %s77
      %p88 = scmp.eq.s32.totalorder %s28, 0
      %p89 = por %p87, %p88
      %p90 = scmp.ne.s32.totalorder %s76, %s77
      %p91 = scmp.eq.s32.totalorder %s29, 1
      %p92 = por %p90, %p91
      %p94 = scmp.ne.s32.totalorder %s77, %s93
      %p95 = scmp.eq.s32.totalorder %s29, 0
      %p96 = por %p94, %p95
      %s97 = ssub.s32 %s30, %s42
      %s98 = ssub.s32 %s31, %s38
      %s99 = sor.u32 %s97, %s98
      %p100 = scmp.eq.s32.totalorder %s99, 0
      %s102 = sadd.s32 %s101, 1
      %s103 = scalar_select %p100, %s101, %s102
      %p106 = pneg %p100
      %p107 = scmp.eq.s32.totalorder %s23, 1
      %p108 = por %p106, %p107
      %p109 = scmp.ne.s32.totalorder %s101, %s104
      %p110 = scmp.eq.s32.totalorder %s23, 0
      %p111 = por %p109, %p110
      %p112 = scmp.ne.s32.totalorder %s101, %s104
      %p113 = scmp.eq.s32.totalorder %s28, 1
      %p114 = por %p112, %p113
      %p115 = scmp.ne.s32.totalorder %s104, %s105
      %p116 = scmp.eq.s32.totalorder %s28, 0
      %p117 = por %p115, %p116
      %p118 = scmp.ne.s32.totalorder %s104, %s105
      %p119 = scmp.eq.s32.totalorder %s29, 1
      %p120 = por %p118, %p119
      %p122 = scmp.ne.s32.totalorder %s105, %s121
      %p123 = scmp.eq.s32.totalorder %s29, 0
      %p124 = por %p122, %p123
      %s126 = sadd.s32 %s125, 1
      %p129 = scmp.eq.s32.totalorder %s23, 1
      %p130 = scmp.ne.s32.totalorder %s125, %s127
      %p131 = scmp.eq.s32.totalorder %s23, 0
      %p132 = por %p130, %p131
      %p133 = scmp.ne.s32.totalorder %s125, %s127
      %p134 = scmp.eq.s32.totalorder %s28, 1
      %p135 = por %p133, %p134
      %p136 = scmp.ne.s32.totalorder %s127, %s128
      %p137 = scmp.eq.s32.totalorder %s28, 0
      %p138 = por %p136, %p137
      %p139 = scmp.ne.s32.totalorder %s127, %s128
      %p140 = scmp.eq.s32.totalorder %s29, 1
      %p141 = por %p139, %p140
      %p143 = scmp.ne.s32.totalorder %s128, %s142
      %p144 = scmp.eq.s32.totalorder %s29, 0
      %p145 = por %p143, %p144
      %s147 = sadd.s32 %s146, 1
      %p150 = scmp.eq.s32.totalorder %s23, 1
      %p151 = scmp.ne.s32.totalorder %s146, %s148
      %p152 = scmp.eq.s32.totalorder %s23, 0
      %p153 = por %p151, %p152
      %p154 = scmp.ne.s32.totalorder %s146, %s148
      %p155 = scmp.eq.s32.totalorder %s28, 1
      %p156 = por %p154, %p155
      %p157 = scmp.ne.s32.totalorder %s148, %s149
      %p158 = scmp.eq.s32.totalorder %s28, 0
      %p159 = por %p157, %p158
      %p160 = scmp.ne.s32.totalorder %s148, %s149
      %p161 = scmp.eq.s32.totalorder %s29, 1
      %p162 = por %p160, %p161
      %p164 = scmp.ne.s32.totalorder %s149, %s163
      %p165 = scmp.eq.s32.totalorder %s29, 0
      %p166 = por %p164, %p165
      %s168 = sadd.s32 %s167, 1
      %p171 = scmp.eq.s32.totalorder %s23, 1
      %p172 = scmp.ne.s32.totalorder %s167, %s169
      %p173 = scmp.eq.s32.totalorder %s23, 0
      %p174 = por %p172, %p173
      %p175 = scmp.ne.s32.totalorder %s167, %s169
      %p176 = scmp.eq.s32.totalorder %s28, 1
      %p177 = por %p175, %p176
      %p178 = scmp.ne.s32.totalorder %s169, %s170
      %p179 = scmp.eq.s32.totalorder %s28, 0
      %p180 = por %p178, %p179
      %p181 = scmp.ne.s32.totalorder %s169, %s170
      %p182 = scmp.eq.s32.totalorder %s29, 1
      %p183 = por %p181, %p182
      %p185 = scmp.ne.s32.totalorder %s170, %s184
      %p186 = scmp.eq.s32.totalorder %s29, 0
      %p187 = por %p185, %p186
      %s189 = sadd.s32 %s188, 1
      %p192 = scmp.eq.s32.totalorder %s23, 1
      %p193 = scmp.ne.s32.totalorder %s188, %s190
      %p194 = scmp.eq.s32.totalorder %s23, 0
      %p195 = por %p193, %p194
      %p196 = scmp.ne.s32.totalorder %s188, %s190
      %p197 = scmp.eq.s32.totalorder %s28, 1
      %p198 = por %p196, %p197
      %p199 = scmp.ne.s32.totalorder %s190, %s191
      %p200 = scmp.eq.s32.totalorder %s28, 0
      %p201 = por %p199, %p200
      %p202 = scmp.ne.s32.totalorder %s190, %s191
      %p203 = scmp.eq.s32.totalorder %s29, 1
      %p204 = por %p202, %p203
      %p206 = scmp.ne.s32.totalorder %s191, %s205
      %p207 = scmp.eq.s32.totalorder %s29, 0
      %p208 = por %p206, %p207
      %s210 = sadd.s32 %s209, 1
      %p213 = scmp.eq.s32.totalorder %s23, 1
      %p214 = scmp.ne.s32.totalorder %s209, %s211
      %p215 = scmp.eq.s32.totalorder %s23, 0
      %p216 = por %p214, %p215
      %p217 = scmp.ne.s32.totalorder %s209, %s211
      %p218 = scmp.eq.s32.totalorder %s28, 1
      %p219 = por %p217, %p218
      %p220 = scmp.ne.s32.totalorder %s211, %s212
      %p221 = scmp.eq.s32.totalorder %s28, 0
      %p222 = por %p220, %p221
      %p223 = scmp.ne.s32.totalorder %s211, %s212
      %p224 = scmp.eq.s32.totalorder %s29, 1
      %p225 = por %p223, %p224
      %p227 = scmp.ne.s32.totalorder %s212, %s226
      %p228 = scmp.eq.s32.totalorder %s29, 0
      %p229 = por %p227, %p228
      %s231 = sadd.s32 %s230, 1
      %p234 = scmp.eq.s32.totalorder %s23, 1
      %p235 = scmp.ne.s32.totalorder %s230, %s232
      %p236 = scmp.eq.s32.totalorder %s23, 0
      %p237 = por %p235, %p236
      %p238 = scmp.ne.s32.totalorder %s230, %s232
      %p239 = scmp.eq.s32.totalorder %s28, 1
      %p240 = por %p238, %p239
      %p241 = scmp.ne.s32.totalorder %s232, %s233
      %p242 = scmp.eq.s32.totalorder %s28, 0
      %p243 = por %p241, %p242
      %p244 = scmp.ne.s32.totalorder %s232, %s233
      %p245 = scmp.eq.s32.totalorder %s29, 1
      %p246 = por %p244, %p245
      %p248 = scmp.ne.s32.totalorder %s233, %s247
      %p249 = scmp.eq.s32.totalorder %s29, 0
      %p250 = por %p248, %p249
      %s252 = sadd.s32 %s251, 1
      %p255 = scmp.eq.s32.totalorder %s23, 1
      %p256 = scmp.ne.s32.totalorder %s251, %s253
      %p257 = scmp.eq.s32.totalorder %s23, 0
      %p258 = por %p256, %p257
      %p259 = scmp.ne.s32.totalorder %s251, %s253
      %p260 = scmp.eq.s32.totalorder %s28, 1
      %p261 = por %p259, %p260
      %p262 = scmp.ne.s32.totalorder %s253, %s254
      %p263 = scmp.eq.s32.totalorder %s28, 0
      %p264 = por %p262, %p263
      %p265 = scmp.ne.s32.totalorder %s253, %s254
      %p266 = scmp.eq.s32.totalorder %s29, 1
      %p267 = por %p265, %p266
      %p269 = scmp.ne.s32.totalorder %s254, %s268
      %p270 = scmp.eq.s32.totalorder %s29, 0
      %p271 = por %p269, %p270
      %s273 = sadd.s32 %s272, 1
      %p276 = scmp.eq.s32.totalorder %s23, 1
      %p277 = scmp.ne.s32.totalorder %s272, %s274
      %p278 = scmp.eq.s32.totalorder %s23, 0
      %p279 = por %p277, %p278
      %p280 = scmp.ne.s32.totalorder %s272, %s274
      %p281 = scmp.eq.s32.totalorder %s28, 1
      %p282 = por %p280, %p281
      %p283 = scmp.ne.s32.totalorder %s274, %s275
      %p284 = scmp.eq.s32.totalorder %s28, 0
      %p285 = por %p283, %p284
      %p286 = scmp.ne.s32.totalorder %s274, %s275
      %p287 = scmp.eq.s32.totalorder %s29, 1
      %p288 = por %p286, %p287
      %p290 = scmp.ne.s32.totalorder %s275, %s289
      %p291 = scmp.eq.s32.totalorder %s29, 0
      %p292 = por %p290, %p291
      %s293 = ssub.s32 %s30, %s42
      %s294 = ssub.s32 %s31, %s38
      %s295 = sor.u32 %s293, %s294
      %p296 = scmp.eq.s32.totalorder %s295, 0
      %s298 = sadd.s32 %s297, 1
      %s299 = scalar_select %p296, %s297, %s298
      %p302 = pneg %p296
      %p303 = scmp.eq.s32.totalorder %s23, 1
      %p304 = por %p302, %p303
      %p305 = scmp.ne.s32.totalorder %s297, %s300
      %p306 = scmp.eq.s32.totalorder %s23, 0
      %p307 = por %p305, %p306
      %p308 = scmp.ne.s32.totalorder %s297, %s300
      %p309 = scmp.eq.s32.totalorder %s28, 1
      %p310 = por %p308, %p309
      %p311 = scmp.ne.s32.totalorder %s300, %s301
      %p312 = scmp.eq.s32.totalorder %s28, 0
      %p313 = por %p311, %p312
      %p314 = scmp.ne.s32.totalorder %s300, %s301
      %p315 = scmp.eq.s32.totalorder %s29, 1
      %p316 = por %p314, %p315
      %p318 = scmp.ne.s32.totalorder %s301, %s317
      %p319 = scmp.eq.s32.totalorder %s29, 0
      %p320 = por %p318, %p319
      %p321 = scmp.le.s32.totalorder 1, %s23
      %p322 = scmp.lt.s32.totalorder %s23, 3
      %p323 = pnand %p321, %p322
      %p324 = pneg %p323
      // Predicated region
      $region9: #{maskformer_decoder_forward.9} parent=5 // pred_check
        _
      $region10: #{maskformer_decoder_forward.9} parent=5 // pred_check_branch
        %326 = sbr.rel (%p323) target = $region12
      $region11: #{maskformer_decoder_forward.9} parent=5 // pred_region
        %s327 = ssub.s32 %s23, 1
        // Predicated region
        $region13: #{maskformer_decoder_forward.9} parent=11 // pred_check
          %p328 = pneg %p138
        $region14: #{maskformer_decoder_forward.9} parent=11 // pred_check_branch
          %330 = sbr.rel (%p328) target = $region16
        $region15: #{maskformer_decoder_forward.9} parent=11 // pred_region
          %332 = vsyncadd [#allocation5], 0
          %s334 = sshll.u32 %s3, 4
          %s335 = int_to_ptr.hbm [resolvable:$true] %s334
          %s336 = sshll.u32 [#allocation4], 4
          %s337 = int_to_ptr.vmem [resolvable:$true] %s336
          %339 = dma.hbm_to_vmem [thread:$0]  %s335, 32, %s337, [#allocation5]
        $region16: #{maskformer_decoder_forward.9} parent=11 // pred_fallthru
          _
        // Predicated region
        $region17: #{maskformer_decoder_forward.9} parent=11 // pred_check
          %p340 = pneg %p159
        $region18: #{maskformer_decoder_forward.9} parent=11 // pred_check_branch
          %342 = sbr.rel (%p340) target = $region20
        $region19: #{maskformer_decoder_forward.9} parent=11 // pred_region
          _
        $region20: #{maskformer_decoder_forward.9} parent=11 // pred_fallthru
          _
        // Predicated region
        $region21: #{maskformer_decoder_forward.9} parent=11 // pred_check
          %p343 = pneg %p180
        $region22: #{maskformer_decoder_forward.9} parent=11 // pred_check_branch
          %345 = sbr.rel (%p343) target = $region24
        $region23: #{maskformer_decoder_forward.9} parent=11 // pred_region
          %347 = vsyncadd [#allocation5], 0
          %s349 = sshll.u32 %s5, 4
          %s350 = int_to_ptr.hbm [resolvable:$true] %s349
          %s351 = sshll.u32 [#allocation6], 4
          %s352 = int_to_ptr.vmem [resolvable:$true] %s351
          %354 = dma.hbm_to_vmem [thread:$0]  %s350, 64, %s352, [#allocation5]
        $region24: #{maskformer_decoder_forward.9} parent=11 // pred_fallthru
          _
        // Predicated region
        $region25: #{maskformer_decoder_forward.9} parent=11 // pred_check
          %p355 = pneg %p201
        $region26: #{maskformer_decoder_forward.9} parent=11 // pred_check_branch
          %357 = sbr.rel (%p355) target = $region28
        $region27: #{maskformer_decoder_forward.9} parent=11 // pred_region
          %359 = vsyncadd [#allocation8], 0
          %s361 = sshll.u32 %s6, 4
          %s362 = int_to_ptr.hbm [resolvable:$true] %s361
          %s363 = sshll.u32 [#allocation7], 4
          %s364 = int_to_ptr.vmem [resolvable:$true] %s363
          %366 = dma.hbm_to_vmem [thread:$0]  %s362, 32, %s364, [#allocation8]
        $region28: #{maskformer_decoder_forward.9} parent=11 // pred_fallthru
          _
        // Predicated region
        $region29: #{maskformer_decoder_forward.9} parent=11 // pred_check
          %p367 = pneg %p222
        $region30: #{maskformer_decoder_forward.9} parent=11 // pred_check_branch
          %369 = sbr.rel (%p367) target = $region32
        $region31: #{maskformer_decoder_forward.9} parent=11 // pred_region
          %371 = vsyncadd [#allocation8], 0
          %s372 = sshll.u32 %s7, 4
          %s373 = int_to_ptr.hbm [resolvable:$true] %s372
          %s374 = sshll.u32 [#allocation9], 4
          %s375 = int_to_ptr.vmem [resolvable:$true] %s374
          %380 = dma.hbm_to_vmem [thread:$0]  %s373, 256, %s375, [#allocation8], 64, 64, 4
        $region32: #{maskformer_decoder_forward.9} parent=11 // pred_fallthru
          _
        // Predicated region
        $region33: #{maskformer_decoder_forward.9} parent=11 // pred_check
          %p381 = pneg %p243
        $region34: #{maskformer_decoder_forward.9} parent=11 // pred_check_branch
          %383 = sbr.rel (%p381) target = $region36
        $region35: #{maskformer_decoder_forward.9} parent=11 // pred_region
          %385 = vsyncadd [#allocation11], 0
          %s387 = sshll.u32 %s8, 4
          %s388 = int_to_ptr.hbm [resolvable:$true] %s387
          %s389 = sshll.u32 [#allocation10], 4
          %s390 = int_to_ptr.vmem [resolvable:$true] %s389
          %392 = dma.hbm_to_vmem [thread:$0]  %s388, 16, %s390, [#allocation11]
        $region36: #{maskformer_decoder_forward.9} parent=11 // pred_fallthru
          _
        // Predicated region
        $region37: #{maskformer_decoder_forward.9} parent=11 // pred_check
          %p393 = pneg %p264
        $region38: #{maskformer_decoder_forward.9} parent=11 // pred_check_branch
          %395 = sbr.rel (%p393) target = $region40
        $region39: #{maskformer_decoder_forward.9} parent=11 // pred_region
          _
        $region40: #{maskformer_decoder_forward.9} parent=11 // pred_fallthru
          _
        // Predicated region
        $region41: #{maskformer_decoder_forward.9} parent=11 // pred_check
          %p396 = pneg %p285
        $region42: #{maskformer_decoder_forward.9} parent=11 // pred_check_branch
          %398 = sbr.rel (%p396) target = $region44
        $region43: #{maskformer_decoder_forward.9} parent=11 // pred_region
          %400 = vsyncadd [#allocation11], 0
          %s402 = sshll.u32 %s10, 4
          %s403 = int_to_ptr.hbm [resolvable:$true] %s402
          %s404 = sshll.u32 [#allocation12], 4
          %s405 = int_to_ptr.vmem [resolvable:$true] %s404
          %407 = dma.hbm_to_vmem [thread:$0]  %s403, 16, %s405, [#allocation11]
        $region44: #{maskformer_decoder_forward.9} parent=11 // pred_fallthru
          _
      $region12: #{maskformer_decoder_forward.9} parent=5 // pred_fallthru
        _
      %p408 = scmp.lt.s32.totalorder %s23, 2
      // Predicated region
      $region45: #{maskformer_decoder_forward.9} parent=5 // pred_check
        %p409 = pneg %p408
      $region46: #{maskformer_decoder_forward.9} parent=5 // pred_check_branch
        %411 = sbr.rel (%p409) target = $region48
      $region47: #{maskformer_decoder_forward.9} parent=5 // pred_region
        // Predicated region
        $region49: #{maskformer_decoder_forward.9} parent=47 // pred_check
          %p412 = pneg %p57
        $region50: #{maskformer_decoder_forward.9} parent=47 // pred_check_branch
          %414 = sbr.rel (%p412) target = $region52
        $region51: #{maskformer_decoder_forward.9} parent=47 // pred_region
          %s415 = sand.u32 %s47, 1
          %s416 = scalar_lea.sflag [#allocation3], %s415
          %s417 = sand.u32 %s47, 1
          %s418 = smul.addr %s417, 16
          %s419 = scalar_lea.vmem [#allocation2], %s418
          %s420 = smul.u32 2, %s31
          %422 = vsyncadd %s416, 0
          %s423 = smul.addr %s30, 2
          %s424 = sadd.s32 %s420, %s423
          %s425 = smul.addr %s424, 8
          %s426 = scalar_lea.hbm %s0, %s425
          %s427 = sshll.u32 %s426, 4
          %s428 = int_to_ptr.hbm [resolvable:$true] %s427
          %s429 = sshll.u32 %s419, 4
          %s430 = int_to_ptr.vmem [resolvable:$true] %s429
          %435 = dma.hbm_to_vmem [thread:$0]  %s428, 256, %s430, %s416, 128, 128, 8
        $region52: #{maskformer_decoder_forward.9} parent=47 // pred_fallthru
          _
        // Predicated region
        $region53: #{maskformer_decoder_forward.9} parent=47 // pred_check
          %p436 = pneg %p83
        $region54: #{maskformer_decoder_forward.9} parent=47 // pred_check_branch
          %438 = sbr.rel (%p436) target = $region56
        $region55: #{maskformer_decoder_forward.9} parent=47 // pred_region
          %p439 = scmp.lt.s32.totalorder %s30, 1
          %s440 = scalar_select %p439, %s30, 1
          %s441 = smul.addr %s440, 8
          %s442 = scalar_lea.vmem %s1, %s441
        $region56: #{maskformer_decoder_forward.9} parent=47 // pred_fallthru
          _
        // Predicated region
        $region57: #{maskformer_decoder_forward.9} parent=47 // pred_check
          %p443 = pneg %p111
        $region58: #{maskformer_decoder_forward.9} parent=47 // pred_check_branch
          %445 = sbr.rel (%p443) target = $region60
        $region59: #{maskformer_decoder_forward.9} parent=47 // pred_region
          %s446 = smul.u32 2, %s31
          %p447 = scmp.lt.s32.totalorder %s30, 1
          %s448 = scalar_select %p447, %s30, 1
          %p449 = scmp.lt.s32.totalorder %s446, 1
          %s450 = scalar_select %p449, %s446, 1
          %s451 = smul.addr %s448, 2
          %s452 = sadd.s32 %s450, %s451
          %s453 = smul.addr %s452, 4
          %s454 = scalar_lea.vmem %s2, %s453
          %s455 = smul.u32 2, %s31
        $region60: #{maskformer_decoder_forward.9} parent=47 // pred_fallthru
          _
      $region48: #{maskformer_decoder_forward.9} parent=5 // pred_fallthru
        _
      %p456 = scmp.le.s32.totalorder 1, %s23
      %p457 = scmp.lt.s32.totalorder %s23, 3
      %p458 = pnand %p456, %p457
      %p459 = pneg %p458
      // Predicated region
      $region61: #{maskformer_decoder_forward.9} parent=5 // pred_check
        _
      $region62: #{maskformer_decoder_forward.9} parent=5 // pred_check_branch
        %461 = sbr.rel (%p458) target = $region64
      $region63: #{maskformer_decoder_forward.9} parent=5 // pred_region
        %s462 = ssub.s32 %s23, 1
        %s463 = sand.u32 %s50, 1
        %s464 = scalar_lea.sflag [#allocation3], %s463
        %s465 = sand.u32 %s50, 1
        %s466 = smul.addr %s465, 16
        %s467 = scalar_lea.vmem [#allocation2], %s466
        // Predicated region
        $region65: #{maskformer_decoder_forward.9} parent=63 // pred_check
          %p468 = pneg %p63
        $region66: #{maskformer_decoder_forward.9} parent=63 // pred_check_branch
          %470 = sbr.rel (%p468) target = $region68
        $region67: #{maskformer_decoder_forward.9} parent=63 // pred_region
          %472 = dma.done %s464, 256
        $region68: #{maskformer_decoder_forward.9} parent=63 // pred_fallthru
          _
        // Predicated region
        $region69: #{maskformer_decoder_forward.9} parent=63 // pred_check
          %p473 = pneg %p138
        $region70: #{maskformer_decoder_forward.9} parent=63 // pred_check_branch
          %475 = sbr.rel (%p473) target = $region72
        $region71: #{maskformer_decoder_forward.9} parent=63 // pred_region
          %477 = dma.done [#allocation5], 32
        $region72: #{maskformer_decoder_forward.9} parent=63 // pred_fallthru
          _
        // Predicated region
        $region73: #{maskformer_decoder_forward.9} parent=63 // pred_check
          %p478 = pneg %p180
        $region74: #{maskformer_decoder_forward.9} parent=63 // pred_check_branch
          %480 = sbr.rel (%p478) target = $region76
        $region75: #{maskformer_decoder_forward.9} parent=63 // pred_region
          %482 = dma.done [#allocation5], 64
        $region76: #{maskformer_decoder_forward.9} parent=63 // pred_fallthru
          _
        // Predicated region
        $region77: #{maskformer_decoder_forward.9} parent=63 // pred_check
          %p483 = pneg %p201
        $region78: #{maskformer_decoder_forward.9} parent=63 // pred_check_branch
          %485 = sbr.rel (%p483) target = $region80
        $region79: #{maskformer_decoder_forward.9} parent=63 // pred_region
          %487 = dma.done [#allocation8], 32
        $region80: #{maskformer_decoder_forward.9} parent=63 // pred_fallthru
          _
        // Predicated region
        $region81: #{maskformer_decoder_forward.9} parent=63 // pred_check
          %p488 = pneg %p222
        $region82: #{maskformer_decoder_forward.9} parent=63 // pred_check_branch
          %490 = sbr.rel (%p488) target = $region84
        $region83: #{maskformer_decoder_forward.9} parent=63 // pred_region
          %492 = dma.done [#allocation8], 256
        $region84: #{maskformer_decoder_forward.9} parent=63 // pred_fallthru
          _
        // Predicated region
        $region85: #{maskformer_decoder_forward.9} parent=63 // pred_check
          %p493 = pneg %p243
        $region86: #{maskformer_decoder_forward.9} parent=63 // pred_check_branch
          %495 = sbr.rel (%p493) target = $region88
        $region87: #{maskformer_decoder_forward.9} parent=63 // pred_region
          %497 = dma.done [#allocation11], 16
        $region88: #{maskformer_decoder_forward.9} parent=63 // pred_fallthru
          _
        // Predicated region
        $region89: #{maskformer_decoder_forward.9} parent=63 // pred_check
          %p498 = pneg %p285
        $region90: #{maskformer_decoder_forward.9} parent=63 // pred_check_branch
          %500 = sbr.rel (%p498) target = $region92
        $region91: #{maskformer_decoder_forward.9} parent=63 // pred_region
          %502 = dma.done [#allocation11], 16
        $region92: #{maskformer_decoder_forward.9} parent=63 // pred_fallthru
          _
        %s503 = sand.u32 %s50, 1
        %s504 = scalar_lea.sflag [#allocation3], %s503
        %s505 = sand.u32 %s50, 1
        %s506 = smul.addr %s505, 16
        %s507 = scalar_lea.vmem [#allocation2], %s506
        %p508 = pneg %p63
        %p509 = pneg %p60
        %p510 = scmp.lt.s32.totalorder %s32, 1
        %s511 = scalar_select %p510, %s32, 1
        %s512 = smul.addr %s511, 8
        %s513 = scalar_lea.vmem %s1, %s512
        %p514 = pneg %p89
        %p515 = pneg %p86
        %s516 = smul.u32 2, %s33
        %p517 = scmp.lt.s32.totalorder %s32, 1
        %s518 = scalar_select %p517, %s32, 1
        %p519 = scmp.lt.s32.totalorder %s516, 1
        %s520 = scalar_select %p519, %s516, 1
        %s521 = smul.addr %s518, 2
        %s522 = sadd.s32 %s520, %s521
        %s523 = smul.addr %s522, 4
        %s524 = scalar_lea.vmem %s2, %s523
        %p525 = pneg %p117
        %p526 = pneg %p114
        %p527 = pneg %p138
        %p528 = pneg %p135
        %p529 = pneg %p159
        %p530 = pneg %p156
        %p531 = pneg %p180
        %p532 = pneg %p177
        %p533 = pneg %p201
        %p534 = pneg %p198
        %p535 = pneg %p222
        %p536 = pneg %p219
        %p537 = pneg %p243
        %p538 = pneg %p240
        %p539 = pneg %p264
        %p540 = pneg %p261
        %p541 = pneg %p285
        %p542 = pneg %p282
        %p543 = pneg %p313
        %p544 = pneg %p310
        %s545 = smul.u32 2, %s33
        %p546 = scmp.lt.s32.totalorder %s32, 1
        %s547 = scalar_select %p546, %s32, 1
        %p548 = scmp.lt.s32.totalorder %s545, 1
        %s549 = scalar_select %p548, %s545, 1
        %s550 = smul.addr %s547, 2
        %s551 = sadd.s32 %s549, %s550
        %s552 = smul.addr %s551, 8
        %s553 = scalar_lea.vmem %s11, %s552
        %s554 = smul.u32 2, %s33
        %p555 = scmp.lt.s32.totalorder %s32, 1
        %s556 = scalar_select %p555, %s32, 1
        %s557 = smul.addr %s556, 8
        %s558 = scalar_lea.vmem %s1, %s557
        %s559 = smul.u32 2, %s33
        %p560 = scmp.lt.s32.totalorder %s32, 1
        %s561 = scalar_select %p560, %s32, 1
        %p562 = scmp.lt.s32.totalorder %s559, 1
        %s563 = scalar_select %p562, %s559, 1
        %s564 = smul.addr %s561, 2
        %s565 = sadd.s32 %s563, %s564
        %s566 = smul.addr %s565, 4
        %s567 = scalar_lea.vmem %s2, %s566
        %s568 = smul.u32 2, %s33
        %s569 = smul.u32 2, %s33
        %p570 = scmp.lt.s32.totalorder %s32, 1
        %s571 = scalar_select %p570, %s32, 1
        %p572 = scmp.lt.s32.totalorder %s569, 1
        %s573 = scalar_select %p572, %s569, 1
        %s574 = smul.addr %s571, 2
        %s575 = sadd.s32 %s573, %s574
        %s576 = smul.addr %s575, 8
        %s577 = scalar_lea.vmem %s11, %s576
        %s578 = smul.u32 2, %s33
        %v580 = vld [vmem:[%s467] sm:$0xff]
        %v581 = vld [vmem:[%s467 + $0x8] sm:$0xff]
        %v582 = vld [vmem:[%s558] sm:$0xff]
        %v583 = vld [vmem:[%s567] sm:$0xf]
        %v584 = vld [vmem:[%s567 + $0x4] sm:$0xf]
        %v585 = vld [vmem:[#allocation4] sm:$0x3]
        %v586 = vld [vmem:[%s4] sm:$0xf]
        %v587 = vld [vmem:[%s4 + $0x4] sm:$0xf]
        %v588 = vld [vmem:[%s4 + $0x8] sm:$0xf]
        %v589 = vld [vmem:[%s4 + $0xc] sm:$0xf]
        %v590 = vld [vmem:[%s4 + $0x10] sm:$0xf]
        %v591 = vld [vmem:[%s4 + $0x14] sm:$0xf]
        %v592 = vld [vmem:[%s4 + $0x18] sm:$0xf]
        %v593 = vld [vmem:[%s4 + $0x1c] sm:$0xf]
        %v594 = vld [vmem:[%s4 + $0x20] sm:$0xf]
        %v595 = vld [vmem:[%s4 + $0x24] sm:$0xf]
        %v596 = vld [vmem:[%s4 + $0x28] sm:$0xf]
        %v597 = vld [vmem:[%s4 + $0x2c] sm:$0xf]
        %v598 = vld [vmem:[%s4 + $0x30] sm:$0xf]
        %v599 = vld [vmem:[%s4 + $0x34] sm:$0xf]
        %v600 = vld [vmem:[%s4 + $0x38] sm:$0xf]
        %v601 = vld [vmem:[%s4 + $0x3c] sm:$0xf]
        %v602 = vld [vmem:[#allocation6] sm:$0xf]
        %vm603 = vcmask 261120
        %v604 = vsel %vm603, %v580, 0.0
        %605 = vadd.xlane.f32.xlu0 %v604
        %v606 = vpop.xlane.xlu0 %605
        %v607 = vsel %vm603, %v581, 0.0
        %608 = vadd.xlane.f32.xlu0 %v607
        %v609 = vpop.xlane.xlu0 %608
        %v610 = vrcp.pop 32.0
        %v611 = vmul.f32 32.0, %v610
        %v612 = vsub.f32 1.0, %v611
        %v613 = vmul.f32 %v610, %v612
        %v614 = vadd.f32 %v610, %v613
        %vm615 = vweird.f32 %v610
        %v616 = vsel %vm615, %v610, %v614
        %v617 = vmul.f32 %v606, %v616
        %v618 = vmul.f32 %v609, %v616
        %v619 = vsub.f32 %v580, %v617
        %v620 = vsub.f32 %v581, %v618
        %v621 = vmul.f32 %v619, %v619
        %v622 = vmul.f32 %v620, %v620
        %v623 = vsel %vm603, %v621, 0.0
        %624 = vadd.xlane.f32.xlu0 %v623
        %v625 = vpop.xlane.xlu0 %624
        %v626 = vsel %vm603, %v622, 0.0
        %627 = vadd.xlane.f32.xlu0 %v626
        %v628 = vpop.xlane.xlu0 %627
        %v629 = vmul.f32 %v625, %v616
        %v630 = vmul.f32 %v628, %v616
        %v631 = vadd.f32 %v629, 1e-05
        %v632 = vadd.f32 %v630, 1e-05
        %v633 = vrsqrt.pop %v631
        %v634 = vmul.f32 %v633, %v631
        %v635 = vmul.f32 %v634, %v633
        %v636 = vmul.f32 0.5, %v635
        %v637 = vsub.f32 1.5, %v636
        %v638 = vmul.f32 %v633, %v637
        %vm639 = vweird.f32 %v631
        %vm640 = vweird.f32 %v633
        %vm641 = vmor %vm639, %vm640
        %v642 = vsel %vm641, %v633, %v638
        %v643 = vrsqrt.pop %v632
        %v644 = vmul.f32 %v643, %v632
        %v645 = vmul.f32 %v644, %v643
        %v646 = vmul.f32 0.5, %v645
        %v647 = vsub.f32 1.5, %v646
        %v648 = vmul.f32 %v643, %v647
        %vm649 = vweird.f32 %v632
        %vm650 = vweird.f32 %v643
        %vm651 = vmor %vm649, %vm650
        %v652 = vsel %vm651, %v643, %v648
        %v653 = vmul.f32 %v619, %v642
        %v654 = vmul.f32 %v620, %v652
        %v655 = vperm.slane %v585, 0
        %v656 = vmul.f32 %v653, %v655
        %v657 = vmul.f32 %v654, %v655
        %v658 = vperm.slane %v585, 1
        %v659 = vadd.f32 %v656, %v658
        %v660 = vadd.f32 %v657, %v658
        %v661 = vpack.c.bf16 %v660, %v659
        %v662 = vpack.c.bf16 %v582, %v582
        %v663 = vperm.slane %v602, 0
        %v668 = vunpack.c.l.b16 %v586
        %v669 = vunpack.c.l.b16 %v587
        %v670 = vunpack.c.l.b16 %v588
        %v671 = vunpack.c.l.b16 %v589
        %v672 = vpack.c.b16 %v669, %v668
        %v673 = vpack.c.b16 %v671, %v670
        %v677 = vsel %vm603, %v661, 0
        %679 = vmatpush.bf16.msra.mxu0 0
        %680 = vmatpush.bf16.msra.mxu0 0
        %681 = vmatpush.bf16.msra.mxu0 0
        %682 = vmatpush.bf16.msra.mxu0 0
        %683 = vmatpush.bf16.msra.mxu0 0
        %684 = vmatpush.bf16.msra.mxu0 0
        %685 = vmatpush.bf16.msra.mxu0 %v673
        %686 = vmatpush.bf16.msra.mxu0 %v672
        %687 = vmatmul.bf16.gmra.mxu0 %v677
        %v688 = vpop.f32.mrf.mxu0
        %v689 = vadd.f32 %v663, %v688
        %v690 = vpop.f32.mrf.mxu0
        %v691 = vadd.f32 %v663, %v690
        %692 = vdwg.mxu0
        %v693 = vperm.slane %v602, 1
        %v698 = vunpack.c.l.b16 %v590
        %v699 = vunpack.c.l.b16 %v591
        %v700 = vunpack.c.l.b16 %v592
        %v701 = vunpack.c.l.b16 %v593
        %v702 = vpack.c.b16 %v699, %v698
        %v703 = vpack.c.b16 %v701, %v700
        %v707 = vsel %vm603, %v662, 0
        %709 = vmatpush.bf16.msra.mxu0 0
        %710 = vmatpush.bf16.msra.mxu0 0
        %711 = vmatpush.bf16.msra.mxu0 0
        %712 = vmatpush.bf16.msra.mxu0 0
        %713 = vmatpush.bf16.msra.mxu0 0
        %714 = vmatpush.bf16.msra.mxu0 0
        %715 = vmatpush.bf16.msra.mxu0 %v703
        %716 = vmatpush.bf16.msra.mxu0 %v702
        %717 = vmatmul.bf16.gmra.mxu0 %v707
        %v718 = vpop.f32.mrf.mxu0
        %v719 = vadd.f32 %v693, %v718
        %v720 = vpop.f32.mrf.mxu0
        %721 = vdwg.mxu0
        %v722 = vperm.slane %v602, 2
        %v727 = vunpack.c.l.b16 %v594
        %v728 = vunpack.c.l.b16 %v595
        %v729 = vunpack.c.l.b16 %v596
        %v730 = vunpack.c.l.b16 %v597
        %v731 = vpack.c.b16 %v728, %v727
        %v732 = vpack.c.b16 %v730, %v729
        %735 = vmatpush.bf16.msra.mxu0 0
        %736 = vmatpush.bf16.msra.mxu0 0
        %737 = vmatpush.bf16.msra.mxu0 0
        %738 = vmatpush.bf16.msra.mxu0 0
        %739 = vmatpush.bf16.msra.mxu0 0
        %740 = vmatpush.bf16.msra.mxu0 0
        %741 = vmatpush.bf16.msra.mxu0 %v732
        %742 = vmatpush.bf16.msra.mxu0 %v731
        %743 = vmatmul.bf16.gmra.mxu0 %v707
        %v744 = vpop.f32.mrf.mxu0
        %v745 = vadd.f32 %v722, %v744
        %v746 = vpop.f32.mrf.mxu0
        %747 = vdwg.mxu0
        %v748 = vunpack.c.l.bf16 %v583
        %v749 = vunpack.c.l.bf16 %v584
        %v750 = vpack.c.bf16 %v691, %v689
        %v751 = vpack.c.bf16 %v719, %v719
        %v752 = vpack.c.bf16 %v745, %v745
        %vm753 = vcmask 130048
        %v755 = vsel %vm753, %v750, 0
        %v758 = vsel %vm753, %v751, 0
        %760 = vmatpush.bf16.xpose.msra.mxu0 0
        %761 = vmatpush.bf16.xpose.msra.mxu0 0
        %762 = vmatpush.bf16.xpose.msra.mxu0 0
        %763 = vmatpush.bf16.xpose.msra.mxu0 0
        %764 = vmatpush.bf16.xpose.msra.mxu0 0
        %765 = vmatpush.bf16.xpose.msra.mxu0 0
        %766 = vmatpush.bf16.xpose.msra.mxu0 0
        %767 = vmatpush.bf16.xpose.msra.mxu0 %v758
        %768 = vmatmul.bf16.gmra.mxu0 %v755
        %v769 = vpop.f32.mrf.mxu0
        %v770 = vadd.f32 0.0, %v769
        %v771 = vpop.f32.mrf.mxu0
        %v772 = vadd.f32 0.0, %v771
        %773 = vdwg.mxu0
        %v774 = vmul.f32 %v770, 0.25
        %v775 = vmul.f32 %v772, 0.25
        %v776 = vadd.f32 %v774, %v748
        %v777 = vadd.f32 %v775, %v749
        %vm778 = vcmask 64512
        %v779 = vsel %vm778, %v776, -inf
        %780 = vmax.xlane.f32.xlu0 %v779
        %v781 = vpop.xlane.xlu0 %780
        %v782 = vsel %vm778, %v777, -inf
        %783 = vmax.xlane.f32.xlu0 %v782
        %v784 = vpop.xlane.xlu0 %783
        %v785 = vsub.f32 %v776, %v781
        %v786 = vsub.f32 %v777, %v784
        %v787 = vmul.f32 %v785, 1.442695
        %v788 = vpow.pop %v787
        %v789 = vmul.f32 %v786, 1.442695
        %v790 = vpow.pop %v789
        %v791 = vsel %vm778, %v788, 0.0
        %792 = vadd.xlane.f32.xlu0 %v791
        %v793 = vpop.xlane.xlu0 %792
        %v794 = vsel %vm778, %v790, 0.0
        %795 = vadd.xlane.f32.xlu0 %v794
        %v796 = vpop.xlane.xlu0 %795
        %v797 = vrcp.pop %v793
        %v798 = vrcp.pop %v796
        %v799 = vmul.f32 %v788, %v797
        %v800 = vmul.f32 %v790, %v798
        %v801 = vpack.c.bf16 %v800, %v799
        %v803 = vsel %vm778, %v801, 0
        %vm805 = vcmask 1043456
        %v807 = vsel %vm805, %v752, 0
        %809 = vmatpush.bf16.msra.mxu0 0
        %810 = vmatpush.bf16.msra.mxu0 0
        %811 = vmatpush.bf16.msra.mxu0 0
        %812 = vmatpush.bf16.msra.mxu0 0
        %813 = vmatpush.bf16.msra.mxu0 0
        %814 = vmatpush.bf16.msra.mxu0 0
        %815 = vmatpush.bf16.msra.mxu0 0
        %816 = vmatpush.bf16.msra.mxu0 %v807
        %817 = vmatmul.bf16.gmra.mxu0 %v803
        %v818 = vpop.f32.mrf.mxu0
        %v819 = vadd.f32 0.0, %v818
        %v820 = vpop.f32.mrf.mxu0
        %v821 = vadd.f32 0.0, %v820
        %822 = vdwg.mxu0
        %824 = vrot.lane.b32.xlu0 %v750, 112
        %v825 = vpop.permute.xlu0 %824
        %827 = vrot.lane.b32.xlu0 %v751, 112
        %v828 = vpop.permute.xlu0 %827
        %v830 = vsel %vm753, %v825, 0
        %v833 = vsel %vm753, %v828, 0
        %835 = vmatpush.bf16.xpose.msra.mxu0 0
        %836 = vmatpush.bf16.xpose.msra.mxu0 0
        %837 = vmatpush.bf16.xpose.msra.mxu0 0
        %838 = vmatpush.bf16.xpose.msra.mxu0 0
        %839 = vmatpush.bf16.xpose.msra.mxu0 0
        %840 = vmatpush.bf16.xpose.msra.mxu0 0
        %841 = vmatpush.bf16.xpose.msra.mxu0 0
        %842 = vmatpush.bf16.xpose.msra.mxu0 %v833
        %843 = vmatmul.bf16.gmra.mxu0 %v830
        %v844 = vpop.f32.mrf.mxu0
        %v845 = vadd.f32 0.0, %v844
        %v846 = vpop.f32.mrf.mxu0
        %v847 = vadd.f32 0.0, %v846
        %848 = vdwg.mxu0
        %v849 = vmul.f32 %v845, 0.25
        %v850 = vmul.f32 %v847, 0.25
        %v851 = vadd.f32 %v849, %v748
        %v852 = vadd.f32 %v850, %v749
        %v853 = vsel %vm778, %v851, -inf
        %854 = vmax.xlane.f32.xlu0 %v853
        %v855 = vpop.xlane.xlu0 %854
        %v856 = vsel %vm778, %v852, -inf
        %857 = vmax.xlane.f32.xlu0 %v856
        %v858 = vpop.xlane.xlu0 %857
        %v859 = vsub.f32 %v851, %v855
        %v860 = vsub.f32 %v852, %v858
        %v861 = vmul.f32 %v859, 1.442695
        %v862 = vpow.pop %v861
        %v863 = vmul.f32 %v860, 1.442695
        %v864 = vpow.pop %v863
        %v865 = vsel %vm778, %v862, 0.0
        %866 = vadd.xlane.f32.xlu0 %v865
        %v867 = vpop.xlane.xlu0 %866
        %v868 = vsel %vm778, %v864, 0.0
        %869 = vadd.xlane.f32.xlu0 %v868
        %v870 = vpop.xlane.xlu0 %869
        %v871 = vrcp.pop %v867
        %v872 = vrcp.pop %v870
        %v873 = vmul.f32 %v862, %v871
        %v874 = vmul.f32 %v864, %v872
        %v875 = vpack.c.bf16 %v874, %v873
        %877 = vrot.lane.b32.xlu0 %v752, 112
        %v878 = vpop.permute.xlu0 %877
        %v880 = vsel %vm778, %v875, 0
        %v883 = vsel %vm805, %v878, 0
        %885 = vmatpush.bf16.msra.mxu0 0
        %886 = vmatpush.bf16.msra.mxu0 0
        %887 = vmatpush.bf16.msra.mxu0 0
        %888 = vmatpush.bf16.msra.mxu0 0
        %889 = vmatpush.bf16.msra.mxu0 0
        %890 = vmatpush.bf16.msra.mxu0 0
        %891 = vmatpush.bf16.msra.mxu0 0
        %892 = vmatpush.bf16.msra.mxu0 %v883
        %893 = vmatmul.bf16.gmra.mxu0 %v880
        %v894 = vpop.f32.mrf.mxu0
        %v895 = vadd.f32 0.0, %v894
        %v896 = vpop.f32.mrf.mxu0
        %v897 = vadd.f32 0.0, %v896
        %898 = vdwg.mxu0
        %901 = vrot.lane.b32.xlu0 %v895, 16
        %v902 = vpop.permute.xlu0 %901
        %903 = vrot.lane.b32.xlu0 %v897, 16
        %v904 = vpop.permute.xlu0 %903
        %v907 = vsel %vm753, %v819, %v902
        %v908 = vsel %vm753, %v821, %v904
        %v909 = vpack.c.bf16 %v908, %v907
        %v910 = vperm.slane %v602, 3
        %v915 = vunpack.c.l.b16 %v598
        %v916 = vunpack.c.l.b16 %v599
        %v917 = vunpack.c.l.b16 %v600
        %v918 = vunpack.c.l.b16 %v601
        %v919 = vpack.c.b16 %v916, %v915
        %v920 = vpack.c.b16 %v918, %v917
        %v924 = vsel %vm603, %v909, 0
        %926 = vmatpush.bf16.msra.mxu0 0
        %927 = vmatpush.bf16.msra.mxu0 0
        %928 = vmatpush.bf16.msra.mxu0 0
        %929 = vmatpush.bf16.msra.mxu0 0
        %930 = vmatpush.bf16.msra.mxu0 0
        %931 = vmatpush.bf16.msra.mxu0 0
        %932 = vmatpush.bf16.msra.mxu0 %v920
        %933 = vmatpush.bf16.msra.mxu0 %v919
        %934 = vmatmul.bf16.gmra.mxu0 %v924
        %v935 = vpop.f32.mrf.mxu0
        %v936 = vadd.f32 %v910, %v935
        %v937 = vpop.f32.mrf.mxu0
        %v938 = vadd.f32 %v910, %v937
        %939 = vdwg.mxu0
        %v940 = vadd.f32 %v580, %v936
        %v941 = vadd.f32 %v581, %v938
        %v942 = vld [vmem:[#allocation7] sm:$0x3]
        %v943 = vld [vmem:[#allocation9] sm:$0xf]
        %v944 = vld [vmem:[#allocation9 + $0x4] sm:$0xf]
        %v945 = vld [vmem:[#allocation9 + $0x8] sm:$0xf]
        %v946 = vld [vmem:[#allocation9 + $0xc] sm:$0xf]
        %v947 = vld [vmem:[#allocation10] sm:$0x1]
        %v948 = vld [vmem:[%s9] sm:$0xf]
        %v949 = vld [vmem:[%s9 + $0x4] sm:$0xf]
        %v950 = vld [vmem:[%s9 + $0x8] sm:$0xf]
        %v951 = vld [vmem:[%s9 + $0xc] sm:$0xf]
        %v952 = vld [vmem:[%s9 + $0x10] sm:$0xf]
        %v953 = vld [vmem:[%s9 + $0x14] sm:$0xf]
        %v954 = vld [vmem:[%s9 + $0x18] sm:$0xf]
        %v955 = vld [vmem:[%s9 + $0x1c] sm:$0xf]
        %v956 = vld [vmem:[#allocation12] sm:$0x1]
        %v957 = vsel %vm603, %v940, 0.0
        %958 = vadd.xlane.f32.xlu0 %v957
        %v959 = vpop.xlane.xlu0 %958
        %v960 = vsel %vm603, %v941, 0.0
        %961 = vadd.xlane.f32.xlu0 %v960
        %v962 = vpop.xlane.xlu0 %961
        %v963 = vmul.f32 %v959, %v616
        %v964 = vmul.f32 %v962, %v616
        %v965 = vsub.f32 %v940, %v963
        %v966 = vsub.f32 %v941, %v964
        %v967 = vmul.f32 %v965, %v965
        %v968 = vmul.f32 %v966, %v966
        %v969 = vsel %vm603, %v967, 0.0
        %970 = vadd.xlane.f32.xlu0 %v969
        %v971 = vpop.xlane.xlu0 %970
        %v972 = vsel %vm603, %v968, 0.0
        %973 = vadd.xlane.f32.xlu0 %v972
        %v974 = vpop.xlane.xlu0 %973
        %v975 = vmul.f32 %v971, %v616
        %v976 = vmul.f32 %v974, %v616
        %v977 = vadd.f32 %v975, 1e-05
        %v978 = vadd.f32 %v976, 1e-05
        %v979 = vrsqrt.pop %v977
        %v980 = vmul.f32 %v979, %v977
        %v981 = vmul.f32 %v980, %v979
        %v982 = vmul.f32 0.5, %v981
        %v983 = vsub.f32 1.5, %v982
        %v984 = vmul.f32 %v979, %v983
        %vm985 = vweird.f32 %v977
        %vm986 = vweird.f32 %v979
        %vm987 = vmor %vm985, %vm986
        %v988 = vsel %vm987, %v979, %v984
        %v989 = vrsqrt.pop %v978
        %v990 = vmul.f32 %v989, %v978
        %v991 = vmul.f32 %v990, %v989
        %v992 = vmul.f32 0.5, %v991
        %v993 = vsub.f32 1.5, %v992
        %v994 = vmul.f32 %v989, %v993
        %vm995 = vweird.f32 %v978
        %vm996 = vweird.f32 %v989
        %vm997 = vmor %vm995, %vm996
        %v998 = vsel %vm997, %v989, %v994
        %v999 = vmul.f32 %v965, %v988
        %v1000 = vmul.f32 %v966, %v998
        %v1001 = vperm.slane %v942, 0
        %v1002 = vmul.f32 %v999, %v1001
        %v1003 = vmul.f32 %v1000, %v1001
        %v1004 = vperm.slane %v942, 1
        %v1005 = vadd.f32 %v1002, %v1004
        %v1006 = vadd.f32 %v1003, %v1004
        %v1007 = vpack.c.bf16 %v1006, %v1005
        %v1009 = vperm.slane %v947, 0
        %v1015 = vunpack.c.l.b16 %v943
        %v1016 = vunpack.c.l.b16 %v944
        %v1017 = vunpack.c.l.b16 %v945
        %v1018 = vunpack.c.l.b16 %v946
        %v1019 = vpack.c.b16 %v1016, %v1015
        %v1020 = vpack.c.b16 %v1018, %v1017
        %v1024 = vsel %vm603, %v1007, 0
        %1026 = vmatpush.bf16.msra.mxu0 0
        %1027 = vmatpush.bf16.msra.mxu0 0
        %1028 = vmatpush.bf16.msra.mxu0 0
        %1029 = vmatpush.bf16.msra.mxu0 0
        %1030 = vmatpush.bf16.msra.mxu0 0
        %1031 = vmatpush.bf16.msra.mxu0 0
        %1032 = vmatpush.bf16.msra.mxu0 %v1020
        %1033 = vmatpush.bf16.msra.mxu0 %v1019
        %1034 = vmatmul.bf16.gmra.mxu0 %v1024
        %v1035 = vpop.f32.mrf.mxu0
        %v1036 = vadd.f32 %v1009, %v1035
        %v1037 = vpop.f32.mrf.mxu0
        %v1038 = vadd.f32 %v1009, %v1037
        %1039 = vdwg.mxu0
        %v1040 = vmul.f32 %v1036, %v1036
        %v1041 = vmul.f32 %v1038, %v1038
        %v1042 = vmul.f32 %v1036, %v1040
        %v1043 = vmul.f32 %v1038, %v1041
        %v1044 = vmul.f32 %v1042, 0.044715
        %v1045 = vmul.f32 %v1043, 0.044715
        %v1046 = vadd.f32 %v1036, %v1044
        %v1047 = vadd.f32 %v1038, %v1045
        %v1048 = vmul.f32 %v1046, 0.7978846
        %v1049 = vmul.f32 %v1047, 0.7978846
        %v1050 = vtanh.pop %v1048
        %v1051 = vtanh.pop %v1049
        %v1052 = vadd.f32 %v1050, 1.0
        %v1053 = vadd.f32 %v1051, 1.0
        %v1054 = vmul.f32 %v1052, 0.5
        %v1055 = vmul.f32 %v1053, 0.5
        %v1056 = vmul.f32 %v1036, %v1054
        %v1057 = vmul.f32 %v1038, %v1055
        %v1058 = vpack.c.bf16 %v1057, %v1056
        %v1067 = vunpack.c.l.b16 %v948
        %v1068 = vunpack.c.l.b16 %v949
        %v1069 = vunpack.c.l.b16 %v950
        %v1070 = vunpack.c.l.b16 %v951
        %v1071 = vunpack.c.l.b16 %v952
        %v1072 = vunpack.c.l.b16 %v953
        %v1073 = vunpack.c.l.b16 %v954
        %v1074 = vunpack.c.l.b16 %v955
        %v1075 = vpack.c.b16 %v1068, %v1067
        %v1076 = vpack.c.b16 %v1070, %v1069
        %v1077 = vpack.c.b16 %v1072, %v1071
        %v1078 = vpack.c.b16 %v1074, %v1073
        %vm1083 = vcmask 523264
        %v1085 = vsel %vm1083, %v1058, 0
        %1087 = vmatpush.bf16.msra.mxu0 0
        %1088 = vmatpush.bf16.msra.mxu0 0
        %1089 = vmatpush.bf16.msra.mxu0 0
        %1090 = vmatpush.bf16.msra.mxu0 0
        %1091 = vmatpush.bf16.msra.mxu0 %v1078
        %1092 = vmatpush.bf16.msra.mxu0 %v1077
        %1093 = vmatpush.bf16.msra.mxu0 %v1076
        %1094 = vmatpush.bf16.msra.mxu0 %v1075
        %1095 = vmatmul.bf16.gmra.mxu0 %v1085
        %v1096 = vpop.f32.mrf.mxu0
        %v1097 = vadd.f32 0.0, %v1096
        %v1098 = vpop.f32.mrf.mxu0
        %v1099 = vadd.f32 0.0, %v1098
        %1100 = vdwg.mxu0
        %v1101 = vadd.f32 %v940, %v1097
        %v1102 = vadd.f32 %v941, %v1099
        %v1104 = vperm.slane %v956, 0
        %v1106 = vadd.f32 %v1101, %v1104
        %v1107 = vadd.f32 %v1102, %v1104
        %1108 = vst.msk [vmem:[%s577] sm:$0xff] %vm603, %v1106
        %1109 = vst.msk [vmem:[%s577 + $0x8] sm:$0xff] %vm603, %v1107
        %s1110 = smul.u32 2, %s33
        %p1111 = scmp.lt.s32.totalorder %s32, 1
        %s1112 = scalar_select %p1111, %s32, 1
        %p1113 = scmp.lt.s32.totalorder %s1110, 1
        %s1114 = scalar_select %p1113, %s1110, 1
        %s1115 = smul.addr %s1112, 2
        %s1116 = sadd.s32 %s1114, %s1115
        %s1117 = smul.addr %s1116, 8
        %s1118 = scalar_lea.vmem %s11, %s1117
        // Predicated region
        $region93: #{maskformer_decoder_forward.9} parent=63 // pred_check
          %p1119 = pneg %p310
        $region94: #{maskformer_decoder_forward.9} parent=63 // pred_check_branch
          %1121 = sbr.rel (%p1119) target = $region96
        $region95: #{maskformer_decoder_forward.9} parent=63 // pred_region
          %s1122 = smul.u32 2, %s33
        $region96: #{maskformer_decoder_forward.9} parent=63 // pred_fallthru
          _
      $region64: #{maskformer_decoder_forward.9} parent=5 // pred_fallthru
        _
      %p1123 = scmp.le.s32.totalorder 2, %s23
      // Predicated region
      $region97: #{maskformer_decoder_forward.9} parent=5 // pred_check
        %p1124 = pneg %p1123
      $region98: #{maskformer_decoder_forward.9} parent=5 // pred_check_branch
        %1126 = sbr.rel (%p1124) target = $region100
      $region99: #{maskformer_decoder_forward.9} parent=5 // pred_region
        %s1127 = ssub.s32 %s23, 2
        // Predicated region
        $region101: #{maskformer_decoder_forward.9} parent=99 // pred_check
          %p1128 = pneg %p316
        $region102: #{maskformer_decoder_forward.9} parent=99 // pred_check_branch
          %1130 = sbr.rel (%p1128) target = $region104
        $region103: #{maskformer_decoder_forward.9} parent=99 // pred_region
          %s1131 = smul.u32 2, %s35
          %p1132 = scmp.lt.s32.totalorder %s34, 1
          %s1133 = scalar_select %p1132, %s34, 1
          %p1134 = scmp.lt.s32.totalorder %s1131, 1
          %s1135 = scalar_select %p1134, %s1131, 1
          %s1136 = smul.addr %s1133, 2
          %s1137 = sadd.s32 %s1135, %s1136
          %s1138 = smul.addr %s1137, 8
          %s1139 = scalar_lea.vmem %s11, %s1138
        $region104: #{maskformer_decoder_forward.9} parent=99 // pred_fallthru
          _
      $region100: #{maskformer_decoder_forward.9} parent=5 // pred_fallthru
        _
    $region6: #{maskformer_decoder_forward.9} parent=1 // loop_footer
      %s27 = sadd.s32 1, %s23
    $region7: #{maskformer_decoder_forward.9} parent=1 // loop_footer_branch
      %22 = sbr.rel target = $region3
    $region8: #{maskformer_decoder_forward.9} parent=1 // loop_exit
      _
    %1140 = vsyncpa [#allocation3], 1
    %s1141 = scalar_lea.sflag [#allocation3], 1
    %1142 = vsyncpa %s1141, 1
    %1143 = vsyncpa [#allocation5], 1
    %1144 = vsyncpa [#allocation8], 1
    %1145 = vsyncpa [#allocation11], 1

// kernel: maskformer_decoder_forward.12
$region0: #{maskformer_decoder_forward.12}
  #allocation0 [shape = 'u32[]', space=smem, size = 0x4, offset = 0x4, fixed_abs, tag = 'smem constant byte address 0x4 - core index']
  #allocation1 [shape = 'u32[72,128]{1,0:T(1,128)}', space=vmem, size = 0x9000, scoped, tag = 'internal scratch']
  %s0 = inlined_call_operand.vmem [shape: f32[2,16,32], index: 0, kind: input, shape index: {}]
  %s1 = inlined_call_operand.vmem [shape: f32[2,8,32], index: 1, kind: input, shape index: {}]
  %s2 = inlined_call_operand.vmem [shape: bf16[2,16,8], index: 2, kind: input, shape index: {}]
  %s3 = inlined_call_operand.hbm [shape: f32[2,32], index: 3, kind: input, shape index: {}]
  %s4 = inlined_call_operand.vmem [shape: bf16[4,32,32], index: 4, kind: input, shape index: {}]
  %s5 = inlined_call_operand.hbm [shape: f32[4,32], index: 5, kind: input, shape index: {}]
  %s6 = inlined_call_operand.hbm [shape: f32[2,32], index: 6, kind: input, shape index: {}]
  %s7 = inlined_call_operand.hbm [shape: bf16[32,64], index: 7, kind: input, shape index: {}]
  %s8 = inlined_call_operand.hbm [shape: f32[1,64], index: 8, kind: input, shape index: {}]
  %s9 = inlined_call_operand.vmem [shape: bf16[64,32], index: 9, kind: input, shape index: {}]
  %s10 = inlined_call_operand.hbm [shape: f32[1,32], index: 10, kind: input, shape index: {}]
  %s11 = inlined_call_operand.vmem [shape: f32[2,16,32], index: 11, kind: output, shape index: {}]
  %s12 = sld [smem:[#allocation0]]
  $region101: #{maskformer_decoder_forward.12} parent=0
    _
  %s14 = ssub.s32 1, %s12
  %s15 = scalar_select 0, %s14, %s12
  $region1: #{maskformer_decoder_forward.12} parent=0
    #allocation2 [shape = 'u8[1024]{0}', space=vmem, size = 0x400, scoped, tag = 'input window, operand 3, single buffered']
    #allocation3 [shape = 's32[2]{0}', space=sflag, size = 0x8, scoped, tag = 'scoped memory for maskformer_decoder_forward.12']
    #allocation4 [shape = 'u8[2048]{0}', space=vmem, size = 0x800, scoped, tag = 'input window, operand 5, single buffered']
    #allocation5 [shape = 's32[1]{0}', space=sflag, size = 0x4, scoped, tag = 'scoped memory for maskformer_decoder_forward.12']
    #allocation6 [shape = 'u8[1024]{0}', space=vmem, size = 0x400, scoped, tag = 'input window, operand 6, single buffered']
    #allocation7 [shape = 'u8[8192]{0}', space=vmem, size = 0x2000, scoped, tag = 'input window, operand 7, single buffered']
    #allocation8 [shape = 's32[1]{0}', space=sflag, size = 0x4, scoped, tag = 'scoped memory for maskformer_decoder_forward.12']
    #allocation9 [shape = 'u8[512]{0}', space=vmem, size = 0x400, scoped, tag = 'input window, operand 8, single buffered']
    #allocation10 [shape = 'u8[512]{0}', space=vmem, size = 0x400, scoped, tag = 'input window, operand 10, single buffered']
    #allocation11 [shape = 's32[1]{0}', space=sflag, size = 0x4, scoped, tag = 'scoped memory for maskformer_decoder_forward.12']
    %16 = vsyncpa [#allocation3], 0
    %17 = vsyncpa [#allocation5], 0
    %18 = vsyncpa [#allocation8], 0
    %19 = vsyncpa [#allocation11], 0
    loop: start=0, step=1, limit=4
    $region2: #{maskformer_decoder_forward.12} parent=1 // loop_pre_header
      _
    $region3: #{maskformer_decoder_forward.12} parent=1 // loop_header
      %s21 = sphi 0, %s25
      %p22 = scmp.ge.s32.totalorder %s21, 4
      %s28 = sphi 0, %s40
      %s29 = sphi 0, %s36
      %s30 = sphi 0, %s28
      %s31 = sphi 0, %s29
      %s32 = sphi 0, %s30
      %s33 = sphi 0, %s31
      %s45 = sphi 0, %s47
      %s48 = sphi 0, %s45
      %s49 = sphi 0, %s48
      %s65 = sphi 0, %s49
      %s71 = sphi 0, %s73
      %s74 = sphi 0, %s71
      %s75 = sphi 0, %s74
      %s91 = sphi 0, %s75
      %s99 = sphi 0, %s101
      %s102 = sphi 0, %s99
      %s103 = sphi 0, %s102
      %s119 = sphi 0, %s103
      %s123 = sphi 0, %s123
      %s125 = sphi 0, %s123
      %s126 = sphi 0, %s125
      %s140 = sphi 0, %s126
      %s144 = sphi 0, %s144
      %s146 = sphi 0, %s144
      %s147 = sphi 0, %s146
      %s161 = sphi 0, %s147
      %s165 = sphi 0, %s165
      %s167 = sphi 0, %s165
      %s168 = sphi 0, %s167
      %s182 = sphi 0, %s168
      %s186 = sphi 0, %s186
      %s188 = sphi 0, %s186
      %s189 = sphi 0, %s188
      %s203 = sphi 0, %s189
      %s207 = sphi 0, %s207
      %s209 = sphi 0, %s207
      %s210 = sphi 0, %s209
      %s224 = sphi 0, %s210
      %s228 = sphi 0, %s228
      %s230 = sphi 0, %s228
      %s231 = sphi 0, %s230
      %s245 = sphi 0, %s231
      %s249 = sphi 0, %s249
      %s251 = sphi 0, %s249
      %s252 = sphi 0, %s251
      %s266 = sphi 0, %s252
      %s270 = sphi 0, %s270
      %s272 = sphi 0, %s270
      %s273 = sphi 0, %s272
      %s287 = sphi 0, %s273
      %s295 = sphi 0, %s297
      %s298 = sphi 0, %s295
      %s299 = sphi 0, %s298
      %s315 = sphi 0, %s299
    $region4: #{maskformer_decoder_forward.12} parent=1 // loop_header_branch
      %24 = sbr.rel (%p22) target = $region8
    $region5: #{maskformer_decoder_forward.12} parent=1 // loop_body
      %s26 = ssub.s32 %s21, 1
      %s27 = ssub.s32 %s21, 2
      %s34 = sadd.s32 1, %s29
      %p35 = scmp.ge.s32.totalorder %s34, 1
      %s36 = scalar_select %p35, 0, %s34
      %s37 = sadd.s32 1, %s28
      %s38 = scalar_select %p35, %s37, %s28
      %p39 = scmp.ge.s32.totalorder %s38, 2
      %s40 = scalar_select %p39, 0, %s38
      %s41 = ssub.s32 %s28, %s40
      %s42 = ssub.s32 %s29, %s36
      %s43 = sor.u32 %s41, %s42
      %p44 = scmp.eq.s32.totalorder %s43, 0
      %s46 = sadd.s32 %s45, 1
      %s47 = scalar_select %p44, %s45, %s46
      %p50 = pneg %p44
      %p51 = scmp.eq.s32.totalorder %s21, 1
      %p52 = por %p50, %p51
      %p53 = scmp.ne.s32.totalorder %s45, %s48
      %p54 = scmp.eq.s32.totalorder %s21, 0
      %p55 = por %p53, %p54
      %p56 = scmp.ne.s32.totalorder %s45, %s48
      %p57 = scmp.eq.s32.totalorder %s26, 1
      %p58 = por %p56, %p57
      %p59 = scmp.ne.s32.totalorder %s48, %s49
      %p60 = scmp.eq.s32.totalorder %s26, 0
      %p61 = por %p59, %p60
      %p62 = scmp.ne.s32.totalorder %s48, %s49
      %p63 = scmp.eq.s32.totalorder %s27, 1
      %p64 = por %p62, %p63
      %p66 = scmp.ne.s32.totalorder %s49, %s65
      %p67 = scmp.eq.s32.totalorder %s27, 0
      %p68 = por %p66, %p67
      %s69 = ssub.s32 %s28, %s40
      %p70 = scmp.eq.s32.totalorder %s69, 0
      %s72 = sadd.s32 %s71, 1
      %s73 = scalar_select %p70, %s71, %s72
      %p76 = pneg %p70
      %p77 = scmp.eq.s32.totalorder %s21, 1
      %p78 = por %p76, %p77
      %p79 = scmp.ne.s32.totalorder %s71, %s74
      %p80 = scmp.eq.s32.totalorder %s21, 0
      %p81 = por %p79, %p80
      %p82 = scmp.ne.s32.totalorder %s71, %s74
      %p83 = scmp.eq.s32.totalorder %s26, 1
      %p84 = por %p82, %p83
      %p85 = scmp.ne.s32.totalorder %s74, %s75
      %p86 = scmp.eq.s32.totalorder %s26, 0
      %p87 = por %p85, %p86
      %p88 = scmp.ne.s32.totalorder %s74, %s75
      %p89 = scmp.eq.s32.totalorder %s27, 1
      %p90 = por %p88, %p89
      %p92 = scmp.ne.s32.totalorder %s75, %s91
      %p93 = scmp.eq.s32.totalorder %s27, 0
      %p94 = por %p92, %p93
      %s95 = ssub.s32 %s28, %s40
      %s96 = ssub.s32 %s29, %s36
      %s97 = sor.u32 %s95, %s96
      %p98 = scmp.eq.s32.totalorder %s97, 0
      %s100 = sadd.s32 %s99, 1
      %s101 = scalar_select %p98, %s99, %s100
      %p104 = pneg %p98
      %p105 = scmp.eq.s32.totalorder %s21, 1
      %p106 = por %p104, %p105
      %p107 = scmp.ne.s32.totalorder %s99, %s102
      %p108 = scmp.eq.s32.totalorder %s21, 0
      %p109 = por %p107, %p108
      %p110 = scmp.ne.s32.totalorder %s99, %s102
      %p111 = scmp.eq.s32.totalorder %s26, 1
      %p112 = por %p110, %p111
      %p113 = scmp.ne.s32.totalorder %s102, %s103
      %p114 = scmp.eq.s32.totalorder %s26, 0
      %p115 = por %p113, %p114
      %p116 = scmp.ne.s32.totalorder %s102, %s103
      %p117 = scmp.eq.s32.totalorder %s27, 1
      %p118 = por %p116, %p117
      %p120 = scmp.ne.s32.totalorder %s103, %s119
      %p121 = scmp.eq.s32.totalorder %s27, 0
      %p122 = por %p120, %p121
      %s124 = sadd.s32 %s123, 1
      %p127 = scmp.eq.s32.totalorder %s21, 1
      %p128 = scmp.ne.s32.totalorder %s123, %s125
      %p129 = scmp.eq.s32.totalorder %s21, 0
      %p130 = por %p128, %p129
      %p131 = scmp.ne.s32.totalorder %s123, %s125
      %p132 = scmp.eq.s32.totalorder %s26, 1
      %p133 = por %p131, %p132
      %p134 = scmp.ne.s32.totalorder %s125, %s126
      %p135 = scmp.eq.s32.totalorder %s26, 0
      %p136 = por %p134, %p135
      %p137 = scmp.ne.s32.totalorder %s125, %s126
      %p138 = scmp.eq.s32.totalorder %s27, 1
      %p139 = por %p137, %p138
      %p141 = scmp.ne.s32.totalorder %s126, %s140
      %p142 = scmp.eq.s32.totalorder %s27, 0
      %p143 = por %p141, %p142
      %s145 = sadd.s32 %s144, 1
      %p148 = scmp.eq.s32.totalorder %s21, 1
      %p149 = scmp.ne.s32.totalorder %s144, %s146
      %p150 = scmp.eq.s32.totalorder %s21, 0
      %p151 = por %p149, %p150
      %p152 = scmp.ne.s32.totalorder %s144, %s146
      %p153 = scmp.eq.s32.totalorder %s26, 1
      %p154 = por %p152, %p153
      %p155 = scmp.ne.s32.totalorder %s146, %s147
      %p156 = scmp.eq.s32.totalorder %s26, 0
      %p157 = por %p155, %p156
      %p158 = scmp.ne.s32.totalorder %s146, %s147
      %p159 = scmp.eq.s32.totalorder %s27, 1
      %p160 = por %p158, %p159
      %p162 = scmp.ne.s32.totalorder %s147, %s161
      %p163 = scmp.eq.s32.totalorder %s27, 0
      %p164 = por %p162, %p163
      %s166 = sadd.s32 %s165, 1
      %p169 = scmp.eq.s32.totalorder %s21, 1
      %p170 = scmp.ne.s32.totalorder %s165, %s167
      %p171 = scmp.eq.s32.totalorder %s21, 0
      %p172 = por %p170, %p171
      %p173 = scmp.ne.s32.totalorder %s165, %s167
      %p174 = scmp.eq.s32.totalorder %s26, 1
      %p175 = por %p173, %p174
      %p176 = scmp.ne.s32.totalorder %s167, %s168
      %p177 = scmp.eq.s32.totalorder %s26, 0
      %p178 = por %p176, %p177
      %p179 = scmp.ne.s32.totalorder %s167, %s168
      %p180 = scmp.eq.s32.totalorder %s27, 1
      %p181 = por %p179, %p180
      %p183 = scmp.ne.s32.totalorder %s168, %s182
      %p184 = scmp.eq.s32.totalorder %s27, 0
      %p185 = por %p183, %p184
      %s187 = sadd.s32 %s186, 1
      %p190 = scmp.eq.s32.totalorder %s21, 1
      %p191 = scmp.ne.s32.totalorder %s186, %s188
      %p192 = scmp.eq.s32.totalorder %s21, 0
      %p193 = por %p191, %p192
      %p194 = scmp.ne.s32.totalorder %s186, %s188
      %p195 = scmp.eq.s32.totalorder %s26, 1
      %p196 = por %p194, %p195
      %p197 = scmp.ne.s32.totalorder %s188, %s189
      %p198 = scmp.eq.s32.totalorder %s26, 0
      %p199 = por %p197, %p198
      %p200 = scmp.ne.s32.totalorder %s188, %s189
      %p201 = scmp.eq.s32.totalorder %s27, 1
      %p202 = por %p200, %p201
      %p204 = scmp.ne.s32.totalorder %s189, %s203
      %p205 = scmp.eq.s32.totalorder %s27, 0
      %p206 = por %p204, %p205
      %s208 = sadd.s32 %s207, 1
      %p211 = scmp.eq.s32.totalorder %s21, 1
      %p212 = scmp.ne.s32.totalorder %s207, %s209
      %p213 = scmp.eq.s32.totalorder %s21, 0
      %p214 = por %p212, %p213
      %p215 = scmp.ne.s32.totalorder %s207, %s209
      %p216 = scmp.eq.s32.totalorder %s26, 1
      %p217 = por %p215, %p216
      %p218 = scmp.ne.s32.totalorder %s209, %s210
      %p219 = scmp.eq.s32.totalorder %s26, 0
      %p220 = por %p218, %p219
      %p221 = scmp.ne.s32.totalorder %s209, %s210
      %p222 = scmp.eq.s32.totalorder %s27, 1
      %p223 = por %p221, %p222
      %p225 = scmp.ne.s32.totalorder %s210, %s224
      %p226 = scmp.eq.s32.totalorder %s27, 0
      %p227 = por %p225, %p226
      %s229 = sadd.s32 %s228, 1
      %p232 = scmp.eq.s32.totalorder %s21, 1
      %p233 = scmp.ne.s32.totalorder %s228, %s230
      %p234 = scmp.eq.s32.totalorder %s21, 0
      %p235 = por %p233, %p234
      %p236 = scmp.ne.s32.totalorder %s228, %s230
      %p237 = scmp.eq.s32.totalorder %s26, 1
      %p238 = por %p236, %p237
      %p239 = scmp.ne.s32.totalorder %s230, %s231
      %p240 = scmp.eq.s32.totalorder %s26, 0
      %p241 = por %p239, %p240
      %p242 = scmp.ne.s32.totalorder %s230, %s231
      %p243 = scmp.eq.s32.totalorder %s27, 1
      %p244 = por %p242, %p243
      %p246 = scmp.ne.s32.totalorder %s231, %s245
      %p247 = scmp.eq.s32.totalorder %s27, 0
      %p248 = por %p246, %p247
      %s250 = sadd.s32 %s249, 1
      %p253 = scmp.eq.s32.totalorder %s21, 1
      %p254 = scmp.ne.s32.totalorder %s249, %s251
      %p255 = scmp.eq.s32.totalorder %s21, 0
      %p256 = por %p254, %p255
      %p257 = scmp.ne.s32.totalorder %s249, %s251
      %p258 = scmp.eq.s32.totalorder %s26, 1
      %p259 = por %p257, %p258
      %p260 = scmp.ne.s32.totalorder %s251, %s252
      %p261 = scmp.eq.s32.totalorder %s26, 0
      %p262 = por %p260, %p261
      %p263 = scmp.ne.s32.totalorder %s251, %s252
      %p264 = scmp.eq.s32.totalorder %s27, 1
      %p265 = por %p263, %p264
      %p267 = scmp.ne.s32.totalorder %s252, %s266
      %p268 = scmp.eq.s32.totalorder %s27, 0
      %p269 = por %p267, %p268
      %s271 = sadd.s32 %s270, 1
      %p274 = scmp.eq.s32.totalorder %s21, 1
      %p275 = scmp.ne.s32.totalorder %s270, %s272
      %p276 = scmp.eq.s32.totalorder %s21, 0
      %p277 = por %p275, %p276
      %p278 = scmp.ne.s32.totalorder %s270, %s272
      %p279 = scmp.eq.s32.totalorder %s26, 1
      %p280 = por %p278, %p279
      %p281 = scmp.ne.s32.totalorder %s272, %s273
      %p282 = scmp.eq.s32.totalorder %s26, 0
      %p283 = por %p281, %p282
      %p284 = scmp.ne.s32.totalorder %s272, %s273
      %p285 = scmp.eq.s32.totalorder %s27, 1
      %p286 = por %p284, %p285
      %p288 = scmp.ne.s32.totalorder %s273, %s287
      %p289 = scmp.eq.s32.totalorder %s27, 0
      %p290 = por %p288, %p289
      %s291 = ssub.s32 %s28, %s40
      %s292 = ssub.s32 %s29, %s36
      %s293 = sor.u32 %s291, %s292
      %p294 = scmp.eq.s32.totalorder %s293, 0
      %s296 = sadd.s32 %s295, 1
      %s297 = scalar_select %p294, %s295, %s296
      %p300 = pneg %p294
      %p301 = scmp.eq.s32.totalorder %s21, 1
      %p302 = por %p300, %p301
      %p303 = scmp.ne.s32.totalorder %s295, %s298
      %p304 = scmp.eq.s32.totalorder %s21, 0
      %p305 = por %p303, %p304
      %p306 = scmp.ne.s32.totalorder %s295, %s298
      %p307 = scmp.eq.s32.totalorder %s26, 1
      %p308 = por %p306, %p307
      %p309 = scmp.ne.s32.totalorder %s298, %s299
      %p310 = scmp.eq.s32.totalorder %s26, 0
      %p311 = por %p309, %p310
      %p312 = scmp.ne.s32.totalorder %s298, %s299
      %p313 = scmp.eq.s32.totalorder %s27, 1
      %p314 = por %p312, %p313
      %p316 = scmp.ne.s32.totalorder %s299, %s315
      %p317 = scmp.eq.s32.totalorder %s27, 0
      %p318 = por %p316, %p317
      %p319 = scmp.le.s32.totalorder 1, %s21
      %p320 = scmp.lt.s32.totalorder %s21, 3
      %p321 = pnand %p319, %p320
      %p322 = pneg %p321
      // Predicated region
      $region9: #{maskformer_decoder_forward.12} parent=5 // pred_check
        _
      $region10: #{maskformer_decoder_forward.12} parent=5 // pred_check_branch
        %324 = sbr.rel (%p321) target = $region12
      $region11: #{maskformer_decoder_forward.12} parent=5 // pred_region
        %s325 = ssub.s32 %s21, 1
        // Predicated region
        $region13: #{maskformer_decoder_forward.12} parent=11 // pred_check
          %p326 = pneg %p136
        $region14: #{maskformer_decoder_forward.12} parent=11 // pred_check_branch
          %328 = sbr.rel (%p326) target = $region16
        $region15: #{maskformer_decoder_forward.12} parent=11 // pred_region
          %330 = vsyncadd [#allocation3], 0
          %s332 = sshll.u32 %s3, 4
          %s333 = int_to_ptr.hbm [resolvable:$true] %s332
          %s334 = sshll.u32 [#allocation2], 4
          %s335 = int_to_ptr.vmem [resolvable:$true] %s334
          %337 = dma.hbm_to_vmem [thread:$0]  %s333, 32, %s335, [#allocation3]
        $region16: #{maskformer_decoder_forward.12} parent=11 // pred_fallthru
          _
        // Predicated region
        $region17: #{maskformer_decoder_forward.12} parent=11 // pred_check
          %p338 = pneg %p157
        $region18: #{maskformer_decoder_forward.12} parent=11 // pred_check_branch
          %340 = sbr.rel (%p338) target = $region20
        $region19: #{maskformer_decoder_forward.12} parent=11 // pred_region
          _
        $region20: #{maskformer_decoder_forward.12} parent=11 // pred_fallthru
          _
        // Predicated region
        $region21: #{maskformer_decoder_forward.12} parent=11 // pred_check
          %p341 = pneg %p178
        $region22: #{maskformer_decoder_forward.12} parent=11 // pred_check_branch
          %343 = sbr.rel (%p341) target = $region24
        $region23: #{maskformer_decoder_forward.12} parent=11 // pred_region
          %345 = vsyncadd [#allocation5], 0
          %s347 = sshll.u32 %s5, 4
          %s348 = int_to_ptr.hbm [resolvable:$true] %s347
          %s349 = sshll.u32 [#allocation4], 4
          %s350 = int_to_ptr.vmem [resolvable:$true] %s349
          %352 = dma.hbm_to_vmem [thread:$0]  %s348, 64, %s350, [#allocation5]
        $region24: #{maskformer_decoder_forward.12} parent=11 // pred_fallthru
          _
        // Predicated region
        $region25: #{maskformer_decoder_forward.12} parent=11 // pred_check
          %p353 = pneg %p199
        $region26: #{maskformer_decoder_forward.12} parent=11 // pred_check_branch
          %355 = sbr.rel (%p353) target = $region28
        $region27: #{maskformer_decoder_forward.12} parent=11 // pred_region
          %357 = vsyncadd [#allocation5], 0
          %s359 = sshll.u32 %s6, 4
          %s360 = int_to_ptr.hbm [resolvable:$true] %s359
          %s361 = sshll.u32 [#allocation6], 4
          %s362 = int_to_ptr.vmem [resolvable:$true] %s361
          %364 = dma.hbm_to_vmem [thread:$0]  %s360, 32, %s362, [#allocation5]
        $region28: #{maskformer_decoder_forward.12} parent=11 // pred_fallthru
          _
        // Predicated region
        $region29: #{maskformer_decoder_forward.12} parent=11 // pred_check
          %p365 = pneg %p220
        $region30: #{maskformer_decoder_forward.12} parent=11 // pred_check_branch
          %367 = sbr.rel (%p365) target = $region32
        $region31: #{maskformer_decoder_forward.12} parent=11 // pred_region
          %369 = vsyncadd [#allocation8], 0
          %s370 = sshll.u32 %s7, 4
          %s371 = int_to_ptr.hbm [resolvable:$true] %s370
          %s372 = sshll.u32 [#allocation7], 4
          %s373 = int_to_ptr.vmem [resolvable:$true] %s372
          %378 = dma.hbm_to_vmem [thread:$0]  %s371, 256, %s373, [#allocation8], 64, 64, 4
        $region32: #{maskformer_decoder_forward.12} parent=11 // pred_fallthru
          _
        // Predicated region
        $region33: #{maskformer_decoder_forward.12} parent=11 // pred_check
          %p379 = pneg %p241
        $region34: #{maskformer_decoder_forward.12} parent=11 // pred_check_branch
          %381 = sbr.rel (%p379) target = $region36
        $region35: #{maskformer_decoder_forward.12} parent=11 // pred_region
          %383 = vsyncadd [#allocation8], 0
          %s385 = sshll.u32 %s8, 4
          %s386 = int_to_ptr.hbm [resolvable:$true] %s385
          %s387 = sshll.u32 [#allocation9], 4
          %s388 = int_to_ptr.vmem [resolvable:$true] %s387
          %390 = dma.hbm_to_vmem [thread:$0]  %s386, 16, %s388, [#allocation8]
        $region36: #{maskformer_decoder_forward.12} parent=11 // pred_fallthru
          _
        // Predicated region
        $region37: #{maskformer_decoder_forward.12} parent=11 // pred_check
          %p391 = pneg %p262
        $region38: #{maskformer_decoder_forward.12} parent=11 // pred_check_branch
          %393 = sbr.rel (%p391) target = $region40
        $region39: #{maskformer_decoder_forward.12} parent=11 // pred_region
          _
        $region40: #{maskformer_decoder_forward.12} parent=11 // pred_fallthru
          _
        // Predicated region
        $region41: #{maskformer_decoder_forward.12} parent=11 // pred_check
          %p394 = pneg %p283
        $region42: #{maskformer_decoder_forward.12} parent=11 // pred_check_branch
          %396 = sbr.rel (%p394) target = $region44
        $region43: #{maskformer_decoder_forward.12} parent=11 // pred_region
          %398 = vsyncadd [#allocation11], 0
          %s400 = sshll.u32 %s10, 4
          %s401 = int_to_ptr.hbm [resolvable:$true] %s400
          %s402 = sshll.u32 [#allocation10], 4
          %s403 = int_to_ptr.vmem [resolvable:$true] %s402
          %405 = dma.hbm_to_vmem [thread:$0]  %s401, 16, %s403, [#allocation11]
        $region44: #{maskformer_decoder_forward.12} parent=11 // pred_fallthru
          _
      $region12: #{maskformer_decoder_forward.12} parent=5 // pred_fallthru
        _
      %p406 = scmp.lt.s32.totalorder %s21, 2
      // Predicated region
      $region45: #{maskformer_decoder_forward.12} parent=5 // pred_check
        %p407 = pneg %p406
      $region46: #{maskformer_decoder_forward.12} parent=5 // pred_check_branch
        %409 = sbr.rel (%p407) target = $region48
      $region47: #{maskformer_decoder_forward.12} parent=5 // pred_region
        // Predicated region
        $region49: #{maskformer_decoder_forward.12} parent=47 // pred_check
          %p410 = pneg %p55
        $region50: #{maskformer_decoder_forward.12} parent=47 // pred_check_branch
          %412 = sbr.rel (%p410) target = $region52
        $region51: #{maskformer_decoder_forward.12} parent=47 // pred_region
          %s413 = smul.u32 2, %s29
          %p414 = scmp.lt.s32.totalorder %s28, 1
          %s415 = scalar_select %p414, %s28, 1
          %p416 = scmp.lt.s32.totalorder %s413, 1
          %s417 = scalar_select %p416, %s413, 1
          %s418 = smul.addr %s415, 2
          %s419 = sadd.s32 %s417, %s418
          %s420 = smul.addr %s419, 8
          %s421 = scalar_lea.vmem %s0, %s420
          %s422 = smul.u32 2, %s29
        $region52: #{maskformer_decoder_forward.12} parent=47 // pred_fallthru
          _
        // Predicated region
        $region53: #{maskformer_decoder_forward.12} parent=47 // pred_check
          %p423 = pneg %p81
        $region54: #{maskformer_decoder_forward.12} parent=47 // pred_check_branch
          %425 = sbr.rel (%p423) target = $region56
        $region55: #{maskformer_decoder_forward.12} parent=47 // pred_region
          %p426 = scmp.lt.s32.totalorder %s28, 1
          %s427 = scalar_select %p426, %s28, 1
          %s428 = smul.addr %s427, 8
          %s429 = scalar_lea.vmem %s1, %s428
        $region56: #{maskformer_decoder_forward.12} parent=47 // pred_fallthru
          _
        // Predicated region
        $region57: #{maskformer_decoder_forward.12} parent=47 // pred_check
          %p430 = pneg %p109
        $region58: #{maskformer_decoder_forward.12} parent=47 // pred_check_branch
          %432 = sbr.rel (%p430) target = $region60
        $region59: #{maskformer_decoder_forward.12} parent=47 // pred_region
          %s433 = smul.u32 2, %s29
          %p434 = scmp.lt.s32.totalorder %s28, 1
          %s435 = scalar_select %p434, %s28, 1
          %p436 = scmp.lt.s32.totalorder %s433, 1
          %s437 = scalar_select %p436, %s433, 1
          %s438 = smul.addr %s435, 2
          %s439 = sadd.s32 %s437, %s438
          %s440 = smul.addr %s439, 4
          %s441 = scalar_lea.vmem %s2, %s440
          %s442 = smul.u32 2, %s29
        $region60: #{maskformer_decoder_forward.12} parent=47 // pred_fallthru
          _
      $region48: #{maskformer_decoder_forward.12} parent=5 // pred_fallthru
        _
      %p443 = scmp.le.s32.totalorder 1, %s21
      %p444 = scmp.lt.s32.totalorder %s21, 3
      %p445 = pnand %p443, %p444
      %p446 = pneg %p445
      // Predicated region
      $region61: #{maskformer_decoder_forward.12} parent=5 // pred_check
        _
      $region62: #{maskformer_decoder_forward.12} parent=5 // pred_check_branch
        %448 = sbr.rel (%p445) target = $region64
      $region63: #{maskformer_decoder_forward.12} parent=5 // pred_region
        %s449 = ssub.s32 %s21, 1
        // Predicated region
        $region65: #{maskformer_decoder_forward.12} parent=63 // pred_check
          %p450 = pneg %p136
        $region66: #{maskformer_decoder_forward.12} parent=63 // pred_check_branch
          %452 = sbr.rel (%p450) target = $region68
        $region67: #{maskformer_decoder_forward.12} parent=63 // pred_region
          %454 = dma.done [#allocation3], 32
        $region68: #{maskformer_decoder_forward.12} parent=63 // pred_fallthru
          _
        // Predicated region
        $region69: #{maskformer_decoder_forward.12} parent=63 // pred_check
          %p455 = pneg %p178
        $region70: #{maskformer_decoder_forward.12} parent=63 // pred_check_branch
          %457 = sbr.rel (%p455) target = $region72
        $region71: #{maskformer_decoder_forward.12} parent=63 // pred_region
          %459 = dma.done [#allocation5], 64
        $region72: #{maskformer_decoder_forward.12} parent=63 // pred_fallthru
          _
        // Predicated region
        $region73: #{maskformer_decoder_forward.12} parent=63 // pred_check
          %p460 = pneg %p199
        $region74: #{maskformer_decoder_forward.12} parent=63 // pred_check_branch
          %462 = sbr.rel (%p460) target = $region76
        $region75: #{maskformer_decoder_forward.12} parent=63 // pred_region
          %464 = dma.done [#allocation5], 32
        $region76: #{maskformer_decoder_forward.12} parent=63 // pred_fallthru
          _
        // Predicated region
        $region77: #{maskformer_decoder_forward.12} parent=63 // pred_check
          %p465 = pneg %p220
        $region78: #{maskformer_decoder_forward.12} parent=63 // pred_check_branch
          %467 = sbr.rel (%p465) target = $region80
        $region79: #{maskformer_decoder_forward.12} parent=63 // pred_region
          %469 = dma.done [#allocation8], 256
        $region80: #{maskformer_decoder_forward.12} parent=63 // pred_fallthru
          _
        // Predicated region
        $region81: #{maskformer_decoder_forward.12} parent=63 // pred_check
          %p470 = pneg %p241
        $region82: #{maskformer_decoder_forward.12} parent=63 // pred_check_branch
          %472 = sbr.rel (%p470) target = $region84
        $region83: #{maskformer_decoder_forward.12} parent=63 // pred_region
          %474 = dma.done [#allocation8], 16
        $region84: #{maskformer_decoder_forward.12} parent=63 // pred_fallthru
          _
        // Predicated region
        $region85: #{maskformer_decoder_forward.12} parent=63 // pred_check
          %p475 = pneg %p283
        $region86: #{maskformer_decoder_forward.12} parent=63 // pred_check_branch
          %477 = sbr.rel (%p475) target = $region88
        $region87: #{maskformer_decoder_forward.12} parent=63 // pred_region
          %479 = dma.done [#allocation11], 16
        $region88: #{maskformer_decoder_forward.12} parent=63 // pred_fallthru
          _
        %s480 = smul.u32 2, %s31
        %p481 = scmp.lt.s32.totalorder %s30, 1
        %s482 = scalar_select %p481, %s30, 1
        %p483 = scmp.lt.s32.totalorder %s480, 1
        %s484 = scalar_select %p483, %s480, 1
        %s485 = smul.addr %s482, 2
        %s486 = sadd.s32 %s484, %s485
        %s487 = smul.addr %s486, 8
        %s488 = scalar_lea.vmem %s0, %s487
        %p489 = pneg %p61
        %p490 = pneg %p58
        %p491 = scmp.lt.s32.totalorder %s30, 1
        %s492 = scalar_select %p491, %s30, 1
        %s493 = smul.addr %s492, 8
        %s494 = scalar_lea.vmem %s1, %s493
        %p495 = pneg %p87
        %p496 = pneg %p84
        %s497 = smul.u32 2, %s31
        %p498 = scmp.lt.s32.totalorder %s30, 1
        %s499 = scalar_select %p498, %s30, 1
        %p500 = scmp.lt.s32.totalorder %s497, 1
        %s501 = scalar_select %p500, %s497, 1
        %s502 = smul.addr %s499, 2
        %s503 = sadd.s32 %s501, %s502
        %s504 = smul.addr %s503, 4
        %s505 = scalar_lea.vmem %s2, %s504
        %p506 = pneg %p115
        %p507 = pneg %p112
        %p508 = pneg %p136
        %p509 = pneg %p133
        %p510 = pneg %p157
        %p511 = pneg %p154
        %p512 = pneg %p178
        %p513 = pneg %p175
        %p514 = pneg %p199
        %p515 = pneg %p196
        %p516 = pneg %p220
        %p517 = pneg %p217
        %p518 = pneg %p241
        %p519 = pneg %p238
        %p520 = pneg %p262
        %p521 = pneg %p259
        %p522 = pneg %p283
        %p523 = pneg %p280
        %p524 = pneg %p311
        %p525 = pneg %p308
        %s526 = smul.u32 2, %s31
        %p527 = scmp.lt.s32.totalorder %s30, 1
        %s528 = scalar_select %p527, %s30, 1
        %p529 = scmp.lt.s32.totalorder %s526, 1
        %s530 = scalar_select %p529, %s526, 1
        %s531 = smul.addr %s528, 2
        %s532 = sadd.s32 %s530, %s531
        %s533 = smul.addr %s532, 8
        %s534 = scalar_lea.vmem %s11, %s533
        %s535 = smul.u32 2, %s31
        %p536 = scmp.lt.s32.totalorder %s30, 1
        %s537 = scalar_select %p536, %s30, 1
        %p538 = scmp.lt.s32.totalorder %s535, 1
        %s539 = scalar_select %p538, %s535, 1
        %s540 = smul.addr %s537, 2
        %s541 = sadd.s32 %s539, %s540
        %s542 = smul.addr %s541, 8
        %s543 = scalar_lea.vmem %s0, %s542
        %s544 = smul.u32 2, %s31
        %p545 = scmp.lt.s32.totalorder %s30, 1
        %s546 = scalar_select %p545, %s30, 1
        %s547 = smul.addr %s546, 8
        %s548 = scalar_lea.vmem %s1, %s547
        %s549 = smul.u32 2, %s31
        %p550 = scmp.lt.s32.totalorder %s30, 1
        %s551 = scalar_select %p550, %s30, 1
        %p552 = scmp.lt.s32.totalorder %s549, 1
        %s553 = scalar_select %p552, %s549, 1
        %s554 = smul.addr %s551, 2
        %s555 = sadd.s32 %s553, %s554
        %s556 = smul.addr %s555, 4
        %s557 = scalar_lea.vmem %s2, %s556
        %s558 = smul.u32 2, %s31
        %s559 = smul.u32 2, %s31
        %p560 = scmp.lt.s32.totalorder %s30, 1
        %s561 = scalar_select %p560, %s30, 1
        %p562 = scmp.lt.s32.totalorder %s559, 1
        %s563 = scalar_select %p562, %s559, 1
        %s564 = smul.addr %s561, 2
        %s565 = sadd.s32 %s563, %s564
        %s566 = smul.addr %s565, 8
        %s567 = scalar_lea.vmem %s11, %s566
        %s568 = smul.u32 2, %s31
        %v570 = vld [vmem:[%s543] sm:$0xff]
        %v571 = vld [vmem:[%s543 + $0x8] sm:$0xff]
        %v572 = vld [vmem:[%s548] sm:$0xff]
        %v573 = vld [vmem:[%s557] sm:$0xf]
        %v574 = vld [vmem:[%s557 + $0x4] sm:$0xf]
        %v575 = vld [vmem:[#allocation2] sm:$0x3]
        %v576 = vld [vmem:[%s4] sm:$0xf]
        %v577 = vld [vmem:[%s4 + $0x4] sm:$0xf]
        %v578 = vld [vmem:[%s4 + $0x8] sm:$0xf]
        %v579 = vld [vmem:[%s4 + $0xc] sm:$0xf]
        %v580 = vld [vmem:[%s4 + $0x10] sm:$0xf]
        %v581 = vld [vmem:[%s4 + $0x14] sm:$0xf]
        %v582 = vld [vmem:[%s4 + $0x18] sm:$0xf]
        %v583 = vld [vmem:[%s4 + $0x1c] sm:$0xf]
        %v584 = vld [vmem:[%s4 + $0x20] sm:$0xf]
        %v585 = vld [vmem:[%s4 + $0x24] sm:$0xf]
        %v586 = vld [vmem:[%s4 + $0x28] sm:$0xf]
        %v587 = vld [vmem:[%s4 + $0x2c] sm:$0xf]
        %v588 = vld [vmem:[%s4 + $0x30] sm:$0xf]
        %v589 = vld [vmem:[%s4 + $0x34] sm:$0xf]
        %v590 = vld [vmem:[%s4 + $0x38] sm:$0xf]
        %v591 = vld [vmem:[%s4 + $0x3c] sm:$0xf]
        %v592 = vld [vmem:[#allocation4] sm:$0xf]
        %vm593 = vcmask 261120
        %v594 = vsel %vm593, %v570, 0.0
        %595 = vadd.xlane.f32.xlu0 %v594
        %v596 = vpop.xlane.xlu0 %595
        %v597 = vsel %vm593, %v571, 0.0
        %598 = vadd.xlane.f32.xlu0 %v597
        %v599 = vpop.xlane.xlu0 %598
        %v600 = vrcp.pop 32.0
        %v601 = vmul.f32 32.0, %v600
        %v602 = vsub.f32 1.0, %v601
        %v603 = vmul.f32 %v600, %v602
        %v604 = vadd.f32 %v600, %v603
        %vm605 = vweird.f32 %v600
        %v606 = vsel %vm605, %v600, %v604
        %v607 = vmul.f32 %v596, %v606
        %v608 = vmul.f32 %v599, %v606
        %v609 = vsub.f32 %v570, %v607
        %v610 = vsub.f32 %v571, %v608
        %v611 = vmul.f32 %v609, %v609
        %v612 = vmul.f32 %v610, %v610
        %v613 = vsel %vm593, %v611, 0.0
        %614 = vadd.xlane.f32.xlu0 %v613
        %v615 = vpop.xlane.xlu0 %614
        %v616 = vsel %vm593, %v612, 0.0
        %617 = vadd.xlane.f32.xlu0 %v616
        %v618 = vpop.xlane.xlu0 %617
        %v619 = vmul.f32 %v615, %v606
        %v620 = vmul.f32 %v618, %v606
        %v621 = vadd.f32 %v619, 1e-05
        %v622 = vadd.f32 %v620, 1e-05
        %v623 = vrsqrt.pop %v621
        %v624 = vmul.f32 %v623, %v621
        %v625 = vmul.f32 %v624, %v623
        %v626 = vmul.f32 0.5, %v625
        %v627 = vsub.f32 1.5, %v626
        %v628 = vmul.f32 %v623, %v627
        %vm629 = vweird.f32 %v621
        %vm630 = vweird.f32 %v623
        %vm631 = vmor %vm629, %vm630
        %v632 = vsel %vm631, %v623, %v628
        %v633 = vrsqrt.pop %v622
        %v634 = vmul.f32 %v633, %v622
        %v635 = vmul.f32 %v634, %v633
        %v636 = vmul.f32 0.5, %v635
        %v637 = vsub.f32 1.5, %v636
        %v638 = vmul.f32 %v633, %v637
        %vm639 = vweird.f32 %v622
        %vm640 = vweird.f32 %v633
        %vm641 = vmor %vm639, %vm640
        %v642 = vsel %vm641, %v633, %v638
        %v643 = vmul.f32 %v609, %v632
        %v644 = vmul.f32 %v610, %v642
        %v645 = vperm.slane %v575, 0
        %v646 = vmul.f32 %v643, %v645
        %v647 = vmul.f32 %v644, %v645
        %v648 = vperm.slane %v575, 1
        %v649 = vadd.f32 %v646, %v648
        %v650 = vadd.f32 %v647, %v648
        %v651 = vpack.c.bf16 %v650, %v649
        %v652 = vpack.c.bf16 %v572, %v572
        %v653 = vperm.slane %v592, 0
        %v658 = vunpack.c.l.b16 %v576
        %v659 = vunpack.c.l.b16 %v577
        %v660 = vunpack.c.l.b16 %v578
        %v661 = vunpack.c.l.b16 %v579
        %v662 = vpack.c.b16 %v659, %v658
        %v663 = vpack.c.b16 %v661, %v660
        %v667 = vsel %vm593, %v651, 0
        %669 = vmatpush.bf16.msra.mxu0 0
        %670 = vmatpush.bf16.msra.mxu0 0
        %671 = vmatpush.bf16.msra.mxu0 0
        %672 = vmatpush.bf16.msra.mxu0 0
        %673 = vmatpush.bf16.msra.mxu0 0
        %674 = vmatpush.bf16.msra.mxu0 0
        %675 = vmatpush.bf16.msra.mxu0 %v663
        %676 = vmatpush.bf16.msra.mxu0 %v662
        %677 = vmatmul.bf16.gmra.mxu0 %v667
        %v678 = vpop.f32.mrf.mxu0
        %v679 = vadd.f32 %v653, %v678
        %v680 = vpop.f32.mrf.mxu0
        %v681 = vadd.f32 %v653, %v680
        %682 = vdwg.mxu0
        %v683 = vperm.slane %v592, 1
        %v688 = vunpack.c.l.b16 %v580
        %v689 = vunpack.c.l.b16 %v581
        %v690 = vunpack.c.l.b16 %v582
        %v691 = vunpack.c.l.b16 %v583
        %v692 = vpack.c.b16 %v689, %v688
        %v693 = vpack.c.b16 %v691, %v690
        %v697 = vsel %vm593, %v652, 0
        %699 = vmatpush.bf16.msra.mxu0 0
        %700 = vmatpush.bf16.msra.mxu0 0
        %701 = vmatpush.bf16.msra.mxu0 0
        %702 = vmatpush.bf16.msra.mxu0 0
        %703 = vmatpush.bf16.msra.mxu0 0
        %704 = vmatpush.bf16.msra.mxu0 0
        %705 = vmatpush.bf16.msra.mxu0 %v693
        %706 = vmatpush.bf16.msra.mxu0 %v692
        %707 = vmatmul.bf16.gmra.mxu0 %v697
        %v708 = vpop.f32.mrf.mxu0
        %v709 = vadd.f32 %v683, %v708
        %v710 = vpop.f32.mrf.mxu0
        %711 = vdwg.mxu0
        %v712 = vperm.slane %v592, 2
        %v717 = vunpack.c.l.b16 %v584
        %v718 = vunpack.c.l.b16 %v585
        %v719 = vunpack.c.l.b16 %v586
        %v720 = vunpack.c.l.b16 %v587
        %v721 = vpack.c.b16 %v718, %v717
        %v722 = vpack.c.b16 %v720, %v719
        %725 = vmatpush.bf16.msra.mxu0 0
        %726 = vmatpush.bf16.msra.mxu0 0
        %727 = vmatpush.bf16.msra.mxu0 0
        %728 = vmatpush.bf16.msra.mxu0 0
        %729 = vmatpush.bf16.msra.mxu0 0
        %730 = vmatpush.bf16.msra.mxu0 0
        %731 = vmatpush.bf16.msra.mxu0 %v722
        %732 = vmatpush.bf16.msra.mxu0 %v721
        %733 = vmatmul.bf16.gmra.mxu0 %v697
        %v734 = vpop.f32.mrf.mxu0
        %v735 = vadd.f32 %v712, %v734
        %v736 = vpop.f32.mrf.mxu0
        %737 = vdwg.mxu0
        %v738 = vunpack.c.l.bf16 %v573
        %v739 = vunpack.c.l.bf16 %v574
        %v740 = vpack.c.bf16 %v681, %v679
        %v741 = vpack.c.bf16 %v709, %v709
        %v742 = vpack.c.bf16 %v735, %v735
        %vm743 = vcmask 130048
        %v745 = vsel %vm743, %v740, 0
        %v748 = vsel %vm743, %v741, 0
        %750 = vmatpush.bf16.xpose.msra.mxu0 0
        %751 = vmatpush.bf16.xpose.msra.mxu0 0
        %752 = vmatpush.bf16.xpose.msra.mxu0 0
        %753 = vmatpush.bf16.xpose.msra.mxu0 0
        %754 = vmatpush.bf16.xpose.msra.mxu0 0
        %755 = vmatpush.bf16.xpose.msra.mxu0 0
        %756 = vmatpush.bf16.xpose.msra.mxu0 0
        %757 = vmatpush.bf16.xpose.msra.mxu0 %v748
        %758 = vmatmul.bf16.gmra.mxu0 %v745
        %v759 = vpop.f32.mrf.mxu0
        %v760 = vadd.f32 0.0, %v759
        %v761 = vpop.f32.mrf.mxu0
        %v762 = vadd.f32 0.0, %v761
        %763 = vdwg.mxu0
        %v764 = vmul.f32 %v760, 0.25
        %v765 = vmul.f32 %v762, 0.25
        %v766 = vadd.f32 %v764, %v738
        %v767 = vadd.f32 %v765, %v739
        %vm768 = vcmask 64512
        %v769 = vsel %vm768, %v766, -inf
        %770 = vmax.xlane.f32.xlu0 %v769
        %v771 = vpop.xlane.xlu0 %770
        %v772 = vsel %vm768, %v767, -inf
        %773 = vmax.xlane.f32.xlu0 %v772
        %v774 = vpop.xlane.xlu0 %773
        %v775 = vsub.f32 %v766, %v771
        %v776 = vsub.f32 %v767, %v774
        %v777 = vmul.f32 %v775, 1.442695
        %v778 = vpow.pop %v777
        %v779 = vmul.f32 %v776, 1.442695
        %v780 = vpow.pop %v779
        %v781 = vsel %vm768, %v778, 0.0
        %782 = vadd.xlane.f32.xlu0 %v781
        %v783 = vpop.xlane.xlu0 %782
        %v784 = vsel %vm768, %v780, 0.0
        %785 = vadd.xlane.f32.xlu0 %v784
        %v786 = vpop.xlane.xlu0 %785
        %v787 = vrcp.pop %v783
        %v788 = vrcp.pop %v786
        %v789 = vmul.f32 %v778, %v787
        %v790 = vmul.f32 %v780, %v788
        %v791 = vpack.c.bf16 %v790, %v789
        %v793 = vsel %vm768, %v791, 0
        %vm795 = vcmask 1043456
        %v797 = vsel %vm795, %v742, 0
        %799 = vmatpush.bf16.msra.mxu0 0
        %800 = vmatpush.bf16.msra.mxu0 0
        %801 = vmatpush.bf16.msra.mxu0 0
        %802 = vmatpush.bf16.msra.mxu0 0
        %803 = vmatpush.bf16.msra.mxu0 0
        %804 = vmatpush.bf16.msra.mxu0 0
        %805 = vmatpush.bf16.msra.mxu0 0
        %806 = vmatpush.bf16.msra.mxu0 %v797
        %807 = vmatmul.bf16.gmra.mxu0 %v793
        %v808 = vpop.f32.mrf.mxu0
        %v809 = vadd.f32 0.0, %v808
        %v810 = vpop.f32.mrf.mxu0
        %v811 = vadd.f32 0.0, %v810
        %812 = vdwg.mxu0
        %814 = vrot.lane.b32.xlu0 %v740, 112
        %v815 = vpop.permute.xlu0 %814
        %817 = vrot.lane.b32.xlu0 %v741, 112
        %v818 = vpop.permute.xlu0 %817
        %v820 = vsel %vm743, %v815, 0
        %v823 = vsel %vm743, %v818, 0
        %825 = vmatpush.bf16.xpose.msra.mxu0 0
        %826 = vmatpush.bf16.xpose.msra.mxu0 0
        %827 = vmatpush.bf16.xpose.msra.mxu0 0
        %828 = vmatpush.bf16.xpose.msra.mxu0 0
        %829 = vmatpush.bf16.xpose.msra.mxu0 0
        %830 = vmatpush.bf16.xpose.msra.mxu0 0
        %831 = vmatpush.bf16.xpose.msra.mxu0 0
        %832 = vmatpush.bf16.xpose.msra.mxu0 %v823
        %833 = vmatmul.bf16.gmra.mxu0 %v820
        %v834 = vpop.f32.mrf.mxu0
        %v835 = vadd.f32 0.0, %v834
        %v836 = vpop.f32.mrf.mxu0
        %v837 = vadd.f32 0.0, %v836
        %838 = vdwg.mxu0
        %v839 = vmul.f32 %v835, 0.25
        %v840 = vmul.f32 %v837, 0.25
        %v841 = vadd.f32 %v839, %v738
        %v842 = vadd.f32 %v840, %v739
        %v843 = vsel %vm768, %v841, -inf
        %844 = vmax.xlane.f32.xlu0 %v843
        %v845 = vpop.xlane.xlu0 %844
        %v846 = vsel %vm768, %v842, -inf
        %847 = vmax.xlane.f32.xlu0 %v846
        %v848 = vpop.xlane.xlu0 %847
        %v849 = vsub.f32 %v841, %v845
        %v850 = vsub.f32 %v842, %v848
        %v851 = vmul.f32 %v849, 1.442695
        %v852 = vpow.pop %v851
        %v853 = vmul.f32 %v850, 1.442695
        %v854 = vpow.pop %v853
        %v855 = vsel %vm768, %v852, 0.0
        %856 = vadd.xlane.f32.xlu0 %v855
        %v857 = vpop.xlane.xlu0 %856
        %v858 = vsel %vm768, %v854, 0.0
        %859 = vadd.xlane.f32.xlu0 %v858
        %v860 = vpop.xlane.xlu0 %859
        %v861 = vrcp.pop %v857
        %v862 = vrcp.pop %v860
        %v863 = vmul.f32 %v852, %v861
        %v864 = vmul.f32 %v854, %v862
        %v865 = vpack.c.bf16 %v864, %v863
        %867 = vrot.lane.b32.xlu0 %v742, 112
        %v868 = vpop.permute.xlu0 %867
        %v870 = vsel %vm768, %v865, 0
        %v873 = vsel %vm795, %v868, 0
        %875 = vmatpush.bf16.msra.mxu0 0
        %876 = vmatpush.bf16.msra.mxu0 0
        %877 = vmatpush.bf16.msra.mxu0 0
        %878 = vmatpush.bf16.msra.mxu0 0
        %879 = vmatpush.bf16.msra.mxu0 0
        %880 = vmatpush.bf16.msra.mxu0 0
        %881 = vmatpush.bf16.msra.mxu0 0
        %882 = vmatpush.bf16.msra.mxu0 %v873
        %883 = vmatmul.bf16.gmra.mxu0 %v870
        %v884 = vpop.f32.mrf.mxu0
        %v885 = vadd.f32 0.0, %v884
        %v886 = vpop.f32.mrf.mxu0
        %v887 = vadd.f32 0.0, %v886
        %888 = vdwg.mxu0
        %891 = vrot.lane.b32.xlu0 %v885, 16
        %v892 = vpop.permute.xlu0 %891
        %893 = vrot.lane.b32.xlu0 %v887, 16
        %v894 = vpop.permute.xlu0 %893
        %v897 = vsel %vm743, %v809, %v892
        %v898 = vsel %vm743, %v811, %v894
        %v899 = vpack.c.bf16 %v898, %v897
        %v900 = vperm.slane %v592, 3
        %v905 = vunpack.c.l.b16 %v588
        %v906 = vunpack.c.l.b16 %v589
        %v907 = vunpack.c.l.b16 %v590
        %v908 = vunpack.c.l.b16 %v591
        %v909 = vpack.c.b16 %v906, %v905
        %v910 = vpack.c.b16 %v908, %v907
        %v914 = vsel %vm593, %v899, 0
        %916 = vmatpush.bf16.msra.mxu0 0
        %917 = vmatpush.bf16.msra.mxu0 0
        %918 = vmatpush.bf16.msra.mxu0 0
        %919 = vmatpush.bf16.msra.mxu0 0
        %920 = vmatpush.bf16.msra.mxu0 0
        %921 = vmatpush.bf16.msra.mxu0 0
        %922 = vmatpush.bf16.msra.mxu0 %v910
        %923 = vmatpush.bf16.msra.mxu0 %v909
        %924 = vmatmul.bf16.gmra.mxu0 %v914
        %v925 = vpop.f32.mrf.mxu0
        %v926 = vadd.f32 %v900, %v925
        %v927 = vpop.f32.mrf.mxu0
        %v928 = vadd.f32 %v900, %v927
        %929 = vdwg.mxu0
        %v930 = vadd.f32 %v570, %v926
        %v931 = vadd.f32 %v571, %v928
        %v932 = vld [vmem:[#allocation6] sm:$0x3]
        %v933 = vld [vmem:[#allocation7] sm:$0xf]
        %v934 = vld [vmem:[#allocation7 + $0x4] sm:$0xf]
        %v935 = vld [vmem:[#allocation7 + $0x8] sm:$0xf]
        %v936 = vld [vmem:[#allocation7 + $0xc] sm:$0xf]
        %v937 = vld [vmem:[#allocation9] sm:$0x1]
        %v938 = vld [vmem:[%s9] sm:$0xf]
        %v939 = vld [vmem:[%s9 + $0x4] sm:$0xf]
        %v940 = vld [vmem:[%s9 + $0x8] sm:$0xf]
        %v941 = vld [vmem:[%s9 + $0xc] sm:$0xf]
        %v942 = vld [vmem:[%s9 + $0x10] sm:$0xf]
        %v943 = vld [vmem:[%s9 + $0x14] sm:$0xf]
        %v944 = vld [vmem:[%s9 + $0x18] sm:$0xf]
        %v945 = vld [vmem:[%s9 + $0x1c] sm:$0xf]
        %v946 = vld [vmem:[#allocation10] sm:$0x1]
        %v947 = vsel %vm593, %v930, 0.0
        %948 = vadd.xlane.f32.xlu0 %v947
        %v949 = vpop.xlane.xlu0 %948
        %v950 = vsel %vm593, %v931, 0.0
        %951 = vadd.xlane.f32.xlu0 %v950
        %v952 = vpop.xlane.xlu0 %951
        %v953 = vmul.f32 %v949, %v606
        %v954 = vmul.f32 %v952, %v606
        %v955 = vsub.f32 %v930, %v953
        %v956 = vsub.f32 %v931, %v954
        %v957 = vmul.f32 %v955, %v955
        %v958 = vmul.f32 %v956, %v956
        %v959 = vsel %vm593, %v957, 0.0
        %960 = vadd.xlane.f32.xlu0 %v959
        %v961 = vpop.xlane.xlu0 %960
        %v962 = vsel %vm593, %v958, 0.0
        %963 = vadd.xlane.f32.xlu0 %v962
        %v964 = vpop.xlane.xlu0 %963
        %v965 = vmul.f32 %v961, %v606
        %v966 = vmul.f32 %v964, %v606
        %v967 = vadd.f32 %v965, 1e-05
        %v968 = vadd.f32 %v966, 1e-05
        %v969 = vrsqrt.pop %v967
        %v970 = vmul.f32 %v969, %v967
        %v971 = vmul.f32 %v970, %v969
        %v972 = vmul.f32 0.5, %v971
        %v973 = vsub.f32 1.5, %v972
        %v974 = vmul.f32 %v969, %v973
        %vm975 = vweird.f32 %v967
        %vm976 = vweird.f32 %v969
        %vm977 = vmor %vm975, %vm976
        %v978 = vsel %vm977, %v969, %v974
        %v979 = vrsqrt.pop %v968
        %v980 = vmul.f32 %v979, %v968
        %v981 = vmul.f32 %v980, %v979
        %v982 = vmul.f32 0.5, %v981
        %v983 = vsub.f32 1.5, %v982
        %v984 = vmul.f32 %v979, %v983
        %vm985 = vweird.f32 %v968
        %vm986 = vweird.f32 %v979
        %vm987 = vmor %vm985, %vm986
        %v988 = vsel %vm987, %v979, %v984
        %v989 = vmul.f32 %v955, %v978
        %v990 = vmul.f32 %v956, %v988
        %v991 = vperm.slane %v932, 0
        %v992 = vmul.f32 %v989, %v991
        %v993 = vmul.f32 %v990, %v991
        %v994 = vperm.slane %v932, 1
        %v995 = vadd.f32 %v992, %v994
        %v996 = vadd.f32 %v993, %v994
        %v997 = vpack.c.bf16 %v996, %v995
        %v999 = vperm.slane %v937, 0
        %v1005 = vunpack.c.l.b16 %v933
        %v1006 = vunpack.c.l.b16 %v934
        %v1007 = vunpack.c.l.b16 %v935
        %v1008 = vunpack.c.l.b16 %v936
        %v1009 = vpack.c.b16 %v1006, %v1005
        %v1010 = vpack.c.b16 %v1008, %v1007
        %v1014 = vsel %vm593, %v997, 0
        %1016 = vmatpush.bf16.msra.mxu0 0
        %1017 = vmatpush.bf16.msra.mxu0 0
        %1018 = vmatpush.bf16.msra.mxu0 0
        %1019 = vmatpush.bf16.msra.mxu0 0
        %1020 = vmatpush.bf16.msra.mxu0 0
        %1021 = vmatpush.bf16.msra.mxu0 0
        %1022 = vmatpush.bf16.msra.mxu0 %v1010
        %1023 = vmatpush.bf16.msra.mxu0 %v1009
        %1024 = vmatmul.bf16.gmra.mxu0 %v1014
        %v1025 = vpop.f32.mrf.mxu0
        %v1026 = vadd.f32 %v999, %v1025
        %v1027 = vpop.f32.mrf.mxu0
        %v1028 = vadd.f32 %v999, %v1027
        %1029 = vdwg.mxu0
        %v1030 = vmul.f32 %v1026, %v1026
        %v1031 = vmul.f32 %v1028, %v1028
        %v1032 = vmul.f32 %v1026, %v1030
        %v1033 = vmul.f32 %v1028, %v1031
        %v1034 = vmul.f32 %v1032, 0.044715
        %v1035 = vmul.f32 %v1033, 0.044715
        %v1036 = vadd.f32 %v1026, %v1034
        %v1037 = vadd.f32 %v1028, %v1035
        %v1038 = vmul.f32 %v1036, 0.7978846
        %v1039 = vmul.f32 %v1037, 0.7978846
        %v1040 = vtanh.pop %v1038
        %v1041 = vtanh.pop %v1039
        %v1042 = vadd.f32 %v1040, 1.0
        %v1043 = vadd.f32 %v1041, 1.0
        %v1044 = vmul.f32 %v1042, 0.5
        %v1045 = vmul.f32 %v1043, 0.5
        %v1046 = vmul.f32 %v1026, %v1044
        %v1047 = vmul.f32 %v1028, %v1045
        %v1048 = vpack.c.bf16 %v1047, %v1046
        %v1057 = vunpack.c.l.b16 %v938
        %v1058 = vunpack.c.l.b16 %v939
        %v1059 = vunpack.c.l.b16 %v940
        %v1060 = vunpack.c.l.b16 %v941
        %v1061 = vunpack.c.l.b16 %v942
        %v1062 = vunpack.c.l.b16 %v943
        %v1063 = vunpack.c.l.b16 %v944
        %v1064 = vunpack.c.l.b16 %v945
        %v1065 = vpack.c.b16 %v1058, %v1057
        %v1066 = vpack.c.b16 %v1060, %v1059
        %v1067 = vpack.c.b16 %v1062, %v1061
        %v1068 = vpack.c.b16 %v1064, %v1063
        %vm1073 = vcmask 523264
        %v1075 = vsel %vm1073, %v1048, 0
        %1077 = vmatpush.bf16.msra.mxu0 0
        %1078 = vmatpush.bf16.msra.mxu0 0
        %1079 = vmatpush.bf16.msra.mxu0 0
        %1080 = vmatpush.bf16.msra.mxu0 0
        %1081 = vmatpush.bf16.msra.mxu0 %v1068
        %1082 = vmatpush.bf16.msra.mxu0 %v1067
        %1083 = vmatpush.bf16.msra.mxu0 %v1066
        %1084 = vmatpush.bf16.msra.mxu0 %v1065
        %1085 = vmatmul.bf16.gmra.mxu0 %v1075
        %v1086 = vpop.f32.mrf.mxu0
        %v1087 = vadd.f32 0.0, %v1086
        %v1088 = vpop.f32.mrf.mxu0
        %v1089 = vadd.f32 0.0, %v1088
        %1090 = vdwg.mxu0
        %v1091 = vadd.f32 %v930, %v1087
        %v1092 = vadd.f32 %v931, %v1089
        %v1094 = vperm.slane %v946, 0
        %v1096 = vadd.f32 %v1091, %v1094
        %v1097 = vadd.f32 %v1092, %v1094
        %1098 = vst.msk [vmem:[%s567] sm:$0xff] %vm593, %v1096
        %1099 = vst.msk [vmem:[%s567 + $0x8] sm:$0xff] %vm593, %v1097
        %s1100 = smul.u32 2, %s31
        %p1101 = scmp.lt.s32.totalorder %s30, 1
        %s1102 = scalar_select %p1101, %s30, 1
        %p1103 = scmp.lt.s32.totalorder %s1100, 1
        %s1104 = scalar_select %p1103, %s1100, 1
        %s1105 = smul.addr %s1102, 2
        %s1106 = sadd.s32 %s1104, %s1105
        %s1107 = smul.addr %s1106, 8
        %s1108 = scalar_lea.vmem %s11, %s1107
        // Predicated region
        $region89: #{maskformer_decoder_forward.12} parent=63 // pred_check
          %p1109 = pneg %p308
        $region90: #{maskformer_decoder_forward.12} parent=63 // pred_check_branch
          %1111 = sbr.rel (%p1109) target = $region92
        $region91: #{maskformer_decoder_forward.12} parent=63 // pred_region
          %s1112 = smul.u32 2, %s31
        $region92: #{maskformer_decoder_forward.12} parent=63 // pred_fallthru
          _
      $region64: #{maskformer_decoder_forward.12} parent=5 // pred_fallthru
        _
      %p1113 = scmp.le.s32.totalorder 2, %s21
      // Predicated region
      $region93: #{maskformer_decoder_forward.12} parent=5 // pred_check
        %p1114 = pneg %p1113
      $region94: #{maskformer_decoder_forward.12} parent=5 // pred_check_branch
        %1116 = sbr.rel (%p1114) target = $region96
      $region95: #{maskformer_decoder_forward.12} parent=5 // pred_region
        %s1117 = ssub.s32 %s21, 2
        // Predicated region
        $region97: #{maskformer_decoder_forward.12} parent=95 // pred_check
          %p1118 = pneg %p314
        $region98: #{maskformer_decoder_forward.12} parent=95 // pred_check_branch
          %1120 = sbr.rel (%p1118) target = $region100
        $region99: #{maskformer_decoder_forward.12} parent=95 // pred_region
          %s1121 = smul.u32 2, %s33
          %p1122 = scmp.lt.s32.totalorder %s32, 1
          %s1123 = scalar_select %p1122, %s32, 1
          %p1124 = scmp.lt.s32.totalorder %s1121, 1
          %s1125 = scalar_select %p1124, %s1121, 1
          %s1126 = smul.addr %s1123, 2
          %s1127 = sadd.s32 %s1125, %s1126
          %s1128 = smul.addr %s1127, 8
          %s1129 = scalar_lea.vmem %s11, %s1128
        $region100: #{maskformer_decoder_forward.12} parent=95 // pred_fallthru
          _
      $region96: #{maskformer_decoder_forward.12} parent=5 // pred_fallthru
        _
    $region6: #{maskformer_decoder_forward.12} parent=1 // loop_footer
      %s25 = sadd.s32 1, %s21
    $region7: #{maskformer_decoder_forward.12} parent=1 // loop_footer_branch
      %20 = sbr.rel target = $region3
    $region8: #{maskformer_decoder_forward.12} parent=1 // loop_exit
      _
    %1130 = vsyncpa [#allocation3], 1
    %s1131 = scalar_lea.sflag [#allocation3], 1
    %1132 = vsyncpa %s1131, 1
    %1133 = vsyncpa [#allocation5], 1
    %1134 = vsyncpa [#allocation8], 1
    %1135 = vsyncpa [#allocation11], 1

// kernel: maskformer_decoder_forward.11
$region0: #{maskformer_decoder_forward.11}
  #allocation0 [shape = 'u32[]', space=smem, size = 0x4, offset = 0x4, fixed_abs, tag = 'smem constant byte address 0x4 - core index']
  #allocation1 [shape = 'u32[72,128]{1,0:T(1,128)}', space=vmem, size = 0x9000, scoped, tag = 'internal scratch']
  %s0 = inlined_call_operand.vmem [shape: f32[2,8,32], index: 0, kind: input, shape index: {}]
  %s1 = inlined_call_operand.vmem [shape: f32[2,16,32], index: 1, kind: input, shape index: {}]
  %s2 = inlined_call_operand.vmem [shape: bf16[2,8,16], index: 2, kind: input, shape index: {}]
  %s3 = inlined_call_operand.vmem [shape: f32[2,32], index: 3, kind: input, shape index: {}]
  %s4 = inlined_call_operand.hbm [shape: bf16[4,32,32], index: 4, kind: input, shape index: {}]
  %s5 = inlined_call_operand.hbm [shape: f32[4,32], index: 5, kind: input, shape index: {}]
  %s6 = inlined_call_operand.hbm [shape: f32[2,32], index: 6, kind: input, shape index: {}]
  %s7 = inlined_call_operand.hbm [shape: bf16[4,32,32], index: 7, kind: input, shape index: {}]
  %s8 = inlined_call_operand.hbm [shape: f32[4,32], index: 8, kind: input, shape index: {}]
  %s9 = inlined_call_operand.hbm [shape: f32[2,32], index: 9, kind: input, shape index: {}]
  %s10 = inlined_call_operand.vmem [shape: bf16[32,64], index: 10, kind: input, shape index: {}]
  %s11 = inlined_call_operand.hbm [shape: f32[1,64], index: 11, kind: input, shape index: {}]
  %s12 = inlined_call_operand.vmem [shape: bf16[64,32], index: 12, kind: input, shape index: {}]
  %s13 = inlined_call_operand.hbm [shape: f32[1,32], index: 13, kind: input, shape index: {}]
  %s14 = inlined_call_operand.vmem [shape: f32[2,8,32], index: 14, kind: output, shape index: {}]
  %s15 = sld [smem:[#allocation0]]
  $region121: #{maskformer_decoder_forward.11} parent=0
    _
  %s17 = ssub.s32 1, %s15
  %s18 = scalar_select 0, %s17, %s15
  $region1: #{maskformer_decoder_forward.11} parent=0
    #allocation2 [shape = 'u8[32768]{0}', space=vmem, size = 0x8000, scoped, tag = 'input window, operand 4, single buffered']
    #allocation3 [shape = 's32[2]{0}', space=sflag, size = 0x8, scoped, tag = 'scoped memory for maskformer_decoder_forward.11']
    #allocation4 [shape = 'u8[2048]{0}', space=vmem, size = 0x800, scoped, tag = 'input window, operand 5, single buffered']
    #allocation5 [shape = 's32[1]{0}', space=sflag, size = 0x4, scoped, tag = 'scoped memory for maskformer_decoder_forward.11']
    #allocation6 [shape = 'u8[1024]{0}', space=vmem, size = 0x400, scoped, tag = 'input window, operand 6, single buffered']
    #allocation7 [shape = 'u8[32768]{0}', space=vmem, size = 0x8000, scoped, tag = 'input window, operand 7, single buffered']
    #allocation8 [shape = 's32[1]{0}', space=sflag, size = 0x4, scoped, tag = 'scoped memory for maskformer_decoder_forward.11']
    #allocation9 [shape = 'u8[2048]{0}', space=vmem, size = 0x800, scoped, tag = 'input window, operand 8, single buffered']
    #allocation10 [shape = 'u8[1024]{0}', space=vmem, size = 0x400, scoped, tag = 'input window, operand 9, single buffered']
    #allocation11 [shape = 's32[1]{0}', space=sflag, size = 0x4, scoped, tag = 'scoped memory for maskformer_decoder_forward.11']
    #allocation12 [shape = 'u8[512]{0}', space=vmem, size = 0x400, scoped, tag = 'input window, operand 11, single buffered']
    #allocation13 [shape = 'u8[512]{0}', space=vmem, size = 0x400, scoped, tag = 'input window, operand 13, single buffered']
    #allocation14 [shape = 's32[1]{0}', space=sflag, size = 0x4, scoped, tag = 'scoped memory for maskformer_decoder_forward.11']
    %19 = vsyncpa [#allocation3], 0
    %20 = vsyncpa [#allocation5], 0
    %21 = vsyncpa [#allocation8], 0
    %22 = vsyncpa [#allocation11], 0
    %23 = vsyncpa [#allocation14], 0
    loop: start=0, step=1, limit=4
    $region2: #{maskformer_decoder_forward.11} parent=1 // loop_pre_header
      _
    $region3: #{maskformer_decoder_forward.11} parent=1 // loop_header
      %s25 = sphi 0, %s29
      %p26 = scmp.ge.s32.totalorder %s25, 4
      %s35 = sphi 0, %s37
      %s38 = sphi 0, %s35
      %s39 = sphi 0, %s38
      %s55 = sphi 0, %s39
      %s61 = sphi 0, %s63
      %s64 = sphi 0, %s61
      %s65 = sphi 0, %s64
      %s81 = sphi 0, %s65
      %s87 = sphi 0, %s89
      %s90 = sphi 0, %s87
      %s91 = sphi 0, %s90
      %s107 = sphi 0, %s91
      %s111 = sphi 0, %s111
      %s113 = sphi 0, %s111
      %s114 = sphi 0, %s113
      %s128 = sphi 0, %s114
      %s132 = sphi 0, %s132
      %s134 = sphi 0, %s132
      %s135 = sphi 0, %s134
      %s149 = sphi 0, %s135
      %s153 = sphi 0, %s153
      %s155 = sphi 0, %s153
      %s156 = sphi 0, %s155
      %s170 = sphi 0, %s156
      %s174 = sphi 0, %s174
      %s176 = sphi 0, %s174
      %s177 = sphi 0, %s176
      %s191 = sphi 0, %s177
      %s195 = sphi 0, %s195
      %s197 = sphi 0, %s195
      %s198 = sphi 0, %s197
      %s212 = sphi 0, %s198
      %s216 = sphi 0, %s216
      %s218 = sphi 0, %s216
      %s219 = sphi 0, %s218
      %s233 = sphi 0, %s219
      %s237 = sphi 0, %s237
      %s239 = sphi 0, %s237
      %s240 = sphi 0, %s239
      %s254 = sphi 0, %s240
      %s258 = sphi 0, %s258
      %s260 = sphi 0, %s258
      %s261 = sphi 0, %s260
      %s275 = sphi 0, %s261
      %s279 = sphi 0, %s279
      %s281 = sphi 0, %s279
      %s282 = sphi 0, %s281
      %s296 = sphi 0, %s282
      %s300 = sphi 0, %s300
      %s302 = sphi 0, %s300
      %s303 = sphi 0, %s302
      %s317 = sphi 0, %s303
      %s321 = sphi 0, %s321
      %s323 = sphi 0, %s321
      %s324 = sphi 0, %s323
      %s338 = sphi 0, %s324
      %s344 = sphi 0, %s346
      %s347 = sphi 0, %s344
      %s348 = sphi 0, %s347
      %s364 = sphi 0, %s348
    $region4: #{maskformer_decoder_forward.11} parent=1 // loop_header_branch
      %28 = sbr.rel (%p26) target = $region8
    $region5: #{maskformer_decoder_forward.11} parent=1 // loop_body
      %s30 = ssub.s32 %s25, 1
      %s31 = ssub.s32 %s25, 2
      %s32 = sadd.s32 %s25, 1
      %s33 = ssub.s32 %s25, %s32
      %p34 = scmp.eq.s32.totalorder %s33, 0
      %s36 = sadd.s32 %s35, 1
      %s37 = scalar_select %p34, %s35, %s36
      %p40 = pneg %p34
      %p41 = scmp.eq.s32.totalorder %s25, 1
      %p42 = por %p40, %p41
      %p43 = scmp.ne.s32.totalorder %s35, %s38
      %p44 = scmp.eq.s32.totalorder %s25, 0
      %p45 = por %p43, %p44
      %p46 = scmp.ne.s32.totalorder %s35, %s38
      %p47 = scmp.eq.s32.totalorder %s30, 1
      %p48 = por %p46, %p47
      %p49 = scmp.ne.s32.totalorder %s38, %s39
      %p50 = scmp.eq.s32.totalorder %s30, 0
      %p51 = por %p49, %p50
      %p52 = scmp.ne.s32.totalorder %s38, %s39
      %p53 = scmp.eq.s32.totalorder %s31, 1
      %p54 = por %p52, %p53
      %p56 = scmp.ne.s32.totalorder %s39, %s55
      %p57 = scmp.eq.s32.totalorder %s31, 0
      %p58 = por %p56, %p57
      %s59 = ssub.s32 %s25, %s32
      %p60 = scmp.eq.s32.totalorder %s59, 0
      %s62 = sadd.s32 %s61, 1
      %s63 = scalar_select %p60, %s61, %s62
      %p66 = pneg %p60
      %p67 = scmp.eq.s32.totalorder %s25, 1
      %p68 = por %p66, %p67
      %p69 = scmp.ne.s32.totalorder %s61, %s64
      %p70 = scmp.eq.s32.totalorder %s25, 0
      %p71 = por %p69, %p70
      %p72 = scmp.ne.s32.totalorder %s61, %s64
      %p73 = scmp.eq.s32.totalorder %s30, 1
      %p74 = por %p72, %p73
      %p75 = scmp.ne.s32.totalorder %s64, %s65
      %p76 = scmp.eq.s32.totalorder %s30, 0
      %p77 = por %p75, %p76
      %p78 = scmp.ne.s32.totalorder %s64, %s65
      %p79 = scmp.eq.s32.totalorder %s31, 1
      %p80 = por %p78, %p79
      %p82 = scmp.ne.s32.totalorder %s65, %s81
      %p83 = scmp.eq.s32.totalorder %s31, 0
      %p84 = por %p82, %p83
      %s85 = ssub.s32 %s25, %s32
      %p86 = scmp.eq.s32.totalorder %s85, 0
      %s88 = sadd.s32 %s87, 1
      %s89 = scalar_select %p86, %s87, %s88
      %p92 = pneg %p86
      %p93 = scmp.eq.s32.totalorder %s25, 1
      %p94 = por %p92, %p93
      %p95 = scmp.ne.s32.totalorder %s87, %s90
      %p96 = scmp.eq.s32.totalorder %s25, 0
      %p97 = por %p95, %p96
      %p98 = scmp.ne.s32.totalorder %s87, %s90
      %p99 = scmp.eq.s32.totalorder %s30, 1
      %p100 = por %p98, %p99
      %p101 = scmp.ne.s32.totalorder %s90, %s91
      %p102 = scmp.eq.s32.totalorder %s30, 0
      %p103 = por %p101, %p102
      %p104 = scmp.ne.s32.totalorder %s90, %s91
      %p105 = scmp.eq.s32.totalorder %s31, 1
      %p106 = por %p104, %p105
      %p108 = scmp.ne.s32.totalorder %s91, %s107
      %p109 = scmp.eq.s32.totalorder %s31, 0
      %p110 = por %p108, %p109
      %s112 = sadd.s32 %s111, 1
      %p115 = scmp.eq.s32.totalorder %s25, 1
      %p116 = scmp.ne.s32.totalorder %s111, %s113
      %p117 = scmp.eq.s32.totalorder %s25, 0
      %p118 = por %p116, %p117
      %p119 = scmp.ne.s32.totalorder %s111, %s113
      %p120 = scmp.eq.s32.totalorder %s30, 1
      %p121 = por %p119, %p120
      %p122 = scmp.ne.s32.totalorder %s113, %s114
      %p123 = scmp.eq.s32.totalorder %s30, 0
      %p124 = por %p122, %p123
      %p125 = scmp.ne.s32.totalorder %s113, %s114
      %p126 = scmp.eq.s32.totalorder %s31, 1
      %p127 = por %p125, %p126
      %p129 = scmp.ne.s32.totalorder %s114, %s128
      %p130 = scmp.eq.s32.totalorder %s31, 0
      %p131 = por %p129, %p130
      %s133 = sadd.s32 %s132, 1
      %p136 = scmp.eq.s32.totalorder %s25, 1
      %p137 = scmp.ne.s32.totalorder %s132, %s134
      %p138 = scmp.eq.s32.totalorder %s25, 0
      %p139 = por %p137, %p138
      %p140 = scmp.ne.s32.totalorder %s132, %s134
      %p141 = scmp.eq.s32.totalorder %s30, 1
      %p142 = por %p140, %p141
      %p143 = scmp.ne.s32.totalorder %s134, %s135
      %p144 = scmp.eq.s32.totalorder %s30, 0
      %p145 = por %p143, %p144
      %p146 = scmp.ne.s32.totalorder %s134, %s135
      %p147 = scmp.eq.s32.totalorder %s31, 1
      %p148 = por %p146, %p147
      %p150 = scmp.ne.s32.totalorder %s135, %s149
      %p151 = scmp.eq.s32.totalorder %s31, 0
      %p152 = por %p150, %p151
      %s154 = sadd.s32 %s153, 1
      %p157 = scmp.eq.s32.totalorder %s25, 1
      %p158 = scmp.ne.s32.totalorder %s153, %s155
      %p159 = scmp.eq.s32.totalorder %s25, 0
      %p160 = por %p158, %p159
      %p161 = scmp.ne.s32.totalorder %s153, %s155
      %p162 = scmp.eq.s32.totalorder %s30, 1
      %p163 = por %p161, %p162
      %p164 = scmp.ne.s32.totalorder %s155, %s156
      %p165 = scmp.eq.s32.totalorder %s30, 0
      %p166 = por %p164, %p165
      %p167 = scmp.ne.s32.totalorder %s155, %s156
      %p168 = scmp.eq.s32.totalorder %s31, 1
      %p169 = por %p167, %p168
      %p171 = scmp.ne.s32.totalorder %s156, %s170
      %p172 = scmp.eq.s32.totalorder %s31, 0
      %p173 = por %p171, %p172
      %s175 = sadd.s32 %s174, 1
      %p178 = scmp.eq.s32.totalorder %s25, 1
      %p179 = scmp.ne.s32.totalorder %s174, %s176
      %p180 = scmp.eq.s32.totalorder %s25, 0
      %p181 = por %p179, %p180
      %p182 = scmp.ne.s32.totalorder %s174, %s176
      %p183 = scmp.eq.s32.totalorder %s30, 1
      %p184 = por %p182, %p183
      %p185 = scmp.ne.s32.totalorder %s176, %s177
      %p186 = scmp.eq.s32.totalorder %s30, 0
      %p187 = por %p185, %p186
      %p188 = scmp.ne.s32.totalorder %s176, %s177
      %p189 = scmp.eq.s32.totalorder %s31, 1
      %p190 = por %p188, %p189
      %p192 = scmp.ne.s32.totalorder %s177, %s191
      %p193 = scmp.eq.s32.totalorder %s31, 0
      %p194 = por %p192, %p193
      %s196 = sadd.s32 %s195, 1
      %p199 = scmp.eq.s32.totalorder %s25, 1
      %p200 = scmp.ne.s32.totalorder %s195, %s197
      %p201 = scmp.eq.s32.totalorder %s25, 0
      %p202 = por %p200, %p201
      %p203 = scmp.ne.s32.totalorder %s195, %s197
      %p204 = scmp.eq.s32.totalorder %s30, 1
      %p205 = por %p203, %p204
      %p206 = scmp.ne.s32.totalorder %s197, %s198
      %p207 = scmp.eq.s32.totalorder %s30, 0
      %p208 = por %p206, %p207
      %p209 = scmp.ne.s32.totalorder %s197, %s198
      %p210 = scmp.eq.s32.totalorder %s31, 1
      %p211 = por %p209, %p210
      %p213 = scmp.ne.s32.totalorder %s198, %s212
      %p214 = scmp.eq.s32.totalorder %s31, 0
      %p215 = por %p213, %p214
      %s217 = sadd.s32 %s216, 1
      %p220 = scmp.eq.s32.totalorder %s25, 1
      %p221 = scmp.ne.s32.totalorder %s216, %s218
      %p222 = scmp.eq.s32.totalorder %s25, 0
      %p223 = por %p221, %p222
      %p224 = scmp.ne.s32.totalorder %s216, %s218
      %p225 = scmp.eq.s32.totalorder %s30, 1
      %p226 = por %p224, %p225
      %p227 = scmp.ne.s32.totalorder %s218, %s219
      %p228 = scmp.eq.s32.totalorder %s30, 0
      %p229 = por %p227, %p228
      %p230 = scmp.ne.s32.totalorder %s218, %s219
      %p231 = scmp.eq.s32.totalorder %s31, 1
      %p232 = por %p230, %p231
      %p234 = scmp.ne.s32.totalorder %s219, %s233
      %p235 = scmp.eq.s32.totalorder %s31, 0
      %p236 = por %p234, %p235
      %s238 = sadd.s32 %s237, 1
      %p241 = scmp.eq.s32.totalorder %s25, 1
      %p242 = scmp.ne.s32.totalorder %s237, %s239
      %p243 = scmp.eq.s32.totalorder %s25, 0
      %p244 = por %p242, %p243
      %p245 = scmp.ne.s32.totalorder %s237, %s239
      %p246 = scmp.eq.s32.totalorder %s30, 1
      %p247 = por %p245, %p246
      %p248 = scmp.ne.s32.totalorder %s239, %s240
      %p249 = scmp.eq.s32.totalorder %s30, 0
      %p250 = por %p248, %p249
      %p251 = scmp.ne.s32.totalorder %s239, %s240
      %p252 = scmp.eq.s32.totalorder %s31, 1
      %p253 = por %p251, %p252
      %p255 = scmp.ne.s32.totalorder %s240, %s254
      %p256 = scmp.eq.s32.totalorder %s31, 0
      %p257 = por %p255, %p256
      %s259 = sadd.s32 %s258, 1
      %p262 = scmp.eq.s32.totalorder %s25, 1
      %p263 = scmp.ne.s32.totalorder %s258, %s260
      %p264 = scmp.eq.s32.totalorder %s25, 0
      %p265 = por %p263, %p264
      %p266 = scmp.ne.s32.totalorder %s258, %s260
      %p267 = scmp.eq.s32.totalorder %s30, 1
      %p268 = por %p266, %p267
      %p269 = scmp.ne.s32.totalorder %s260, %s261
      %p270 = scmp.eq.s32.totalorder %s30, 0
      %p271 = por %p269, %p270
      %p272 = scmp.ne.s32.totalorder %s260, %s261
      %p273 = scmp.eq.s32.totalorder %s31, 1
      %p274 = por %p272, %p273
      %p276 = scmp.ne.s32.totalorder %s261, %s275
      %p277 = scmp.eq.s32.totalorder %s31, 0
      %p278 = por %p276, %p277
      %s280 = sadd.s32 %s279, 1
      %p283 = scmp.eq.s32.totalorder %s25, 1
      %p284 = scmp.ne.s32.totalorder %s279, %s281
      %p285 = scmp.eq.s32.totalorder %s25, 0
      %p286 = por %p284, %p285
      %p287 = scmp.ne.s32.totalorder %s279, %s281
      %p288 = scmp.eq.s32.totalorder %s30, 1
      %p289 = por %p287, %p288
      %p290 = scmp.ne.s32.totalorder %s281, %s282
      %p291 = scmp.eq.s32.totalorder %s30, 0
      %p292 = por %p290, %p291
      %p293 = scmp.ne.s32.totalorder %s281, %s282
      %p294 = scmp.eq.s32.totalorder %s31, 1
      %p295 = por %p293, %p294
      %p297 = scmp.ne.s32.totalorder %s282, %s296
      %p298 = scmp.eq.s32.totalorder %s31, 0
      %p299 = por %p297, %p298
      %s301 = sadd.s32 %s300, 1
      %p304 = scmp.eq.s32.totalorder %s25, 1
      %p305 = scmp.ne.s32.totalorder %s300, %s302
      %p306 = scmp.eq.s32.totalorder %s25, 0
      %p307 = por %p305, %p306
      %p308 = scmp.ne.s32.totalorder %s300, %s302
      %p309 = scmp.eq.s32.totalorder %s30, 1
      %p310 = por %p308, %p309
      %p311 = scmp.ne.s32.totalorder %s302, %s303
      %p312 = scmp.eq.s32.totalorder %s30, 0
      %p313 = por %p311, %p312
      %p314 = scmp.ne.s32.totalorder %s302, %s303
      %p315 = scmp.eq.s32.totalorder %s31, 1
      %p316 = por %p314, %p315
      %p318 = scmp.ne.s32.totalorder %s303, %s317
      %p319 = scmp.eq.s32.totalorder %s31, 0
      %p320 = por %p318, %p319
      %s322 = sadd.s32 %s321, 1
      %p325 = scmp.eq.s32.totalorder %s25, 1
      %p326 = scmp.ne.s32.totalorder %s321, %s323
      %p327 = scmp.eq.s32.totalorder %s25, 0
      %p328 = por %p326, %p327
      %p329 = scmp.ne.s32.totalorder %s321, %s323
      %p330 = scmp.eq.s32.totalorder %s30, 1
      %p331 = por %p329, %p330
      %p332 = scmp.ne.s32.totalorder %s323, %s324
      %p333 = scmp.eq.s32.totalorder %s30, 0
      %p334 = por %p332, %p333
      %p335 = scmp.ne.s32.totalorder %s323, %s324
      %p336 = scmp.eq.s32.totalorder %s31, 1
      %p337 = por %p335, %p336
      %p339 = scmp.ne.s32.totalorder %s324, %s338
      %p340 = scmp.eq.s32.totalorder %s31, 0
      %p341 = por %p339, %p340
      %s342 = ssub.s32 %s25, %s32
      %p343 = scmp.eq.s32.totalorder %s342, 0
      %s345 = sadd.s32 %s344, 1
      %s346 = scalar_select %p343, %s344, %s345
      %p349 = pneg %p343
      %p350 = scmp.eq.s32.totalorder %s25, 1
      %p351 = por %p349, %p350
      %p352 = scmp.ne.s32.totalorder %s344, %s347
      %p353 = scmp.eq.s32.totalorder %s25, 0
      %p354 = por %p352, %p353
      %p355 = scmp.ne.s32.totalorder %s344, %s347
      %p356 = scmp.eq.s32.totalorder %s30, 1
      %p357 = por %p355, %p356
      %p358 = scmp.ne.s32.totalorder %s347, %s348
      %p359 = scmp.eq.s32.totalorder %s30, 0
      %p360 = por %p358, %p359
      %p361 = scmp.ne.s32.totalorder %s347, %s348
      %p362 = scmp.eq.s32.totalorder %s31, 1
      %p363 = por %p361, %p362
      %p365 = scmp.ne.s32.totalorder %s348, %s364
      %p366 = scmp.eq.s32.totalorder %s31, 0
      %p367 = por %p365, %p366
      %p368 = scmp.le.s32.totalorder 1, %s25
      %p369 = scmp.lt.s32.totalorder %s25, 3
      %p370 = pnand %p368, %p369
      %p371 = pneg %p370
      // Predicated region
      $region9: #{maskformer_decoder_forward.11} parent=5 // pred_check
        _
      $region10: #{maskformer_decoder_forward.11} parent=5 // pred_check_branch
        %373 = sbr.rel (%p370) target = $region12
      $region11: #{maskformer_decoder_forward.11} parent=5 // pred_region
        %s374 = ssub.s32 %s25, 1
        // Predicated region
        $region13: #{maskformer_decoder_forward.11} parent=11 // pred_check
          %p375 = pneg %p124
        $region14: #{maskformer_decoder_forward.11} parent=11 // pred_check_branch
          %377 = sbr.rel (%p375) target = $region16
        $region15: #{maskformer_decoder_forward.11} parent=11 // pred_region
          _
        $region16: #{maskformer_decoder_forward.11} parent=11 // pred_fallthru
          _
        // Predicated region
        $region17: #{maskformer_decoder_forward.11} parent=11 // pred_check
          %p378 = pneg %p145
        $region18: #{maskformer_decoder_forward.11} parent=11 // pred_check_branch
          %380 = sbr.rel (%p378) target = $region20
        $region19: #{maskformer_decoder_forward.11} parent=11 // pred_region
          %382 = vsyncadd [#allocation3], 0
          %s383 = sshll.u32 %s4, 4
          %s384 = int_to_ptr.hbm [resolvable:$true] %s383
          %s385 = sshll.u32 [#allocation2], 4
          %s386 = int_to_ptr.vmem [resolvable:$true] %s385
          %391 = dma.hbm_to_vmem [thread:$0]  %s384, 1024, %s386, [#allocation3], 64, 64, 4
        $region20: #{maskformer_decoder_forward.11} parent=11 // pred_fallthru
          _
        // Predicated region
        $region21: #{maskformer_decoder_forward.11} parent=11 // pred_check
          %p392 = pneg %p166
        $region22: #{maskformer_decoder_forward.11} parent=11 // pred_check_branch
          %394 = sbr.rel (%p392) target = $region24
        $region23: #{maskformer_decoder_forward.11} parent=11 // pred_region
          %396 = vsyncadd [#allocation5], 0
          %s398 = sshll.u32 %s5, 4
          %s399 = int_to_ptr.hbm [resolvable:$true] %s398
          %s400 = sshll.u32 [#allocation4], 4
          %s401 = int_to_ptr.vmem [resolvable:$true] %s400
          %403 = dma.hbm_to_vmem [thread:$0]  %s399, 64, %s401, [#allocation5]
        $region24: #{maskformer_decoder_forward.11} parent=11 // pred_fallthru
          _
        // Predicated region
        $region25: #{maskformer_decoder_forward.11} parent=11 // pred_check
          %p404 = pneg %p187
        $region26: #{maskformer_decoder_forward.11} parent=11 // pred_check_branch
          %406 = sbr.rel (%p404) target = $region28
        $region27: #{maskformer_decoder_forward.11} parent=11 // pred_region
          %408 = vsyncadd [#allocation5], 0
          %s410 = sshll.u32 %s6, 4
          %s411 = int_to_ptr.hbm [resolvable:$true] %s410
          %s412 = sshll.u32 [#allocation6], 4
          %s413 = int_to_ptr.vmem [resolvable:$true] %s412
          %415 = dma.hbm_to_vmem [thread:$0]  %s411, 32, %s413, [#allocation5]
        $region28: #{maskformer_decoder_forward.11} parent=11 // pred_fallthru
          _
        // Predicated region
        $region29: #{maskformer_decoder_forward.11} parent=11 // pred_check
          %p416 = pneg %p208
        $region30: #{maskformer_decoder_forward.11} parent=11 // pred_check_branch
          %418 = sbr.rel (%p416) target = $region32
        $region31: #{maskformer_decoder_forward.11} parent=11 // pred_region
          %420 = vsyncadd [#allocation8], 0
          %s421 = sshll.u32 %s7, 4
          %s422 = int_to_ptr.hbm [resolvable:$true] %s421
          %s423 = sshll.u32 [#allocation7], 4
          %s424 = int_to_ptr.vmem [resolvable:$true] %s423
          %429 = dma.hbm_to_vmem [thread:$0]  %s422, 1024, %s424, [#allocation8], 64, 64, 4
        $region32: #{maskformer_decoder_forward.11} parent=11 // pred_fallthru
          _
        // Predicated region
        $region33: #{maskformer_decoder_forward.11} parent=11 // pred_check
          %p430 = pneg %p229
        $region34: #{maskformer_decoder_forward.11} parent=11 // pred_check_branch
          %432 = sbr.rel (%p430) target = $region36
        $region35: #{maskformer_decoder_forward.11} parent=11 // pred_region
          %434 = vsyncadd [#allocation8], 0
          %s436 = sshll.u32 %s8, 4
          %s437 = int_to_ptr.hbm [resolvable:$true] %s436
          %s438 = sshll.u32 [#allocation9], 4
          %s439 = int_to_ptr.vmem [resolvable:$true] %s438
          %441 = dma.hbm_to_vmem [thread:$0]  %s437, 64, %s439, [#allocation8]
        $region36: #{maskformer_decoder_forward.11} parent=11 // pred_fallthru
          _
        // Predicated region
        $region37: #{maskformer_decoder_forward.11} parent=11 // pred_check
          %p442 = pneg %p250
        $region38: #{maskformer_decoder_forward.11} parent=11 // pred_check_branch
          %444 = sbr.rel (%p442) target = $region40
        $region39: #{maskformer_decoder_forward.11} parent=11 // pred_region
          %446 = vsyncadd [#allocation11], 0
          %s448 = sshll.u32 %s9, 4
          %s449 = int_to_ptr.hbm [resolvable:$true] %s448
          %s450 = sshll.u32 [#allocation10], 4
          %s451 = int_to_ptr.vmem [resolvable:$true] %s450
          %453 = dma.hbm_to_vmem [thread:$0]  %s449, 32, %s451, [#allocation11]
        $region40: #{maskformer_decoder_forward.11} parent=11 // pred_fallthru
          _
        // Predicated region
        $region41: #{maskformer_decoder_forward.11} parent=11 // pred_check
          %p454 = pneg %p271
        $region42: #{maskformer_decoder_forward.11} parent=11 // pred_check_branch
          %456 = sbr.rel (%p454) target = $region44
        $region43: #{maskformer_decoder_forward.11} parent=11 // pred_region
          _
        $region44: #{maskformer_decoder_forward.11} parent=11 // pred_fallthru
          _
        // Predicated region
        $region45: #{maskformer_decoder_forward.11} parent=11 // pred_check
          %p457 = pneg %p292
        $region46: #{maskformer_decoder_forward.11} parent=11 // pred_check_branch
          %459 = sbr.rel (%p457) target = $region48
        $region47: #{maskformer_decoder_forward.11} parent=11 // pred_region
          %461 = vsyncadd [#allocation11], 0
          %s463 = sshll.u32 %s11, 4
          %s464 = int_to_ptr.hbm [resolvable:$true] %s463
          %s465 = sshll.u32 [#allocation12], 4
          %s466 = int_to_ptr.vmem [resolvable:$true] %s465
          %468 = dma.hbm_to_vmem [thread:$0]  %s464, 16, %s466, [#allocation11]
        $region48: #{maskformer_decoder_forward.11} parent=11 // pred_fallthru
          _
        // Predicated region
        $region49: #{maskformer_decoder_forward.11} parent=11 // pred_check
          %p469 = pneg %p313
        $region50: #{maskformer_decoder_forward.11} parent=11 // pred_check_branch
          %471 = sbr.rel (%p469) target = $region52
        $region51: #{maskformer_decoder_forward.11} parent=11 // pred_region
          _
        $region52: #{maskformer_decoder_forward.11} parent=11 // pred_fallthru
          _
        // Predicated region
        $region53: #{maskformer_decoder_forward.11} parent=11 // pred_check
          %p472 = pneg %p334
        $region54: #{maskformer_decoder_forward.11} parent=11 // pred_check_branch
          %474 = sbr.rel (%p472) target = $region56
        $region55: #{maskformer_decoder_forward.11} parent=11 // pred_region
          %476 = vsyncadd [#allocation14], 0
          %s478 = sshll.u32 %s13, 4
          %s479 = int_to_ptr.hbm [resolvable:$true] %s478
          %s480 = sshll.u32 [#allocation13], 4
          %s481 = int_to_ptr.vmem [resolvable:$true] %s480
          %483 = dma.hbm_to_vmem [thread:$0]  %s479, 16, %s481, [#allocation14]
        $region56: #{maskformer_decoder_forward.11} parent=11 // pred_fallthru
          _
      $region12: #{maskformer_decoder_forward.11} parent=5 // pred_fallthru
        _
      %p484 = scmp.lt.s32.totalorder %s25, 2
      // Predicated region
      $region57: #{maskformer_decoder_forward.11} parent=5 // pred_check
        %p485 = pneg %p484
      $region58: #{maskformer_decoder_forward.11} parent=5 // pred_check_branch
        %487 = sbr.rel (%p485) target = $region60
      $region59: #{maskformer_decoder_forward.11} parent=5 // pred_region
        // Predicated region
        $region61: #{maskformer_decoder_forward.11} parent=59 // pred_check
          %p488 = pneg %p45
        $region62: #{maskformer_decoder_forward.11} parent=59 // pred_check_branch
          %490 = sbr.rel (%p488) target = $region64
        $region63: #{maskformer_decoder_forward.11} parent=59 // pred_region
          %p491 = scmp.lt.s32.totalorder %s25, 1
          %s492 = scalar_select %p491, %s25, 1
          %s493 = smul.addr %s492, 8
          %s494 = scalar_lea.vmem %s0, %s493
        $region64: #{maskformer_decoder_forward.11} parent=59 // pred_fallthru
          _
        // Predicated region
        $region65: #{maskformer_decoder_forward.11} parent=59 // pred_check
          %p495 = pneg %p71
        $region66: #{maskformer_decoder_forward.11} parent=59 // pred_check_branch
          %497 = sbr.rel (%p495) target = $region68
        $region67: #{maskformer_decoder_forward.11} parent=59 // pred_region
          %p498 = scmp.lt.s32.totalorder %s25, 1
          %s499 = scalar_select %p498, %s25, 1
          %s500 = smul.addr %s499, 2
          %s501 = smul.addr %s500, 8
          %s502 = scalar_lea.vmem %s1, %s501
        $region68: #{maskformer_decoder_forward.11} parent=59 // pred_fallthru
          _
        // Predicated region
        $region69: #{maskformer_decoder_forward.11} parent=59 // pred_check
          %p503 = pneg %p97
        $region70: #{maskformer_decoder_forward.11} parent=59 // pred_check_branch
          %505 = sbr.rel (%p503) target = $region72
        $region71: #{maskformer_decoder_forward.11} parent=59 // pred_region
          %p506 = scmp.lt.s32.totalorder %s25, 1
          %s507 = scalar_select %p506, %s25, 1
          %s508 = smul.addr %s507, 4
          %s509 = scalar_lea.vmem %s2, %s508
        $region72: #{maskformer_decoder_forward.11} parent=59 // pred_fallthru
          _
      $region60: #{maskformer_decoder_forward.11} parent=5 // pred_fallthru
        _
      %p510 = scmp.le.s32.totalorder 1, %s25
      %p511 = scmp.lt.s32.totalorder %s25, 3
      %p512 = pnand %p510, %p511
      %p513 = pneg %p512
      // Predicated region
      $region73: #{maskformer_decoder_forward.11} parent=5 // pred_check
        _
      $region74: #{maskformer_decoder_forward.11} parent=5 // pred_check_branch
        %515 = sbr.rel (%p512) target = $region76
      $region75: #{maskformer_decoder_forward.11} parent=5 // pred_region
        %s516 = ssub.s32 %s25, 1
        // Predicated region
        $region77: #{maskformer_decoder_forward.11} parent=75 // pred_check
          %p517 = pneg %p145
        $region78: #{maskformer_decoder_forward.11} parent=75 // pred_check_branch
          %519 = sbr.rel (%p517) target = $region80
        $region79: #{maskformer_decoder_forward.11} parent=75 // pred_region
          %521 = dma.done [#allocation3], 1024
        $region80: #{maskformer_decoder_forward.11} parent=75 // pred_fallthru
          _
        // Predicated region
        $region81: #{maskformer_decoder_forward.11} parent=75 // pred_check
          %p522 = pneg %p166
        $region82: #{maskformer_decoder_forward.11} parent=75 // pred_check_branch
          %524 = sbr.rel (%p522) target = $region84
        $region83: #{maskformer_decoder_forward.11} parent=75 // pred_region
          %526 = dma.done [#allocation5], 64
        $region84: #{maskformer_decoder_forward.11} parent=75 // pred_fallthru
          _
        // Predicated region
        $region85: #{maskformer_decoder_forward.11} parent=75 // pred_check
          %p527 = pneg %p187
        $region86: #{maskformer_decoder_forward.11} parent=75 // pred_check_branch
          %529 = sbr.rel (%p527) target = $region88
        $region87: #{maskformer_decoder_forward.11} parent=75 // pred_region
          %531 = dma.done [#allocation5], 32
        $region88: #{maskformer_decoder_forward.11} parent=75 // pred_fallthru
          _
        // Predicated region
        $region89: #{maskformer_decoder_forward.11} parent=75 // pred_check
          %p532 = pneg %p208
        $region90: #{maskformer_decoder_forward.11} parent=75 // pred_check_branch
          %534 = sbr.rel (%p532) target = $region92
        $region91: #{maskformer_decoder_forward.11} parent=75 // pred_region
          %536 = dma.done [#allocation8], 1024
        $region92: #{maskformer_decoder_forward.11} parent=75 // pred_fallthru
          _
        // Predicated region
        $region93: #{maskformer_decoder_forward.11} parent=75 // pred_check
          %p537 = pneg %p229
        $region94: #{maskformer_decoder_forward.11} parent=75 // pred_check_branch
          %539 = sbr.rel (%p537) target = $region96
        $region95: #{maskformer_decoder_forward.11} parent=75 // pred_region
          %541 = dma.done [#allocation8], 64
        $region96: #{maskformer_decoder_forward.11} parent=75 // pred_fallthru
          _
        // Predicated region
        $region97: #{maskformer_decoder_forward.11} parent=75 // pred_check
          %p542 = pneg %p250
        $region98: #{maskformer_decoder_forward.11} parent=75 // pred_check_branch
          %544 = sbr.rel (%p542) target = $region100
        $region99: #{maskformer_decoder_forward.11} parent=75 // pred_region
          %546 = dma.done [#allocation11], 32
        $region100: #{maskformer_decoder_forward.11} parent=75 // pred_fallthru
          _
        // Predicated region
        $region101: #{maskformer_decoder_forward.11} parent=75 // pred_check
          %p547 = pneg %p292
        $region102: #{maskformer_decoder_forward.11} parent=75 // pred_check_branch
          %549 = sbr.rel (%p547) target = $region104
        $region103: #{maskformer_decoder_forward.11} parent=75 // pred_region
          %551 = dma.done [#allocation11], 16
        $region104: #{maskformer_decoder_forward.11} parent=75 // pred_fallthru
          _
        // Predicated region
        $region105: #{maskformer_decoder_forward.11} parent=75 // pred_check
          %p552 = pneg %p334
        $region106: #{maskformer_decoder_forward.11} parent=75 // pred_check_branch
          %554 = sbr.rel (%p552) target = $region108
        $region107: #{maskformer_decoder_forward.11} parent=75 // pred_region
          %556 = dma.done [#allocation14], 16
        $region108: #{maskformer_decoder_forward.11} parent=75 // pred_fallthru
          _
        %p557 = scmp.lt.s32.totalorder %s30, 1
        %s558 = scalar_select %p557, %s30, 1
        %s559 = smul.addr %s558, 8
        %s560 = scalar_lea.vmem %s0, %s559
        %p561 = pneg %p51
        %p562 = pneg %p48
        %p563 = scmp.lt.s32.totalorder %s30, 1
        %s564 = scalar_select %p563, %s30, 1
        %s565 = smul.addr %s564, 2
        %s566 = smul.addr %s565, 8
        %s567 = scalar_lea.vmem %s1, %s566
        %p568 = pneg %p77
        %p569 = pneg %p74
        %p570 = scmp.lt.s32.totalorder %s30, 1
        %s571 = scalar_select %p570, %s30, 1
        %s572 = smul.addr %s571, 4
        %s573 = scalar_lea.vmem %s2, %s572
        %p574 = pneg %p103
        %p575 = pneg %p100
        %p576 = pneg %p124
        %p577 = pneg %p121
        %p578 = pneg %p145
        %p579 = pneg %p142
        %p580 = pneg %p166
        %p581 = pneg %p163
        %p582 = pneg %p187
        %p583 = pneg %p184
        %p584 = pneg %p208
        %p585 = pneg %p205
        %p586 = pneg %p229
        %p587 = pneg %p226
        %p588 = pneg %p250
        %p589 = pneg %p247
        %p590 = pneg %p271
        %p591 = pneg %p268
        %p592 = pneg %p292
        %p593 = pneg %p289
        %p594 = pneg %p313
        %p595 = pneg %p310
        %p596 = pneg %p334
        %p597 = pneg %p331
        %p598 = pneg %p360
        %p599 = pneg %p357
        %p600 = scmp.lt.s32.totalorder %s30, 1
        %s601 = scalar_select %p600, %s30, 1
        %s602 = smul.addr %s601, 8
        %s603 = scalar_lea.vmem %s14, %s602
        %p604 = scmp.lt.s32.totalorder %s30, 1
        %s605 = scalar_select %p604, %s30, 1
        %s606 = smul.addr %s605, 8
        %s607 = scalar_lea.vmem %s0, %s606
        %p608 = scmp.lt.s32.totalorder %s30, 1
        %s609 = scalar_select %p608, %s30, 1
        %s610 = smul.addr %s609, 2
        %s611 = smul.addr %s610, 8
        %s612 = scalar_lea.vmem %s1, %s611
        %p613 = scmp.lt.s32.totalorder %s30, 1
        %s614 = scalar_select %p613, %s30, 1
        %s615 = smul.addr %s614, 4
        %s616 = scalar_lea.vmem %s2, %s615
        %p617 = scmp.lt.s32.totalorder %s30, 1
        %s618 = scalar_select %p617, %s30, 1
        %s619 = smul.addr %s618, 8
        %s620 = scalar_lea.vmem %s14, %s619
        %v622 = vld [vmem:[%s607] sm:$0xff]
        %v623 = vld [vmem:[%s612] sm:$0xff]
        %v624 = vld [vmem:[%s612 + $0x8] sm:$0xff]
        %v625 = vld [vmem:[%s616] sm:$0xf]
        %v626 = vld [vmem:[%s3] sm:$0x3]
        %v627 = vld [vmem:[#allocation2] sm:$0xf]
        %v628 = vld [vmem:[#allocation2 + $0x4] sm:$0xf]
        %v629 = vld [vmem:[#allocation2 + $0x8] sm:$0xf]
        %v630 = vld [vmem:[#allocation2 + $0xc] sm:$0xf]
        %v631 = vld [vmem:[#allocation2 + $0x10] sm:$0xf]
        %v632 = vld [vmem:[#allocation2 + $0x14] sm:$0xf]
        %v633 = vld [vmem:[#allocation2 + $0x18] sm:$0xf]
        %v634 = vld [vmem:[#allocation2 + $0x1c] sm:$0xf]
        %v635 = vld [vmem:[#allocation2 + $0x20] sm:$0xf]
        %v636 = vld [vmem:[#allocation2 + $0x24] sm:$0xf]
        %v637 = vld [vmem:[#allocation2 + $0x28] sm:$0xf]
        %v638 = vld [vmem:[#allocation2 + $0x2c] sm:$0xf]
        %v639 = vld [vmem:[#allocation2 + $0x30] sm:$0xf]
        %v640 = vld [vmem:[#allocation2 + $0x34] sm:$0xf]
        %v641 = vld [vmem:[#allocation2 + $0x38] sm:$0xf]
        %v642 = vld [vmem:[#allocation2 + $0x3c] sm:$0xf]
        %v643 = vld [vmem:[#allocation4] sm:$0xf]
        %vm644 = vcmask 261120
        %v645 = vsel %vm644, %v622, 0.0
        %646 = vadd.xlane.f32.xlu0 %v645
        %v647 = vpop.xlane.xlu0 %646
        %v648 = vrcp.pop 32.0
        %v649 = vmul.f32 32.0, %v648
        %v650 = vsub.f32 1.0, %v649
        %v651 = vmul.f32 %v648, %v650
        %v652 = vadd.f32 %v648, %v651
        %vm653 = vweird.f32 %v648
        %v654 = vsel %vm653, %v648, %v652
        %v655 = vmul.f32 %v647, %v654
        %v656 = vsub.f32 %v622, %v655
        %v657 = vmul.f32 %v656, %v656
        %v658 = vsel %vm644, %v657, 0.0
        %659 = vadd.xlane.f32.xlu0 %v658
        %v660 = vpop.xlane.xlu0 %659
        %v661 = vmul.f32 %v660, %v654
        %v662 = vadd.f32 %v661, 1e-05
        %v663 = vrsqrt.pop %v662
        %v664 = vmul.f32 %v663, %v662
        %v665 = vmul.f32 %v664, %v663
        %v666 = vmul.f32 0.5, %v665
        %v667 = vsub.f32 1.5, %v666
        %v668 = vmul.f32 %v663, %v667
        %vm669 = vweird.f32 %v662
        %vm670 = vweird.f32 %v663
        %vm671 = vmor %vm669, %vm670
        %v672 = vsel %vm671, %v663, %v668
        %v673 = vmul.f32 %v656, %v672
        %v674 = vperm.slane %v626, 0
        %v675 = vmul.f32 %v673, %v674
        %v676 = vperm.slane %v626, 1
        %v677 = vadd.f32 %v675, %v676
        %v678 = vpack.c.bf16 %v677, %v677
        %v679 = vpack.c.bf16 %v624, %v623
        %v680 = vperm.slane %v643, 0
        %v685 = vunpack.c.l.b16 %v627
        %v686 = vunpack.c.l.b16 %v628
        %v687 = vunpack.c.l.b16 %v629
        %v688 = vunpack.c.l.b16 %v630
        %v689 = vpack.c.b16 %v686, %v685
        %v690 = vpack.c.b16 %v688, %v687
        %v694 = vsel %vm644, %v678, 0
        %696 = vmatpush.bf16.msra.mxu0 0
        %697 = vmatpush.bf16.msra.mxu0 0
        %698 = vmatpush.bf16.msra.mxu0 0
        %699 = vmatpush.bf16.msra.mxu0 0
        %700 = vmatpush.bf16.msra.mxu0 0
        %701 = vmatpush.bf16.msra.mxu0 0
        %702 = vmatpush.bf16.msra.mxu0 %v690
        %703 = vmatpush.bf16.msra.mxu0 %v689
        %704 = vmatmul.bf16.gmra.mxu0 %v694
        %v705 = vpop.f32.mrf.mxu0
        %v706 = vadd.f32 %v680, %v705
        %v707 = vpop.f32.mrf.mxu0
        %708 = vdwg.mxu0
        %v709 = vperm.slane %v643, 1
        %v714 = vunpack.c.l.b16 %v631
        %v715 = vunpack.c.l.b16 %v632
        %v716 = vunpack.c.l.b16 %v633
        %v717 = vunpack.c.l.b16 %v634
        %v718 = vpack.c.b16 %v715, %v714
        %v719 = vpack.c.b16 %v717, %v716
        %v723 = vsel %vm644, %v679, 0
        %725 = vmatpush.bf16.msra.mxu0 0
        %726 = vmatpush.bf16.msra.mxu0 0
        %727 = vmatpush.bf16.msra.mxu0 0
        %728 = vmatpush.bf16.msra.mxu0 0
        %729 = vmatpush.bf16.msra.mxu0 0
        %730 = vmatpush.bf16.msra.mxu0 0
        %731 = vmatpush.bf16.msra.mxu0 %v719
        %732 = vmatpush.bf16.msra.mxu0 %v718
        %733 = vmatmul.bf16.gmra.mxu0 %v723
        %v734 = vpop.f32.mrf.mxu0
        %v735 = vadd.f32 %v709, %v734
        %v736 = vpop.f32.mrf.mxu0
        %v737 = vadd.f32 %v709, %v736
        %738 = vdwg.mxu0
        %v739 = vperm.slane %v643, 2
        %v744 = vunpack.c.l.b16 %v635
        %v745 = vunpack.c.l.b16 %v636
        %v746 = vunpack.c.l.b16 %v637
        %v747 = vunpack.c.l.b16 %v638
        %v748 = vpack.c.b16 %v745, %v744
        %v749 = vpack.c.b16 %v747, %v746
        %752 = vmatpush.bf16.msra.mxu0 0
        %753 = vmatpush.bf16.msra.mxu0 0
        %754 = vmatpush.bf16.msra.mxu0 0
        %755 = vmatpush.bf16.msra.mxu0 0
        %756 = vmatpush.bf16.msra.mxu0 0
        %757 = vmatpush.bf16.msra.mxu0 0
        %758 = vmatpush.bf16.msra.mxu0 %v749
        %759 = vmatpush.bf16.msra.mxu0 %v748
        %760 = vmatmul.bf16.gmra.mxu0 %v723
        %v761 = vpop.f32.mrf.mxu0
        %v762 = vadd.f32 %v739, %v761
        %v763 = vpop.f32.mrf.mxu0
        %v764 = vadd.f32 %v739, %v763
        %765 = vdwg.mxu0
        %v766 = vunpack.c.l.bf16 %v625
        %v767 = vpack.c.bf16 %v706, %v706
        %v768 = vpack.c.bf16 %v737, %v735
        %v769 = vpack.c.bf16 %v764, %v762
        %vm770 = vcmask 130048
        %v772 = vsel %vm770, %v767, 0
        %v775 = vsel %vm770, %v768, 0
        %777 = vmatpush.bf16.xpose.msra.mxu0 0
        %778 = vmatpush.bf16.xpose.msra.mxu0 0
        %779 = vmatpush.bf16.xpose.msra.mxu0 0
        %780 = vmatpush.bf16.xpose.msra.mxu0 0
        %781 = vmatpush.bf16.xpose.msra.mxu0 0
        %782 = vmatpush.bf16.xpose.msra.mxu0 0
        %783 = vmatpush.bf16.xpose.msra.mxu0 0
        %784 = vmatpush.bf16.xpose.msra.mxu0 %v775
        %785 = vmatmul.bf16.gmra.mxu0 %v772
        %v786 = vpop.f32.mrf.mxu0
        %v787 = vadd.f32 0.0, %v786
        %v788 = vpop.f32.mrf.mxu0
        %789 = vdwg.mxu0
        %v790 = vmul.f32 %v787, 0.25
        %v791 = vadd.f32 %v790, %v766
        %v792 = vsel %vm770, %v791, -inf
        %793 = vmax.xlane.f32.xlu0 %v792
        %v794 = vpop.xlane.xlu0 %793
        %v795 = vsub.f32 %v791, %v794
        %v796 = vmul.f32 %v795, 1.442695
        %v797 = vpow.pop %v796
        %v798 = vsel %vm770, %v797, 0.0
        %799 = vadd.xlane.f32.xlu0 %v798
        %v800 = vpop.xlane.xlu0 %799
        %v801 = vrcp.pop %v800
        %v802 = vmul.f32 %v797, %v801
        %v803 = vpack.c.bf16 %v802, %v802
        %v805 = vsel %vm770, %v803, 0
        %807 = vmatpush.bf16.msra.mxu0 0
        %808 = vmatpush.bf16.msra.mxu0 0
        %809 = vmatpush.bf16.msra.mxu0 0
        %810 = vmatpush.bf16.msra.mxu0 0
        %811 = vmatpush.bf16.msra.mxu0 0
        %812 = vmatpush.bf16.msra.mxu0 0
        %813 = vmatpush.bf16.msra.mxu0 0
        %814 = vmatpush.bf16.msra.mxu0 %v769
        %815 = vmatmul.bf16.gmra.mxu0 %v805
        %v816 = vpop.f32.mrf.mxu0
        %v817 = vadd.f32 0.0, %v816
        %v818 = vpop.f32.mrf.mxu0
        %819 = vdwg.mxu0
        %821 = vrot.lane.b32.xlu0 %v767, 112
        %v822 = vpop.permute.xlu0 %821
        %824 = vrot.lane.b32.xlu0 %v768, 112
        %v825 = vpop.permute.xlu0 %824
        %v827 = vsel %vm770, %v822, 0
        %v830 = vsel %vm770, %v825, 0
        %832 = vmatpush.bf16.xpose.msra.mxu0 0
        %833 = vmatpush.bf16.xpose.msra.mxu0 0
        %834 = vmatpush.bf16.xpose.msra.mxu0 0
        %835 = vmatpush.bf16.xpose.msra.mxu0 0
        %836 = vmatpush.bf16.xpose.msra.mxu0 0
        %837 = vmatpush.bf16.xpose.msra.mxu0 0
        %838 = vmatpush.bf16.xpose.msra.mxu0 0
        %839 = vmatpush.bf16.xpose.msra.mxu0 %v830
        %840 = vmatmul.bf16.gmra.mxu0 %v827
        %v841 = vpop.f32.mrf.mxu0
        %v842 = vadd.f32 0.0, %v841
        %v843 = vpop.f32.mrf.mxu0
        %844 = vdwg.mxu0
        %v845 = vmul.f32 %v842, 0.25
        %v846 = vadd.f32 %v845, %v766
        %v847 = vsel %vm770, %v846, -inf
        %848 = vmax.xlane.f32.xlu0 %v847
        %v849 = vpop.xlane.xlu0 %848
        %v850 = vsub.f32 %v846, %v849
        %v851 = vmul.f32 %v850, 1.442695
        %v852 = vpow.pop %v851
        %v853 = vsel %vm770, %v852, 0.0
        %854 = vadd.xlane.f32.xlu0 %v853
        %v855 = vpop.xlane.xlu0 %854
        %v856 = vrcp.pop %v855
        %v857 = vmul.f32 %v852, %v856
        %v858 = vpack.c.bf16 %v857, %v857
        %860 = vrot.lane.b32.xlu0 %v769, 112
        %v861 = vpop.permute.xlu0 %860
        %v864 = vsel %vm770, %v858, 0
        %866 = vmatpush.bf16.msra.mxu0 0
        %867 = vmatpush.bf16.msra.mxu0 0
        %868 = vmatpush.bf16.msra.mxu0 0
        %869 = vmatpush.bf16.msra.mxu0 0
        %870 = vmatpush.bf16.msra.mxu0 0
        %871 = vmatpush.bf16.msra.mxu0 0
        %872 = vmatpush.bf16.msra.mxu0 0
        %873 = vmatpush.bf16.msra.mxu0 %v861
        %874 = vmatmul.bf16.gmra.mxu0 %v864
        %v875 = vpop.f32.mrf.mxu0
        %v876 = vadd.f32 0.0, %v875
        %v877 = vpop.f32.mrf.mxu0
        %878 = vdwg.mxu0
        %880 = vrot.lane.b32.xlu0 %v876, 16
        %v881 = vpop.permute.xlu0 %880
        %v883 = vsel %vm770, %v817, %v881
        %v884 = vpack.c.bf16 %v883, %v883
        %v885 = vperm.slane %v643, 3
        %v890 = vunpack.c.l.b16 %v639
        %v891 = vunpack.c.l.b16 %v640
        %v892 = vunpack.c.l.b16 %v641
        %v893 = vunpack.c.l.b16 %v642
        %v894 = vpack.c.b16 %v891, %v890
        %v895 = vpack.c.b16 %v893, %v892
        %v899 = vsel %vm644, %v884, 0
        %901 = vmatpush.bf16.msra.mxu0 0
        %902 = vmatpush.bf16.msra.mxu0 0
        %903 = vmatpush.bf16.msra.mxu0 0
        %904 = vmatpush.bf16.msra.mxu0 0
        %905 = vmatpush.bf16.msra.mxu0 0
        %906 = vmatpush.bf16.msra.mxu0 0
        %907 = vmatpush.bf16.msra.mxu0 %v895
        %908 = vmatpush.bf16.msra.mxu0 %v894
        %909 = vmatmul.bf16.gmra.mxu0 %v899
        %v910 = vpop.f32.mrf.mxu0
        %v911 = vadd.f32 %v885, %v910
        %v912 = vpop.f32.mrf.mxu0
        %913 = vdwg.mxu0
        %v914 = vadd.f32 %v622, %v911
        %v915 = vld [vmem:[#allocation6] sm:$0x3]
        %v916 = vld [vmem:[#allocation7] sm:$0xf]
        %v917 = vld [vmem:[#allocation7 + $0x4] sm:$0xf]
        %v918 = vld [vmem:[#allocation7 + $0x8] sm:$0xf]
        %v919 = vld [vmem:[#allocation7 + $0xc] sm:$0xf]
        %v920 = vld [vmem:[#allocation7 + $0x10] sm:$0xf]
        %v921 = vld [vmem:[#allocation7 + $0x14] sm:$0xf]
        %v922 = vld [vmem:[#allocation7 + $0x18] sm:$0xf]
        %v923 = vld [vmem:[#allocation7 + $0x1c] sm:$0xf]
        %v924 = vld [vmem:[#allocation7 + $0x20] sm:$0xf]
        %v925 = vld [vmem:[#allocation7 + $0x24] sm:$0xf]
        %v926 = vld [vmem:[#allocation7 + $0x28] sm:$0xf]
        %v927 = vld [vmem:[#allocation7 + $0x2c] sm:$0xf]
        %v928 = vld [vmem:[#allocation7 + $0x30] sm:$0xf]
        %v929 = vld [vmem:[#allocation7 + $0x34] sm:$0xf]
        %v930 = vld [vmem:[#allocation7 + $0x38] sm:$0xf]
        %v931 = vld [vmem:[#allocation7 + $0x3c] sm:$0xf]
        %v932 = vld [vmem:[#allocation9] sm:$0xf]
        %v933 = vsel %vm644, %v914, 0.0
        %934 = vadd.xlane.f32.xlu0 %v933
        %v935 = vpop.xlane.xlu0 %934
        %v936 = vmul.f32 %v935, %v654
        %v937 = vsub.f32 %v914, %v936
        %v938 = vmul.f32 %v937, %v937
        %v939 = vsel %vm644, %v938, 0.0
        %940 = vadd.xlane.f32.xlu0 %v939
        %v941 = vpop.xlane.xlu0 %940
        %v942 = vmul.f32 %v941, %v654
        %v943 = vadd.f32 %v942, 1e-05
        %v944 = vrsqrt.pop %v943
        %v945 = vmul.f32 %v944, %v943
        %v946 = vmul.f32 %v945, %v944
        %v947 = vmul.f32 0.5, %v946
        %v948 = vsub.f32 1.5, %v947
        %v949 = vmul.f32 %v944, %v948
        %vm950 = vweird.f32 %v943
        %vm951 = vweird.f32 %v944
        %vm952 = vmor %vm950, %vm951
        %v953 = vsel %vm952, %v944, %v949
        %v954 = vmul.f32 %v937, %v953
        %v955 = vperm.slane %v915, 0
        %v956 = vmul.f32 %v954, %v955
        %v957 = vperm.slane %v915, 1
        %v958 = vadd.f32 %v956, %v957
        %v959 = vpack.c.bf16 %v958, %v958
        %v960 = vperm.slane %v932, 0
        %v965 = vunpack.c.l.b16 %v916
        %v966 = vunpack.c.l.b16 %v917
        %v967 = vunpack.c.l.b16 %v918
        %v968 = vunpack.c.l.b16 %v919
        %v969 = vpack.c.b16 %v966, %v965
        %v970 = vpack.c.b16 %v968, %v967
        %v974 = vsel %vm644, %v959, 0
        %976 = vmatpush.bf16.msra.mxu0 0
        %977 = vmatpush.bf16.msra.mxu0 0
        %978 = vmatpush.bf16.msra.mxu0 0
        %979 = vmatpush.bf16.msra.mxu0 0
        %980 = vmatpush.bf16.msra.mxu0 0
        %981 = vmatpush.bf16.msra.mxu0 0
        %982 = vmatpush.bf16.msra.mxu0 %v970
        %983 = vmatpush.bf16.msra.mxu0 %v969
        %984 = vmatmul.bf16.gmra.mxu0 %v974
        %v985 = vpop.f32.mrf.mxu0
        %v986 = vadd.f32 %v960, %v985
        %v987 = vpop.f32.mrf.mxu0
        %988 = vdwg.mxu0
        %v989 = vperm.slane %v932, 1
        %v994 = vunpack.c.l.b16 %v920
        %v995 = vunpack.c.l.b16 %v921
        %v996 = vunpack.c.l.b16 %v922
        %v997 = vunpack.c.l.b16 %v923
        %v998 = vpack.c.b16 %v995, %v994
        %v999 = vpack.c.b16 %v997, %v996
        %1002 = vmatpush.bf16.msra.mxu0 0
        %1003 = vmatpush.bf16.msra.mxu0 0
        %1004 = vmatpush.bf16.msra.mxu0 0
        %1005 = vmatpush.bf16.msra.mxu0 0
        %1006 = vmatpush.bf16.msra.mxu0 0
        %1007 = vmatpush.bf16.msra.mxu0 0
        %1008 = vmatpush.bf16.msra.mxu0 %v999
        %1009 = vmatpush.bf16.msra.mxu0 %v998
        %1010 = vmatmul.bf16.gmra.mxu0 %v974
        %v1011 = vpop.f32.mrf.mxu0
        %v1012 = vadd.f32 %v989, %v1011
        %v1013 = vpop.f32.mrf.mxu0
        %1014 = vdwg.mxu0
        %v1015 = vperm.slane %v932, 2
        %v1020 = vunpack.c.l.b16 %v924
        %v1021 = vunpack.c.l.b16 %v925
        %v1022 = vunpack.c.l.b16 %v926
        %v1023 = vunpack.c.l.b16 %v927
        %v1024 = vpack.c.b16 %v1021, %v1020
        %v1025 = vpack.c.b16 %v1023, %v1022
        %1028 = vmatpush.bf16.msra.mxu0 0
        %1029 = vmatpush.bf16.msra.mxu0 0
        %1030 = vmatpush.bf16.msra.mxu0 0
        %1031 = vmatpush.bf16.msra.mxu0 0
        %1032 = vmatpush.bf16.msra.mxu0 0
        %1033 = vmatpush.bf16.msra.mxu0 0
        %1034 = vmatpush.bf16.msra.mxu0 %v1025
        %1035 = vmatpush.bf16.msra.mxu0 %v1024
        %1036 = vmatmul.bf16.gmra.mxu0 %v974
        %v1037 = vpop.f32.mrf.mxu0
        %v1038 = vadd.f32 %v1015, %v1037
        %v1039 = vpop.f32.mrf.mxu0
        %1040 = vdwg.mxu0
        %v1041 = vpack.c.bf16 %v986, %v986
        %v1042 = vpack.c.bf16 %v1012, %v1012
        %v1043 = vpack.c.bf16 %v1038, %v1038
        %v1045 = vsel %vm770, %v1041, 0
        %v1048 = vsel %vm770, %v1042, 0
        %1050 = vmatpush.bf16.xpose.msra.mxu0 0
        %1051 = vmatpush.bf16.xpose.msra.mxu0 0
        %1052 = vmatpush.bf16.xpose.msra.mxu0 0
        %1053 = vmatpush.bf16.xpose.msra.mxu0 0
        %1054 = vmatpush.bf16.xpose.msra.mxu0 0
        %1055 = vmatpush.bf16.xpose.msra.mxu0 0
        %1056 = vmatpush.bf16.xpose.msra.mxu0 0
        %1057 = vmatpush.bf16.xpose.msra.mxu0 %v1048
        %1058 = vmatmul.bf16.gmra.mxu0 %v1045
        %v1059 = vpop.f32.mrf.mxu0
        %v1060 = vadd.f32 0.0, %v1059
        %v1061 = vpop.f32.mrf.mxu0
        %1062 = vdwg.mxu0
        %v1063 = vmul.f32 %v1060, 0.25
        %vm1064 = vcmask 64512
        %v1065 = vsel %vm1064, %v1063, -inf
        %1066 = vmax.xlane.f32.xlu0 %v1065
        %v1067 = vpop.xlane.xlu0 %1066
        %v1068 = vsub.f32 %v1063, %v1067
        %v1069 = vmul.f32 %v1068, 1.442695
        %v1070 = vpow.pop %v1069
        %v1071 = vsel %vm1064, %v1070, 0.0
        %1072 = vadd.xlane.f32.xlu0 %v1071
        %v1073 = vpop.xlane.xlu0 %1072
        %v1074 = vrcp.pop %v1073
        %v1075 = vmul.f32 %v1070, %v1074
        %v1076 = vpack.c.bf16 %v1075, %v1075
        %v1078 = vsel %vm1064, %v1076, 0
        %vm1080 = vcmask 1043456
        %v1082 = vsel %vm1080, %v1043, 0
        %1084 = vmatpush.bf16.msra.mxu0 0
        %1085 = vmatpush.bf16.msra.mxu0 0
        %1086 = vmatpush.bf16.msra.mxu0 0
        %1087 = vmatpush.bf16.msra.mxu0 0
        %1088 = vmatpush.bf16.msra.mxu0 0
        %1089 = vmatpush.bf16.msra.mxu0 0
        %1090 = vmatpush.bf16.msra.mxu0 0
        %1091 = vmatpush.bf16.msra.mxu0 %v1082
        %1092 = vmatmul.bf16.gmra.mxu0 %v1078
        %v1093 = vpop.f32.mrf.mxu0
        %v1094 = vadd.f32 0.0, %v1093
        %v1095 = vpop.f32.mrf.mxu0
        %1096 = vdwg.mxu0
        %1098 = vrot.lane.b32.xlu0 %v1041, 112
        %v1099 = vpop.permute.xlu0 %1098
        %1101 = vrot.lane.b32.xlu0 %v1042, 112
        %v1102 = vpop.permute.xlu0 %1101
        %v1104 = vsel %vm770, %v1099, 0
        %v1107 = vsel %vm770, %v1102, 0
        %1109 = vmatpush.bf16.xpose.msra.mxu0 0
        %1110 = vmatpush.bf16.xpose.msra.mxu0 0
        %1111 = vmatpush.bf16.xpose.msra.mxu0 0
        %1112 = vmatpush.bf16.xpose.msra.mxu0 0
        %1113 = vmatpush.bf16.xpose.msra.mxu0 0
        %1114 = vmatpush.bf16.xpose.msra.mxu0 0
        %1115 = vmatpush.bf16.xpose.msra.mxu0 0
        %1116 = vmatpush.bf16.xpose.msra.mxu0 %v1107
        %1117 = vmatmul.bf16.gmra.mxu0 %v1104
        %v1118 = vpop.f32.mrf.mxu0
        %v1119 = vadd.f32 0.0, %v1118
        %v1120 = vpop.f32.mrf.mxu0
        %1121 = vdwg.mxu0
        %v1122 = vmul.f32 %v1119, 0.25
        %v1123 = vsel %vm1064, %v1122, -inf
        %1124 = vmax.xlane.f32.xlu0 %v1123
        %v1125 = vpop.xlane.xlu0 %1124
        %v1126 = vsub.f32 %v1122, %v1125
        %v1127 = vmul.f32 %v1126, 1.442695
        %v1128 = vpow.pop %v1127
        %v1129 = vsel %vm1064, %v1128, 0.0
        %1130 = vadd.xlane.f32.xlu0 %v1129
        %v1131 = vpop.xlane.xlu0 %1130
        %v1132 = vrcp.pop %v1131
        %v1133 = vmul.f32 %v1128, %v1132
        %v1134 = vpack.c.bf16 %v1133, %v1133
        %1136 = vrot.lane.b32.xlu0 %v1043, 112
        %v1137 = vpop.permute.xlu0 %1136
        %v1139 = vsel %vm1064, %v1134, 0
        %v1142 = vsel %vm1080, %v1137, 0
        %1144 = vmatpush.bf16.msra.mxu0 0
        %1145 = vmatpush.bf16.msra.mxu0 0
        %1146 = vmatpush.bf16.msra.mxu0 0
        %1147 = vmatpush.bf16.msra.mxu0 0
        %1148 = vmatpush.bf16.msra.mxu0 0
        %1149 = vmatpush.bf16.msra.mxu0 0
        %1150 = vmatpush.bf16.msra.mxu0 0
        %1151 = vmatpush.bf16.msra.mxu0 %v1142
        %1152 = vmatmul.bf16.gmra.mxu0 %v1139
        %v1153 = vpop.f32.mrf.mxu0
        %v1154 = vadd.f32 0.0, %v1153
        %v1155 = vpop.f32.mrf.mxu0
        %1156 = vdwg.mxu0
        %1158 = vrot.lane.b32.xlu0 %v1154, 16
        %v1159 = vpop.permute.xlu0 %1158
        %v1161 = vsel %vm770, %v1094, %v1159
        %v1162 = vpack.c.bf16 %v1161, %v1161
        %v1163 = vperm.slane %v932, 3
        %v1168 = vunpack.c.l.b16 %v928
        %v1169 = vunpack.c.l.b16 %v929
        %v1170 = vunpack.c.l.b16 %v930
        %v1171 = vunpack.c.l.b16 %v931
        %v1172 = vpack.c.b16 %v1169, %v1168
        %v1173 = vpack.c.b16 %v1171, %v1170
        %v1177 = vsel %vm644, %v1162, 0
        %1179 = vmatpush.bf16.msra.mxu0 0
        %1180 = vmatpush.bf16.msra.mxu0 0
        %1181 = vmatpush.bf16.msra.mxu0 0
        %1182 = vmatpush.bf16.msra.mxu0 0
        %1183 = vmatpush.bf16.msra.mxu0 0
        %1184 = vmatpush.bf16.msra.mxu0 0
        %1185 = vmatpush.bf16.msra.mxu0 %v1173
        %1186 = vmatpush.bf16.msra.mxu0 %v1172
        %1187 = vmatmul.bf16.gmra.mxu0 %v1177
        %v1188 = vpop.f32.mrf.mxu0
        %v1189 = vadd.f32 %v1163, %v1188
        %v1190 = vpop.f32.mrf.mxu0
        %1191 = vdwg.mxu0
        %v1192 = vadd.f32 %v914, %v1189
        %v1193 = vld [vmem:[#allocation10] sm:$0x3]
        %v1194 = vld [vmem:[%s10] sm:$0xf]
        %v1195 = vld [vmem:[%s10 + $0x4] sm:$0xf]
        %v1196 = vld [vmem:[%s10 + $0x8] sm:$0xf]
        %v1197 = vld [vmem:[%s10 + $0xc] sm:$0xf]
        %v1198 = vld [vmem:[#allocation12] sm:$0x1]
        %v1199 = vld [vmem:[%s12] sm:$0xf]
        %v1200 = vld [vmem:[%s12 + $0x4] sm:$0xf]
        %v1201 = vld [vmem:[%s12 + $0x8] sm:$0xf]
        %v1202 = vld [vmem:[%s12 + $0xc] sm:$0xf]
        %v1203 = vld [vmem:[%s12 + $0x10] sm:$0xf]
        %v1204 = vld [vmem:[%s12 + $0x14] sm:$0xf]
        %v1205 = vld [vmem:[%s12 + $0x18] sm:$0xf]
        %v1206 = vld [vmem:[%s12 + $0x1c] sm:$0xf]
        %v1207 = vld [vmem:[#allocation13] sm:$0x1]
        %v1208 = vsel %vm644, %v1192, 0.0
        %1209 = vadd.xlane.f32.xlu0 %v1208
        %v1210 = vpop.xlane.xlu0 %1209
        %v1211 = vmul.f32 %v1210, %v654
        %v1212 = vsub.f32 %v1192, %v1211
        %v1213 = vmul.f32 %v1212, %v1212
        %v1214 = vsel %vm644, %v1213, 0.0
        %1215 = vadd.xlane.f32.xlu0 %v1214
        %v1216 = vpop.xlane.xlu0 %1215
        %v1217 = vmul.f32 %v1216, %v654
        %v1218 = vadd.f32 %v1217, 1e-05
        %v1219 = vrsqrt.pop %v1218
        %v1220 = vmul.f32 %v1219, %v1218
        %v1221 = vmul.f32 %v1220, %v1219
        %v1222 = vmul.f32 0.5, %v1221
        %v1223 = vsub.f32 1.5, %v1222
        %v1224 = vmul.f32 %v1219, %v1223
        %vm1225 = vweird.f32 %v1218
        %vm1226 = vweird.f32 %v1219
        %vm1227 = vmor %vm1225, %vm1226
        %v1228 = vsel %vm1227, %v1219, %v1224
        %v1229 = vmul.f32 %v1212, %v1228
        %v1230 = vperm.slane %v1193, 0
        %v1231 = vmul.f32 %v1229, %v1230
        %v1232 = vperm.slane %v1193, 1
        %v1233 = vadd.f32 %v1231, %v1232
        %v1234 = vpack.c.bf16 %v1233, %v1233
        %v1236 = vperm.slane %v1198, 0
        %v1242 = vunpack.c.l.b16 %v1194
        %v1243 = vunpack.c.l.b16 %v1195
        %v1244 = vunpack.c.l.b16 %v1196
        %v1245 = vunpack.c.l.b16 %v1197
        %v1246 = vpack.c.b16 %v1243, %v1242
        %v1247 = vpack.c.b16 %v1245, %v1244
        %v1251 = vsel %vm644, %v1234, 0
        %1253 = vmatpush.bf16.msra.mxu0 0
        %1254 = vmatpush.bf16.msra.mxu0 0
        %1255 = vmatpush.bf16.msra.mxu0 0
        %1256 = vmatpush.bf16.msra.mxu0 0
        %1257 = vmatpush.bf16.msra.mxu0 0
        %1258 = vmatpush.bf16.msra.mxu0 0
        %1259 = vmatpush.bf16.msra.mxu0 %v1247
        %1260 = vmatpush.bf16.msra.mxu0 %v1246
        %1261 = vmatmul.bf16.gmra.mxu0 %v1251
        %v1262 = vpop.f32.mrf.mxu0
        %v1263 = vadd.f32 %v1236, %v1262
        %v1264 = vpop.f32.mrf.mxu0
        %1265 = vdwg.mxu0
        %v1266 = vmul.f32 %v1263, %v1263
        %v1267 = vmul.f32 %v1263, %v1266
        %v1268 = vmul.f32 %v1267, 0.044715
        %v1269 = vadd.f32 %v1263, %v1268
        %v1270 = vmul.f32 %v1269, 0.7978846
        %v1271 = vtanh.pop %v1270
        %v1272 = vadd.f32 %v1271, 1.0
        %v1273 = vmul.f32 %v1272, 0.5
        %v1274 = vmul.f32 %v1263, %v1273
        %v1275 = vpack.c.bf16 %v1274, %v1274
        %v1284 = vunpack.c.l.b16 %v1199
        %v1285 = vunpack.c.l.b16 %v1200
        %v1286 = vunpack.c.l.b16 %v1201
        %v1287 = vunpack.c.l.b16 %v1202
        %v1288 = vunpack.c.l.b16 %v1203
        %v1289 = vunpack.c.l.b16 %v1204
        %v1290 = vunpack.c.l.b16 %v1205
        %v1291 = vunpack.c.l.b16 %v1206
        %v1292 = vpack.c.b16 %v1285, %v1284
        %v1293 = vpack.c.b16 %v1287, %v1286
        %v1294 = vpack.c.b16 %v1289, %v1288
        %v1295 = vpack.c.b16 %v1291, %v1290
        %vm1300 = vcmask 523264
        %v1302 = vsel %vm1300, %v1275, 0
        %1304 = vmatpush.bf16.msra.mxu0 0
        %1305 = vmatpush.bf16.msra.mxu0 0
        %1306 = vmatpush.bf16.msra.mxu0 0
        %1307 = vmatpush.bf16.msra.mxu0 0
        %1308 = vmatpush.bf16.msra.mxu0 %v1295
        %1309 = vmatpush.bf16.msra.mxu0 %v1294
        %1310 = vmatpush.bf16.msra.mxu0 %v1293
        %1311 = vmatpush.bf16.msra.mxu0 %v1292
        %1312 = vmatmul.bf16.gmra.mxu0 %v1302
        %v1313 = vpop.f32.mrf.mxu0
        %v1314 = vadd.f32 0.0, %v1313
        %v1315 = vpop.f32.mrf.mxu0
        %1316 = vdwg.mxu0
        %v1317 = vadd.f32 %v1192, %v1314
        %v1319 = vperm.slane %v1207, 0
        %v1321 = vadd.f32 %v1317, %v1319
        %1322 = vst.msk [vmem:[%s620] sm:$0xff] %vm644, %v1321
        %p1323 = scmp.lt.s32.totalorder %s30, 1
        %s1324 = scalar_select %p1323, %s30, 1
        %s1325 = smul.addr %s1324, 8
        %s1326 = scalar_lea.vmem %s14, %s1325
        // Predicated region
        $region109: #{maskformer_decoder_forward.11} parent=75 // pred_check
          %p1327 = pneg %p357
        $region110: #{maskformer_decoder_forward.11} parent=75 // pred_check_branch
          %1329 = sbr.rel (%p1327) target = $region112
        $region111: #{maskformer_decoder_forward.11} parent=75 // pred_region
          _
        $region112: #{maskformer_decoder_forward.11} parent=75 // pred_fallthru
          _
      $region76: #{maskformer_decoder_forward.11} parent=5 // pred_fallthru
        _
      %p1330 = scmp.le.s32.totalorder 2, %s25
      // Predicated region
      $region113: #{maskformer_decoder_forward.11} parent=5 // pred_check
        %p1331 = pneg %p1330
      $region114: #{maskformer_decoder_forward.11} parent=5 // pred_check_branch
        %1333 = sbr.rel (%p1331) target = $region116
      $region115: #{maskformer_decoder_forward.11} parent=5 // pred_region
        %s1334 = ssub.s32 %s25, 2
        // Predicated region
        $region117: #{maskformer_decoder_forward.11} parent=115 // pred_check
          %p1335 = pneg %p363
        $region118: #{maskformer_decoder_forward.11} parent=115 // pred_check_branch
          %1337 = sbr.rel (%p1335) target = $region120
        $region119: #{maskformer_decoder_forward.11} parent=115 // pred_region
          %p1338 = scmp.lt.s32.totalorder %s31, 1
          %s1339 = scalar_select %p1338, %s31, 1
          %s1340 = smul.addr %s1339, 8
          %s1341 = scalar_lea.vmem %s14, %s1340
        $region120: #{maskformer_decoder_forward.11} parent=115 // pred_fallthru
          _
      $region116: #{maskformer_decoder_forward.11} parent=5 // pred_fallthru
        _
    $region6: #{maskformer_decoder_forward.11} parent=1 // loop_footer
      %s29 = sadd.s32 1, %s25
    $region7: #{maskformer_decoder_forward.11} parent=1 // loop_footer_branch
      %24 = sbr.rel target = $region3
    $region8: #{maskformer_decoder_forward.11} parent=1 // loop_exit
      _
    %1342 = vsyncpa [#allocation3], 1
    %s1343 = scalar_lea.sflag [#allocation3], 1
    %1344 = vsyncpa %s1343, 1
    %1345 = vsyncpa [#allocation5], 1
    %1346 = vsyncpa [#allocation8], 1
    %1347 = vsyncpa [#allocation11], 1
    %1348 = vsyncpa [#allocation14], 1

// kernel: maskformer_decoder_forward.13
$region0: #{maskformer_decoder_forward.13}
  #allocation0 [shape = 'u32[]', space=smem, size = 0x4, offset = 0x4, fixed_abs, tag = 'smem constant byte address 0x4 - core index']
  #allocation1 [shape = 'u32[72,128]{1,0:T(1,128)}', space=vmem, size = 0x9000, scoped, tag = 'internal scratch']
  #allocation2 [shape = 'f32[1,1]{1,0:T(1,128)S(1)}', space=vmem, size = 0x200, scoped, tag = 'scoped memory for maskformer_decoder_forward.13']
  %s0 = inlined_call_operand.vmem [shape: f32[2,8,32], index: 0, kind: input, shape index: {}]
  %s1 = inlined_call_operand.vmem [shape: f32[2,16,32], index: 1, kind: input, shape index: {}]
  %s2 = inlined_call_operand.vmem [shape: bf16[32,32], index: 2, kind: input, shape index: {}]
  %s3 = inlined_call_operand.vmem [shape: f32[1,32], index: 3, kind: input, shape index: {}]
  %s4 = inlined_call_operand.vmem [shape: bf16[32,1], index: 4, kind: input, shape index: {}]
  %s5 = inlined_call_operand.<no memory space> [shape: f32[1,1], index: 5, kind: input, shape index: {}]
  %s6 = inlined_call_operand.hbm [shape: f32[2,8,16], index: 6, kind: output, shape index: {0}]
  %s7 = inlined_call_operand.vmem [shape: f32[2,8,1], index: 7, kind: output, shape index: {1}]
  %8 = xla_tuple %s6, %s7
  %s9 = sld [smem:[#allocation0]]
  $region65: #{maskformer_decoder_forward.13} parent=0
    _
  %s11 = ssub.s32 1, %s9
  %s12 = scalar_select 0, %s11, %s9
  %v13 = vstv %s5
  %14 = vst [vmem:[#allocation2] sm:$0x1] %v13
  $region1: #{maskformer_decoder_forward.13} parent=0
    #allocation3 [shape = 'u8[8192]{0}', space=vmem, size = 0x2000, scoped, tag = 'output window, operand 0']
    #allocation4 [shape = 's32[2]{0}', space=sflag, size = 0x8, scoped, tag = 'scoped memory for maskformer_decoder_forward.13']
    %15 = vsyncpa [#allocation4], 0
    %s16 = scalar_lea.sflag [#allocation4], 1
    %17 = vsyncpa %s16, 0
    loop: start=0, step=1, limit=4
    $region2: #{maskformer_decoder_forward.13} parent=1 // loop_pre_header
      _
    $region3: #{maskformer_decoder_forward.13} parent=1 // loop_header
      %s19 = sphi 0, %s23
      %p20 = scmp.ge.s32.totalorder %s19, 4
      %s29 = sphi 0, %s31
      %s32 = sphi 0, %s29
      %s33 = sphi 0, %s32
      %s49 = sphi 0, %s33
      %s55 = sphi 0, %s57
      %s58 = sphi 0, %s55
      %s59 = sphi 0, %s58
      %s75 = sphi 0, %s59
      %s79 = sphi 0, %s79
      %s81 = sphi 0, %s79
      %s82 = sphi 0, %s81
      %s96 = sphi 0, %s82
      %s100 = sphi 0, %s100
      %s102 = sphi 0, %s100
      %s103 = sphi 0, %s102
      %s117 = sphi 0, %s103
      %s121 = sphi 0, %s121
      %s123 = sphi 0, %s121
      %s124 = sphi 0, %s123
      %s138 = sphi 0, %s124
      %s142 = sphi 0, %s142
      %s144 = sphi 0, %s142
      %s145 = sphi 0, %s144
      %s159 = sphi 0, %s145
      %s165 = sphi 0, %s167
      %s168 = sphi 0, %s165
      %s169 = sphi 0, %s168
      %s185 = sphi 0, %s169
      %s191 = sphi 0, %s193
      %s194 = sphi 0, %s191
      %s195 = sphi 0, %s194
      %s211 = sphi 0, %s195
    $region4: #{maskformer_decoder_forward.13} parent=1 // loop_header_branch
      %22 = sbr.rel (%p20) target = $region8
    $region5: #{maskformer_decoder_forward.13} parent=1 // loop_body
      %s24 = ssub.s32 %s19, 1
      %s25 = ssub.s32 %s19, 2
      %s26 = sadd.s32 %s19, 1
      %s27 = ssub.s32 %s19, %s26
      %p28 = scmp.eq.s32.totalorder %s27, 0
      %s30 = sadd.s32 %s29, 1
      %s31 = scalar_select %p28, %s29, %s30
      %p34 = pneg %p28
      %p35 = scmp.eq.s32.totalorder %s19, 1
      %p36 = por %p34, %p35
      %p37 = scmp.ne.s32.totalorder %s29, %s32
      %p38 = scmp.eq.s32.totalorder %s19, 0
      %p39 = por %p37, %p38
      %p40 = scmp.ne.s32.totalorder %s29, %s32
      %p41 = scmp.eq.s32.totalorder %s24, 1
      %p42 = por %p40, %p41
      %p43 = scmp.ne.s32.totalorder %s32, %s33
      %p44 = scmp.eq.s32.totalorder %s24, 0
      %p45 = por %p43, %p44
      %p46 = scmp.ne.s32.totalorder %s32, %s33
      %p47 = scmp.eq.s32.totalorder %s25, 1
      %p48 = por %p46, %p47
      %p50 = scmp.ne.s32.totalorder %s33, %s49
      %p51 = scmp.eq.s32.totalorder %s25, 0
      %p52 = por %p50, %p51
      %s53 = ssub.s32 %s19, %s26
      %p54 = scmp.eq.s32.totalorder %s53, 0
      %s56 = sadd.s32 %s55, 1
      %s57 = scalar_select %p54, %s55, %s56
      %p60 = pneg %p54
      %p61 = scmp.eq.s32.totalorder %s19, 1
      %p62 = por %p60, %p61
      %p63 = scmp.ne.s32.totalorder %s55, %s58
      %p64 = scmp.eq.s32.totalorder %s19, 0
      %p65 = por %p63, %p64
      %p66 = scmp.ne.s32.totalorder %s55, %s58
      %p67 = scmp.eq.s32.totalorder %s24, 1
      %p68 = por %p66, %p67
      %p69 = scmp.ne.s32.totalorder %s58, %s59
      %p70 = scmp.eq.s32.totalorder %s24, 0
      %p71 = por %p69, %p70
      %p72 = scmp.ne.s32.totalorder %s58, %s59
      %p73 = scmp.eq.s32.totalorder %s25, 1
      %p74 = por %p72, %p73
      %p76 = scmp.ne.s32.totalorder %s59, %s75
      %p77 = scmp.eq.s32.totalorder %s25, 0
      %p78 = por %p76, %p77
      %s80 = sadd.s32 %s79, 1
      %p83 = scmp.eq.s32.totalorder %s19, 1
      %p84 = scmp.ne.s32.totalorder %s79, %s81
      %p85 = scmp.eq.s32.totalorder %s19, 0
      %p86 = por %p84, %p85
      %p87 = scmp.ne.s32.totalorder %s79, %s81
      %p88 = scmp.eq.s32.totalorder %s24, 1
      %p89 = por %p87, %p88
      %p90 = scmp.ne.s32.totalorder %s81, %s82
      %p91 = scmp.eq.s32.totalorder %s24, 0
      %p92 = por %p90, %p91
      %p93 = scmp.ne.s32.totalorder %s81, %s82
      %p94 = scmp.eq.s32.totalorder %s25, 1
      %p95 = por %p93, %p94
      %p97 = scmp.ne.s32.totalorder %s82, %s96
      %p98 = scmp.eq.s32.totalorder %s25, 0
      %p99 = por %p97, %p98
      %s101 = sadd.s32 %s100, 1
      %p104 = scmp.eq.s32.totalorder %s19, 1
      %p105 = scmp.ne.s32.totalorder %s100, %s102
      %p106 = scmp.eq.s32.totalorder %s19, 0
      %p107 = por %p105, %p106
      %p108 = scmp.ne.s32.totalorder %s100, %s102
      %p109 = scmp.eq.s32.totalorder %s24, 1
      %p110 = por %p108, %p109
      %p111 = scmp.ne.s32.totalorder %s102, %s103
      %p112 = scmp.eq.s32.totalorder %s24, 0
      %p113 = por %p111, %p112
      %p114 = scmp.ne.s32.totalorder %s102, %s103
      %p115 = scmp.eq.s32.totalorder %s25, 1
      %p116 = por %p114, %p115
      %p118 = scmp.ne.s32.totalorder %s103, %s117
      %p119 = scmp.eq.s32.totalorder %s25, 0
      %p120 = por %p118, %p119
      %s122 = sadd.s32 %s121, 1
      %p125 = scmp.eq.s32.totalorder %s19, 1
      %p126 = scmp.ne.s32.totalorder %s121, %s123
      %p127 = scmp.eq.s32.totalorder %s19, 0
      %p128 = por %p126, %p127
      %p129 = scmp.ne.s32.totalorder %s121, %s123
      %p130 = scmp.eq.s32.totalorder %s24, 1
      %p131 = por %p129, %p130
      %p132 = scmp.ne.s32.totalorder %s123, %s124
      %p133 = scmp.eq.s32.totalorder %s24, 0
      %p134 = por %p132, %p133
      %p135 = scmp.ne.s32.totalorder %s123, %s124
      %p136 = scmp.eq.s32.totalorder %s25, 1
      %p137 = por %p135, %p136
      %p139 = scmp.ne.s32.totalorder %s124, %s138
      %p140 = scmp.eq.s32.totalorder %s25, 0
      %p141 = por %p139, %p140
      %s143 = sadd.s32 %s142, 1
      %p146 = scmp.eq.s32.totalorder %s19, 1
      %p147 = scmp.ne.s32.totalorder %s142, %s144
      %p148 = scmp.eq.s32.totalorder %s19, 0
      %p149 = por %p147, %p148
      %p150 = scmp.ne.s32.totalorder %s142, %s144
      %p151 = scmp.eq.s32.totalorder %s24, 1
      %p152 = por %p150, %p151
      %p153 = scmp.ne.s32.totalorder %s144, %s145
      %p154 = scmp.eq.s32.totalorder %s24, 0
      %p155 = por %p153, %p154
      %p156 = scmp.ne.s32.totalorder %s144, %s145
      %p157 = scmp.eq.s32.totalorder %s25, 1
      %p158 = por %p156, %p157
      %p160 = scmp.ne.s32.totalorder %s145, %s159
      %p161 = scmp.eq.s32.totalorder %s25, 0
      %p162 = por %p160, %p161
      %s163 = ssub.s32 %s19, %s26
      %p164 = scmp.eq.s32.totalorder %s163, 0
      %s166 = sadd.s32 %s165, 1
      %s167 = scalar_select %p164, %s165, %s166
      %p170 = pneg %p164
      %p171 = scmp.eq.s32.totalorder %s19, 1
      %p172 = por %p170, %p171
      %p173 = scmp.ne.s32.totalorder %s165, %s168
      %p174 = scmp.eq.s32.totalorder %s19, 0
      %p175 = por %p173, %p174
      %p176 = scmp.ne.s32.totalorder %s165, %s168
      %p177 = scmp.eq.s32.totalorder %s24, 1
      %p178 = por %p176, %p177
      %p179 = scmp.ne.s32.totalorder %s168, %s169
      %p180 = scmp.eq.s32.totalorder %s24, 0
      %p181 = por %p179, %p180
      %p182 = scmp.ne.s32.totalorder %s168, %s169
      %p183 = scmp.eq.s32.totalorder %s25, 1
      %p184 = por %p182, %p183
      %p186 = scmp.ne.s32.totalorder %s169, %s185
      %p187 = scmp.eq.s32.totalorder %s25, 0
      %p188 = por %p186, %p187
      %s189 = ssub.s32 %s19, %s26
      %p190 = scmp.eq.s32.totalorder %s189, 0
      %s192 = sadd.s32 %s191, 1
      %s193 = scalar_select %p190, %s191, %s192
      %p196 = pneg %p190
      %p197 = scmp.eq.s32.totalorder %s19, 1
      %p198 = por %p196, %p197
      %p199 = scmp.ne.s32.totalorder %s191, %s194
      %p200 = scmp.eq.s32.totalorder %s19, 0
      %p201 = por %p199, %p200
      %p202 = scmp.ne.s32.totalorder %s191, %s194
      %p203 = scmp.eq.s32.totalorder %s24, 1
      %p204 = por %p202, %p203
      %p205 = scmp.ne.s32.totalorder %s194, %s195
      %p206 = scmp.eq.s32.totalorder %s24, 0
      %p207 = por %p205, %p206
      %p208 = scmp.ne.s32.totalorder %s194, %s195
      %p209 = scmp.eq.s32.totalorder %s25, 1
      %p210 = por %p208, %p209
      %p212 = scmp.ne.s32.totalorder %s195, %s211
      %p213 = scmp.eq.s32.totalorder %s25, 0
      %p214 = por %p212, %p213
      %p215 = scmp.le.s32.totalorder 1, %s19
      %p216 = scmp.lt.s32.totalorder %s19, 3
      %p217 = pnand %p215, %p216
      %p218 = pneg %p217
      // Predicated region
      $region9: #{maskformer_decoder_forward.13} parent=5 // pred_check
        _
      $region10: #{maskformer_decoder_forward.13} parent=5 // pred_check_branch
        %220 = sbr.rel (%p217) target = $region12
      $region11: #{maskformer_decoder_forward.13} parent=5 // pred_region
        %s221 = ssub.s32 %s19, 1
        // Predicated region
        $region13: #{maskformer_decoder_forward.13} parent=11 // pred_check
          %p222 = pneg %p92
        $region14: #{maskformer_decoder_forward.13} parent=11 // pred_check_branch
          %224 = sbr.rel (%p222) target = $region16
        $region15: #{maskformer_decoder_forward.13} parent=11 // pred_region
          _
        $region16: #{maskformer_decoder_forward.13} parent=11 // pred_fallthru
          _
        // Predicated region
        $region17: #{maskformer_decoder_forward.13} parent=11 // pred_check
          %p225 = pneg %p113
        $region18: #{maskformer_decoder_forward.13} parent=11 // pred_check_branch
          %227 = sbr.rel (%p225) target = $region20
        $region19: #{maskformer_decoder_forward.13} parent=11 // pred_region
          _
        $region20: #{maskformer_decoder_forward.13} parent=11 // pred_fallthru
          _
        // Predicated region
        $region21: #{maskformer_decoder_forward.13} parent=11 // pred_check
          %p228 = pneg %p134
        $region22: #{maskformer_decoder_forward.13} parent=11 // pred_check_branch
          %230 = sbr.rel (%p228) target = $region24
        $region23: #{maskformer_decoder_forward.13} parent=11 // pred_region
          _
        $region24: #{maskformer_decoder_forward.13} parent=11 // pred_fallthru
          _
        // Predicated region
        $region25: #{maskformer_decoder_forward.13} parent=11 // pred_check
          %p231 = pneg %p155
        $region26: #{maskformer_decoder_forward.13} parent=11 // pred_check_branch
          %233 = sbr.rel (%p231) target = $region28
        $region27: #{maskformer_decoder_forward.13} parent=11 // pred_region
          _
        $region28: #{maskformer_decoder_forward.13} parent=11 // pred_fallthru
          _
      $region12: #{maskformer_decoder_forward.13} parent=5 // pred_fallthru
        _
      %p234 = scmp.lt.s32.totalorder %s19, 2
      // Predicated region
      $region29: #{maskformer_decoder_forward.13} parent=5 // pred_check
        %p235 = pneg %p234
      $region30: #{maskformer_decoder_forward.13} parent=5 // pred_check_branch
        %237 = sbr.rel (%p235) target = $region32
      $region31: #{maskformer_decoder_forward.13} parent=5 // pred_region
        // Predicated region
        $region33: #{maskformer_decoder_forward.13} parent=31 // pred_check
          %p238 = pneg %p39
        $region34: #{maskformer_decoder_forward.13} parent=31 // pred_check_branch
          %240 = sbr.rel (%p238) target = $region36
        $region35: #{maskformer_decoder_forward.13} parent=31 // pred_region
          %p241 = scmp.lt.s32.totalorder %s19, 1
          %s242 = scalar_select %p241, %s19, 1
          %s243 = smul.addr %s242, 8
          %s244 = scalar_lea.vmem %s0, %s243
        $region36: #{maskformer_decoder_forward.13} parent=31 // pred_fallthru
          _
        // Predicated region
        $region37: #{maskformer_decoder_forward.13} parent=31 // pred_check
          %p245 = pneg %p65
        $region38: #{maskformer_decoder_forward.13} parent=31 // pred_check_branch
          %247 = sbr.rel (%p245) target = $region40
        $region39: #{maskformer_decoder_forward.13} parent=31 // pred_region
          %p248 = scmp.lt.s32.totalorder %s19, 1
          %s249 = scalar_select %p248, %s19, 1
          %s250 = smul.addr %s249, 2
          %s251 = smul.addr %s250, 8
          %s252 = scalar_lea.vmem %s1, %s251
        $region40: #{maskformer_decoder_forward.13} parent=31 // pred_fallthru
          _
      $region32: #{maskformer_decoder_forward.13} parent=5 // pred_fallthru
        _
      %p253 = scmp.le.s32.totalorder 1, %s19
      %p254 = scmp.lt.s32.totalorder %s19, 3
      %p255 = pnand %p253, %p254
      %p256 = pneg %p255
      // Predicated region
      $region41: #{maskformer_decoder_forward.13} parent=5 // pred_check
        _
      $region42: #{maskformer_decoder_forward.13} parent=5 // pred_check_branch
        %258 = sbr.rel (%p255) target = $region44
      $region43: #{maskformer_decoder_forward.13} parent=5 // pred_region
        %s259 = ssub.s32 %s19, 1
        %p260 = scmp.lt.s32.totalorder %s24, 1
        %s261 = scalar_select %p260, %s24, 1
        %s262 = smul.addr %s261, 8
        %s263 = scalar_lea.vmem %s0, %s262
        %p264 = pneg %p45
        %p265 = pneg %p42
        %p266 = scmp.lt.s32.totalorder %s24, 1
        %s267 = scalar_select %p266, %s24, 1
        %s268 = smul.addr %s267, 2
        %s269 = smul.addr %s268, 8
        %s270 = scalar_lea.vmem %s1, %s269
        %p271 = pneg %p71
        %p272 = pneg %p68
        %p273 = pneg %p92
        %p274 = pneg %p89
        %p275 = pneg %p113
        %p276 = pneg %p110
        %p277 = pneg %p134
        %p278 = pneg %p131
        %p279 = pneg %p155
        %p280 = pneg %p152
        %p281 = pneg %p181
        %p282 = pneg %p178
        %s283 = sand.u32 %s168, 1
        %s284 = scalar_lea.sflag [#allocation4], %s283
        %s285 = sand.u32 %s168, 1
        %s286 = smul.addr %s285, 8
        %s287 = scalar_lea.vmem [#allocation3], %s286
        %p288 = pneg %p207
        %p289 = pneg %p204
        %p290 = scmp.lt.s32.totalorder %s24, 1
        %s291 = scalar_select %p290, %s24, 1
        %s292 = smul.addr %s291, 8
        %s293 = scalar_lea.vmem %s7, %s292
        %p294 = scmp.lt.s32.totalorder %s24, 1
        %s295 = scalar_select %p294, %s24, 1
        %s296 = smul.addr %s295, 8
        %s297 = scalar_lea.vmem %s0, %s296
        %p298 = scmp.lt.s32.totalorder %s24, 1
        %s299 = scalar_select %p298, %s24, 1
        %s300 = smul.addr %s299, 2
        %s301 = smul.addr %s300, 8
        %s302 = scalar_lea.vmem %s1, %s301
        %p303 = scmp.lt.s32.totalorder %s24, 1
        %s304 = scalar_select %p303, %s24, 1
        %s305 = smul.addr %s304, 8
        %s306 = scalar_lea.vmem %s7, %s305
        %v308 = vld [vmem:[%s297] sm:$0xff]
        %v309 = vld [vmem:[%s302] sm:$0xff]
        %v310 = vld [vmem:[%s302 + $0x8] sm:$0xff]
        %v311 = vpack.c.bf16 %v308, %v308
        %v312 = vld [vmem:[%s2] sm:$0xf]
        %v313 = vld [vmem:[%s2 + $0x4] sm:$0xf]
        %v314 = vld [vmem:[%s2 + $0x8] sm:$0xf]
        %v315 = vld [vmem:[%s2 + $0xc] sm:$0xf]
        %v316 = vld [vmem:[%s3] sm:$0x1]
        %v318 = vperm.slane %v316, 0
        %v324 = vunpack.c.l.b16 %v312
        %v325 = vunpack.c.l.b16 %v313
        %v326 = vunpack.c.l.b16 %v314
        %v327 = vunpack.c.l.b16 %v315
        %v328 = vpack.c.b16 %v325, %v324
        %v329 = vpack.c.b16 %v327, %v326
        %vm332 = vcmask 261120
        %v334 = vsel %vm332, %v311, 0
        %336 = vmatpush.bf16.msra.mxu0 0
        %337 = vmatpush.bf16.msra.mxu0 0
        %338 = vmatpush.bf16.msra.mxu0 0
        %339 = vmatpush.bf16.msra.mxu0 0
        %340 = vmatpush.bf16.msra.mxu0 0
        %341 = vmatpush.bf16.msra.mxu0 0
        %342 = vmatpush.bf16.msra.mxu0 %v329
        %343 = vmatpush.bf16.msra.mxu0 %v328
        %344 = vmatmul.bf16.gmra.mxu0 %v334
        %v345 = vpop.f32.mrf.mxu0
        %v346 = vadd.f32 %v318, %v345
        %v347 = vpop.f32.mrf.mxu0
        %348 = vdwg.mxu0
        %v349 = vpack.c.bf16 %v346, %v346
        %v350 = vpack.c.bf16 %v310, %v309
        %v352 = vsel %vm332, %v349, 0
        %v355 = vsel %vm332, %v350, 0
        %357 = vmatpush.bf16.xpose.msra.mxu0 0
        %358 = vmatpush.bf16.xpose.msra.mxu0 0
        %359 = vmatpush.bf16.xpose.msra.mxu0 0
        %360 = vmatpush.bf16.xpose.msra.mxu0 0
        %361 = vmatpush.bf16.xpose.msra.mxu0 0
        %362 = vmatpush.bf16.xpose.msra.mxu0 0
        %363 = vmatpush.bf16.xpose.msra.mxu0 0
        %364 = vmatpush.bf16.xpose.msra.mxu0 %v355
        %365 = vmatmul.bf16.gmra.mxu0 %v352
        %v366 = vpop.f32.mrf.mxu0
        %v367 = vadd.f32 0.0, %v366
        %v368 = vpop.f32.mrf.mxu0
        %369 = vdwg.mxu0
        %vm370 = vcmask 130048
        %371 = vst.msk [vmem:[%s287] sm:$0xff] %vm370, %v367
        %v372 = vld [vmem:[%s4] sm:$0xf]
        %v373 = vld [vmem:[%s4 + $0x4] sm:$0xf]
        %v374 = vld [vmem:[%s4 + $0x8] sm:$0xf]
        %v375 = vld [vmem:[%s4 + $0xc] sm:$0xf]
        %v376 = vld [vmem:[#allocation2] sm:$0x1]
        %v378 = vperm.slane %v376, 0
        %v384 = vunpack.c.l.b16 %v372
        %v385 = vunpack.c.l.b16 %v373
        %v386 = vunpack.c.l.b16 %v374
        %v387 = vunpack.c.l.b16 %v375
        %v388 = vpack.c.b16 %v385, %v384
        %v389 = vpack.c.b16 %v387, %v386
        %392 = vmatpush.bf16.msra.mxu0 0
        %393 = vmatpush.bf16.msra.mxu0 0
        %394 = vmatpush.bf16.msra.mxu0 0
        %395 = vmatpush.bf16.msra.mxu0 0
        %396 = vmatpush.bf16.msra.mxu0 0
        %397 = vmatpush.bf16.msra.mxu0 0
        %398 = vmatpush.bf16.msra.mxu0 %v389
        %399 = vmatpush.bf16.msra.mxu0 %v388
        %400 = vmatmul.bf16.gmra.mxu0 %v334
        %v401 = vpop.f32.mrf.mxu0
        %v402 = vadd.f32 %v378, %v401
        %v403 = vpop.f32.mrf.mxu0
        %404 = vdwg.mxu0
        %vm405 = vcmask 7168
        %406 = vst.msk [vmem:[%s306] sm:$0xff] %vm405, %v402
        %s407 = sand.u32 %s168, 1
        %s408 = scalar_lea.sflag [#allocation4], %s407
        %s409 = sand.u32 %s168, 1
        %s410 = smul.addr %s409, 8
        %s411 = scalar_lea.vmem [#allocation3], %s410
        %p412 = scmp.lt.s32.totalorder %s24, 1
        %s413 = scalar_select %p412, %s24, 1
        %s414 = smul.addr %s413, 8
        %s415 = scalar_lea.vmem %s7, %s414
        // Predicated region
        $region45: #{maskformer_decoder_forward.13} parent=43 // pred_check
          %p416 = pneg %p178
        $region46: #{maskformer_decoder_forward.13} parent=43 // pred_check_branch
          %418 = sbr.rel (%p416) target = $region48
        $region47: #{maskformer_decoder_forward.13} parent=43 // pred_region
          %420 = vsyncadd %s408, 0
          %s421 = smul.addr %s24, 8
          %s422 = scalar_lea.hbm %s6, %s421
          %s424 = sshll.u32 %s411, 4
          %s425 = int_to_ptr.vmem [resolvable:$true] %s424
          %s426 = sshll.u32 %s422, 4
          %s427 = int_to_ptr.hbm [resolvable:$true] %s426
          %429 = dma.vmem_to_hbm [thread:$0]  %s425, 128, %s427, %s408
        $region48: #{maskformer_decoder_forward.13} parent=43 // pred_fallthru
          _
        // Predicated region
        $region49: #{maskformer_decoder_forward.13} parent=43 // pred_check
          %p430 = pneg %p204
        $region50: #{maskformer_decoder_forward.13} parent=43 // pred_check_branch
          %432 = sbr.rel (%p430) target = $region52
        $region51: #{maskformer_decoder_forward.13} parent=43 // pred_region
          _
        $region52: #{maskformer_decoder_forward.13} parent=43 // pred_fallthru
          _
      $region44: #{maskformer_decoder_forward.13} parent=5 // pred_fallthru
        _
      %p433 = scmp.le.s32.totalorder 2, %s19
      // Predicated region
      $region53: #{maskformer_decoder_forward.13} parent=5 // pred_check
        %p434 = pneg %p433
      $region54: #{maskformer_decoder_forward.13} parent=5 // pred_check_branch
        %436 = sbr.rel (%p434) target = $region56
      $region55: #{maskformer_decoder_forward.13} parent=5 // pred_region
        %s437 = ssub.s32 %s19, 2
        // Predicated region
        $region57: #{maskformer_decoder_forward.13} parent=55 // pred_check
          %p438 = pneg %p184
        $region58: #{maskformer_decoder_forward.13} parent=55 // pred_check_branch
          %440 = sbr.rel (%p438) target = $region60
        $region59: #{maskformer_decoder_forward.13} parent=55 // pred_region
          %s441 = sand.u32 %s169, 1
          %s442 = scalar_lea.sflag [#allocation4], %s441
          %s443 = sand.u32 %s169, 1
          %s444 = smul.addr %s443, 8
          %s445 = scalar_lea.vmem [#allocation3], %s444
          %447 = dma.done %s442, 128
        $region60: #{maskformer_decoder_forward.13} parent=55 // pred_fallthru
          _
        // Predicated region
        $region61: #{maskformer_decoder_forward.13} parent=55 // pred_check
          %p448 = pneg %p210
        $region62: #{maskformer_decoder_forward.13} parent=55 // pred_check_branch
          %450 = sbr.rel (%p448) target = $region64
        $region63: #{maskformer_decoder_forward.13} parent=55 // pred_region
          %p451 = scmp.lt.s32.totalorder %s25, 1
          %s452 = scalar_select %p451, %s25, 1
          %s453 = smul.addr %s452, 8
          %s454 = scalar_lea.vmem %s7, %s453
        $region64: #{maskformer_decoder_forward.13} parent=55 // pred_fallthru
          _
      $region56: #{maskformer_decoder_forward.13} parent=5 // pred_fallthru
        _
    $region6: #{maskformer_decoder_forward.13} parent=1 // loop_footer
      %s23 = sadd.s32 1, %s19
    $region7: #{maskformer_decoder_forward.13} parent=1 // loop_footer_branch
      %18 = sbr.rel target = $region3
    $region8: #{maskformer_decoder_forward.13} parent=1 // loop_exit
      _
    %455 = vsyncpa [#allocation4], 1
    %s456 = scalar_lea.sflag [#allocation4], 1
    %457 = vsyncpa %s456, 1

</llo_original>
